<compile_context>
chip_gen: v5e
topology: v5e:2x2
jax: 0.10.0
libtpu: 0.0.40
codegen_flags: <defaults>
</compile_context>

<pallas_src>
import functools
import math

import jax
import jax.numpy as jnp
from jax.experimental import pallas as pl
from jax.experimental.pallas import tpu as pltpu


# --------------------------- generation-aware config ------------------------

def _device_kind():
    try:
        return jax.devices()[0].device_kind.lower()
    except Exception:
        return ""


_KIND = _device_kind()
if "v6" in _KIND:                       # v6e: 128 MiB VMEM, 2x256^2 MXU
    _TM, _TN, _TK = 512, 1024, 2048
    _VMEM_LIMIT = 96 * (1 << 20)
elif "v7" in _KIND or "7x" in _KIND:    # v7x: 64 MiB VMEM, 2 TCs
    _TM, _TN, _TK = 256, 1024, 2048
    _VMEM_LIMIT = 48 * (1 << 20)
else:                                   # v5e / unknown: 16 MiB default scoped VMEM
    _TM, _TN, _TK = 256, 512, 1024
    _VMEM_LIMIT = None


def _compiler_params(dim_sem):
    kwargs = dict(dimension_semantics=dim_sem)
    if _VMEM_LIMIT is not None:
        kwargs["vmem_limit_bytes"] = _VMEM_LIMIT
    return pltpu.CompilerParams(**kwargs)


def _round_up(x, m):
    return ((x + m - 1) // m) * m


# --------------------------- tiled fused matmul -----------------------------

def _matmul_kernel(x_ref, w_ref, b_ref, *rest, pre_relu, post_gain, has_res):
    if has_res:
        res_ref, o_ref, acc_ref = rest
    else:
        res_ref = None
        o_ref, acc_ref = rest

    @pl.when(pl.program_id(2) == 0)
    def _init():
        acc_ref[...] = jnp.zeros_like(acc_ref)

    x = x_ref[...]
    if pre_relu:                       # fused prologue ReLU (res-path relu_k)
        x = jnp.maximum(x, 0)
    acc_ref[...] += jnp.dot(x.astype(jnp.bfloat16),
                            w_ref[...].astype(jnp.bfloat16),
                            preferred_element_type=jnp.float32)

    @pl.when(pl.program_id(2) == pl.num_programs(2) - 1)
    def _finalize():
        y = acc_ref[...] + b_ref[...].astype(jnp.float32)      # fused bias
        if has_res:                     # fused skip: id_path + post_gain * res
            y = res_ref[...].astype(jnp.float32) + post_gain * y
        o_ref[...] = y.astype(o_ref.dtype)


def fused_matmul(x, w, b, *, pre_relu=False, residual=None, post_gain=1.0,
                 out_dtype=jnp.bfloat16):
    """y = [residual + post_gain *] (relu?(x) @ w + b).  x:(M,K) w:(K,N) b:(N,)."""
    M, K = x.shape
    N = w.shape[1]
    # 16-aligned M tile (bf16 sublane packing), 128-aligned N/K tiles; pad the
    # operands up to tile multiples (no-op at real DalleEncoder shapes).
    tm = min(_TM, _round_up(M, 16))
    tn = min(_TN, _round_up(N, 128))
    tk = min(_TK, _round_up(K, 128))
    Mp, Np, Kp = _round_up(M, tm), _round_up(N, tn), _round_up(K, tk)

    xp = x if (Mp == M and Kp == K) else jnp.pad(x, ((0, Mp - M), (0, Kp - K)))
    wp = w if (Kp == K and Np == N) else jnp.pad(w, ((0, Kp - K), (0, Np - N)))
    bp = b if Np == N else jnp.pad(b, (0, Np - N))
    bp = bp.reshape(1, Np).astype(jnp.float32)

    in_specs = [
        pl.BlockSpec((tm, tk), lambda i, j, k: (i, k)),
        pl.BlockSpec((tk, tn), lambda i, j, k: (k, j)),
        pl.BlockSpec((1, tn), lambda i, j, k: (0, j)),
    ]
    args = [xp, wp, bp]
    has_res = residual is not None
    if has_res:
        rp = residual if (Mp == M and Np == N) else jnp.pad(
            residual, ((0, Mp - M), (0, Np - N)))
        in_specs.append(pl.BlockSpec((tm, tn), lambda i, j, k: (i, j)))
        args.append(rp)

    kernel = functools.partial(_matmul_kernel, pre_relu=pre_relu,
                               post_gain=float(post_gain), has_res=has_res)
    out = pl.pallas_call(
        kernel,
        out_shape=jax.ShapeDtypeStruct((Mp, Np), out_dtype),
        grid=(Mp // tm, Np // tn, Kp // tk),
        in_specs=in_specs,
        out_specs=pl.BlockSpec((tm, tn), lambda i, j, k: (i, j)),
        scratch_shapes=[pltpu.VMEM((tm, tn), jnp.float32)],
        compiler_params=_compiler_params(("parallel", "parallel", "arbitrary")),
    )(*args)
    if Mp != M or Np != N:
        out = out[:M, :N]
    return out


# ------------------------------- convolution --------------------------------

def dalle_conv2d(x, w, b, kw, *, pre_relu=False, residual=None, post_gain=1.0,
                 out_dtype=jnp.bfloat16):
    """DalleConv2d (conv2d, padding=(kw-1)//2) as im2col + fused Pallas matmul.

    x: (N,H,W,Cin) NHWC (bf16 activations).  w: (kw*kw*Cin, Cout) bf16 with the
    contraction axis ordered (ky, kx, ci): w[(ky*kw+kx)*Cin + ci, co].
    """
    N, H, W, Cin = x.shape
    Cout = w.shape[1]
    if kw == 1:
        x2 = x.reshape(N * H * W, Cin).astype(jnp.bfloat16)   # bf16 LHS DMA
    else:
        pad = (kw - 1) // 2
        xp = jnp.pad(x, ((0, 0), (pad, pad), (pad, pad), (0, 0)))
        # TODO(synk): im2col patch extraction stays in XLA glue; an in-kernel
        # halo DMA would avoid the kw^2 HBM read amplification.
        cols = [xp[:, ky:ky + H, kx:kx + W, :]
                for ky in range(kw) for kx in range(kw)]
        x2 = (jnp.concatenate(cols, axis=-1)
                 .reshape(N * H * W, kw * kw * Cin)
                 .astype(jnp.bfloat16))
    res2 = residual.reshape(N * H * W, Cout) if residual is not None else None
    y = fused_matmul(x2, w, b, pre_relu=pre_relu, residual=res2,
                     post_gain=post_gain, out_dtype=out_dtype)
    return y.reshape(N, H, W, Cout)


# -------------------------------- max pooling -------------------------------

def _maxpool_kernel(x_ref, o_ref, *, c):
    x = x_ref[0]                                   # (tr, 2, Wo, 2C)
    m = jnp.maximum(x[:, 0], x[:, 1])              # max over the 2 rows
    o_ref[0] = jnp.maximum(m[:, :, :c], m[:, :, c:]).astype(o_ref.dtype)


def _pick_rows(ho, row_bytes, limit=2 << 20):
    tr = 1
    for cand in range(1, ho + 1):
        if ho % cand == 0 and cand * row_bytes <= limit:
            tr = cand
    return tr


def maxpool2x2(x):
    """nn.MaxPool2d(kernel_size=2) on NHWC input; single HBM pass, bf16 in/out."""
    N, H, W, C = x.shape
    Ho, Wo = H // 2, W // 2
    if H != 2 * Ho or W != 2 * Wo:                 # PyTorch drops odd remainder
        x = x[:, :2 * Ho, :2 * Wo, :]
    # Pure-view reshape (no HBM transpose): xr[n,i,di,j,dj*C+c] = x[n,2i+di,2j+dj,c]
    xr = x.reshape(N, Ho, 2, Wo, 2 * C)
    row_bytes = 2 * Wo * 2 * C * x.dtype.itemsize
    tr = _pick_rows(Ho, row_bytes)
    kernel = functools.partial(_maxpool_kernel, c=C)
    return pl.pallas_call(
        kernel,
        out_shape=jax.ShapeDtypeStruct((N, Ho, Wo, C), x.dtype),
        grid=(N, Ho // tr),
        in_specs=[pl.BlockSpec((1, tr, 2, Wo, 2 * C), lambda n, r: (n, r, 0, 0, 0))],
        out_specs=pl.BlockSpec((1, tr, Wo, C), lambda n, r: (n, r, 0, 0)),
        compiler_params=_compiler_params(("parallel", "parallel")),
    )(xr)


# ------------------------------ model forward -------------------------------

def encoder_block_forward(x, bp, post_gain):
    """DalleEncoderBlock: id_path(x) + post_gain * res_path(x)."""
    if bp["id"] is None:
        ident = x
    else:
        # TODO(synk): could be folded into conv_4's K axis to save one HBM pass.
        ident = dalle_conv2d(x, bp["id"]["w"], bp["id"]["b"], 1)
    h = dalle_conv2d(x, bp["c1"]["w"], bp["c1"]["b"], 3, pre_relu=True)
    h = dalle_conv2d(h, bp["c2"]["w"], bp["c2"]["b"], 3, pre_relu=True)
    h = dalle_conv2d(h, bp["c3"]["w"], bp["c3"]["b"], 3, pre_relu=True)
    # conv_4 (1x1) with fused pre-ReLU and fused skip (+ post_gain scaling).
    return dalle_conv2d(h, bp["c4"]["w"], bp["c4"]["b"], 1, pre_relu=True,
                        residual=ident, post_gain=post_gain)


def dalle_encoder_forward(pixel_values, params, *, n_blk_per_group):
    """pixel_values: NCHW (B, C, H, W) -> logits NCHW (B, vocab, H/8, W/8)."""
    x = jnp.transpose(pixel_values, (0, 2, 3, 1))        # NCHW -> NHWC
    n_layers = 4 * n_blk_per_group                        # group_count = 4
    post_gain = 1.0 / (n_layers ** 2)

    # 'input': 7x7 conv (bf16 activations from here on)
    x = dalle_conv2d(x, params["input"]["w"], params["input"]["b"], 7)

    # group_1 .. group_4 (pool after groups 1-3 only)
    for gi, group in enumerate(params["groups"]):
        for bp in group["blocks"]:
            x = encoder_block_forward(x, bp, post_gain)
        if gi < 3:
            x = maxpool2x2(x)

    # 'output': ReLU -> 1x1 conv to vocab logits (ReLU fused, f32 logits)
    x = dalle_conv2d(x, params["output"]["w"], params["output"]["b"], 1,
                     pre_relu=True, out_dtype=jnp.float32)
    return jnp.transpose(x, (0, 3, 1, 2))                 # back to NCHW


# ------------------------------ parameter init ------------------------------

def init_params(key, *, input_channels, n_hid, n_blk_per_group, vocab_size):
    keys = iter(jax.random.split(key, 256))

    def conv_p(cin, cout, kw):
        # matches DalleConv2d: w ~ N(0, 1/(cin*kw^2)), b = 0; stored flattened
        # as (kw*kw*cin, cout) in (ky, kx, ci) order, weights kept in bf16.
        std = 1.0 / math.sqrt(cin * kw * kw)
        w = std * jax.random.normal(next(keys), (kw * kw * cin, cout),
                                    dtype=jnp.float32)
        return {"w": w.astype(jnp.bfloat16), "b": jnp.zeros((cout,), jnp.float32)}

    def block_p(n_in, n_out):
        n_hid_blk = n_out // 4
        return {
            "id": None if n_in == n_out else conv_p(n_in, n_out, 1),
            "c1": conv_p(n_in, n_hid_blk, 3),
            "c2": conv_p(n_hid_blk, n_hid_blk, 3),
            "c3": conv_p(n_hid_blk, n_hid_blk, 3),
            "c4": conv_p(n_hid_blk, n_out, 1),
        }

    group_io = [(1 * n_hid, 1 * n_hid), (1 * n_hid, 2 * n_hid),
                (2 * n_hid, 4 * n_hid), (4 * n_hid, 8 * n_hid)]
    groups = []
    for n_in, n_out in group_io:
        blocks = [block_p(n_in if i == 0 else n_out, n_out)
                  for i in range(n_blk_per_group)]
        groups.append({"blocks": blocks})

    return {
        "input": conv_p(input_channels, n_hid, 7),
        "groups": groups,
        "output": conv_p(8 * n_hid, vocab_size, 1),
    }


# ---------------------------------- main ------------------------------------

if __name__ == "__main__":
    B, C_IN, IMG = 2, 3, 16
    N_HID, N_BLK, VOCAB = 16, 1, 64          # small DalleEncoder config

    key = jax.random.PRNGKey(0)
    pkey, xkey = jax.random.split(key)
    params = init_params(pkey, input_channels=C_IN, n_hid=N_HID,
                         n_blk_per_group=N_BLK, vocab_size=VOCAB)
    pixel_values = jax.random.normal(xkey, (B, C_IN, IMG, IMG), dtype=jnp.float32)

    fwd = jax.jit(functools.partial(dalle_encoder_forward,
                                    n_blk_per_group=N_BLK))
    logits = fwd(pixel_values, params)
    jax.block_until_ready(logits)

    assert logits.shape == (B, VOCAB, IMG // 8, IMG // 8)
    assert logits.dtype == jnp.float32
    assert bool(jnp.all(jnp.isfinite(logits)))
    print("KERNEL_OK")
</pallas_src>

<mosaic_0001>
module attributes {stable_mosaic.version = 11 : i64} {
  func.func @_matmul_kernel(%arg0: i32, %arg1: i32, %arg2: i32, %arg3: memref<256x256xbf16, #tpu.memory_space<vmem>>, %arg4: memref<256x128xbf16, #tpu.memory_space<vmem>>, %arg5: memref<1x128xf32, #tpu.memory_space<vmem>>, %arg6: memref<256x128xbf16, #tpu.memory_space<vmem>>, %arg7: memref<256x128xf32, #tpu.memory_space<vmem>>) attributes {dimension_semantics = [#tpu.dimension_semantics<parallel>, #tpu.dimension_semantics<parallel>, #tpu.dimension_semantics<arbitrary>], iteration_bounds = array<i64: 2, 1, 1>, scalar_prefetch = 0 : i64, scratch_operands = 1 : i64, tpu.core_type = #tpu.core_type<tc>, window_params = [{transform_indices = @transform_0, window_bounds = array<i64: 256, 256>}, {transform_indices = @transform_1, window_bounds = array<i64: 256, 128>}, {transform_indices = @transform_2, window_bounds = array<i64: 1, 128>}, {transform_indices = @transform_3, window_bounds = array<i64: 256, 128>}]} {
    %c0_i32 = arith.constant 0 : i32
    %0 = arith.cmpi eq, %arg2, %c0_i32 : i32
    %1 = arith.extui %0 : i1 to i32
    %c0_i32_0 = arith.constant 0 : i32
    %2 = arith.cmpi ne, %1, %c0_i32_0 : i32
    scf.if %2 {
      %cst_10 = arith.constant 0.000000e+00 : f32
      %12 = vector.broadcast %cst_10 : f32 to vector<256x128xf32>
      %c0_11 = arith.constant 0 : index
      %c0_12 = arith.constant 0 : index
      %13 = vector.load %arg7[%c0_11, %c0_12] : memref<256x128xf32, #tpu.memory_space<vmem>>, vector<256x128xf32>
      tpu.vector_store %arg7[%c0_11, %c0_12], %12 {strides = array<i32>} : memref<256x128xf32, #tpu.memory_space<vmem>>, vector<256x128xf32>,
    } else {
    }
    %c0 = arith.constant 0 : index
    %c0_1 = arith.constant 0 : index
    %3 = vector.load %arg3[%c0, %c0_1] : memref<256x256xbf16, #tpu.memory_space<vmem>>, vector<256x256xbf16>
    %c0_2 = arith.constant 0 : index
    %c0_3 = arith.constant 0 : index
    %4 = vector.load %arg7[%c0_2, %c0_3] : memref<256x128xf32, #tpu.memory_space<vmem>>, vector<256x128xf32>
    %c0_4 = arith.constant 0 : index
    %c0_5 = arith.constant 0 : index
    %5 = vector.load %arg4[%c0_4, %c0_5] : memref<256x128xbf16, #tpu.memory_space<vmem>>, vector<256x128xbf16>
    %cst = arith.constant dense<0.000000e+00> : vector<256x128xf32>
    %6 = tpu.matmul %3, %5, %cst {dimension_numbers = #tpu.dot_dimension_numbers<[1], [0], [0], [1], [0, 0, 1, 1], [], []>} : vector<256x256xbf16>, vector<256x128xbf16>, vector<256x128xf32> -> vector<256x128xf32>
    %7 = arith.addf %4, %6 : vector<256x128xf32>
    %c0_6 = arith.constant 0 : index
    %c0_7 = arith.constant 0 : index
    %8 = vector.load %arg7[%c0_6, %c0_7] : memref<256x128xf32, #tpu.memory_space<vmem>>, vector<256x128xf32>
    tpu.vector_store %arg7[%c0_6, %c0_7], %7 {strides = array<i32>} : memref<256x128xf32, #tpu.memory_space<vmem>>, vector<256x128xf32>,
    %c0_i32_8 = arith.constant 0 : i32
    %9 = arith.cmpi eq, %arg2, %c0_i32_8 : i32
    %10 = arith.extui %9 : i1 to i32
    %c0_i32_9 = arith.constant 0 : i32
    %11 = arith.cmpi ne, %10, %c0_i32_9 : i32
    scf.if %11 {
      %c0_10 = arith.constant 0 : index
      %c0_11 = arith.constant 0 : index
      %12 = vector.load %arg7[%c0_10, %c0_11] : memref<256x128xf32, #tpu.memory_space<vmem>>, vector<256x128xf32>
      %c0_12 = arith.constant 0 : index
      %c0_13 = arith.constant 0 : index
      %13 = vector.load %arg5[%c0_12, %c0_13] : memref<1x128xf32, #tpu.memory_space<vmem>>, vector<1x128xf32>
      %14 = vector.broadcast %13 : vector<1x128xf32> to vector<256x128xf32>
      %15 = arith.addf %12, %14 : vector<256x128xf32>
      %16 = arith.truncf %15 : vector<256x128xf32> to vector<256x128xbf16>
      %c0_14 = arith.constant 0 : index
      %c0_15 = arith.constant 0 : index
      %17 = vector.load %arg6[%c0_14, %c0_15] : memref<256x128xbf16, #tpu.memory_space<vmem>>, vector<256x128xbf16>
      tpu.vector_store %arg6[%c0_14, %c0_15], %16 {strides = array<i32>} : memref<256x128xbf16, #tpu.memory_space<vmem>>, vector<256x128xbf16>,
    } else {
    }
    return
  }
  func.func @transform_0(%arg0: i32, %arg1: i32, %arg2: i32) -> (i32, i32) {
    %c0_i32 = arith.constant 0 : i32
    return %arg0, %arg2 : i32, i32
  }
  func.func @transform_1(%arg0: i32, %arg1: i32, %arg2: i32) -> (i32, i32) {
    %c0_i32 = arith.constant 0 : i32
    return %arg2, %arg1 : i32, i32
  }
  func.func @transform_2(%arg0: i32, %arg1: i32, %arg2: i32) -> (i32, i32) {
    %c0_i32 = arith.constant 0 : i32
    %c0_i32_0 = arith.constant 0 : i32
    return %c0_i32, %arg1 : i32, i32
  }
  func.func @transform_3(%arg0: i32, %arg1: i32, %arg2: i32) -> (i32, i32) {
    %c0_i32 = arith.constant 0 : i32
    return %arg0, %arg1 : i32, i32
  }
}

module attributes {stable_mosaic.version = 11 : i64} {
  func.func @_matmul_kernel(%arg0: i32, %arg1: i32, %arg2: i32, %arg3: memref<256x256xbf16, #tpu.memory_space<vmem>>, %arg4: memref<256x128xbf16, #tpu.memory_space<vmem>>, %arg5: memref<1x128xf32, #tpu.memory_space<vmem>>, %arg6: memref<256x128xbf16, #tpu.memory_space<vmem>>, %arg7: memref<256x128xf32, #tpu.memory_space<vmem>>) attributes {dimension_semantics = [#tpu.dimension_semantics<parallel>, #tpu.dimension_semantics<parallel>, #tpu.dimension_semantics<arbitrary>], iteration_bounds = array<i64: 2, 1, 1>, scalar_prefetch = 0 : i64, scratch_operands = 1 : i64, tpu.core_type = #tpu.core_type<tc>, window_params = [{transform_indices = @transform_0, window_bounds = array<i64: 256, 256>}, {transform_indices = @transform_1, window_bounds = array<i64: 256, 128>}, {transform_indices = @transform_2, window_bounds = array<i64: 1, 128>}, {transform_indices = @transform_3, window_bounds = array<i64: 256, 128>}]} {
    %c0_i32 = arith.constant 0 : i32
    %0 = arith.cmpi eq, %arg2, %c0_i32 : i32
    %1 = arith.extui %0 : i1 to i32
    %c0_i32_0 = arith.constant 0 : i32
    %2 = arith.cmpi ne, %1, %c0_i32_0 : i32
    scf.if %2 {
      %cst_11 = arith.constant 0.000000e+00 : f32
      %14 = vector.broadcast %cst_11 : f32 to vector<256x128xf32>
      %c0_12 = arith.constant 0 : index
      %c0_13 = arith.constant 0 : index
      %15 = vector.load %arg7[%c0_12, %c0_13] : memref<256x128xf32, #tpu.memory_space<vmem>>, vector<256x128xf32>
      tpu.vector_store %arg7[%c0_12, %c0_13], %14 {strides = array<i32>} : memref<256x128xf32, #tpu.memory_space<vmem>>, vector<256x128xf32>,
    } else {
    }
    %c0 = arith.constant 0 : index
    %c0_1 = arith.constant 0 : index
    %3 = vector.load %arg3[%c0, %c0_1] : memref<256x256xbf16, #tpu.memory_space<vmem>>, vector<256x256xbf16>
    %cst = arith.constant 0.000000e+00 : bf16
    %4 = vector.broadcast %cst : bf16 to vector<256x256xbf16>
    %5 = arith.maximumf %3, %4 : vector<256x256xbf16>
    %c0_2 = arith.constant 0 : index
    %c0_3 = arith.constant 0 : index
    %6 = vector.load %arg7[%c0_2, %c0_3] : memref<256x128xf32, #tpu.memory_space<vmem>>, vector<256x128xf32>
    %c0_4 = arith.constant 0 : index
    %c0_5 = arith.constant 0 : index
    %7 = vector.load %arg4[%c0_4, %c0_5] : memref<256x128xbf16, #tpu.memory_space<vmem>>, vector<256x128xbf16>
    %cst_6 = arith.constant dense<0.000000e+00> : vector<256x128xf32>
    %8 = tpu.matmul %5, %7, %cst_6 {dimension_numbers = #tpu.dot_dimension_numbers<[1], [0], [0], [1], [0, 0, 1, 1], [], []>} : vector<256x256xbf16>, vector<256x128xbf16>, vector<256x128xf32> -> vector<256x128xf32>
    %9 = arith.addf %6, %8 : vector<256x128xf32>
    %c0_7 = arith.constant 0 : index
    %c0_8 = arith.constant 0 : index
    %10 = vector.load %arg7[%c0_7, %c0_8] : memref<256x128xf32, #tpu.memory_space<vmem>>, vector<256x128xf32>
    tpu.vector_store %arg7[%c0_7, %c0_8], %9 {strides = array<i32>} : memref<256x128xf32, #tpu.memory_space<vmem>>, vector<256x128xf32>,
    %c0_i32_9 = arith.constant 0 : i32
    %11 = arith.cmpi eq, %arg2, %c0_i32_9 : i32
    %12 = arith.extui %11 : i1 to i32
    %c0_i32_10 = arith.constant 0 : i32
    %13 = arith.cmpi ne, %12, %c0_i32_10 : i32
    scf.if %13 {
      %c0_11 = arith.constant 0 : index
      %c0_12 = arith.constant 0 : index
      %14 = vector.load %arg7[%c0_11, %c0_12] : memref<256x128xf32, #tpu.memory_space<vmem>>, vector<256x128xf32>
      %c0_13 = arith.constant 0 : index
      %c0_14 = arith.constant 0 : index
      %15 = vector.load %arg5[%c0_13, %c0_14] : memref<1x128xf32, #tpu.memory_space<vmem>>, vector<1x128xf32>
      %16 = vector.broadcast %15 : vector<1x128xf32> to vector<256x128xf32>
      %17 = arith.addf %14, %16 : vector<256x128xf32>
      %18 = arith.truncf %17 : vector<256x128xf32> to vector<256x128xbf16>
      %c0_15 = arith.constant 0 : index
      %c0_16 = arith.constant 0 : index
      %19 = vector.load %arg6[%c0_15, %c0_16] : memref<256x128xbf16, #tpu.memory_space<vmem>>, vector<256x128xbf16>
      tpu.vector_store %arg6[%c0_15, %c0_16], %18 {strides = array<i32>} : memref<256x128xbf16, #tpu.memory_space<vmem>>, vector<256x128xbf16>,
    } else {
    }
    return
  }
  func.func @transform_0(%arg0: i32, %arg1: i32, %arg2: i32) -> (i32, i32) {
    %c0_i32 = arith.constant 0 : i32
    return %arg0, %arg2 : i32, i32
  }
  func.func @transform_1(%arg0: i32, %arg1: i32, %arg2: i32) -> (i32, i32) {
    %c0_i32 = arith.constant 0 : i32
    return %arg2, %arg1 : i32, i32
  }
  func.func @transform_2(%arg0: i32, %arg1: i32, %arg2: i32) -> (i32, i32) {
    %c0_i32 = arith.constant 0 : i32
    %c0_i32_0 = arith.constant 0 : i32
    return %c0_i32, %arg1 : i32, i32
  }
  func.func @transform_3(%arg0: i32, %arg1: i32, %arg2: i32) -> (i32, i32) {
    %c0_i32 = arith.constant 0 : i32
    return %arg0, %arg1 : i32, i32
  }
}

module attributes {stable_mosaic.version = 11 : i64} {
  func.func @_matmul_kernel(%arg0: i32, %arg1: i32, %arg2: i32, %arg3: memref<256x128xbf16, #tpu.memory_space<vmem>>, %arg4: memref<128x128xbf16, #tpu.memory_space<vmem>>, %arg5: memref<1x128xf32, #tpu.memory_space<vmem>>, %arg6: memref<256x128xbf16, #tpu.memory_space<vmem>>, %arg7: memref<256x128xf32, #tpu.memory_space<vmem>>) attributes {dimension_semantics = [#tpu.dimension_semantics<parallel>, #tpu.dimension_semantics<parallel>, #tpu.dimension_semantics<arbitrary>], iteration_bounds = array<i64: 2, 1, 1>, scalar_prefetch = 0 : i64, scratch_operands = 1 : i64, tpu.core_type = #tpu.core_type<tc>, window_params = [{transform_indices = @transform_0, window_bounds = array<i64: 256, 128>}, {transform_indices = @transform_1, window_bounds = array<i64: 128, 128>}, {transform_indices = @transform_2, window_bounds = array<i64: 1, 128>}, {transform_indices = @transform_3, window_bounds = array<i64: 256, 128>}]} {
    %c0_i32 = arith.constant 0 : i32
    %0 = arith.cmpi eq, %arg2, %c0_i32 : i32
    %1 = arith.extui %0 : i1 to i32
    %c0_i32_0 = arith.constant 0 : i32
    %2 = arith.cmpi ne, %1, %c0_i32_0 : i32
    scf.if %2 {
      %cst_11 = arith.constant 0.000000e+00 : f32
      %14 = vector.broadcast %cst_11 : f32 to vector<256x128xf32>
      %c0_12 = arith.constant 0 : index
      %c0_13 = arith.constant 0 : index
      %15 = vector.load %arg7[%c0_12, %c0_13] : memref<256x128xf32, #tpu.memory_space<vmem>>, vector<256x128xf32>
      tpu.vector_store %arg7[%c0_12, %c0_13], %14 {strides = array<i32>} : memref<256x128xf32, #tpu.memory_space<vmem>>, vector<256x128xf32>,
    } else {
    }
    %c0 = arith.constant 0 : index
    %c0_1 = arith.constant 0 : index
    %3 = vector.load %arg3[%c0, %c0_1] : memref<256x128xbf16, #tpu.memory_space<vmem>>, vector<256x128xbf16>
    %cst = arith.constant 0.000000e+00 : bf16
    %4 = vector.broadcast %cst : bf16 to vector<256x128xbf16>
    %5 = arith.maximumf %3, %4 : vector<256x128xbf16>
    %c0_2 = arith.constant 0 : index
    %c0_3 = arith.constant 0 : index
    %6 = vector.load %arg7[%c0_2, %c0_3] : memref<256x128xf32, #tpu.memory_space<vmem>>, vector<256x128xf32>
    %c0_4 = arith.constant 0 : index
    %c0_5 = arith.constant 0 : index
    %7 = vector.load %arg4[%c0_4, %c0_5] : memref<128x128xbf16, #tpu.memory_space<vmem>>, vector<128x128xbf16>
    %cst_6 = arith.constant dense<0.000000e+00> : vector<256x128xf32>
    %8 = tpu.matmul %5, %7, %cst_6 {dimension_numbers = #tpu.dot_dimension_numbers<[1], [0], [0], [1], [0, 0, 1, 1], [], []>} : vector<256x128xbf16>, vector<128x128xbf16>, vector<256x128xf32> -> vector<256x128xf32>
    %9 = arith.addf %6, %8 : vector<256x128xf32>
    %c0_7 = arith.constant 0 : index
    %c0_8 = arith.constant 0 : index
    %10 = vector.load %arg7[%c0_7, %c0_8] : memref<256x128xf32, #tpu.memory_space<vmem>>, vector<256x128xf32>
    tpu.vector_store %arg7[%c0_7, %c0_8], %9 {strides = array<i32>} : memref<256x128xf32, #tpu.memory_space<vmem>>, vector<256x128xf32>,
    %c0_i32_9 = arith.constant 0 : i32
    %11 = arith.cmpi eq, %arg2, %c0_i32_9 : i32
    %12 = arith.extui %11 : i1 to i32
    %c0_i32_10 = arith.constant 0 : i32
    %13 = arith.cmpi ne, %12, %c0_i32_10 : i32
    scf.if %13 {
      %c0_11 = arith.constant 0 : index
      %c0_12 = arith.constant 0 : index
      %14 = vector.load %arg7[%c0_11, %c0_12] : memref<256x128xf32, #tpu.memory_space<vmem>>, vector<256x128xf32>
      %c0_13 = arith.constant 0 : index
      %c0_14 = arith.constant 0 : index
      %15 = vector.load %arg5[%c0_13, %c0_14] : memref<1x128xf32, #tpu.memory_space<vmem>>, vector<1x128xf32>
      %16 = vector.broadcast %15 : vector<1x128xf32> to vector<256x128xf32>
      %17 = arith.addf %14, %16 : vector<256x128xf32>
      %18 = arith.truncf %17 : vector<256x128xf32> to vector<256x128xbf16>
      %c0_15 = arith.constant 0 : index
      %c0_16 = arith.constant 0 : index
      %19 = vector.load %arg6[%c0_15, %c0_16] : memref<256x128xbf16, #tpu.memory_space<vmem>>, vector<256x128xbf16>
      tpu.vector_store %arg6[%c0_15, %c0_16], %18 {strides = array<i32>} : memref<256x128xbf16, #tpu.memory_space<vmem>>, vector<256x128xbf16>,
    } else {
    }
    return
  }
  func.func @transform_0(%arg0: i32, %arg1: i32, %arg2: i32) -> (i32, i32) {
    %c0_i32 = arith.constant 0 : i32
    return %arg0, %arg2 : i32, i32
  }
  func.func @transform_1(%arg0: i32, %arg1: i32, %arg2: i32) -> (i32, i32) {
    %c0_i32 = arith.constant 0 : i32
    return %arg2, %arg1 : i32, i32
  }
  func.func @transform_2(%arg0: i32, %arg1: i32, %arg2: i32) -> (i32, i32) {
    %c0_i32 = arith.constant 0 : i32
    %c0_i32_0 = arith.constant 0 : i32
    return %c0_i32, %arg1 : i32, i32
  }
  func.func @transform_3(%arg0: i32, %arg1: i32, %arg2: i32) -> (i32, i32) {
    %c0_i32 = arith.constant 0 : i32
    return %arg0, %arg1 : i32, i32
  }
}

module attributes {stable_mosaic.version = 11 : i64} {
  func.func @_matmul_kernel(%arg0: i32, %arg1: i32, %arg2: i32, %arg3: memref<256x128xbf16, #tpu.memory_space<vmem>>, %arg4: memref<128x128xbf16, #tpu.memory_space<vmem>>, %arg5: memref<1x128xf32, #tpu.memory_space<vmem>>, %arg6: memref<256x128xbf16, #tpu.memory_space<vmem>>, %arg7: memref<256x128xbf16, #tpu.memory_space<vmem>>, %arg8: memref<256x128xf32, #tpu.memory_space<vmem>>) attributes {dimension_semantics = [#tpu.dimension_semantics<parallel>, #tpu.dimension_semantics<parallel>, #tpu.dimension_semantics<arbitrary>], iteration_bounds = array<i64: 2, 1, 1>, scalar_prefetch = 0 : i64, scratch_operands = 1 : i64, tpu.core_type = #tpu.core_type<tc>, window_params = [{transform_indices = @transform_0, window_bounds = array<i64: 256, 128>}, {transform_indices = @transform_1, window_bounds = array<i64: 128, 128>}, {transform_indices = @transform_2, window_bounds = array<i64: 1, 128>}, {transform_indices = @transform_3, window_bounds = array<i64: 256, 128>}, {transform_indices = @transform_4, window_bounds = array<i64: 256, 128>}]} {
    %c0_i32 = arith.constant 0 : i32
    %0 = arith.cmpi eq, %arg2, %c0_i32 : i32
    %1 = arith.extui %0 : i1 to i32
    %c0_i32_0 = arith.constant 0 : i32
    %2 = arith.cmpi ne, %1, %c0_i32_0 : i32
    scf.if %2 {
      %cst_11 = arith.constant 0.000000e+00 : f32
      %14 = vector.broadcast %cst_11 : f32 to vector<256x128xf32>
      %c0_12 = arith.constant 0 : index
      %c0_13 = arith.constant 0 : index
      %15 = vector.load %arg8[%c0_12, %c0_13] : memref<256x128xf32, #tpu.memory_space<vmem>>, vector<256x128xf32>
      tpu.vector_store %arg8[%c0_12, %c0_13], %14 {strides = array<i32>} : memref<256x128xf32, #tpu.memory_space<vmem>>, vector<256x128xf32>,
    } else {
    }
    %c0 = arith.constant 0 : index
    %c0_1 = arith.constant 0 : index
    %3 = vector.load %arg3[%c0, %c0_1] : memref<256x128xbf16, #tpu.memory_space<vmem>>, vector<256x128xbf16>
    %cst = arith.constant 0.000000e+00 : bf16
    %4 = vector.broadcast %cst : bf16 to vector<256x128xbf16>
    %5 = arith.maximumf %3, %4 : vector<256x128xbf16>
    %c0_2 = arith.constant 0 : index
    %c0_3 = arith.constant 0 : index
    %6 = vector.load %arg8[%c0_2, %c0_3] : memref<256x128xf32, #tpu.memory_space<vmem>>, vector<256x128xf32>
    %c0_4 = arith.constant 0 : index
    %c0_5 = arith.constant 0 : index
    %7 = vector.load %arg4[%c0_4, %c0_5] : memref<128x128xbf16, #tpu.memory_space<vmem>>, vector<128x128xbf16>
    %cst_6 = arith.constant dense<0.000000e+00> : vector<256x128xf32>
    %8 = tpu.matmul %5, %7, %cst_6 {dimension_numbers = #tpu.dot_dimension_numbers<[1], [0], [0], [1], [0, 0, 1, 1], [], []>} : vector<256x128xbf16>, vector<128x128xbf16>, vector<256x128xf32> -> vector<256x128xf32>
    %9 = arith.addf %6, %8 : vector<256x128xf32>
    %c0_7 = arith.constant 0 : index
    %c0_8 = arith.constant 0 : index
    %10 = vector.load %arg8[%c0_7, %c0_8] : memref<256x128xf32, #tpu.memory_space<vmem>>, vector<256x128xf32>
    tpu.vector_store %arg8[%c0_7, %c0_8], %9 {strides = array<i32>} : memref<256x128xf32, #tpu.memory_space<vmem>>, vector<256x128xf32>,
    %c0_i32_9 = arith.constant 0 : i32
    %11 = arith.cmpi eq, %arg2, %c0_i32_9 : i32
    %12 = arith.extui %11 : i1 to i32
    %c0_i32_10 = arith.constant 0 : i32
    %13 = arith.cmpi ne, %12, %c0_i32_10 : i32
    scf.if %13 {
      %c0_11 = arith.constant 0 : index
      %c0_12 = arith.constant 0 : index
      %14 = vector.load %arg8[%c0_11, %c0_12] : memref<256x128xf32, #tpu.memory_space<vmem>>, vector<256x128xf32>
      %c0_13 = arith.constant 0 : index
      %c0_14 = arith.constant 0 : index
      %15 = vector.load %arg5[%c0_13, %c0_14] : memref<1x128xf32, #tpu.memory_space<vmem>>, vector<1x128xf32>
      %16 = vector.broadcast %15 : vector<1x128xf32> to vector<256x128xf32>
      %17 = arith.addf %14, %16 : vector<256x128xf32>
      %c0_15 = arith.constant 0 : index
      %c0_16 = arith.constant 0 : index
      %18 = vector.load %arg6[%c0_15, %c0_16] : memref<256x128xbf16, #tpu.memory_space<vmem>>, vector<256x128xbf16>
      %19 = arith.extf %18 : vector<256x128xbf16> to vector<256x128xf32>
      %cst_17 = arith.constant 6.250000e-02 : f32
      %20 = vector.broadcast %cst_17 : f32 to vector<256x128xf32>
      %21 = arith.mulf %20, %17 : vector<256x128xf32>
      %22 = arith.addf %19, %21 : vector<256x128xf32>
      %23 = arith.truncf %22 : vector<256x128xf32> to vector<256x128xbf16>
      %c0_18 = arith.constant 0 : index
      %c0_19 = arith.constant 0 : index
      %24 = vector.load %arg7[%c0_18, %c0_19] : memref<256x128xbf16, #tpu.memory_space<vmem>>, vector<256x128xbf16>
      tpu.vector_store %arg7[%c0_18, %c0_19], %23 {strides = array<i32>} : memref<256x128xbf16, #tpu.memory_space<vmem>>, vector<256x128xbf16>,
    } else {
    }
    return
  }
  func.func @transform_0(%arg0: i32, %arg1: i32, %arg2: i32) -> (i32, i32) {
    %c0_i32 = arith.constant 0 : i32
    return %arg0, %arg2 : i32, i32
  }
  func.func @transform_1(%arg0: i32, %arg1: i32, %arg2: i32) -> (i32, i32) {
    %c0_i32 = arith.constant 0 : i32
    return %arg2, %arg1 : i32, i32
  }
  func.func @transform_2(%arg0: i32, %arg1: i32, %arg2: i32) -> (i32, i32) {
    %c0_i32 = arith.constant 0 : i32
    %c0_i32_0 = arith.constant 0 : i32
    return %c0_i32, %arg1 : i32, i32
  }
  func.func @transform_3(%arg0: i32, %arg1: i32, %arg2: i32) -> (i32, i32) {
    %c0_i32 = arith.constant 0 : i32
    return %arg0, %arg1 : i32, i32
  }
  func.func @transform_4(%arg0: i32, %arg1: i32, %arg2: i32) -> (i32, i32) {
    %c0_i32 = arith.constant 0 : i32
    return %arg0, %arg1 : i32, i32
  }
}

module attributes {stable_mosaic.version = 11 : i64} {
  func.func @_maxpool_kernel(%arg0: i32, %arg1: i32, %arg2: memref<1x8x2x8x32xbf16, #tpu.memory_space<vmem>>, %arg3: memref<1x8x8x16xbf16, #tpu.memory_space<vmem>>) attributes {dimension_semantics = [#tpu.dimension_semantics<parallel>, #tpu.dimension_semantics<parallel>], iteration_bounds = array<i64: 2, 1>, scalar_prefetch = 0 : i64, scratch_operands = 0 : i64, tpu.core_type = #tpu.core_type<tc>, window_params = [{transform_indices = @transform_0, window_bounds = array<i64: 1, 8, 2, 8, 32>}, {transform_indices = @transform_1, window_bounds = array<i64: 1, 8, 8, 16>}]} {
    %c0 = arith.constant 0 : index
    %c0_0 = arith.constant 0 : index
    %c0_1 = arith.constant 0 : index
    %c0_2 = arith.constant 0 : index
    %c0_3 = arith.constant 0 : index
    %0 = vector.load %arg2[%c0, %c0_0, %c0_1, %c0_2, %c0_3] : memref<1x8x2x8x32xbf16, #tpu.memory_space<vmem>>, vector<1x8x2x8x32xbf16>
    %1 = vector.shape_cast %0 : vector<1x8x2x8x32xbf16> to vector<8x2x8x32xbf16>
    %2 = vector.extract_strided_slice %1 {offsets = [0, 0, 0, 0], sizes = [8, 1, 8, 32], strides = [1, 1, 1, 1]} : vector<8x2x8x32xbf16> to vector<8x1x8x32xbf16>
    %3 = vector.shape_cast %2 : vector<8x1x8x32xbf16> to vector<8x8x32xbf16>
    %4 = vector.extract_strided_slice %1 {offsets = [0, 1, 0, 0], sizes = [8, 1, 8, 32], strides = [1, 1, 1, 1]} : vector<8x2x8x32xbf16> to vector<8x1x8x32xbf16>
    %5 = vector.shape_cast %4 : vector<8x1x8x32xbf16> to vector<8x8x32xbf16>
    %6 = arith.maximumf %3, %5 : vector<8x8x32xbf16>
    %7 = vector.extract_strided_slice %6 {offsets = [0, 0, 0], sizes = [8, 8, 16], strides = [1, 1, 1]} : vector<8x8x32xbf16> to vector<8x8x16xbf16>
    %8 = vector.extract_strided_slice %6 {offsets = [0, 0, 16], sizes = [8, 8, 16], strides = [1, 1, 1]} : vector<8x8x32xbf16> to vector<8x8x16xbf16>
    %9 = arith.maximumf %7, %8 : vector<8x8x16xbf16>
    %c0_4 = arith.constant 0 : index
    %c0_5 = arith.constant 0 : index
    %c0_6 = arith.constant 0 : index
    %c0_7 = arith.constant 0 : index
    %10 = vector.load %arg3[%c0_4, %c0_5, %c0_6, %c0_7] : memref<1x8x8x16xbf16, #tpu.memory_space<vmem>>, vector<1x8x8x16xbf16>
    %11 = vector.shape_cast %10 : vector<1x8x8x16xbf16> to vector<8x8x16xbf16>
    %12 = vector.shape_cast %9 : vector<8x8x16xbf16> to vector<1x8x8x16xbf16>
    tpu.vector_store %arg3[%c0_4, %c0_5, %c0_6, %c0_7], %12 {strides = array<i32>} : memref<1x8x8x16xbf16, #tpu.memory_space<vmem>>, vector<1x8x8x16xbf16>,
    return
  }
  func.func @transform_0(%arg0: i32, %arg1: i32) -> (i32, i32, i32, i32, i32) {
    %c0_i32 = arith.constant 0 : i32
    %c0_i32_0 = arith.constant 0 : i32
    %c0_i32_1 = arith.constant 0 : i32
    %c0_i32_2 = arith.constant 0 : i32
    return %arg0, %arg1, %c0_i32, %c0_i32_0, %c0_i32_1 : i32, i32, i32, i32, i32
  }
  func.func @transform_1(%arg0: i32, %arg1: i32) -> (i32, i32, i32, i32) {
    %c0_i32 = arith.constant 0 : i32
    %c0_i32_0 = arith.constant 0 : i32
    %c0_i32_1 = arith.constant 0 : i32
    return %arg0, %arg1, %c0_i32, %c0_i32_0 : i32, i32, i32, i32
  }
}

module attributes {stable_mosaic.version = 11 : i64} {
  func.func @_matmul_kernel(%arg0: i32, %arg1: i32, %arg2: i32, %arg3: memref<128x256xbf16, #tpu.memory_space<vmem>>, %arg4: memref<256x128xbf16, #tpu.memory_space<vmem>>, %arg5: memref<1x128xf32, #tpu.memory_space<vmem>>, %arg6: memref<128x128xbf16, #tpu.memory_space<vmem>>, %arg7: memref<128x128xf32, #tpu.memory_space<vmem>>) attributes {dimension_semantics = [#tpu.dimension_semantics<parallel>, #tpu.dimension_semantics<parallel>, #tpu.dimension_semantics<arbitrary>], iteration_bounds = array<i64: 1, 1, 1>, scalar_prefetch = 0 : i64, scratch_operands = 1 : i64, tpu.core_type = #tpu.core_type<tc>, window_params = [{transform_indices = @transform_0, window_bounds = array<i64: 128, 256>}, {transform_indices = @transform_1, window_bounds = array<i64: 256, 128>}, {transform_indices = @transform_2, window_bounds = array<i64: 1, 128>}, {transform_indices = @transform_3, window_bounds = array<i64: 128, 128>}]} {
    %c0_i32 = arith.constant 0 : i32
    %0 = arith.cmpi eq, %arg2, %c0_i32 : i32
    %1 = arith.extui %0 : i1 to i32
    %c0_i32_0 = arith.constant 0 : i32
    %2 = arith.cmpi ne, %1, %c0_i32_0 : i32
    scf.if %2 {
      %cst_11 = arith.constant 0.000000e+00 : f32
      %14 = vector.broadcast %cst_11 : f32 to vector<128x128xf32>
      %c0_12 = arith.constant 0 : index
      %c0_13 = arith.constant 0 : index
      %15 = vector.load %arg7[%c0_12, %c0_13] : memref<128x128xf32, #tpu.memory_space<vmem>>, vector<128x128xf32>
      tpu.vector_store %arg7[%c0_12, %c0_13], %14 {strides = array<i32>} : memref<128x128xf32, #tpu.memory_space<vmem>>, vector<128x128xf32>,
    } else {
    }
    %c0 = arith.constant 0 : index
    %c0_1 = arith.constant 0 : index
    %3 = vector.load %arg3[%c0, %c0_1] : memref<128x256xbf16, #tpu.memory_space<vmem>>, vector<128x256xbf16>
    %cst = arith.constant 0.000000e+00 : bf16
    %4 = vector.broadcast %cst : bf16 to vector<128x256xbf16>
    %5 = arith.maximumf %3, %4 : vector<128x256xbf16>
    %c0_2 = arith.constant 0 : index
    %c0_3 = arith.constant 0 : index
    %6 = vector.load %arg7[%c0_2, %c0_3] : memref<128x128xf32, #tpu.memory_space<vmem>>, vector<128x128xf32>
    %c0_4 = arith.constant 0 : index
    %c0_5 = arith.constant 0 : index
    %7 = vector.load %arg4[%c0_4, %c0_5] : memref<256x128xbf16, #tpu.memory_space<vmem>>, vector<256x128xbf16>
    %cst_6 = arith.constant dense<0.000000e+00> : vector<128x128xf32>
    %8 = tpu.matmul %5, %7, %cst_6 {dimension_numbers = #tpu.dot_dimension_numbers<[1], [0], [0], [1], [0, 0, 1, 1], [], []>} : vector<128x256xbf16>, vector<256x128xbf16>, vector<128x128xf32> -> vector<128x128xf32>
    %9 = arith.addf %6, %8 : vector<128x128xf32>
    %c0_7 = arith.constant 0 : index
    %c0_8 = arith.constant 0 : index
    %10 = vector.load %arg7[%c0_7, %c0_8] : memref<128x128xf32, #tpu.memory_space<vmem>>, vector<128x128xf32>
    tpu.vector_store %arg7[%c0_7, %c0_8], %9 {strides = array<i32>} : memref<128x128xf32, #tpu.memory_space<vmem>>, vector<128x128xf32>,
    %c0_i32_9 = arith.constant 0 : i32
    %11 = arith.cmpi eq, %arg2, %c0_i32_9 : i32
    %12 = arith.extui %11 : i1 to i32
    %c0_i32_10 = arith.constant 0 : i32
    %13 = arith.cmpi ne, %12, %c0_i32_10 : i32
    scf.if %13 {
      %c0_11 = arith.constant 0 : index
      %c0_12 = arith.constant 0 : index
      %14 = vector.load %arg7[%c0_11, %c0_12] : memref<128x128xf32, #tpu.memory_space<vmem>>, vector<128x128xf32>
      %c0_13 = arith.constant 0 : index
      %c0_14 = arith.constant 0 : index
      %15 = vector.load %arg5[%c0_13, %c0_14] : memref<1x128xf32, #tpu.memory_space<vmem>>, vector<1x128xf32>
      %16 = vector.broadcast %15 : vector<1x128xf32> to vector<128x128xf32>
      %17 = arith.addf %14, %16 : vector<128x128xf32>
      %18 = arith.truncf %17 : vector<128x128xf32> to vector<128x128xbf16>
      %c0_15 = arith.constant 0 : index
      %c0_16 = arith.constant 0 : index
      %19 = vector.load %arg6[%c0_15, %c0_16] : memref<128x128xbf16, #tpu.memory_space<vmem>>, vector<128x128xbf16>
      tpu.vector_store %arg6[%c0_15, %c0_16], %18 {strides = array<i32>} : memref<128x128xbf16, #tpu.memory_space<vmem>>, vector<128x128xbf16>,
    } else {
    }
    return
  }
  func.func @transform_0(%arg0: i32, %arg1: i32, %arg2: i32) -> (i32, i32) {
    %c0_i32 = arith.constant 0 : i32
    return %arg0, %arg2 : i32, i32
  }
  func.func @transform_1(%arg0: i32, %arg1: i32, %arg2: i32) -> (i32, i32) {
    %c0_i32 = arith.constant 0 : i32
    return %arg2, %arg1 : i32, i32
  }
  func.func @transform_2(%arg0: i32, %arg1: i32, %arg2: i32) -> (i32, i32) {
    %c0_i32 = arith.constant 0 : i32
    %c0_i32_0 = arith.constant 0 : i32
    return %c0_i32, %arg1 : i32, i32
  }
  func.func @transform_3(%arg0: i32, %arg1: i32, %arg2: i32) -> (i32, i32) {
    %c0_i32 = arith.constant 0 : i32
    return %arg0, %arg1 : i32, i32
  }
}

module attributes {stable_mosaic.version = 11 : i64} {
  func.func @_matmul_kernel(%arg0: i32, %arg1: i32, %arg2: i32, %arg3: memref<128x128xbf16, #tpu.memory_space<vmem>>, %arg4: memref<128x128xbf16, #tpu.memory_space<vmem>>, %arg5: memref<1x128xf32, #tpu.memory_space<vmem>>, %arg6: memref<128x128xbf16, #tpu.memory_space<vmem>>, %arg7: memref<128x128xf32, #tpu.memory_space<vmem>>) attributes {dimension_semantics = [#tpu.dimension_semantics<parallel>, #tpu.dimension_semantics<parallel>, #tpu.dimension_semantics<arbitrary>], iteration_bounds = array<i64: 1, 1, 1>, scalar_prefetch = 0 : i64, scratch_operands = 1 : i64, tpu.core_type = #tpu.core_type<tc>, window_params = [{transform_indices = @transform_0, window_bounds = array<i64: 128, 128>}, {transform_indices = @transform_1, window_bounds = array<i64: 128, 128>}, {transform_indices = @transform_2, window_bounds = array<i64: 1, 128>}, {transform_indices = @transform_3, window_bounds = array<i64: 128, 128>}]} {
    %c0_i32 = arith.constant 0 : i32
    %0 = arith.cmpi eq, %arg2, %c0_i32 : i32
    %1 = arith.extui %0 : i1 to i32
    %c0_i32_0 = arith.constant 0 : i32
    %2 = arith.cmpi ne, %1, %c0_i32_0 : i32
    scf.if %2 {
      %cst_10 = arith.constant 0.000000e+00 : f32
      %12 = vector.broadcast %cst_10 : f32 to vector<128x128xf32>
      %c0_11 = arith.constant 0 : index
      %c0_12 = arith.constant 0 : index
      %13 = vector.load %arg7[%c0_11, %c0_12] : memref<128x128xf32, #tpu.memory_space<vmem>>, vector<128x128xf32>
      tpu.vector_store %arg7[%c0_11, %c0_12], %12 {strides = array<i32>} : memref<128x128xf32, #tpu.memory_space<vmem>>, vector<128x128xf32>,
    } else {
    }
    %c0 = arith.constant 0 : index
    %c0_1 = arith.constant 0 : index
    %3 = vector.load %arg3[%c0, %c0_1] : memref<128x128xbf16, #tpu.memory_space<vmem>>, vector<128x128xbf16>
    %c0_2 = arith.constant 0 : index
    %c0_3 = arith.constant 0 : index
    %4 = vector.load %arg7[%c0_2, %c0_3] : memref<128x128xf32, #tpu.memory_space<vmem>>, vector<128x128xf32>
    %c0_4 = arith.constant 0 : index
    %c0_5 = arith.constant 0 : index
    %5 = vector.load %arg4[%c0_4, %c0_5] : memref<128x128xbf16, #tpu.memory_space<vmem>>, vector<128x128xbf16>
    %cst = arith.constant dense<0.000000e+00> : vector<128x128xf32>
    %6 = tpu.matmul %3, %5, %cst {dimension_numbers = #tpu.dot_dimension_numbers<[1], [0], [0], [1], [0, 0, 1, 1], [], []>} : vector<128x128xbf16>, vector<128x128xbf16>, vector<128x128xf32> -> vector<128x128xf32>
    %7 = arith.addf %4, %6 : vector<128x128xf32>
    %c0_6 = arith.constant 0 : index
    %c0_7 = arith.constant 0 : index
    %8 = vector.load %arg7[%c0_6, %c0_7] : memref<128x128xf32, #tpu.memory_space<vmem>>, vector<128x128xf32>
    tpu.vector_store %arg7[%c0_6, %c0_7], %7 {strides = array<i32>} : memref<128x128xf32, #tpu.memory_space<vmem>>, vector<128x128xf32>,
    %c0_i32_8 = arith.constant 0 : i32
    %9 = arith.cmpi eq, %arg2, %c0_i32_8 : i32
    %10 = arith.extui %9 : i1 to i32
    %c0_i32_9 = arith.constant 0 : i32
    %11 = arith.cmpi ne, %10, %c0_i32_9 : i32
    scf.if %11 {
      %c0_10 = arith.constant 0 : index
      %c0_11 = arith.constant 0 : index
      %12 = vector.load %arg7[%c0_10, %c0_11] : memref<128x128xf32, #tpu.memory_space<vmem>>, vector<128x128xf32>
      %c0_12 = arith.constant 0 : index
      %c0_13 = arith.constant 0 : index
      %13 = vector.load %arg5[%c0_12, %c0_13] : memref<1x128xf32, #tpu.memory_space<vmem>>, vector<1x128xf32>
      %14 = vector.broadcast %13 : vector<1x128xf32> to vector<128x128xf32>
      %15 = arith.addf %12, %14 : vector<128x128xf32>
      %16 = arith.truncf %15 : vector<128x128xf32> to vector<128x128xbf16>
      %c0_14 = arith.constant 0 : index
      %c0_15 = arith.constant 0 : index
      %17 = vector.load %arg6[%c0_14, %c0_15] : memref<128x128xbf16, #tpu.memory_space<vmem>>, vector<128x128xbf16>
      tpu.vector_store %arg6[%c0_14, %c0_15], %16 {strides = array<i32>} : memref<128x128xbf16, #tpu.memory_space<vmem>>, vector<128x128xbf16>,
    } else {
    }
    return
  }
  func.func @transform_0(%arg0: i32, %arg1: i32, %arg2: i32) -> (i32, i32) {
    %c0_i32 = arith.constant 0 : i32
    return %arg0, %arg2 : i32, i32
  }
  func.func @transform_1(%arg0: i32, %arg1: i32, %arg2: i32) -> (i32, i32) {
    %c0_i32 = arith.constant 0 : i32
    return %arg2, %arg1 : i32, i32
  }
  func.func @transform_2(%arg0: i32, %arg1: i32, %arg2: i32) -> (i32, i32) {
    %c0_i32 = arith.constant 0 : i32
    %c0_i32_0 = arith.constant 0 : i32
    return %c0_i32, %arg1 : i32, i32
  }
  func.func @transform_3(%arg0: i32, %arg1: i32, %arg2: i32) -> (i32, i32) {
    %c0_i32 = arith.constant 0 : i32
    return %arg0, %arg1 : i32, i32
  }
}

module attributes {stable_mosaic.version = 11 : i64} {
  func.func @_matmul_kernel(%arg0: i32, %arg1: i32, %arg2: i32, %arg3: memref<128x128xbf16, #tpu.memory_space<vmem>>, %arg4: memref<128x128xbf16, #tpu.memory_space<vmem>>, %arg5: memref<1x128xf32, #tpu.memory_space<vmem>>, %arg6: memref<128x128xbf16, #tpu.memory_space<vmem>>, %arg7: memref<128x128xf32, #tpu.memory_space<vmem>>) attributes {dimension_semantics = [#tpu.dimension_semantics<parallel>, #tpu.dimension_semantics<parallel>, #tpu.dimension_semantics<arbitrary>], iteration_bounds = array<i64: 1, 1, 1>, scalar_prefetch = 0 : i64, scratch_operands = 1 : i64, tpu.core_type = #tpu.core_type<tc>, window_params = [{transform_indices = @transform_0, window_bounds = array<i64: 128, 128>}, {transform_indices = @transform_1, window_bounds = array<i64: 128, 128>}, {transform_indices = @transform_2, window_bounds = array<i64: 1, 128>}, {transform_indices = @transform_3, window_bounds = array<i64: 128, 128>}]} {
    %c0_i32 = arith.constant 0 : i32
    %0 = arith.cmpi eq, %arg2, %c0_i32 : i32
    %1 = arith.extui %0 : i1 to i32
    %c0_i32_0 = arith.constant 0 : i32
    %2 = arith.cmpi ne, %1, %c0_i32_0 : i32
    scf.if %2 {
      %cst_11 = arith.constant 0.000000e+00 : f32
      %14 = vector.broadcast %cst_11 : f32 to vector<128x128xf32>
      %c0_12 = arith.constant 0 : index
      %c0_13 = arith.constant 0 : index
      %15 = vector.load %arg7[%c0_12, %c0_13] : memref<128x128xf32, #tpu.memory_space<vmem>>, vector<128x128xf32>
      tpu.vector_store %arg7[%c0_12, %c0_13], %14 {strides = array<i32>} : memref<128x128xf32, #tpu.memory_space<vmem>>, vector<128x128xf32>,
    } else {
    }
    %c0 = arith.constant 0 : index
    %c0_1 = arith.constant 0 : index
    %3 = vector.load %arg3[%c0, %c0_1] : memref<128x128xbf16, #tpu.memory_space<vmem>>, vector<128x128xbf16>
    %cst = arith.constant 0.000000e+00 : bf16
    %4 = vector.broadcast %cst : bf16 to vector<128x128xbf16>
    %5 = arith.maximumf %3, %4 : vector<128x128xbf16>
    %c0_2 = arith.constant 0 : index
    %c0_3 = arith.constant 0 : index
    %6 = vector.load %arg7[%c0_2, %c0_3] : memref<128x128xf32, #tpu.memory_space<vmem>>, vector<128x128xf32>
    %c0_4 = arith.constant 0 : index
    %c0_5 = arith.constant 0 : index
    %7 = vector.load %arg4[%c0_4, %c0_5] : memref<128x128xbf16, #tpu.memory_space<vmem>>, vector<128x128xbf16>
    %cst_6 = arith.constant dense<0.000000e+00> : vector<128x128xf32>
    %8 = tpu.matmul %5, %7, %cst_6 {dimension_numbers = #tpu.dot_dimension_numbers<[1], [0], [0], [1], [0, 0, 1, 1], [], []>} : vector<128x128xbf16>, vector<128x128xbf16>, vector<128x128xf32> -> vector<128x128xf32>
    %9 = arith.addf %6, %8 : vector<128x128xf32>
    %c0_7 = arith.constant 0 : index
    %c0_8 = arith.constant 0 : index
    %10 = vector.load %arg7[%c0_7, %c0_8] : memref<128x128xf32, #tpu.memory_space<vmem>>, vector<128x128xf32>
    tpu.vector_store %arg7[%c0_7, %c0_8], %9 {strides = array<i32>} : memref<128x128xf32, #tpu.memory_space<vmem>>, vector<128x128xf32>,
    %c0_i32_9 = arith.constant 0 : i32
    %11 = arith.cmpi eq, %arg2, %c0_i32_9 : i32
    %12 = arith.extui %11 : i1 to i32
    %c0_i32_10 = arith.constant 0 : i32
    %13 = arith.cmpi ne, %12, %c0_i32_10 : i32
    scf.if %13 {
      %c0_11 = arith.constant 0 : index
      %c0_12 = arith.constant 0 : index
      %14 = vector.load %arg7[%c0_11, %c0_12] : memref<128x128xf32, #tpu.memory_space<vmem>>, vector<128x128xf32>
      %c0_13 = arith.constant 0 : index
      %c0_14 = arith.constant 0 : index
      %15 = vector.load %arg5[%c0_13, %c0_14] : memref<1x128xf32, #tpu.memory_space<vmem>>, vector<1x128xf32>
      %16 = vector.broadcast %15 : vector<1x128xf32> to vector<128x128xf32>
      %17 = arith.addf %14, %16 : vector<128x128xf32>
      %18 = arith.truncf %17 : vector<128x128xf32> to vector<128x128xbf16>
      %c0_15 = arith.constant 0 : index
      %c0_16 = arith.constant 0 : index
      %19 = vector.load %arg6[%c0_15, %c0_16] : memref<128x128xbf16, #tpu.memory_space<vmem>>, vector<128x128xbf16>
      tpu.vector_store %arg6[%c0_15, %c0_16], %18 {strides = array<i32>} : memref<128x128xbf16, #tpu.memory_space<vmem>>, vector<128x128xbf16>,
    } else {
    }
    return
  }
  func.func @transform_0(%arg0: i32, %arg1: i32, %arg2: i32) -> (i32, i32) {
    %c0_i32 = arith.constant 0 : i32
    return %arg0, %arg2 : i32, i32
  }
  func.func @transform_1(%arg0: i32, %arg1: i32, %arg2: i32) -> (i32, i32) {
    %c0_i32 = arith.constant 0 : i32
    return %arg2, %arg1 : i32, i32
  }
  func.func @transform_2(%arg0: i32, %arg1: i32, %arg2: i32) -> (i32, i32) {
    %c0_i32 = arith.constant 0 : i32
    %c0_i32_0 = arith.constant 0 : i32
    return %c0_i32, %arg1 : i32, i32
  }
  func.func @transform_3(%arg0: i32, %arg1: i32, %arg2: i32) -> (i32, i32) {
    %c0_i32 = arith.constant 0 : i32
    return %arg0, %arg1 : i32, i32
  }
}

module attributes {stable_mosaic.version = 11 : i64} {
  func.func @_matmul_kernel(%arg0: i32, %arg1: i32, %arg2: i32, %arg3: memref<128x128xbf16, #tpu.memory_space<vmem>>, %arg4: memref<128x128xbf16, #tpu.memory_space<vmem>>, %arg5: memref<1x128xf32, #tpu.memory_space<vmem>>, %arg6: memref<128x128xbf16, #tpu.memory_space<vmem>>, %arg7: memref<128x128xbf16, #tpu.memory_space<vmem>>, %arg8: memref<128x128xf32, #tpu.memory_space<vmem>>) attributes {dimension_semantics = [#tpu.dimension_semantics<parallel>, #tpu.dimension_semantics<parallel>, #tpu.dimension_semantics<arbitrary>], iteration_bounds = array<i64: 1, 1, 1>, scalar_prefetch = 0 : i64, scratch_operands = 1 : i64, tpu.core_type = #tpu.core_type<tc>, window_params = [{transform_indices = @transform_0, window_bounds = array<i64: 128, 128>}, {transform_indices = @transform_1, window_bounds = array<i64: 128, 128>}, {transform_indices = @transform_2, window_bounds = array<i64: 1, 128>}, {transform_indices = @transform_3, window_bounds = array<i64: 128, 128>}, {transform_indices = @transform_4, window_bounds = array<i64: 128, 128>}]} {
    %c0_i32 = arith.constant 0 : i32
    %0 = arith.cmpi eq, %arg2, %c0_i32 : i32
    %1 = arith.extui %0 : i1 to i32
    %c0_i32_0 = arith.constant 0 : i32
    %2 = arith.cmpi ne, %1, %c0_i32_0 : i32
    scf.if %2 {
      %cst_11 = arith.constant 0.000000e+00 : f32
      %14 = vector.broadcast %cst_11 : f32 to vector<128x128xf32>
      %c0_12 = arith.constant 0 : index
      %c0_13 = arith.constant 0 : index
      %15 = vector.load %arg8[%c0_12, %c0_13] : memref<128x128xf32, #tpu.memory_space<vmem>>, vector<128x128xf32>
      tpu.vector_store %arg8[%c0_12, %c0_13], %14 {strides = array<i32>} : memref<128x128xf32, #tpu.memory_space<vmem>>, vector<128x128xf32>,
    } else {
    }
    %c0 = arith.constant 0 : index
    %c0_1 = arith.constant 0 : index
    %3 = vector.load %arg3[%c0, %c0_1] : memref<128x128xbf16, #tpu.memory_space<vmem>>, vector<128x128xbf16>
    %cst = arith.constant 0.000000e+00 : bf16
    %4 = vector.broadcast %cst : bf16 to vector<128x128xbf16>
    %5 = arith.maximumf %3, %4 : vector<128x128xbf16>
    %c0_2 = arith.constant 0 : index
    %c0_3 = arith.constant 0 : index
    %6 = vector.load %arg8[%c0_2, %c0_3] : memref<128x128xf32, #tpu.memory_space<vmem>>, vector<128x128xf32>
    %c0_4 = arith.constant 0 : index
    %c0_5 = arith.constant 0 : index
    %7 = vector.load %arg4[%c0_4, %c0_5] : memref<128x128xbf16, #tpu.memory_space<vmem>>, vector<128x128xbf16>
    %cst_6 = arith.constant dense<0.000000e+00> : vector<128x128xf32>
    %8 = tpu.matmul %5, %7, %cst_6 {dimension_numbers = #tpu.dot_dimension_numbers<[1], [0], [0], [1], [0, 0, 1, 1], [], []>} : vector<128x128xbf16>, vector<128x128xbf16>, vector<128x128xf32> -> vector<128x128xf32>
    %9 = arith.addf %6, %8 : vector<128x128xf32>
    %c0_7 = arith.constant 0 : index
    %c0_8 = arith.constant 0 : index
    %10 = vector.load %arg8[%c0_7, %c0_8] : memref<128x128xf32, #tpu.memory_space<vmem>>, vector<128x128xf32>
    tpu.vector_store %arg8[%c0_7, %c0_8], %9 {strides = array<i32>} : memref<128x128xf32, #tpu.memory_space<vmem>>, vector<128x128xf32>,
    %c0_i32_9 = arith.constant 0 : i32
    %11 = arith.cmpi eq, %arg2, %c0_i32_9 : i32
    %12 = arith.extui %11 : i1 to i32
    %c0_i32_10 = arith.constant 0 : i32
    %13 = arith.cmpi ne, %12, %c0_i32_10 : i32
    scf.if %13 {
      %c0_11 = arith.constant 0 : index
      %c0_12 = arith.constant 0 : index
      %14 = vector.load %arg8[%c0_11, %c0_12] : memref<128x128xf32, #tpu.memory_space<vmem>>, vector<128x128xf32>
      %c0_13 = arith.constant 0 : index
      %c0_14 = arith.constant 0 : index
      %15 = vector.load %arg5[%c0_13, %c0_14] : memref<1x128xf32, #tpu.memory_space<vmem>>, vector<1x128xf32>
      %16 = vector.broadcast %15 : vector<1x128xf32> to vector<128x128xf32>
      %17 = arith.addf %14, %16 : vector<128x128xf32>
      %c0_15 = arith.constant 0 : index
      %c0_16 = arith.constant 0 : index
      %18 = vector.load %arg6[%c0_15, %c0_16] : memref<128x128xbf16, #tpu.memory_space<vmem>>, vector<128x128xbf16>
      %19 = arith.extf %18 : vector<128x128xbf16> to vector<128x128xf32>
      %cst_17 = arith.constant 6.250000e-02 : f32
      %20 = vector.broadcast %cst_17 : f32 to vector<128x128xf32>
      %21 = arith.mulf %20, %17 : vector<128x128xf32>
      %22 = arith.addf %19, %21 : vector<128x128xf32>
      %23 = arith.truncf %22 : vector<128x128xf32> to vector<128x128xbf16>
      %c0_18 = arith.constant 0 : index
      %c0_19 = arith.constant 0 : index
      %24 = vector.load %arg7[%c0_18, %c0_19] : memref<128x128xbf16, #tpu.memory_space<vmem>>, vector<128x128xbf16>
      tpu.vector_store %arg7[%c0_18, %c0_19], %23 {strides = array<i32>} : memref<128x128xbf16, #tpu.memory_space<vmem>>, vector<128x128xbf16>,
    } else {
    }
    return
  }
  func.func @transform_0(%arg0: i32, %arg1: i32, %arg2: i32) -> (i32, i32) {
    %c0_i32 = arith.constant 0 : i32
    return %arg0, %arg2 : i32, i32
  }
  func.func @transform_1(%arg0: i32, %arg1: i32, %arg2: i32) -> (i32, i32) {
    %c0_i32 = arith.constant 0 : i32
    return %arg2, %arg1 : i32, i32
  }
  func.func @transform_2(%arg0: i32, %arg1: i32, %arg2: i32) -> (i32, i32) {
    %c0_i32 = arith.constant 0 : i32
    %c0_i32_0 = arith.constant 0 : i32
    return %c0_i32, %arg1 : i32, i32
  }
  func.func @transform_3(%arg0: i32, %arg1: i32, %arg2: i32) -> (i32, i32) {
    %c0_i32 = arith.constant 0 : i32
    return %arg0, %arg1 : i32, i32
  }
  func.func @transform_4(%arg0: i32, %arg1: i32, %arg2: i32) -> (i32, i32) {
    %c0_i32 = arith.constant 0 : i32
    return %arg0, %arg1 : i32, i32
  }
}

module attributes {stable_mosaic.version = 11 : i64} {
  func.func @_maxpool_kernel(%arg0: i32, %arg1: i32, %arg2: memref<1x4x2x4x64xbf16, #tpu.memory_space<vmem>>, %arg3: memref<1x4x4x32xbf16, #tpu.memory_space<vmem>>) attributes {dimension_semantics = [#tpu.dimension_semantics<parallel>, #tpu.dimension_semantics<parallel>], iteration_bounds = array<i64: 2, 1>, scalar_prefetch = 0 : i64, scratch_operands = 0 : i64, tpu.core_type = #tpu.core_type<tc>, window_params = [{transform_indices = @transform_0, window_bounds = array<i64: 1, 4, 2, 4, 64>}, {transform_indices = @transform_1, window_bounds = array<i64: 1, 4, 4, 32>}]} {
    %c0 = arith.constant 0 : index
    %c0_0 = arith.constant 0 : index
    %c0_1 = arith.constant 0 : index
    %c0_2 = arith.constant 0 : index
    %c0_3 = arith.constant 0 : index
    %0 = vector.load %arg2[%c0, %c0_0, %c0_1, %c0_2, %c0_3] : memref<1x4x2x4x64xbf16, #tpu.memory_space<vmem>>, vector<1x4x2x4x64xbf16>
    %1 = vector.shape_cast %0 : vector<1x4x2x4x64xbf16> to vector<4x2x4x64xbf16>
    %2 = vector.extract_strided_slice %1 {offsets = [0, 0, 0, 0], sizes = [4, 1, 4, 64], strides = [1, 1, 1, 1]} : vector<4x2x4x64xbf16> to vector<4x1x4x64xbf16>
    %3 = vector.shape_cast %2 : vector<4x1x4x64xbf16> to vector<4x4x64xbf16>
    %4 = vector.extract_strided_slice %1 {offsets = [0, 1, 0, 0], sizes = [4, 1, 4, 64], strides = [1, 1, 1, 1]} : vector<4x2x4x64xbf16> to vector<4x1x4x64xbf16>
    %5 = vector.shape_cast %4 : vector<4x1x4x64xbf16> to vector<4x4x64xbf16>
    %6 = arith.maximumf %3, %5 : vector<4x4x64xbf16>
    %7 = vector.extract_strided_slice %6 {offsets = [0, 0, 0], sizes = [4, 4, 32], strides = [1, 1, 1]} : vector<4x4x64xbf16> to vector<4x4x32xbf16>
    %8 = vector.extract_strided_slice %6 {offsets = [0, 0, 32], sizes = [4, 4, 32], strides = [1, 1, 1]} : vector<4x4x64xbf16> to vector<4x4x32xbf16>
    %9 = arith.maximumf %7, %8 : vector<4x4x32xbf16>
    %c0_4 = arith.constant 0 : index
    %c0_5 = arith.constant 0 : index
    %c0_6 = arith.constant 0 : index
    %c0_7 = arith.constant 0 : index
    %10 = vector.load %arg3[%c0_4, %c0_5, %c0_6, %c0_7] : memref<1x4x4x32xbf16, #tpu.memory_space<vmem>>, vector<1x4x4x32xbf16>
    %11 = vector.shape_cast %10 : vector<1x4x4x32xbf16> to vector<4x4x32xbf16>
    %12 = vector.shape_cast %9 : vector<4x4x32xbf16> to vector<1x4x4x32xbf16>
    tpu.vector_store %arg3[%c0_4, %c0_5, %c0_6, %c0_7], %12 {strides = array<i32>} : memref<1x4x4x32xbf16, #tpu.memory_space<vmem>>, vector<1x4x4x32xbf16>,
    return
  }
  func.func @transform_0(%arg0: i32, %arg1: i32) -> (i32, i32, i32, i32, i32) {
    %c0_i32 = arith.constant 0 : i32
    %c0_i32_0 = arith.constant 0 : i32
    %c0_i32_1 = arith.constant 0 : i32
    %c0_i32_2 = arith.constant 0 : i32
    return %arg0, %arg1, %c0_i32, %c0_i32_0, %c0_i32_1 : i32, i32, i32, i32, i32
  }
  func.func @transform_1(%arg0: i32, %arg1: i32) -> (i32, i32, i32, i32) {
    %c0_i32 = arith.constant 0 : i32
    %c0_i32_0 = arith.constant 0 : i32
    %c0_i32_1 = arith.constant 0 : i32
    return %arg0, %arg1, %c0_i32, %c0_i32_0 : i32, i32, i32, i32
  }
}

module attributes {stable_mosaic.version = 11 : i64} {
  func.func @_matmul_kernel(%arg0: i32, %arg1: i32, %arg2: i32, %arg3: memref<32x384xbf16, #tpu.memory_space<vmem>>, %arg4: memref<384x128xbf16, #tpu.memory_space<vmem>>, %arg5: memref<1x128xf32, #tpu.memory_space<vmem>>, %arg6: memref<32x128xbf16, #tpu.memory_space<vmem>>, %arg7: memref<32x128xf32, #tpu.memory_space<vmem>>) attributes {dimension_semantics = [#tpu.dimension_semantics<parallel>, #tpu.dimension_semantics<parallel>, #tpu.dimension_semantics<arbitrary>], iteration_bounds = array<i64: 1, 1, 1>, scalar_prefetch = 0 : i64, scratch_operands = 1 : i64, tpu.core_type = #tpu.core_type<tc>, window_params = [{transform_indices = @transform_0, window_bounds = array<i64: 32, 384>}, {transform_indices = @transform_1, window_bounds = array<i64: 384, 128>}, {transform_indices = @transform_2, window_bounds = array<i64: 1, 128>}, {transform_indices = @transform_3, window_bounds = array<i64: 32, 128>}]} {
    %c0_i32 = arith.constant 0 : i32
    %0 = arith.cmpi eq, %arg2, %c0_i32 : i32
    %1 = arith.extui %0 : i1 to i32
    %c0_i32_0 = arith.constant 0 : i32
    %2 = arith.cmpi ne, %1, %c0_i32_0 : i32
    scf.if %2 {
      %cst_11 = arith.constant 0.000000e+00 : f32
      %14 = vector.broadcast %cst_11 : f32 to vector<32x128xf32>
      %c0_12 = arith.constant 0 : index
      %c0_13 = arith.constant 0 : index
      %15 = vector.load %arg7[%c0_12, %c0_13] : memref<32x128xf32, #tpu.memory_space<vmem>>, vector<32x128xf32>
      tpu.vector_store %arg7[%c0_12, %c0_13], %14 {strides = array<i32>} : memref<32x128xf32, #tpu.memory_space<vmem>>, vector<32x128xf32>,
    } else {
    }
    %c0 = arith.constant 0 : index
    %c0_1 = arith.constant 0 : index
    %3 = vector.load %arg3[%c0, %c0_1] : memref<32x384xbf16, #tpu.memory_space<vmem>>, vector<32x384xbf16>
    %cst = arith.constant 0.000000e+00 : bf16
    %4 = vector.broadcast %cst : bf16 to vector<32x384xbf16>
    %5 = arith.maximumf %3, %4 : vector<32x384xbf16>
    %c0_2 = arith.constant 0 : index
    %c0_3 = arith.constant 0 : index
    %6 = vector.load %arg7[%c0_2, %c0_3] : memref<32x128xf32, #tpu.memory_space<vmem>>, vector<32x128xf32>
    %c0_4 = arith.constant 0 : index
    %c0_5 = arith.constant 0 : index
    %7 = vector.load %arg4[%c0_4, %c0_5] : memref<384x128xbf16, #tpu.memory_space<vmem>>, vector<384x128xbf16>
    %cst_6 = arith.constant dense<0.000000e+00> : vector<32x128xf32>
    %8 = tpu.matmul %5, %7, %cst_6 {dimension_numbers = #tpu.dot_dimension_numbers<[1], [0], [0], [1], [0, 0, 1, 1], [], []>} : vector<32x384xbf16>, vector<384x128xbf16>, vector<32x128xf32> -> vector<32x128xf32>
    %9 = arith.addf %6, %8 : vector<32x128xf32>
    %c0_7 = arith.constant 0 : index
    %c0_8 = arith.constant 0 : index
    %10 = vector.load %arg7[%c0_7, %c0_8] : memref<32x128xf32, #tpu.memory_space<vmem>>, vector<32x128xf32>
    tpu.vector_store %arg7[%c0_7, %c0_8], %9 {strides = array<i32>} : memref<32x128xf32, #tpu.memory_space<vmem>>, vector<32x128xf32>,
    %c0_i32_9 = arith.constant 0 : i32
    %11 = arith.cmpi eq, %arg2, %c0_i32_9 : i32
    %12 = arith.extui %11 : i1 to i32
    %c0_i32_10 = arith.constant 0 : i32
    %13 = arith.cmpi ne, %12, %c0_i32_10 : i32
    scf.if %13 {
      %c0_11 = arith.constant 0 : index
      %c0_12 = arith.constant 0 : index
      %14 = vector.load %arg7[%c0_11, %c0_12] : memref<32x128xf32, #tpu.memory_space<vmem>>, vector<32x128xf32>
      %c0_13 = arith.constant 0 : index
      %c0_14 = arith.constant 0 : index
      %15 = vector.load %arg5[%c0_13, %c0_14] : memref<1x128xf32, #tpu.memory_space<vmem>>, vector<1x128xf32>
      %16 = vector.broadcast %15 : vector<1x128xf32> to vector<32x128xf32>
      %17 = arith.addf %14, %16 : vector<32x128xf32>
      %18 = arith.truncf %17 : vector<32x128xf32> to vector<32x128xbf16>
      %c0_15 = arith.constant 0 : index
      %c0_16 = arith.constant 0 : index
      %19 = vector.load %arg6[%c0_15, %c0_16] : memref<32x128xbf16, #tpu.memory_space<vmem>>, vector<32x128xbf16>
      tpu.vector_store %arg6[%c0_15, %c0_16], %18 {strides = array<i32>} : memref<32x128xbf16, #tpu.memory_space<vmem>>, vector<32x128xbf16>,
    } else {
    }
    return
  }
  func.func @transform_0(%arg0: i32, %arg1: i32, %arg2: i32) -> (i32, i32) {
    %c0_i32 = arith.constant 0 : i32
    return %arg0, %arg2 : i32, i32
  }
  func.func @transform_1(%arg0: i32, %arg1: i32, %arg2: i32) -> (i32, i32) {
    %c0_i32 = arith.constant 0 : i32
    return %arg2, %arg1 : i32, i32
  }
  func.func @transform_2(%arg0: i32, %arg1: i32, %arg2: i32) -> (i32, i32) {
    %c0_i32 = arith.constant 0 : i32
    %c0_i32_0 = arith.constant 0 : i32
    return %c0_i32, %arg1 : i32, i32
  }
  func.func @transform_3(%arg0: i32, %arg1: i32, %arg2: i32) -> (i32, i32) {
    %c0_i32 = arith.constant 0 : i32
    return %arg0, %arg1 : i32, i32
  }
}

module attributes {stable_mosaic.version = 11 : i64} {
  func.func @_matmul_kernel(%arg0: i32, %arg1: i32, %arg2: i32, %arg3: memref<32x256xbf16, #tpu.memory_space<vmem>>, %arg4: memref<256x128xbf16, #tpu.memory_space<vmem>>, %arg5: memref<1x128xf32, #tpu.memory_space<vmem>>, %arg6: memref<32x128xbf16, #tpu.memory_space<vmem>>, %arg7: memref<32x128xf32, #tpu.memory_space<vmem>>) attributes {dimension_semantics = [#tpu.dimension_semantics<parallel>, #tpu.dimension_semantics<parallel>, #tpu.dimension_semantics<arbitrary>], iteration_bounds = array<i64: 1, 1, 1>, scalar_prefetch = 0 : i64, scratch_operands = 1 : i64, tpu.core_type = #tpu.core_type<tc>, window_params = [{transform_indices = @transform_0, window_bounds = array<i64: 32, 256>}, {transform_indices = @transform_1, window_bounds = array<i64: 256, 128>}, {transform_indices = @transform_2, window_bounds = array<i64: 1, 128>}, {transform_indices = @transform_3, window_bounds = array<i64: 32, 128>}]} {
    %c0_i32 = arith.constant 0 : i32
    %0 = arith.cmpi eq, %arg2, %c0_i32 : i32
    %1 = arith.extui %0 : i1 to i32
    %c0_i32_0 = arith.constant 0 : i32
    %2 = arith.cmpi ne, %1, %c0_i32_0 : i32
    scf.if %2 {
      %cst_11 = arith.constant 0.000000e+00 : f32
      %14 = vector.broadcast %cst_11 : f32 to vector<32x128xf32>
      %c0_12 = arith.constant 0 : index
      %c0_13 = arith.constant 0 : index
      %15 = vector.load %arg7[%c0_12, %c0_13] : memref<32x128xf32, #tpu.memory_space<vmem>>, vector<32x128xf32>
      tpu.vector_store %arg7[%c0_12, %c0_13], %14 {strides = array<i32>} : memref<32x128xf32, #tpu.memory_space<vmem>>, vector<32x128xf32>,
    } else {
    }
    %c0 = arith.constant 0 : index
    %c0_1 = arith.constant 0 : index
    %3 = vector.load %arg3[%c0, %c0_1] : memref<32x256xbf16, #tpu.memory_space<vmem>>, vector<32x256xbf16>
    %cst = arith.constant 0.000000e+00 : bf16
    %4 = vector.broadcast %cst : bf16 to vector<32x256xbf16>
    %5 = arith.maximumf %3, %4 : vector<32x256xbf16>
    %c0_2 = arith.constant 0 : index
    %c0_3 = arith.constant 0 : index
    %6 = vector.load %arg7[%c0_2, %c0_3] : memref<32x128xf32, #tpu.memory_space<vmem>>, vector<32x128xf32>
    %c0_4 = arith.constant 0 : index
    %c0_5 = arith.constant 0 : index
    %7 = vector.load %arg4[%c0_4, %c0_5] : memref<256x128xbf16, #tpu.memory_space<vmem>>, vector<256x128xbf16>
    %cst_6 = arith.constant dense<0.000000e+00> : vector<32x128xf32>
    %8 = tpu.matmul %5, %7, %cst_6 {dimension_numbers = #tpu.dot_dimension_numbers<[1], [0], [0], [1], [0, 0, 1, 1], [], []>} : vector<32x256xbf16>, vector<256x128xbf16>, vector<32x128xf32> -> vector<32x128xf32>
    %9 = arith.addf %6, %8 : vector<32x128xf32>
    %c0_7 = arith.constant 0 : index
    %c0_8 = arith.constant 0 : index
    %10 = vector.load %arg7[%c0_7, %c0_8] : memref<32x128xf32, #tpu.memory_space<vmem>>, vector<32x128xf32>
    tpu.vector_store %arg7[%c0_7, %c0_8], %9 {strides = array<i32>} : memref<32x128xf32, #tpu.memory_space<vmem>>, vector<32x128xf32>,
    %c0_i32_9 = arith.constant 0 : i32
    %11 = arith.cmpi eq, %arg2, %c0_i32_9 : i32
    %12 = arith.extui %11 : i1 to i32
    %c0_i32_10 = arith.constant 0 : i32
    %13 = arith.cmpi ne, %12, %c0_i32_10 : i32
    scf.if %13 {
      %c0_11 = arith.constant 0 : index
      %c0_12 = arith.constant 0 : index
      %14 = vector.load %arg7[%c0_11, %c0_12] : memref<32x128xf32, #tpu.memory_space<vmem>>, vector<32x128xf32>
      %c0_13 = arith.constant 0 : index
      %c0_14 = arith.constant 0 : index
      %15 = vector.load %arg5[%c0_13, %c0_14] : memref<1x128xf32, #tpu.memory_space<vmem>>, vector<1x128xf32>
      %16 = vector.broadcast %15 : vector<1x128xf32> to vector<32x128xf32>
      %17 = arith.addf %14, %16 : vector<32x128xf32>
      %18 = arith.truncf %17 : vector<32x128xf32> to vector<32x128xbf16>
      %c0_15 = arith.constant 0 : index
      %c0_16 = arith.constant 0 : index
      %19 = vector.load %arg6[%c0_15, %c0_16] : memref<32x128xbf16, #tpu.memory_space<vmem>>, vector<32x128xbf16>
      tpu.vector_store %arg6[%c0_15, %c0_16], %18 {strides = array<i32>} : memref<32x128xbf16, #tpu.memory_space<vmem>>, vector<32x128xbf16>,
    } else {
    }
    return
  }
  func.func @transform_0(%arg0: i32, %arg1: i32, %arg2: i32) -> (i32, i32) {
    %c0_i32 = arith.constant 0 : i32
    return %arg0, %arg2 : i32, i32
  }
  func.func @transform_1(%arg0: i32, %arg1: i32, %arg2: i32) -> (i32, i32) {
    %c0_i32 = arith.constant 0 : i32
    return %arg2, %arg1 : i32, i32
  }
  func.func @transform_2(%arg0: i32, %arg1: i32, %arg2: i32) -> (i32, i32) {
    %c0_i32 = arith.constant 0 : i32
    %c0_i32_0 = arith.constant 0 : i32
    return %c0_i32, %arg1 : i32, i32
  }
  func.func @transform_3(%arg0: i32, %arg1: i32, %arg2: i32) -> (i32, i32) {
    %c0_i32 = arith.constant 0 : i32
    return %arg0, %arg1 : i32, i32
  }
}

module attributes {stable_mosaic.version = 11 : i64} {
  func.func @_matmul_kernel(%arg0: i32, %arg1: i32, %arg2: i32, %arg3: memref<32x128xbf16, #tpu.memory_space<vmem>>, %arg4: memref<128x128xbf16, #tpu.memory_space<vmem>>, %arg5: memref<1x128xf32, #tpu.memory_space<vmem>>, %arg6: memref<32x128xbf16, #tpu.memory_space<vmem>>, %arg7: memref<32x128xf32, #tpu.memory_space<vmem>>) attributes {dimension_semantics = [#tpu.dimension_semantics<parallel>, #tpu.dimension_semantics<parallel>, #tpu.dimension_semantics<arbitrary>], iteration_bounds = array<i64: 1, 1, 1>, scalar_prefetch = 0 : i64, scratch_operands = 1 : i64, tpu.core_type = #tpu.core_type<tc>, window_params = [{transform_indices = @transform_0, window_bounds = array<i64: 32, 128>}, {transform_indices = @transform_1, window_bounds = array<i64: 128, 128>}, {transform_indices = @transform_2, window_bounds = array<i64: 1, 128>}, {transform_indices = @transform_3, window_bounds = array<i64: 32, 128>}]} {
    %c0_i32 = arith.constant 0 : i32
    %0 = arith.cmpi eq, %arg2, %c0_i32 : i32
    %1 = arith.extui %0 : i1 to i32
    %c0_i32_0 = arith.constant 0 : i32
    %2 = arith.cmpi ne, %1, %c0_i32_0 : i32
    scf.if %2 {
      %cst_10 = arith.constant 0.000000e+00 : f32
      %12 = vector.broadcast %cst_10 : f32 to vector<32x128xf32>
      %c0_11 = arith.constant 0 : index
      %c0_12 = arith.constant 0 : index
      %13 = vector.load %arg7[%c0_11, %c0_12] : memref<32x128xf32, #tpu.memory_space<vmem>>, vector<32x128xf32>
      tpu.vector_store %arg7[%c0_11, %c0_12], %12 {strides = array<i32>} : memref<32x128xf32, #tpu.memory_space<vmem>>, vector<32x128xf32>,
    } else {
    }
    %c0 = arith.constant 0 : index
    %c0_1 = arith.constant 0 : index
    %3 = vector.load %arg3[%c0, %c0_1] : memref<32x128xbf16, #tpu.memory_space<vmem>>, vector<32x128xbf16>
    %c0_2 = arith.constant 0 : index
    %c0_3 = arith.constant 0 : index
    %4 = vector.load %arg7[%c0_2, %c0_3] : memref<32x128xf32, #tpu.memory_space<vmem>>, vector<32x128xf32>
    %c0_4 = arith.constant 0 : index
    %c0_5 = arith.constant 0 : index
    %5 = vector.load %arg4[%c0_4, %c0_5] : memref<128x128xbf16, #tpu.memory_space<vmem>>, vector<128x128xbf16>
    %cst = arith.constant dense<0.000000e+00> : vector<32x128xf32>
    %6 = tpu.matmul %3, %5, %cst {dimension_numbers = #tpu.dot_dimension_numbers<[1], [0], [0], [1], [0, 0, 1, 1], [], []>} : vector<32x128xbf16>, vector<128x128xbf16>, vector<32x128xf32> -> vector<32x128xf32>
    %7 = arith.addf %4, %6 : vector<32x128xf32>
    %c0_6 = arith.constant 0 : index
    %c0_7 = arith.constant 0 : index
    %8 = vector.load %arg7[%c0_6, %c0_7] : memref<32x128xf32, #tpu.memory_space<vmem>>, vector<32x128xf32>
    tpu.vector_store %arg7[%c0_6, %c0_7], %7 {strides = array<i32>} : memref<32x128xf32, #tpu.memory_space<vmem>>, vector<32x128xf32>,
    %c0_i32_8 = arith.constant 0 : i32
    %9 = arith.cmpi eq, %arg2, %c0_i32_8 : i32
    %10 = arith.extui %9 : i1 to i32
    %c0_i32_9 = arith.constant 0 : i32
    %11 = arith.cmpi ne, %10, %c0_i32_9 : i32
    scf.if %11 {
      %c0_10 = arith.constant 0 : index
      %c0_11 = arith.constant 0 : index
      %12 = vector.load %arg7[%c0_10, %c0_11] : memref<32x128xf32, #tpu.memory_space<vmem>>, vector<32x128xf32>
      %c0_12 = arith.constant 0 : index
      %c0_13 = arith.constant 0 : index
      %13 = vector.load %arg5[%c0_12, %c0_13] : memref<1x128xf32, #tpu.memory_space<vmem>>, vector<1x128xf32>
      %14 = vector.broadcast %13 : vector<1x128xf32> to vector<32x128xf32>
      %15 = arith.addf %12, %14 : vector<32x128xf32>
      %16 = arith.truncf %15 : vector<32x128xf32> to vector<32x128xbf16>
      %c0_14 = arith.constant 0 : index
      %c0_15 = arith.constant 0 : index
      %17 = vector.load %arg6[%c0_14, %c0_15] : memref<32x128xbf16, #tpu.memory_space<vmem>>, vector<32x128xbf16>
      tpu.vector_store %arg6[%c0_14, %c0_15], %16 {strides = array<i32>} : memref<32x128xbf16, #tpu.memory_space<vmem>>, vector<32x128xbf16>,
    } else {
    }
    return
  }
  func.func @transform_0(%arg0: i32, %arg1: i32, %arg2: i32) -> (i32, i32) {
    %c0_i32 = arith.constant 0 : i32
    return %arg0, %arg2 : i32, i32
  }
  func.func @transform_1(%arg0: i32, %arg1: i32, %arg2: i32) -> (i32, i32) {
    %c0_i32 = arith.constant 0 : i32
    return %arg2, %arg1 : i32, i32
  }
  func.func @transform_2(%arg0: i32, %arg1: i32, %arg2: i32) -> (i32, i32) {
    %c0_i32 = arith.constant 0 : i32
    %c0_i32_0 = arith.constant 0 : i32
    return %c0_i32, %arg1 : i32, i32
  }
  func.func @transform_3(%arg0: i32, %arg1: i32, %arg2: i32) -> (i32, i32) {
    %c0_i32 = arith.constant 0 : i32
    return %arg0, %arg1 : i32, i32
  }
}

module attributes {stable_mosaic.version = 11 : i64} {
  func.func @_matmul_kernel(%arg0: i32, %arg1: i32, %arg2: i32, %arg3: memref<32x128xbf16, #tpu.memory_space<vmem>>, %arg4: memref<128x128xbf16, #tpu.memory_space<vmem>>, %arg5: memref<1x128xf32, #tpu.memory_space<vmem>>, %arg6: memref<32x128xbf16, #tpu.memory_space<vmem>>, %arg7: memref<32x128xbf16, #tpu.memory_space<vmem>>, %arg8: memref<32x128xf32, #tpu.memory_space<vmem>>) attributes {dimension_semantics = [#tpu.dimension_semantics<parallel>, #tpu.dimension_semantics<parallel>, #tpu.dimension_semantics<arbitrary>], iteration_bounds = array<i64: 1, 1, 1>, scalar_prefetch = 0 : i64, scratch_operands = 1 : i64, tpu.core_type = #tpu.core_type<tc>, window_params = [{transform_indices = @transform_0, window_bounds = array<i64: 32, 128>}, {transform_indices = @transform_1, window_bounds = array<i64: 128, 128>}, {transform_indices = @transform_2, window_bounds = array<i64: 1, 128>}, {transform_indices = @transform_3, window_bounds = array<i64: 32, 128>}, {transform_indices = @transform_4, window_bounds = array<i64: 32, 128>}]} {
    %c0_i32 = arith.constant 0 : i32
    %0 = arith.cmpi eq, %arg2, %c0_i32 : i32
    %1 = arith.extui %0 : i1 to i32
    %c0_i32_0 = arith.constant 0 : i32
    %2 = arith.cmpi ne, %1, %c0_i32_0 : i32
    scf.if %2 {
      %cst_11 = arith.constant 0.000000e+00 : f32
      %14 = vector.broadcast %cst_11 : f32 to vector<32x128xf32>
      %c0_12 = arith.constant 0 : index
      %c0_13 = arith.constant 0 : index
      %15 = vector.load %arg8[%c0_12, %c0_13] : memref<32x128xf32, #tpu.memory_space<vmem>>, vector<32x128xf32>
      tpu.vector_store %arg8[%c0_12, %c0_13], %14 {strides = array<i32>} : memref<32x128xf32, #tpu.memory_space<vmem>>, vector<32x128xf32>,
    } else {
    }
    %c0 = arith.constant 0 : index
    %c0_1 = arith.constant 0 : index
    %3 = vector.load %arg3[%c0, %c0_1] : memref<32x128xbf16, #tpu.memory_space<vmem>>, vector<32x128xbf16>
    %cst = arith.constant 0.000000e+00 : bf16
    %4 = vector.broadcast %cst : bf16 to vector<32x128xbf16>
    %5 = arith.maximumf %3, %4 : vector<32x128xbf16>
    %c0_2 = arith.constant 0 : index
    %c0_3 = arith.constant 0 : index
    %6 = vector.load %arg8[%c0_2, %c0_3] : memref<32x128xf32, #tpu.memory_space<vmem>>, vector<32x128xf32>
    %c0_4 = arith.constant 0 : index
    %c0_5 = arith.constant 0 : index
    %7 = vector.load %arg4[%c0_4, %c0_5] : memref<128x128xbf16, #tpu.memory_space<vmem>>, vector<128x128xbf16>
    %cst_6 = arith.constant dense<0.000000e+00> : vector<32x128xf32>
    %8 = tpu.matmul %5, %7, %cst_6 {dimension_numbers = #tpu.dot_dimension_numbers<[1], [0], [0], [1], [0, 0, 1, 1], [], []>} : vector<32x128xbf16>, vector<128x128xbf16>, vector<32x128xf32> -> vector<32x128xf32>
    %9 = arith.addf %6, %8 : vector<32x128xf32>
    %c0_7 = arith.constant 0 : index
    %c0_8 = arith.constant 0 : index
    %10 = vector.load %arg8[%c0_7, %c0_8] : memref<32x128xf32, #tpu.memory_space<vmem>>, vector<32x128xf32>
    tpu.vector_store %arg8[%c0_7, %c0_8], %9 {strides = array<i32>} : memref<32x128xf32, #tpu.memory_space<vmem>>, vector<32x128xf32>,
    %c0_i32_9 = arith.constant 0 : i32
    %11 = arith.cmpi eq, %arg2, %c0_i32_9 : i32
    %12 = arith.extui %11 : i1 to i32
    %c0_i32_10 = arith.constant 0 : i32
    %13 = arith.cmpi ne, %12, %c0_i32_10 : i32
    scf.if %13 {
      %c0_11 = arith.constant 0 : index
      %c0_12 = arith.constant 0 : index
      %14 = vector.load %arg8[%c0_11, %c0_12] : memref<32x128xf32, #tpu.memory_space<vmem>>, vector<32x128xf32>
      %c0_13 = arith.constant 0 : index
      %c0_14 = arith.constant 0 : index
      %15 = vector.load %arg5[%c0_13, %c0_14] : memref<1x128xf32, #tpu.memory_space<vmem>>, vector<1x128xf32>
      %16 = vector.broadcast %15 : vector<1x128xf32> to vector<32x128xf32>
      %17 = arith.addf %14, %16 : vector<32x128xf32>
      %c0_15 = arith.constant 0 : index
      %c0_16 = arith.constant 0 : index
      %18 = vector.load %arg6[%c0_15, %c0_16] : memref<32x128xbf16, #tpu.memory_space<vmem>>, vector<32x128xbf16>
      %19 = arith.extf %18 : vector<32x128xbf16> to vector<32x128xf32>
      %cst_17 = arith.constant 6.250000e-02 : f32
      %20 = vector.broadcast %cst_17 : f32 to vector<32x128xf32>
      %21 = arith.mulf %20, %17 : vector<32x128xf32>
      %22 = arith.addf %19, %21 : vector<32x128xf32>
      %23 = arith.truncf %22 : vector<32x128xf32> to vector<32x128xbf16>
      %c0_18 = arith.constant 0 : index
      %c0_19 = arith.constant 0 : index
      %24 = vector.load %arg7[%c0_18, %c0_19] : memref<32x128xbf16, #tpu.memory_space<vmem>>, vector<32x128xbf16>
      tpu.vector_store %arg7[%c0_18, %c0_19], %23 {strides = array<i32>} : memref<32x128xbf16, #tpu.memory_space<vmem>>, vector<32x128xbf16>,
    } else {
    }
    return
  }
  func.func @transform_0(%arg0: i32, %arg1: i32, %arg2: i32) -> (i32, i32) {
    %c0_i32 = arith.constant 0 : i32
    return %arg0, %arg2 : i32, i32
  }
  func.func @transform_1(%arg0: i32, %arg1: i32, %arg2: i32) -> (i32, i32) {
    %c0_i32 = arith.constant 0 : i32
    return %arg2, %arg1 : i32, i32
  }
  func.func @transform_2(%arg0: i32, %arg1: i32, %arg2: i32) -> (i32, i32) {
    %c0_i32 = arith.constant 0 : i32
    %c0_i32_0 = arith.constant 0 : i32
    return %c0_i32, %arg1 : i32, i32
  }
  func.func @transform_3(%arg0: i32, %arg1: i32, %arg2: i32) -> (i32, i32) {
    %c0_i32 = arith.constant 0 : i32
    return %arg0, %arg1 : i32, i32
  }
  func.func @transform_4(%arg0: i32, %arg1: i32, %arg2: i32) -> (i32, i32) {
    %c0_i32 = arith.constant 0 : i32
    return %arg0, %arg1 : i32, i32
  }
}

module attributes {stable_mosaic.version = 11 : i64} {
  func.func @_maxpool_kernel(%arg0: i32, %arg1: i32, %arg2: memref<1x2x2x2x128xbf16, #tpu.memory_space<vmem>>, %arg3: memref<1x2x2x64xbf16, #tpu.memory_space<vmem>>) attributes {dimension_semantics = [#tpu.dimension_semantics<parallel>, #tpu.dimension_semantics<parallel>], iteration_bounds = array<i64: 2, 1>, scalar_prefetch = 0 : i64, scratch_operands = 0 : i64, tpu.core_type = #tpu.core_type<tc>, window_params = [{transform_indices = @transform_0, window_bounds = array<i64: 1, 2, 2, 2, 128>}, {transform_indices = @transform_1, window_bounds = array<i64: 1, 2, 2, 64>}]} {
    %c0 = arith.constant 0 : index
    %c0_0 = arith.constant 0 : index
    %c0_1 = arith.constant 0 : index
    %c0_2 = arith.constant 0 : index
    %c0_3 = arith.constant 0 : index
    %0 = vector.load %arg2[%c0, %c0_0, %c0_1, %c0_2, %c0_3] : memref<1x2x2x2x128xbf16, #tpu.memory_space<vmem>>, vector<1x2x2x2x128xbf16>
    %1 = vector.shape_cast %0 : vector<1x2x2x2x128xbf16> to vector<2x2x2x128xbf16>
    %2 = vector.extract_strided_slice %1 {offsets = [0, 0, 0, 0], sizes = [2, 1, 2, 128], strides = [1, 1, 1, 1]} : vector<2x2x2x128xbf16> to vector<2x1x2x128xbf16>
    %3 = vector.shape_cast %2 : vector<2x1x2x128xbf16> to vector<2x2x128xbf16>
    %4 = vector.extract_strided_slice %1 {offsets = [0, 1, 0, 0], sizes = [2, 1, 2, 128], strides = [1, 1, 1, 1]} : vector<2x2x2x128xbf16> to vector<2x1x2x128xbf16>
    %5 = vector.shape_cast %4 : vector<2x1x2x128xbf16> to vector<2x2x128xbf16>
    %6 = arith.maximumf %3, %5 : vector<2x2x128xbf16>
    %7 = vector.extract_strided_slice %6 {offsets = [0, 0, 0], sizes = [2, 2, 64], strides = [1, 1, 1]} : vector<2x2x128xbf16> to vector<2x2x64xbf16>
    %8 = vector.extract_strided_slice %6 {offsets = [0, 0, 64], sizes = [2, 2, 64], strides = [1, 1, 1]} : vector<2x2x128xbf16> to vector<2x2x64xbf16>
    %9 = arith.maximumf %7, %8 : vector<2x2x64xbf16>
    %c0_4 = arith.constant 0 : index
    %c0_5 = arith.constant 0 : index
    %c0_6 = arith.constant 0 : index
    %c0_7 = arith.constant 0 : index
    %10 = vector.load %arg3[%c0_4, %c0_5, %c0_6, %c0_7] : memref<1x2x2x64xbf16, #tpu.memory_space<vmem>>, vector<1x2x2x64xbf16>
    %11 = vector.shape_cast %10 : vector<1x2x2x64xbf16> to vector<2x2x64xbf16>
    %12 = vector.shape_cast %9 : vector<2x2x64xbf16> to vector<1x2x2x64xbf16>
    tpu.vector_store %arg3[%c0_4, %c0_5, %c0_6, %c0_7], %12 {strides = array<i32>} : memref<1x2x2x64xbf16, #tpu.memory_space<vmem>>, vector<1x2x2x64xbf16>,
    return
  }
  func.func @transform_0(%arg0: i32, %arg1: i32) -> (i32, i32, i32, i32, i32) {
    %c0_i32 = arith.constant 0 : i32
    %c0_i32_0 = arith.constant 0 : i32
    %c0_i32_1 = arith.constant 0 : i32
    %c0_i32_2 = arith.constant 0 : i32
    return %arg0, %arg1, %c0_i32, %c0_i32_0, %c0_i32_1 : i32, i32, i32, i32, i32
  }
  func.func @transform_1(%arg0: i32, %arg1: i32) -> (i32, i32, i32, i32) {
    %c0_i32 = arith.constant 0 : i32
    %c0_i32_0 = arith.constant 0 : i32
    %c0_i32_1 = arith.constant 0 : i32
    return %arg0, %arg1, %c0_i32, %c0_i32_0 : i32, i32, i32, i32
  }
}

module attributes {stable_mosaic.version = 11 : i64} {
  func.func @_matmul_kernel(%arg0: i32, %arg1: i32, %arg2: i32, %arg3: memref<16x640xbf16, #tpu.memory_space<vmem>>, %arg4: memref<640x128xbf16, #tpu.memory_space<vmem>>, %arg5: memref<1x128xf32, #tpu.memory_space<vmem>>, %arg6: memref<16x128xbf16, #tpu.memory_space<vmem>>, %arg7: memref<16x128xf32, #tpu.memory_space<vmem>>) attributes {dimension_semantics = [#tpu.dimension_semantics<parallel>, #tpu.dimension_semantics<parallel>, #tpu.dimension_semantics<arbitrary>], iteration_bounds = array<i64: 1, 1, 1>, scalar_prefetch = 0 : i64, scratch_operands = 1 : i64, tpu.core_type = #tpu.core_type<tc>, window_params = [{transform_indices = @transform_0, window_bounds = array<i64: 16, 640>}, {transform_indices = @transform_1, window_bounds = array<i64: 640, 128>}, {transform_indices = @transform_2, window_bounds = array<i64: 1, 128>}, {transform_indices = @transform_3, window_bounds = array<i64: 16, 128>}]} {
    %c0_i32 = arith.constant 0 : i32
    %0 = arith.cmpi eq, %arg2, %c0_i32 : i32
    %1 = arith.extui %0 : i1 to i32
    %c0_i32_0 = arith.constant 0 : i32
    %2 = arith.cmpi ne, %1, %c0_i32_0 : i32
    scf.if %2 {
      %cst_11 = arith.constant 0.000000e+00 : f32
      %14 = vector.broadcast %cst_11 : f32 to vector<16x128xf32>
      %c0_12 = arith.constant 0 : index
      %c0_13 = arith.constant 0 : index
      %15 = vector.load %arg7[%c0_12, %c0_13] : memref<16x128xf32, #tpu.memory_space<vmem>>, vector<16x128xf32>
      tpu.vector_store %arg7[%c0_12, %c0_13], %14 {strides = array<i32>} : memref<16x128xf32, #tpu.memory_space<vmem>>, vector<16x128xf32>,
    } else {
    }
    %c0 = arith.constant 0 : index
    %c0_1 = arith.constant 0 : index
    %3 = vector.load %arg3[%c0, %c0_1] : memref<16x640xbf16, #tpu.memory_space<vmem>>, vector<16x640xbf16>
    %cst = arith.constant 0.000000e+00 : bf16
    %4 = vector.broadcast %cst : bf16 to vector<16x640xbf16>
    %5 = arith.maximumf %3, %4 : vector<16x640xbf16>
    %c0_2 = arith.constant 0 : index
    %c0_3 = arith.constant 0 : index
    %6 = vector.load %arg7[%c0_2, %c0_3] : memref<16x128xf32, #tpu.memory_space<vmem>>, vector<16x128xf32>
    %c0_4 = arith.constant 0 : index
    %c0_5 = arith.constant 0 : index
    %7 = vector.load %arg4[%c0_4, %c0_5] : memref<640x128xbf16, #tpu.memory_space<vmem>>, vector<640x128xbf16>
    %cst_6 = arith.constant dense<0.000000e+00> : vector<16x128xf32>
    %8 = tpu.matmul %5, %7, %cst_6 {dimension_numbers = #tpu.dot_dimension_numbers<[1], [0], [0], [1], [0, 0, 1, 1], [], []>} : vector<16x640xbf16>, vector<640x128xbf16>, vector<16x128xf32> -> vector<16x128xf32>
    %9 = arith.addf %6, %8 : vector<16x128xf32>
    %c0_7 = arith.constant 0 : index
    %c0_8 = arith.constant 0 : index
    %10 = vector.load %arg7[%c0_7, %c0_8] : memref<16x128xf32, #tpu.memory_space<vmem>>, vector<16x128xf32>
    tpu.vector_store %arg7[%c0_7, %c0_8], %9 {strides = array<i32>} : memref<16x128xf32, #tpu.memory_space<vmem>>, vector<16x128xf32>,
    %c0_i32_9 = arith.constant 0 : i32
    %11 = arith.cmpi eq, %arg2, %c0_i32_9 : i32
    %12 = arith.extui %11 : i1 to i32
    %c0_i32_10 = arith.constant 0 : i32
    %13 = arith.cmpi ne, %12, %c0_i32_10 : i32
    scf.if %13 {
      %c0_11 = arith.constant 0 : index
      %c0_12 = arith.constant 0 : index
      %14 = vector.load %arg7[%c0_11, %c0_12] : memref<16x128xf32, #tpu.memory_space<vmem>>, vector<16x128xf32>
      %c0_13 = arith.constant 0 : index
      %c0_14 = arith.constant 0 : index
      %15 = vector.load %arg5[%c0_13, %c0_14] : memref<1x128xf32, #tpu.memory_space<vmem>>, vector<1x128xf32>
      %16 = vector.broadcast %15 : vector<1x128xf32> to vector<16x128xf32>
      %17 = arith.addf %14, %16 : vector<16x128xf32>
      %18 = arith.truncf %17 : vector<16x128xf32> to vector<16x128xbf16>
      %c0_15 = arith.constant 0 : index
      %c0_16 = arith.constant 0 : index
      %19 = vector.load %arg6[%c0_15, %c0_16] : memref<16x128xbf16, #tpu.memory_space<vmem>>, vector<16x128xbf16>
      tpu.vector_store %arg6[%c0_15, %c0_16], %18 {strides = array<i32>} : memref<16x128xbf16, #tpu.memory_space<vmem>>, vector<16x128xbf16>,
    } else {
    }
    return
  }
  func.func @transform_0(%arg0: i32, %arg1: i32, %arg2: i32) -> (i32, i32) {
    %c0_i32 = arith.constant 0 : i32
    return %arg0, %arg2 : i32, i32
  }
  func.func @transform_1(%arg0: i32, %arg1: i32, %arg2: i32) -> (i32, i32) {
    %c0_i32 = arith.constant 0 : i32
    return %arg2, %arg1 : i32, i32
  }
  func.func @transform_2(%arg0: i32, %arg1: i32, %arg2: i32) -> (i32, i32) {
    %c0_i32 = arith.constant 0 : i32
    %c0_i32_0 = arith.constant 0 : i32
    return %c0_i32, %arg1 : i32, i32
  }
  func.func @transform_3(%arg0: i32, %arg1: i32, %arg2: i32) -> (i32, i32) {
    %c0_i32 = arith.constant 0 : i32
    return %arg0, %arg1 : i32, i32
  }
}

module attributes {stable_mosaic.version = 11 : i64} {
  func.func @_matmul_kernel(%arg0: i32, %arg1: i32, %arg2: i32, %arg3: memref<16x384xbf16, #tpu.memory_space<vmem>>, %arg4: memref<384x128xbf16, #tpu.memory_space<vmem>>, %arg5: memref<1x128xf32, #tpu.memory_space<vmem>>, %arg6: memref<16x128xbf16, #tpu.memory_space<vmem>>, %arg7: memref<16x128xf32, #tpu.memory_space<vmem>>) attributes {dimension_semantics = [#tpu.dimension_semantics<parallel>, #tpu.dimension_semantics<parallel>, #tpu.dimension_semantics<arbitrary>], iteration_bounds = array<i64: 1, 1, 1>, scalar_prefetch = 0 : i64, scratch_operands = 1 : i64, tpu.core_type = #tpu.core_type<tc>, window_params = [{transform_indices = @transform_0, window_bounds = array<i64: 16, 384>}, {transform_indices = @transform_1, window_bounds = array<i64: 384, 128>}, {transform_indices = @transform_2, window_bounds = array<i64: 1, 128>}, {transform_indices = @transform_3, window_bounds = array<i64: 16, 128>}]} {
    %c0_i32 = arith.constant 0 : i32
    %0 = arith.cmpi eq, %arg2, %c0_i32 : i32
    %1 = arith.extui %0 : i1 to i32
    %c0_i32_0 = arith.constant 0 : i32
    %2 = arith.cmpi ne, %1, %c0_i32_0 : i32
    scf.if %2 {
      %cst_11 = arith.constant 0.000000e+00 : f32
      %14 = vector.broadcast %cst_11 : f32 to vector<16x128xf32>
      %c0_12 = arith.constant 0 : index
      %c0_13 = arith.constant 0 : index
      %15 = vector.load %arg7[%c0_12, %c0_13] : memref<16x128xf32, #tpu.memory_space<vmem>>, vector<16x128xf32>
      tpu.vector_store %arg7[%c0_12, %c0_13], %14 {strides = array<i32>} : memref<16x128xf32, #tpu.memory_space<vmem>>, vector<16x128xf32>,
    } else {
    }
    %c0 = arith.constant 0 : index
    %c0_1 = arith.constant 0 : index
    %3 = vector.load %arg3[%c0, %c0_1] : memref<16x384xbf16, #tpu.memory_space<vmem>>, vector<16x384xbf16>
    %cst = arith.constant 0.000000e+00 : bf16
    %4 = vector.broadcast %cst : bf16 to vector<16x384xbf16>
    %5 = arith.maximumf %3, %4 : vector<16x384xbf16>
    %c0_2 = arith.constant 0 : index
    %c0_3 = arith.constant 0 : index
    %6 = vector.load %arg7[%c0_2, %c0_3] : memref<16x128xf32, #tpu.memory_space<vmem>>, vector<16x128xf32>
    %c0_4 = arith.constant 0 : index
    %c0_5 = arith.constant 0 : index
    %7 = vector.load %arg4[%c0_4, %c0_5] : memref<384x128xbf16, #tpu.memory_space<vmem>>, vector<384x128xbf16>
    %cst_6 = arith.constant dense<0.000000e+00> : vector<16x128xf32>
    %8 = tpu.matmul %5, %7, %cst_6 {dimension_numbers = #tpu.dot_dimension_numbers<[1], [0], [0], [1], [0, 0, 1, 1], [], []>} : vector<16x384xbf16>, vector<384x128xbf16>, vector<16x128xf32> -> vector<16x128xf32>
    %9 = arith.addf %6, %8 : vector<16x128xf32>
    %c0_7 = arith.constant 0 : index
    %c0_8 = arith.constant 0 : index
    %10 = vector.load %arg7[%c0_7, %c0_8] : memref<16x128xf32, #tpu.memory_space<vmem>>, vector<16x128xf32>
    tpu.vector_store %arg7[%c0_7, %c0_8], %9 {strides = array<i32>} : memref<16x128xf32, #tpu.memory_space<vmem>>, vector<16x128xf32>,
    %c0_i32_9 = arith.constant 0 : i32
    %11 = arith.cmpi eq, %arg2, %c0_i32_9 : i32
    %12 = arith.extui %11 : i1 to i32
    %c0_i32_10 = arith.constant 0 : i32
    %13 = arith.cmpi ne, %12, %c0_i32_10 : i32
    scf.if %13 {
      %c0_11 = arith.constant 0 : index
      %c0_12 = arith.constant 0 : index
      %14 = vector.load %arg7[%c0_11, %c0_12] : memref<16x128xf32, #tpu.memory_space<vmem>>, vector<16x128xf32>
      %c0_13 = arith.constant 0 : index
      %c0_14 = arith.constant 0 : index
      %15 = vector.load %arg5[%c0_13, %c0_14] : memref<1x128xf32, #tpu.memory_space<vmem>>, vector<1x128xf32>
      %16 = vector.broadcast %15 : vector<1x128xf32> to vector<16x128xf32>
      %17 = arith.addf %14, %16 : vector<16x128xf32>
      %18 = arith.truncf %17 : vector<16x128xf32> to vector<16x128xbf16>
      %c0_15 = arith.constant 0 : index
      %c0_16 = arith.constant 0 : index
      %19 = vector.load %arg6[%c0_15, %c0_16] : memref<16x128xbf16, #tpu.memory_space<vmem>>, vector<16x128xbf16>
      tpu.vector_store %arg6[%c0_15, %c0_16], %18 {strides = array<i32>} : memref<16x128xbf16, #tpu.memory_space<vmem>>, vector<16x128xbf16>,
    } else {
    }
    return
  }
  func.func @transform_0(%arg0: i32, %arg1: i32, %arg2: i32) -> (i32, i32) {
    %c0_i32 = arith.constant 0 : i32
    return %arg0, %arg2 : i32, i32
  }
  func.func @transform_1(%arg0: i32, %arg1: i32, %arg2: i32) -> (i32, i32) {
    %c0_i32 = arith.constant 0 : i32
    return %arg2, %arg1 : i32, i32
  }
  func.func @transform_2(%arg0: i32, %arg1: i32, %arg2: i32) -> (i32, i32) {
    %c0_i32 = arith.constant 0 : i32
    %c0_i32_0 = arith.constant 0 : i32
    return %c0_i32, %arg1 : i32, i32
  }
  func.func @transform_3(%arg0: i32, %arg1: i32, %arg2: i32) -> (i32, i32) {
    %c0_i32 = arith.constant 0 : i32
    return %arg0, %arg1 : i32, i32
  }
}

module attributes {stable_mosaic.version = 11 : i64} {
  func.func @_matmul_kernel(%arg0: i32, %arg1: i32, %arg2: i32, %arg3: memref<16x128xbf16, #tpu.memory_space<vmem>>, %arg4: memref<128x128xbf16, #tpu.memory_space<vmem>>, %arg5: memref<1x128xf32, #tpu.memory_space<vmem>>, %arg6: memref<16x128xbf16, #tpu.memory_space<vmem>>, %arg7: memref<16x128xf32, #tpu.memory_space<vmem>>) attributes {dimension_semantics = [#tpu.dimension_semantics<parallel>, #tpu.dimension_semantics<parallel>, #tpu.dimension_semantics<arbitrary>], iteration_bounds = array<i64: 1, 1, 1>, scalar_prefetch = 0 : i64, scratch_operands = 1 : i64, tpu.core_type = #tpu.core_type<tc>, window_params = [{transform_indices = @transform_0, window_bounds = array<i64: 16, 128>}, {transform_indices = @transform_1, window_bounds = array<i64: 128, 128>}, {transform_indices = @transform_2, window_bounds = array<i64: 1, 128>}, {transform_indices = @transform_3, window_bounds = array<i64: 16, 128>}]} {
    %c0_i32 = arith.constant 0 : i32
    %0 = arith.cmpi eq, %arg2, %c0_i32 : i32
    %1 = arith.extui %0 : i1 to i32
    %c0_i32_0 = arith.constant 0 : i32
    %2 = arith.cmpi ne, %1, %c0_i32_0 : i32
    scf.if %2 {
      %cst_10 = arith.constant 0.000000e+00 : f32
      %12 = vector.broadcast %cst_10 : f32 to vector<16x128xf32>
      %c0_11 = arith.constant 0 : index
      %c0_12 = arith.constant 0 : index
      %13 = vector.load %arg7[%c0_11, %c0_12] : memref<16x128xf32, #tpu.memory_space<vmem>>, vector<16x128xf32>
      tpu.vector_store %arg7[%c0_11, %c0_12], %12 {strides = array<i32>} : memref<16x128xf32, #tpu.memory_space<vmem>>, vector<16x128xf32>,
    } else {
    }
    %c0 = arith.constant 0 : index
    %c0_1 = arith.constant 0 : index
    %3 = vector.load %arg3[%c0, %c0_1] : memref<16x128xbf16, #tpu.memory_space<vmem>>, vector<16x128xbf16>
    %c0_2 = arith.constant 0 : index
    %c0_3 = arith.constant 0 : index
    %4 = vector.load %arg7[%c0_2, %c0_3] : memref<16x128xf32, #tpu.memory_space<vmem>>, vector<16x128xf32>
    %c0_4 = arith.constant 0 : index
    %c0_5 = arith.constant 0 : index
    %5 = vector.load %arg4[%c0_4, %c0_5] : memref<128x128xbf16, #tpu.memory_space<vmem>>, vector<128x128xbf16>
    %cst = arith.constant dense<0.000000e+00> : vector<16x128xf32>
    %6 = tpu.matmul %3, %5, %cst {dimension_numbers = #tpu.dot_dimension_numbers<[1], [0], [0], [1], [0, 0, 1, 1], [], []>} : vector<16x128xbf16>, vector<128x128xbf16>, vector<16x128xf32> -> vector<16x128xf32>
    %7 = arith.addf %4, %6 : vector<16x128xf32>
    %c0_6 = arith.constant 0 : index
    %c0_7 = arith.constant 0 : index
    %8 = vector.load %arg7[%c0_6, %c0_7] : memref<16x128xf32, #tpu.memory_space<vmem>>, vector<16x128xf32>
    tpu.vector_store %arg7[%c0_6, %c0_7], %7 {strides = array<i32>} : memref<16x128xf32, #tpu.memory_space<vmem>>, vector<16x128xf32>,
    %c0_i32_8 = arith.constant 0 : i32
    %9 = arith.cmpi eq, %arg2, %c0_i32_8 : i32
    %10 = arith.extui %9 : i1 to i32
    %c0_i32_9 = arith.constant 0 : i32
    %11 = arith.cmpi ne, %10, %c0_i32_9 : i32
    scf.if %11 {
      %c0_10 = arith.constant 0 : index
      %c0_11 = arith.constant 0 : index
      %12 = vector.load %arg7[%c0_10, %c0_11] : memref<16x128xf32, #tpu.memory_space<vmem>>, vector<16x128xf32>
      %c0_12 = arith.constant 0 : index
      %c0_13 = arith.constant 0 : index
      %13 = vector.load %arg5[%c0_12, %c0_13] : memref<1x128xf32, #tpu.memory_space<vmem>>, vector<1x128xf32>
      %14 = vector.broadcast %13 : vector<1x128xf32> to vector<16x128xf32>
      %15 = arith.addf %12, %14 : vector<16x128xf32>
      %16 = arith.truncf %15 : vector<16x128xf32> to vector<16x128xbf16>
      %c0_14 = arith.constant 0 : index
      %c0_15 = arith.constant 0 : index
      %17 = vector.load %arg6[%c0_14, %c0_15] : memref<16x128xbf16, #tpu.memory_space<vmem>>, vector<16x128xbf16>
      tpu.vector_store %arg6[%c0_14, %c0_15], %16 {strides = array<i32>} : memref<16x128xbf16, #tpu.memory_space<vmem>>, vector<16x128xbf16>,
    } else {
    }
    return
  }
  func.func @transform_0(%arg0: i32, %arg1: i32, %arg2: i32) -> (i32, i32) {
    %c0_i32 = arith.constant 0 : i32
    return %arg0, %arg2 : i32, i32
  }
  func.func @transform_1(%arg0: i32, %arg1: i32, %arg2: i32) -> (i32, i32) {
    %c0_i32 = arith.constant 0 : i32
    return %arg2, %arg1 : i32, i32
  }
  func.func @transform_2(%arg0: i32, %arg1: i32, %arg2: i32) -> (i32, i32) {
    %c0_i32 = arith.constant 0 : i32
    %c0_i32_0 = arith.constant 0 : i32
    return %c0_i32, %arg1 : i32, i32
  }
  func.func @transform_3(%arg0: i32, %arg1: i32, %arg2: i32) -> (i32, i32) {
    %c0_i32 = arith.constant 0 : i32
    return %arg0, %arg1 : i32, i32
  }
}

module attributes {stable_mosaic.version = 11 : i64} {
  func.func @_matmul_kernel(%arg0: i32, %arg1: i32, %arg2: i32, %arg3: memref<16x128xbf16, #tpu.memory_space<vmem>>, %arg4: memref<128x128xbf16, #tpu.memory_space<vmem>>, %arg5: memref<1x128xf32, #tpu.memory_space<vmem>>, %arg6: memref<16x128xbf16, #tpu.memory_space<vmem>>, %arg7: memref<16x128xbf16, #tpu.memory_space<vmem>>, %arg8: memref<16x128xf32, #tpu.memory_space<vmem>>) attributes {dimension_semantics = [#tpu.dimension_semantics<parallel>, #tpu.dimension_semantics<parallel>, #tpu.dimension_semantics<arbitrary>], iteration_bounds = array<i64: 1, 1, 1>, scalar_prefetch = 0 : i64, scratch_operands = 1 : i64, tpu.core_type = #tpu.core_type<tc>, window_params = [{transform_indices = @transform_0, window_bounds = array<i64: 16, 128>}, {transform_indices = @transform_1, window_bounds = array<i64: 128, 128>}, {transform_indices = @transform_2, window_bounds = array<i64: 1, 128>}, {transform_indices = @transform_3, window_bounds = array<i64: 16, 128>}, {transform_indices = @transform_4, window_bounds = array<i64: 16, 128>}]} {
    %c0_i32 = arith.constant 0 : i32
    %0 = arith.cmpi eq, %arg2, %c0_i32 : i32
    %1 = arith.extui %0 : i1 to i32
    %c0_i32_0 = arith.constant 0 : i32
    %2 = arith.cmpi ne, %1, %c0_i32_0 : i32
    scf.if %2 {
      %cst_11 = arith.constant 0.000000e+00 : f32
      %14 = vector.broadcast %cst_11 : f32 to vector<16x128xf32>
      %c0_12 = arith.constant 0 : index
      %c0_13 = arith.constant 0 : index
      %15 = vector.load %arg8[%c0_12, %c0_13] : memref<16x128xf32, #tpu.memory_space<vmem>>, vector<16x128xf32>
      tpu.vector_store %arg8[%c0_12, %c0_13], %14 {strides = array<i32>} : memref<16x128xf32, #tpu.memory_space<vmem>>, vector<16x128xf32>,
    } else {
    }
    %c0 = arith.constant 0 : index
    %c0_1 = arith.constant 0 : index
    %3 = vector.load %arg3[%c0, %c0_1] : memref<16x128xbf16, #tpu.memory_space<vmem>>, vector<16x128xbf16>
    %cst = arith.constant 0.000000e+00 : bf16
    %4 = vector.broadcast %cst : bf16 to vector<16x128xbf16>
    %5 = arith.maximumf %3, %4 : vector<16x128xbf16>
    %c0_2 = arith.constant 0 : index
    %c0_3 = arith.constant 0 : index
    %6 = vector.load %arg8[%c0_2, %c0_3] : memref<16x128xf32, #tpu.memory_space<vmem>>, vector<16x128xf32>
    %c0_4 = arith.constant 0 : index
    %c0_5 = arith.constant 0 : index
    %7 = vector.load %arg4[%c0_4, %c0_5] : memref<128x128xbf16, #tpu.memory_space<vmem>>, vector<128x128xbf16>
    %cst_6 = arith.constant dense<0.000000e+00> : vector<16x128xf32>
    %8 = tpu.matmul %5, %7, %cst_6 {dimension_numbers = #tpu.dot_dimension_numbers<[1], [0], [0], [1], [0, 0, 1, 1], [], []>} : vector<16x128xbf16>, vector<128x128xbf16>, vector<16x128xf32> -> vector<16x128xf32>
    %9 = arith.addf %6, %8 : vector<16x128xf32>
    %c0_7 = arith.constant 0 : index
    %c0_8 = arith.constant 0 : index
    %10 = vector.load %arg8[%c0_7, %c0_8] : memref<16x128xf32, #tpu.memory_space<vmem>>, vector<16x128xf32>
    tpu.vector_store %arg8[%c0_7, %c0_8], %9 {strides = array<i32>} : memref<16x128xf32, #tpu.memory_space<vmem>>, vector<16x128xf32>,
    %c0_i32_9 = arith.constant 0 : i32
    %11 = arith.cmpi eq, %arg2, %c0_i32_9 : i32
    %12 = arith.extui %11 : i1 to i32
    %c0_i32_10 = arith.constant 0 : i32
    %13 = arith.cmpi ne, %12, %c0_i32_10 : i32
    scf.if %13 {
      %c0_11 = arith.constant 0 : index
      %c0_12 = arith.constant 0 : index
      %14 = vector.load %arg8[%c0_11, %c0_12] : memref<16x128xf32, #tpu.memory_space<vmem>>, vector<16x128xf32>
      %c0_13 = arith.constant 0 : index
      %c0_14 = arith.constant 0 : index
      %15 = vector.load %arg5[%c0_13, %c0_14] : memref<1x128xf32, #tpu.memory_space<vmem>>, vector<1x128xf32>
      %16 = vector.broadcast %15 : vector<1x128xf32> to vector<16x128xf32>
      %17 = arith.addf %14, %16 : vector<16x128xf32>
      %c0_15 = arith.constant 0 : index
      %c0_16 = arith.constant 0 : index
      %18 = vector.load %arg6[%c0_15, %c0_16] : memref<16x128xbf16, #tpu.memory_space<vmem>>, vector<16x128xbf16>
      %19 = arith.extf %18 : vector<16x128xbf16> to vector<16x128xf32>
      %cst_17 = arith.constant 6.250000e-02 : f32
      %20 = vector.broadcast %cst_17 : f32 to vector<16x128xf32>
      %21 = arith.mulf %20, %17 : vector<16x128xf32>
      %22 = arith.addf %19, %21 : vector<16x128xf32>
      %23 = arith.truncf %22 : vector<16x128xf32> to vector<16x128xbf16>
      %c0_18 = arith.constant 0 : index
      %c0_19 = arith.constant 0 : index
      %24 = vector.load %arg7[%c0_18, %c0_19] : memref<16x128xbf16, #tpu.memory_space<vmem>>, vector<16x128xbf16>
      tpu.vector_store %arg7[%c0_18, %c0_19], %23 {strides = array<i32>} : memref<16x128xbf16, #tpu.memory_space<vmem>>, vector<16x128xbf16>,
    } else {
    }
    return
  }
  func.func @transform_0(%arg0: i32, %arg1: i32, %arg2: i32) -> (i32, i32) {
    %c0_i32 = arith.constant 0 : i32
    return %arg0, %arg2 : i32, i32
  }
  func.func @transform_1(%arg0: i32, %arg1: i32, %arg2: i32) -> (i32, i32) {
    %c0_i32 = arith.constant 0 : i32
    return %arg2, %arg1 : i32, i32
  }
  func.func @transform_2(%arg0: i32, %arg1: i32, %arg2: i32) -> (i32, i32) {
    %c0_i32 = arith.constant 0 : i32
    %c0_i32_0 = arith.constant 0 : i32
    return %c0_i32, %arg1 : i32, i32
  }
  func.func @transform_3(%arg0: i32, %arg1: i32, %arg2: i32) -> (i32, i32) {
    %c0_i32 = arith.constant 0 : i32
    return %arg0, %arg1 : i32, i32
  }
  func.func @transform_4(%arg0: i32, %arg1: i32, %arg2: i32) -> (i32, i32) {
    %c0_i32 = arith.constant 0 : i32
    return %arg0, %arg1 : i32, i32
  }
}

module attributes {stable_mosaic.version = 11 : i64} {
  func.func @_matmul_kernel(%arg0: i32, %arg1: i32, %arg2: i32, %arg3: memref<16x128xbf16, #tpu.memory_space<vmem>>, %arg4: memref<128x128xbf16, #tpu.memory_space<vmem>>, %arg5: memref<1x128xf32, #tpu.memory_space<vmem>>, %arg6: memref<16x128xf32, #tpu.memory_space<vmem>>, %arg7: memref<16x128xf32, #tpu.memory_space<vmem>>) attributes {dimension_semantics = [#tpu.dimension_semantics<parallel>, #tpu.dimension_semantics<parallel>, #tpu.dimension_semantics<arbitrary>], iteration_bounds = array<i64: 1, 1, 1>, scalar_prefetch = 0 : i64, scratch_operands = 1 : i64, tpu.core_type = #tpu.core_type<tc>, window_params = [{transform_indices = @transform_0, window_bounds = array<i64: 16, 128>}, {transform_indices = @transform_1, window_bounds = array<i64: 128, 128>}, {transform_indices = @transform_2, window_bounds = array<i64: 1, 128>}, {transform_indices = @transform_3, window_bounds = array<i64: 16, 128>}]} {
    %c0_i32 = arith.constant 0 : i32
    %0 = arith.cmpi eq, %arg2, %c0_i32 : i32
    %1 = arith.extui %0 : i1 to i32
    %c0_i32_0 = arith.constant 0 : i32
    %2 = arith.cmpi ne, %1, %c0_i32_0 : i32
    scf.if %2 {
      %cst_11 = arith.constant 0.000000e+00 : f32
      %14 = vector.broadcast %cst_11 : f32 to vector<16x128xf32>
      %c0_12 = arith.constant 0 : index
      %c0_13 = arith.constant 0 : index
      %15 = vector.load %arg7[%c0_12, %c0_13] : memref<16x128xf32, #tpu.memory_space<vmem>>, vector<16x128xf32>
      tpu.vector_store %arg7[%c0_12, %c0_13], %14 {strides = array<i32>} : memref<16x128xf32, #tpu.memory_space<vmem>>, vector<16x128xf32>,
    } else {
    }
    %c0 = arith.constant 0 : index
    %c0_1 = arith.constant 0 : index
    %3 = vector.load %arg3[%c0, %c0_1] : memref<16x128xbf16, #tpu.memory_space<vmem>>, vector<16x128xbf16>
    %cst = arith.constant 0.000000e+00 : bf16
    %4 = vector.broadcast %cst : bf16 to vector<16x128xbf16>
    %5 = arith.maximumf %3, %4 : vector<16x128xbf16>
    %c0_2 = arith.constant 0 : index
    %c0_3 = arith.constant 0 : index
    %6 = vector.load %arg7[%c0_2, %c0_3] : memref<16x128xf32, #tpu.memory_space<vmem>>, vector<16x128xf32>
    %c0_4 = arith.constant 0 : index
    %c0_5 = arith.constant 0 : index
    %7 = vector.load %arg4[%c0_4, %c0_5] : memref<128x128xbf16, #tpu.memory_space<vmem>>, vector<128x128xbf16>
    %cst_6 = arith.constant dense<0.000000e+00> : vector<16x128xf32>
    %8 = tpu.matmul %5, %7, %cst_6 {dimension_numbers = #tpu.dot_dimension_numbers<[1], [0], [0], [1], [0, 0, 1, 1], [], []>} : vector<16x128xbf16>, vector<128x128xbf16>, vector<16x128xf32> -> vector<16x128xf32>
    %9 = arith.addf %6, %8 : vector<16x128xf32>
    %c0_7 = arith.constant 0 : index
    %c0_8 = arith.constant 0 : index
    %10 = vector.load %arg7[%c0_7, %c0_8] : memref<16x128xf32, #tpu.memory_space<vmem>>, vector<16x128xf32>
    tpu.vector_store %arg7[%c0_7, %c0_8], %9 {strides = array<i32>} : memref<16x128xf32, #tpu.memory_space<vmem>>, vector<16x128xf32>,
    %c0_i32_9 = arith.constant 0 : i32
    %11 = arith.cmpi eq, %arg2, %c0_i32_9 : i32
    %12 = arith.extui %11 : i1 to i32
    %c0_i32_10 = arith.constant 0 : i32
    %13 = arith.cmpi ne, %12, %c0_i32_10 : i32
    scf.if %13 {
      %c0_11 = arith.constant 0 : index
      %c0_12 = arith.constant 0 : index
      %14 = vector.load %arg7[%c0_11, %c0_12] : memref<16x128xf32, #tpu.memory_space<vmem>>, vector<16x128xf32>
      %c0_13 = arith.constant 0 : index
      %c0_14 = arith.constant 0 : index
      %15 = vector.load %arg5[%c0_13, %c0_14] : memref<1x128xf32, #tpu.memory_space<vmem>>, vector<1x128xf32>
      %16 = vector.broadcast %15 : vector<1x128xf32> to vector<16x128xf32>
      %17 = arith.addf %14, %16 : vector<16x128xf32>
      %c0_15 = arith.constant 0 : index
      %c0_16 = arith.constant 0 : index
      %18 = vector.load %arg6[%c0_15, %c0_16] : memref<16x128xf32, #tpu.memory_space<vmem>>, vector<16x128xf32>
      tpu.vector_store %arg6[%c0_15, %c0_16], %17 {strides = array<i32>} : memref<16x128xf32, #tpu.memory_space<vmem>>, vector<16x128xf32>,
    } else {
    }
    return
  }
  func.func @transform_0(%arg0: i32, %arg1: i32, %arg2: i32) -> (i32, i32) {
    %c0_i32 = arith.constant 0 : i32
    return %arg0, %arg2 : i32, i32
  }
  func.func @transform_1(%arg0: i32, %arg1: i32, %arg2: i32) -> (i32, i32) {
    %c0_i32 = arith.constant 0 : i32
    return %arg2, %arg1 : i32, i32
  }
  func.func @transform_2(%arg0: i32, %arg1: i32, %arg2: i32) -> (i32, i32) {
    %c0_i32 = arith.constant 0 : i32
    %c0_i32_0 = arith.constant 0 : i32
    return %c0_i32, %arg1 : i32, i32
  }
  func.func @transform_3(%arg0: i32, %arg1: i32, %arg2: i32) -> (i32, i32) {
    %c0_i32 = arith.constant 0 : i32
    return %arg0, %arg1 : i32, i32
  }
}

</mosaic_0001>

<llo_original>
// kernel: dalle_encoder_forward.24
$region0: #{dalle_encoder_forward.24}
  #allocation0 [shape = 'u32[]', space=smem, size = 0x4, offset = 0x4, fixed_abs, tag = 'smem constant byte address 0x4 - core index']
  #allocation1 [shape = 'u32[72,128]{1,0:T(1,128)}', space=vmem, size = 0x9000, scoped, tag = 'internal scratch']
  #allocation2 [shape = 'f32[256,128]{1,0:T(8,128)}', space=vmem, size = 0x20000, scoped, tag = 'scratch operand']
  %s0 = inlined_call_operand.vmem [shape: bf16[512,256], index: 0, kind: input, shape index: {}]
  %s1 = inlined_call_operand.vmem [shape: bf16[256,128], index: 1, kind: input, shape index: {}]
  %s2 = inlined_call_operand.vmem [shape: f32[1,128], index: 2, kind: input, shape index: {}]
  %s3 = inlined_call_operand.vmem [shape: bf16[512,128], index: 3, kind: output, shape index: {}]
  %s4 = sld [smem:[#allocation0]]
  $region53: #{dalle_encoder_forward.24} parent=0
    _
  %s6 = ssub.s32 1, %s4
  %s7 = scalar_select 0, %s6, %s4
  loop: start=0, step=1, limit=4
  $region2: #{dalle_encoder_forward.24} parent=0 // loop_pre_header
    _
  $region3: #{dalle_encoder_forward.24} parent=0 // loop_header
    %s9 = sphi 0, %s13
    %p10 = scmp.ge.s32.totalorder %s9, 4
    %s16 = sphi 0, %s35
    %s17 = sphi 0, %s31
    %s18 = sphi 0, %s27
    %s19 = sphi 0, %s16
    %s20 = sphi 0, %s17
    %s21 = sphi 0, %s18
    %s22 = sphi 0, %s19
    %s23 = sphi 0, %s20
    %s24 = sphi 0, %s21
    %s40 = sphi 0, %s42
    %s43 = sphi 0, %s40
    %s44 = sphi 0, %s43
    %s60 = sphi 0, %s44
    %s68 = sphi 0, %s70
    %s71 = sphi 0, %s68
    %s72 = sphi 0, %s71
    %s88 = sphi 0, %s72
    %s94 = sphi 0, %s96
    %s97 = sphi 0, %s94
    %s98 = sphi 0, %s97
    %s114 = sphi 0, %s98
    %s122 = sphi 0, %s124
    %s125 = sphi 0, %s122
    %s126 = sphi 0, %s125
    %s142 = sphi 0, %s126
  $region4: #{dalle_encoder_forward.24} parent=0 // loop_header_branch
    %12 = sbr.rel (%p10) target = $region8
  $region5: #{dalle_encoder_forward.24} parent=0 // loop_body
    %s14 = ssub.s32 %s9, 1
    %s15 = ssub.s32 %s9, 2
    %s25 = sadd.s32 1, %s18
    %p26 = scmp.ge.s32.totalorder %s25, 1
    %s27 = scalar_select %p26, 0, %s25
    %s28 = sadd.s32 1, %s17
    %s29 = scalar_select %p26, %s28, %s17
    %p30 = scmp.ge.s32.totalorder %s29, 1
    %s31 = scalar_select %p30, 0, %s29
    %s32 = sadd.s32 1, %s16
    %s33 = scalar_select %p30, %s32, %s16
    %p34 = scmp.ge.s32.totalorder %s33, 2
    %s35 = scalar_select %p34, 0, %s33
    %s36 = ssub.s32 %s16, %s35
    %s37 = ssub.s32 %s18, %s27
    %s38 = sor.u32 %s36, %s37
    %p39 = scmp.eq.s32.totalorder %s38, 0
    %s41 = sadd.s32 %s40, 1
    %s42 = scalar_select %p39, %s40, %s41
    %p45 = pneg %p39
    %p46 = scmp.eq.s32.totalorder %s9, 1
    %p47 = por %p45, %p46
    %p48 = scmp.ne.s32.totalorder %s40, %s43
    %p49 = scmp.eq.s32.totalorder %s9, 0
    %p50 = por %p48, %p49
    %p51 = scmp.ne.s32.totalorder %s40, %s43
    %p52 = scmp.eq.s32.totalorder %s14, 1
    %p53 = por %p51, %p52
    %p54 = scmp.ne.s32.totalorder %s43, %s44
    %p55 = scmp.eq.s32.totalorder %s14, 0
    %p56 = por %p54, %p55
    %p57 = scmp.ne.s32.totalorder %s43, %s44
    %p58 = scmp.eq.s32.totalorder %s15, 1
    %p59 = por %p57, %p58
    %p61 = scmp.ne.s32.totalorder %s44, %s60
    %p62 = scmp.eq.s32.totalorder %s15, 0
    %p63 = por %p61, %p62
    %s64 = ssub.s32 %s18, %s27
    %s65 = ssub.s32 %s17, %s31
    %s66 = sor.u32 %s64, %s65
    %p67 = scmp.eq.s32.totalorder %s66, 0
    %s69 = sadd.s32 %s68, 1
    %s70 = scalar_select %p67, %s68, %s69
    %p73 = pneg %p67
    %p74 = scmp.eq.s32.totalorder %s9, 1
    %p75 = por %p73, %p74
    %p76 = scmp.ne.s32.totalorder %s68, %s71
    %p77 = scmp.eq.s32.totalorder %s9, 0
    %p78 = por %p76, %p77
    %p79 = scmp.ne.s32.totalorder %s68, %s71
    %p80 = scmp.eq.s32.totalorder %s14, 1
    %p81 = por %p79, %p80
    %p82 = scmp.ne.s32.totalorder %s71, %s72
    %p83 = scmp.eq.s32.totalorder %s14, 0
    %p84 = por %p82, %p83
    %p85 = scmp.ne.s32.totalorder %s71, %s72
    %p86 = scmp.eq.s32.totalorder %s15, 1
    %p87 = por %p85, %p86
    %p89 = scmp.ne.s32.totalorder %s72, %s88
    %p90 = scmp.eq.s32.totalorder %s15, 0
    %p91 = por %p89, %p90
    %s92 = ssub.s32 %s17, %s31
    %p93 = scmp.eq.s32.totalorder %s92, 0
    %s95 = sadd.s32 %s94, 1
    %s96 = scalar_select %p93, %s94, %s95
    %p99 = pneg %p93
    %p100 = scmp.eq.s32.totalorder %s9, 1
    %p101 = por %p99, %p100
    %p102 = scmp.ne.s32.totalorder %s94, %s97
    %p103 = scmp.eq.s32.totalorder %s9, 0
    %p104 = por %p102, %p103
    %p105 = scmp.ne.s32.totalorder %s94, %s97
    %p106 = scmp.eq.s32.totalorder %s14, 1
    %p107 = por %p105, %p106
    %p108 = scmp.ne.s32.totalorder %s97, %s98
    %p109 = scmp.eq.s32.totalorder %s14, 0
    %p110 = por %p108, %p109
    %p111 = scmp.ne.s32.totalorder %s97, %s98
    %p112 = scmp.eq.s32.totalorder %s15, 1
    %p113 = por %p111, %p112
    %p115 = scmp.ne.s32.totalorder %s98, %s114
    %p116 = scmp.eq.s32.totalorder %s15, 0
    %p117 = por %p115, %p116
    %s118 = ssub.s32 %s16, %s35
    %s119 = ssub.s32 %s17, %s31
    %s120 = sor.u32 %s118, %s119
    %p121 = scmp.eq.s32.totalorder %s120, 0
    %s123 = sadd.s32 %s122, 1
    %s124 = scalar_select %p121, %s122, %s123
    %p127 = pneg %p121
    %p128 = scmp.eq.s32.totalorder %s9, 1
    %p129 = por %p127, %p128
    %p130 = scmp.ne.s32.totalorder %s122, %s125
    %p131 = scmp.eq.s32.totalorder %s9, 0
    %p132 = por %p130, %p131
    %p133 = scmp.ne.s32.totalorder %s122, %s125
    %p134 = scmp.eq.s32.totalorder %s14, 1
    %p135 = por %p133, %p134
    %p136 = scmp.ne.s32.totalorder %s125, %s126
    %p137 = scmp.eq.s32.totalorder %s14, 0
    %p138 = por %p136, %p137
    %p139 = scmp.ne.s32.totalorder %s125, %s126
    %p140 = scmp.eq.s32.totalorder %s15, 1
    %p141 = por %p139, %p140
    %p143 = scmp.ne.s32.totalorder %s126, %s142
    %p144 = scmp.eq.s32.totalorder %s15, 0
    %p145 = por %p143, %p144
    %p146 = scmp.le.s32.totalorder 1, %s9
    %p147 = scmp.lt.s32.totalorder %s9, 3
    %p148 = pnand %p146, %p147
    %p149 = pneg %p148
    // Predicated region
    $region9: #{dalle_encoder_forward.24} parent=5 // pred_check
      _
    $region10: #{dalle_encoder_forward.24} parent=5 // pred_check_branch
      %151 = sbr.rel (%p148) target = $region12
    $region11: #{dalle_encoder_forward.24} parent=5 // pred_region
      %s152 = ssub.s32 %s9, 1
      // Predicated region
      $region13: #{dalle_encoder_forward.24} parent=11 // pred_check
        %p153 = pneg %p84
      $region14: #{dalle_encoder_forward.24} parent=11 // pred_check_branch
        %155 = sbr.rel (%p153) target = $region16
      $region15: #{dalle_encoder_forward.24} parent=11 // pred_region
        %s156 = smul.u32 32, %s21
        %p157 = scmp.lt.s32.totalorder %s156, 31
        %s158 = scalar_select %p157, %s156, 31
        %p159 = scmp.lt.s32.totalorder %s20, 0
        %s160 = scalar_select %p159, %s20, 0
        %s161 = sadd.s32 %s160, %s158
        %s162 = smul.addr %s161, 4
        %s163 = scalar_lea.vmem %s1, %s162
        %s164 = smul.u32 32, %s21
      $region16: #{dalle_encoder_forward.24} parent=11 // pred_fallthru
        _
      // Predicated region
      $region17: #{dalle_encoder_forward.24} parent=11 // pred_check
        %p165 = pneg %p110
      $region18: #{dalle_encoder_forward.24} parent=11 // pred_check_branch
        %167 = sbr.rel (%p165) target = $region20
      $region19: #{dalle_encoder_forward.24} parent=11 // pred_region
        %p168 = scmp.lt.s32.totalorder %s20, 0
        %s169 = scalar_select %p168, %s20, 0
        %s170 = scalar_lea.vmem %s2, %s169
      $region20: #{dalle_encoder_forward.24} parent=11 // pred_fallthru
        _
    $region12: #{dalle_encoder_forward.24} parent=5 // pred_fallthru
      _
    %p171 = scmp.lt.s32.totalorder %s9, 2
    // Predicated region
    $region21: #{dalle_encoder_forward.24} parent=5 // pred_check
      %p172 = pneg %p171
    $region22: #{dalle_encoder_forward.24} parent=5 // pred_check_branch
      %174 = sbr.rel (%p172) target = $region24
    $region23: #{dalle_encoder_forward.24} parent=5 // pred_region
      // Predicated region
      $region25: #{dalle_encoder_forward.24} parent=23 // pred_check
        %p175 = pneg %p50
      $region26: #{dalle_encoder_forward.24} parent=23 // pred_check_branch
        %177 = sbr.rel (%p175) target = $region28
      $region27: #{dalle_encoder_forward.24} parent=23 // pred_region
        %s178 = smul.u32 32, %s16
        %s179 = smul.u32 2, %s18
        %p180 = scmp.lt.s32.totalorder %s178, 63
        %s181 = scalar_select %p180, %s178, 63
        %p182 = scmp.lt.s32.totalorder %s179, 1
        %s183 = scalar_select %p182, %s179, 1
        %s184 = smul.addr %s181, 2
        %s185 = sadd.s32 %s183, %s184
        %s186 = smul.addr %s185, 4
        %s187 = scalar_lea.vmem %s0, %s186
        %s188 = smul.u32 32, %s16
        %s189 = smul.u32 2, %s18
      $region28: #{dalle_encoder_forward.24} parent=23 // pred_fallthru
        _
    $region24: #{dalle_encoder_forward.24} parent=5 // pred_fallthru
      _
    %p190 = scmp.le.s32.totalorder 1, %s9
    %p191 = scmp.lt.s32.totalorder %s9, 3
    %p192 = pnand %p190, %p191
    %p193 = pneg %p192
    // Predicated region
    $region29: #{dalle_encoder_forward.24} parent=5 // pred_check
      _
    $region30: #{dalle_encoder_forward.24} parent=5 // pred_check_branch
      %195 = sbr.rel (%p192) target = $region32
    $region31: #{dalle_encoder_forward.24} parent=5 // pred_region
      %s196 = ssub.s32 %s9, 1
      %s197 = smul.u32 32, %s19
      %s198 = smul.u32 2, %s21
      %p199 = scmp.lt.s32.totalorder %s197, 63
      %s200 = scalar_select %p199, %s197, 63
      %p201 = scmp.lt.s32.totalorder %s198, 1
      %s202 = scalar_select %p201, %s198, 1
      %s203 = smul.addr %s200, 2
      %s204 = sadd.s32 %s202, %s203
      %s205 = smul.addr %s204, 4
      %s206 = scalar_lea.vmem %s0, %s205
      %p207 = pneg %p56
      %p208 = pneg %p53
      %s209 = smul.u32 32, %s21
      %p210 = scmp.lt.s32.totalorder %s209, 31
      %s211 = scalar_select %p210, %s209, 31
      %p212 = scmp.lt.s32.totalorder %s20, 0
      %s213 = scalar_select %p212, %s20, 0
      %s214 = sadd.s32 %s213, %s211
      %s215 = smul.addr %s214, 4
      %s216 = scalar_lea.vmem %s1, %s215
      %p217 = pneg %p84
      %p218 = pneg %p81
      %p219 = scmp.lt.s32.totalorder %s20, 0
      %s220 = scalar_select %p219, %s20, 0
      %s221 = scalar_lea.vmem %s2, %s220
      %p222 = pneg %p110
      %p223 = pneg %p107
      %p224 = pneg %p138
      %p225 = pneg %p135
      %s226 = smul.u32 32, %s19
      %p227 = scmp.lt.s32.totalorder %s226, 63
      %s228 = scalar_select %p227, %s226, 63
      %p229 = scmp.lt.s32.totalorder %s20, 0
      %s230 = scalar_select %p229, %s20, 0
      %s231 = sadd.s32 %s230, %s228
      %s232 = smul.addr %s231, 4
      %s233 = scalar_lea.vmem %s3, %s232
      %s234 = smul.u32 32, %s19
      %s235 = smul.u32 2, %s21
      %p236 = scmp.lt.s32.totalorder %s234, 63
      %s237 = scalar_select %p236, %s234, 63
      %p238 = scmp.lt.s32.totalorder %s235, 1
      %s239 = scalar_select %p238, %s235, 1
      %s240 = smul.addr %s237, 2
      %s241 = sadd.s32 %s239, %s240
      %s242 = smul.addr %s241, 4
      %s243 = scalar_lea.vmem %s0, %s242
      %s244 = smul.u32 32, %s19
      %s245 = smul.u32 2, %s21
      %s246 = smul.u32 32, %s21
      %p247 = scmp.lt.s32.totalorder %s246, 31
      %s248 = scalar_select %p247, %s246, 31
      %p249 = scmp.lt.s32.totalorder %s20, 0
      %s250 = scalar_select %p249, %s20, 0
      %s251 = sadd.s32 %s250, %s248
      %s252 = smul.addr %s251, 4
      %s253 = scalar_lea.vmem %s1, %s252
      %s254 = smul.u32 32, %s21
      %p255 = scmp.lt.s32.totalorder %s20, 0
      %s256 = scalar_select %p255, %s20, 0
      %s257 = scalar_lea.vmem %s2, %s256
      %s258 = smul.u32 32, %s19
      %p259 = scmp.lt.s32.totalorder %s258, 63
      %s260 = scalar_select %p259, %s258, 63
      %p261 = scmp.lt.s32.totalorder %s20, 0
      %s262 = scalar_select %p261, %s20, 0
      %s263 = sadd.s32 %s262, %s260
      %s264 = smul.addr %s263, 4
      %s265 = scalar_lea.vmem %s3, %s264
      %s266 = smul.u32 32, %s19
      %p267 = scmp.eq.s32.totalorder %s21, 0
      // Predicated region
      $region33: #{dalle_encoder_forward.24} parent=31 // pred_check
        %p268 = pneg %p267
      $region34: #{dalle_encoder_forward.24} parent=31 // pred_check_branch
        %270 = sbr.rel (%p268) target = $region36
      $region35: #{dalle_encoder_forward.24} parent=31 // pred_region
        %271 = vst [vmem:[#allocation2] sm:$0xff] 0.0
        %272 = vst [vmem:[#allocation2 + $0x8] sm:$0xff] 0.0
        %273 = vst [vmem:[#allocation2 + $0x10] sm:$0xff] 0.0
        %274 = vst [vmem:[#allocation2 + $0x18] sm:$0xff] 0.0
        %275 = vst [vmem:[#allocation2 + $0x20] sm:$0xff] 0.0
        %276 = vst [vmem:[#allocation2 + $0x28] sm:$0xff] 0.0
        %277 = vst [vmem:[#allocation2 + $0x30] sm:$0xff] 0.0
        %278 = vst [vmem:[#allocation2 + $0x38] sm:$0xff] 0.0
        %279 = vst [vmem:[#allocation2 + $0x40] sm:$0xff] 0.0
        %280 = vst [vmem:[#allocation2 + $0x48] sm:$0xff] 0.0
        %281 = vst [vmem:[#allocation2 + $0x50] sm:$0xff] 0.0
        %282 = vst [vmem:[#allocation2 + $0x58] sm:$0xff] 0.0
        %283 = vst [vmem:[#allocation2 + $0x60] sm:$0xff] 0.0
        %284 = vst [vmem:[#allocation2 + $0x68] sm:$0xff] 0.0
        %285 = vst [vmem:[#allocation2 + $0x70] sm:$0xff] 0.0
        %286 = vst [vmem:[#allocation2 + $0x78] sm:$0xff] 0.0
        %287 = vst [vmem:[#allocation2 + $0x80] sm:$0xff] 0.0
        %288 = vst [vmem:[#allocation2 + $0x88] sm:$0xff] 0.0
        %289 = vst [vmem:[#allocation2 + $0x90] sm:$0xff] 0.0
        %290 = vst [vmem:[#allocation2 + $0x98] sm:$0xff] 0.0
        %291 = vst [vmem:[#allocation2 + $0xa0] sm:$0xff] 0.0
        %292 = vst [vmem:[#allocation2 + $0xa8] sm:$0xff] 0.0
        %293 = vst [vmem:[#allocation2 + $0xb0] sm:$0xff] 0.0
        %294 = vst [vmem:[#allocation2 + $0xb8] sm:$0xff] 0.0
        %295 = vst [vmem:[#allocation2 + $0xc0] sm:$0xff] 0.0
        %296 = vst [vmem:[#allocation2 + $0xc8] sm:$0xff] 0.0
        %297 = vst [vmem:[#allocation2 + $0xd0] sm:$0xff] 0.0
        %298 = vst [vmem:[#allocation2 + $0xd8] sm:$0xff] 0.0
        %299 = vst [vmem:[#allocation2 + $0xe0] sm:$0xff] 0.0
        %300 = vst [vmem:[#allocation2 + $0xe8] sm:$0xff] 0.0
        %301 = vst [vmem:[#allocation2 + $0xf0] sm:$0xff] 0.0
        %302 = vst [vmem:[#allocation2 + $0xf8] sm:$0xff] 0.0
      $region36: #{dalle_encoder_forward.24} parent=31 // pred_fallthru
        _
      %v303 = vld [vmem:[%s243] sm:$0xff]
      %v304 = vld [vmem:[%s243 + $0x8] sm:$0xff]
      %v305 = vld [vmem:[%s243 + $0x10] sm:$0xff]
      %v306 = vld [vmem:[%s243 + $0x18] sm:$0xff]
      %v307 = vld [vmem:[%s243 + $0x20] sm:$0xff]
      %v308 = vld [vmem:[%s243 + $0x28] sm:$0xff]
      %v309 = vld [vmem:[%s243 + $0x30] sm:$0xff]
      %v310 = vld [vmem:[%s243 + $0x38] sm:$0xff]
      %v311 = vld [vmem:[%s243 + $0x40] sm:$0xff]
      %v312 = vld [vmem:[%s243 + $0x48] sm:$0xff]
      %v313 = vld [vmem:[%s243 + $0x50] sm:$0xff]
      %v314 = vld [vmem:[%s243 + $0x58] sm:$0xff]
      %v315 = vld [vmem:[%s243 + $0x60] sm:$0xff]
      %v316 = vld [vmem:[%s243 + $0x68] sm:$0xff]
      %v317 = vld [vmem:[%s243 + $0x70] sm:$0xff]
      %v318 = vld [vmem:[%s243 + $0x78] sm:$0xff]
      %v319 = vld [vmem:[%s243 + $0x80] sm:$0xff]
      %v320 = vld [vmem:[%s243 + $0x88] sm:$0xff]
      %v321 = vld [vmem:[%s243 + $0x90] sm:$0xff]
      %v322 = vld [vmem:[%s243 + $0x98] sm:$0xff]
      %v323 = vld [vmem:[%s243 + $0xa0] sm:$0xff]
      %v324 = vld [vmem:[%s243 + $0xa8] sm:$0xff]
      %v325 = vld [vmem:[%s243 + $0xb0] sm:$0xff]
      %v326 = vld [vmem:[%s243 + $0xb8] sm:$0xff]
      %v327 = vld [vmem:[%s243 + $0xc0] sm:$0xff]
      %v328 = vld [vmem:[%s243 + $0xc8] sm:$0xff]
      %v329 = vld [vmem:[%s243 + $0xd0] sm:$0xff]
      %v330 = vld [vmem:[%s243 + $0xd8] sm:$0xff]
      %v331 = vld [vmem:[%s243 + $0xe0] sm:$0xff]
      %v332 = vld [vmem:[%s243 + $0xe8] sm:$0xff]
      %v333 = vld [vmem:[%s243 + $0xf0] sm:$0xff]
      %v334 = vld [vmem:[%s243 + $0xf8] sm:$0xff]
      %v335 = vld [vmem:[#allocation2] sm:$0xff]
      %v336 = vld [vmem:[#allocation2 + $0x8] sm:$0xff]
      %v337 = vld [vmem:[#allocation2 + $0x10] sm:$0xff]
      %v338 = vld [vmem:[#allocation2 + $0x18] sm:$0xff]
      %v339 = vld [vmem:[#allocation2 + $0x20] sm:$0xff]
      %v340 = vld [vmem:[#allocation2 + $0x28] sm:$0xff]
      %v341 = vld [vmem:[#allocation2 + $0x30] sm:$0xff]
      %v342 = vld [vmem:[#allocation2 + $0x38] sm:$0xff]
      %v343 = vld [vmem:[#allocation2 + $0x40] sm:$0xff]
      %v344 = vld [vmem:[#allocation2 + $0x48] sm:$0xff]
      %v345 = vld [vmem:[#allocation2 + $0x50] sm:$0xff]
      %v346 = vld [vmem:[#allocation2 + $0x58] sm:$0xff]
      %v347 = vld [vmem:[#allocation2 + $0x60] sm:$0xff]
      %v348 = vld [vmem:[#allocation2 + $0x68] sm:$0xff]
      %v349 = vld [vmem:[#allocation2 + $0x70] sm:$0xff]
      %v350 = vld [vmem:[#allocation2 + $0x78] sm:$0xff]
      %v351 = vld [vmem:[#allocation2 + $0x80] sm:$0xff]
      %v352 = vld [vmem:[#allocation2 + $0x88] sm:$0xff]
      %v353 = vld [vmem:[#allocation2 + $0x90] sm:$0xff]
      %v354 = vld [vmem:[#allocation2 + $0x98] sm:$0xff]
      %v355 = vld [vmem:[#allocation2 + $0xa0] sm:$0xff]
      %v356 = vld [vmem:[#allocation2 + $0xa8] sm:$0xff]
      %v357 = vld [vmem:[#allocation2 + $0xb0] sm:$0xff]
      %v358 = vld [vmem:[#allocation2 + $0xb8] sm:$0xff]
      %v359 = vld [vmem:[#allocation2 + $0xc0] sm:$0xff]
      %v360 = vld [vmem:[#allocation2 + $0xc8] sm:$0xff]
      %v361 = vld [vmem:[#allocation2 + $0xd0] sm:$0xff]
      %v362 = vld [vmem:[#allocation2 + $0xd8] sm:$0xff]
      %v363 = vld [vmem:[#allocation2 + $0xe0] sm:$0xff]
      %v364 = vld [vmem:[#allocation2 + $0xe8] sm:$0xff]
      %v365 = vld [vmem:[#allocation2 + $0xf0] sm:$0xff]
      %v366 = vld [vmem:[#allocation2 + $0xf8] sm:$0xff]
      %v367 = vld [vmem:[%s253] sm:$0xf]
      %v368 = vld [vmem:[%s253 + $0x4] sm:$0xf]
      %v369 = vld [vmem:[%s253 + $0x8] sm:$0xf]
      %v370 = vld [vmem:[%s253 + $0xc] sm:$0xf]
      %v371 = vld [vmem:[%s253 + $0x10] sm:$0xf]
      %v372 = vld [vmem:[%s253 + $0x14] sm:$0xf]
      %v373 = vld [vmem:[%s253 + $0x18] sm:$0xf]
      %v374 = vld [vmem:[%s253 + $0x1c] sm:$0xf]
      %v375 = vld [vmem:[%s253 + $0x20] sm:$0xf]
      %v376 = vld [vmem:[%s253 + $0x24] sm:$0xf]
      %v377 = vld [vmem:[%s253 + $0x28] sm:$0xf]
      %v378 = vld [vmem:[%s253 + $0x2c] sm:$0xf]
      %v379 = vld [vmem:[%s253 + $0x30] sm:$0xf]
      %v380 = vld [vmem:[%s253 + $0x34] sm:$0xf]
      %v381 = vld [vmem:[%s253 + $0x38] sm:$0xf]
      %v382 = vld [vmem:[%s253 + $0x3c] sm:$0xf]
      %v383 = vld [vmem:[%s253 + $0x40] sm:$0xf]
      %v384 = vld [vmem:[%s253 + $0x44] sm:$0xf]
      %v385 = vld [vmem:[%s253 + $0x48] sm:$0xf]
      %v386 = vld [vmem:[%s253 + $0x4c] sm:$0xf]
      %v387 = vld [vmem:[%s253 + $0x50] sm:$0xf]
      %v388 = vld [vmem:[%s253 + $0x54] sm:$0xf]
      %v389 = vld [vmem:[%s253 + $0x58] sm:$0xf]
      %v390 = vld [vmem:[%s253 + $0x5c] sm:$0xf]
      %v391 = vld [vmem:[%s253 + $0x60] sm:$0xf]
      %v392 = vld [vmem:[%s253 + $0x64] sm:$0xf]
      %v393 = vld [vmem:[%s253 + $0x68] sm:$0xf]
      %v394 = vld [vmem:[%s253 + $0x6c] sm:$0xf]
      %v395 = vld [vmem:[%s253 + $0x70] sm:$0xf]
      %v396 = vld [vmem:[%s253 + $0x74] sm:$0xf]
      %v397 = vld [vmem:[%s253 + $0x78] sm:$0xf]
      %v398 = vld [vmem:[%s253 + $0x7c] sm:$0xf]
      %v431 = vunpack.c.l.b16 %v303
      %v432 = vunpack.c.h.b16 %v303
      %v433 = vunpack.c.l.b16 %v304
      %v434 = vunpack.c.h.b16 %v304
      %v435 = vunpack.c.l.b16 %v305
      %v436 = vunpack.c.h.b16 %v305
      %v437 = vunpack.c.l.b16 %v306
      %v438 = vunpack.c.h.b16 %v306
      %v439 = vunpack.c.l.b16 %v307
      %v440 = vunpack.c.h.b16 %v307
      %v441 = vunpack.c.l.b16 %v308
      %v442 = vunpack.c.h.b16 %v308
      %v443 = vunpack.c.l.b16 %v309
      %v444 = vunpack.c.h.b16 %v309
      %v445 = vunpack.c.l.b16 %v310
      %v446 = vunpack.c.h.b16 %v310
      %v447 = vunpack.c.l.b16 %v311
      %v448 = vunpack.c.h.b16 %v311
      %v449 = vunpack.c.l.b16 %v312
      %v450 = vunpack.c.h.b16 %v312
      %v451 = vunpack.c.l.b16 %v313
      %v452 = vunpack.c.h.b16 %v313
      %v453 = vunpack.c.l.b16 %v314
      %v454 = vunpack.c.h.b16 %v314
      %v455 = vunpack.c.l.b16 %v315
      %v456 = vunpack.c.h.b16 %v315
      %v457 = vunpack.c.l.b16 %v316
      %v458 = vunpack.c.h.b16 %v316
      %v459 = vunpack.c.l.b16 %v317
      %v460 = vunpack.c.h.b16 %v317
      %v461 = vunpack.c.l.b16 %v318
      %v462 = vunpack.c.h.b16 %v318
      %v463 = vunpack.c.l.b16 %v319
      %v464 = vunpack.c.h.b16 %v319
      %v465 = vunpack.c.l.b16 %v320
      %v466 = vunpack.c.h.b16 %v320
      %v467 = vunpack.c.l.b16 %v321
      %v468 = vunpack.c.h.b16 %v321
      %v469 = vunpack.c.l.b16 %v322
      %v470 = vunpack.c.h.b16 %v322
      %v471 = vunpack.c.l.b16 %v323
      %v472 = vunpack.c.h.b16 %v323
      %v473 = vunpack.c.l.b16 %v324
      %v474 = vunpack.c.h.b16 %v324
      %v475 = vunpack.c.l.b16 %v325
      %v476 = vunpack.c.h.b16 %v325
      %v477 = vunpack.c.l.b16 %v326
      %v478 = vunpack.c.h.b16 %v326
      %v479 = vunpack.c.l.b16 %v327
      %v480 = vunpack.c.h.b16 %v327
      %v481 = vunpack.c.l.b16 %v328
      %v482 = vunpack.c.h.b16 %v328
      %v483 = vunpack.c.l.b16 %v329
      %v484 = vunpack.c.h.b16 %v329
      %v485 = vunpack.c.l.b16 %v330
      %v486 = vunpack.c.h.b16 %v330
      %v487 = vunpack.c.l.b16 %v331
      %v488 = vunpack.c.h.b16 %v331
      %v489 = vunpack.c.l.b16 %v332
      %v490 = vunpack.c.h.b16 %v332
      %v491 = vunpack.c.l.b16 %v333
      %v492 = vunpack.c.h.b16 %v333
      %v493 = vunpack.c.l.b16 %v334
      %v494 = vunpack.c.h.b16 %v334
      %v495 = vpack.c.b16 %v433, %v431
      %v496 = vpack.c.b16 %v434, %v432
      %v497 = vpack.c.b16 %v437, %v435
      %v498 = vpack.c.b16 %v438, %v436
      %v499 = vpack.c.b16 %v441, %v439
      %v500 = vpack.c.b16 %v442, %v440
      %v501 = vpack.c.b16 %v445, %v443
      %v502 = vpack.c.b16 %v446, %v444
      %v503 = vpack.c.b16 %v449, %v447
      %v504 = vpack.c.b16 %v450, %v448
      %v505 = vpack.c.b16 %v453, %v451
      %v506 = vpack.c.b16 %v454, %v452
      %v507 = vpack.c.b16 %v457, %v455
      %v508 = vpack.c.b16 %v458, %v456
      %v509 = vpack.c.b16 %v461, %v459
      %v510 = vpack.c.b16 %v462, %v460
      %v511 = vpack.c.b16 %v465, %v463
      %v512 = vpack.c.b16 %v466, %v464
      %v513 = vpack.c.b16 %v469, %v467
      %v514 = vpack.c.b16 %v470, %v468
      %v515 = vpack.c.b16 %v473, %v471
      %v516 = vpack.c.b16 %v474, %v472
      %v517 = vpack.c.b16 %v477, %v475
      %v518 = vpack.c.b16 %v478, %v476
      %v519 = vpack.c.b16 %v481, %v479
      %v520 = vpack.c.b16 %v482, %v480
      %v521 = vpack.c.b16 %v485, %v483
      %v522 = vpack.c.b16 %v486, %v484
      %v523 = vpack.c.b16 %v489, %v487
      %v524 = vpack.c.b16 %v490, %v488
      %v525 = vpack.c.b16 %v493, %v491
      %v526 = vpack.c.b16 %v494, %v492
      %v591 = vunpack.c.l.b16 %v367
      %v592 = vunpack.c.l.b16 %v368
      %v593 = vunpack.c.l.b16 %v369
      %v594 = vunpack.c.l.b16 %v370
      %v595 = vunpack.c.l.b16 %v371
      %v596 = vunpack.c.l.b16 %v372
      %v597 = vunpack.c.l.b16 %v373
      %v598 = vunpack.c.l.b16 %v374
      %v599 = vunpack.c.l.b16 %v375
      %v600 = vunpack.c.l.b16 %v376
      %v601 = vunpack.c.l.b16 %v377
      %v602 = vunpack.c.l.b16 %v378
      %v603 = vunpack.c.l.b16 %v379
      %v604 = vunpack.c.l.b16 %v380
      %v605 = vunpack.c.l.b16 %v381
      %v606 = vunpack.c.l.b16 %v382
      %v607 = vunpack.c.l.b16 %v383
      %v608 = vunpack.c.l.b16 %v384
      %v609 = vunpack.c.l.b16 %v385
      %v610 = vunpack.c.l.b16 %v386
      %v611 = vunpack.c.l.b16 %v387
      %v612 = vunpack.c.l.b16 %v388
      %v613 = vunpack.c.l.b16 %v389
      %v614 = vunpack.c.l.b16 %v390
      %v615 = vunpack.c.l.b16 %v391
      %v616 = vunpack.c.l.b16 %v392
      %v617 = vunpack.c.l.b16 %v393
      %v618 = vunpack.c.l.b16 %v394
      %v619 = vunpack.c.l.b16 %v395
      %v620 = vunpack.c.l.b16 %v396
      %v621 = vunpack.c.l.b16 %v397
      %v622 = vunpack.c.l.b16 %v398
      %v623 = vpack.c.b16 %v592, %v591
      %v624 = vpack.c.b16 %v594, %v593
      %v625 = vpack.c.b16 %v596, %v595
      %v626 = vpack.c.b16 %v598, %v597
      %v627 = vpack.c.b16 %v600, %v599
      %v628 = vpack.c.b16 %v602, %v601
      %v629 = vpack.c.b16 %v604, %v603
      %v630 = vpack.c.b16 %v606, %v605
      %v631 = vpack.c.b16 %v608, %v607
      %v632 = vpack.c.b16 %v610, %v609
      %v633 = vpack.c.b16 %v612, %v611
      %v634 = vpack.c.b16 %v614, %v613
      %v635 = vpack.c.b16 %v616, %v615
      %v636 = vpack.c.b16 %v618, %v617
      %v637 = vpack.c.b16 %v620, %v619
      %v638 = vpack.c.b16 %v622, %v621
      %655 = vmatpush.bf16.msra.mxu0 %v630
      %656 = vmatpush.bf16.msra.mxu0 %v629
      %657 = vmatpush.bf16.msra.mxu0 %v628
      %658 = vmatpush.bf16.msra.mxu0 %v627
      %659 = vmatpush.bf16.msra.mxu0 %v626
      %660 = vmatpush.bf16.msra.mxu0 %v625
      %661 = vmatpush.bf16.msra.mxu0 %v624
      %662 = vmatpush.bf16.msra.mxu0 %v623
      %663 = vmatmul.bf16.gmra.mxu0 %v495
      %v664 = vpop.f32.mrf.mxu0
      %v665 = vadd.f32 0.0, %v664
      %v666 = vpop.f32.mrf.mxu0
      %v667 = vadd.f32 0.0, %v666
      %668 = vmatmul.bf16.gmra.mxu0 %v497
      %v669 = vpop.f32.mrf.mxu0
      %v670 = vadd.f32 0.0, %v669
      %v671 = vpop.f32.mrf.mxu0
      %v672 = vadd.f32 0.0, %v671
      %673 = vmatmul.bf16.gmra.mxu0 %v499
      %v674 = vpop.f32.mrf.mxu0
      %v675 = vadd.f32 0.0, %v674
      %v676 = vpop.f32.mrf.mxu0
      %v677 = vadd.f32 0.0, %v676
      %678 = vmatmul.bf16.gmra.mxu0 %v501
      %v679 = vpop.f32.mrf.mxu0
      %v680 = vadd.f32 0.0, %v679
      %v681 = vpop.f32.mrf.mxu0
      %v682 = vadd.f32 0.0, %v681
      %683 = vmatmul.bf16.gmra.mxu0 %v503
      %v684 = vpop.f32.mrf.mxu0
      %v685 = vadd.f32 0.0, %v684
      %v686 = vpop.f32.mrf.mxu0
      %v687 = vadd.f32 0.0, %v686
      %688 = vmatmul.bf16.gmra.mxu0 %v505
      %v689 = vpop.f32.mrf.mxu0
      %v690 = vadd.f32 0.0, %v689
      %v691 = vpop.f32.mrf.mxu0
      %v692 = vadd.f32 0.0, %v691
      %693 = vmatmul.bf16.gmra.mxu0 %v507
      %v694 = vpop.f32.mrf.mxu0
      %v695 = vadd.f32 0.0, %v694
      %v696 = vpop.f32.mrf.mxu0
      %v697 = vadd.f32 0.0, %v696
      %698 = vmatmul.bf16.gmra.mxu0 %v509
      %v699 = vpop.f32.mrf.mxu0
      %v700 = vadd.f32 0.0, %v699
      %v701 = vpop.f32.mrf.mxu0
      %v702 = vadd.f32 0.0, %v701
      %703 = vmatmul.bf16.gmra.mxu0 %v511
      %v704 = vpop.f32.mrf.mxu0
      %v705 = vadd.f32 0.0, %v704
      %v706 = vpop.f32.mrf.mxu0
      %v707 = vadd.f32 0.0, %v706
      %708 = vmatmul.bf16.gmra.mxu0 %v513
      %v709 = vpop.f32.mrf.mxu0
      %v710 = vadd.f32 0.0, %v709
      %v711 = vpop.f32.mrf.mxu0
      %v712 = vadd.f32 0.0, %v711
      %713 = vmatmul.bf16.gmra.mxu0 %v515
      %v714 = vpop.f32.mrf.mxu0
      %v715 = vadd.f32 0.0, %v714
      %v716 = vpop.f32.mrf.mxu0
      %v717 = vadd.f32 0.0, %v716
      %718 = vmatmul.bf16.gmra.mxu0 %v517
      %v719 = vpop.f32.mrf.mxu0
      %v720 = vadd.f32 0.0, %v719
      %v721 = vpop.f32.mrf.mxu0
      %v722 = vadd.f32 0.0, %v721
      %723 = vmatmul.bf16.gmra.mxu0 %v519
      %v724 = vpop.f32.mrf.mxu0
      %v725 = vadd.f32 0.0, %v724
      %v726 = vpop.f32.mrf.mxu0
      %v727 = vadd.f32 0.0, %v726
      %728 = vmatmul.bf16.gmra.mxu0 %v521
      %v729 = vpop.f32.mrf.mxu0
      %v730 = vadd.f32 0.0, %v729
      %v731 = vpop.f32.mrf.mxu0
      %v732 = vadd.f32 0.0, %v731
      %733 = vmatmul.bf16.gmra.mxu0 %v523
      %v734 = vpop.f32.mrf.mxu0
      %v735 = vadd.f32 0.0, %v734
      %v736 = vpop.f32.mrf.mxu0
      %v737 = vadd.f32 0.0, %v736
      %738 = vmatmul.bf16.gmra.mxu0 %v525
      %v739 = vpop.f32.mrf.mxu0
      %v740 = vadd.f32 0.0, %v739
      %v741 = vpop.f32.mrf.mxu0
      %v742 = vadd.f32 0.0, %v741
      %743 = vdwg.mxu0
      %744 = vmatpush.bf16.msra.mxu0 %v638
      %745 = vmatpush.bf16.msra.mxu0 %v637
      %746 = vmatpush.bf16.msra.mxu0 %v636
      %747 = vmatpush.bf16.msra.mxu0 %v635
      %748 = vmatpush.bf16.msra.mxu0 %v634
      %749 = vmatpush.bf16.msra.mxu0 %v633
      %750 = vmatpush.bf16.msra.mxu0 %v632
      %751 = vmatpush.bf16.msra.mxu0 %v631
      %752 = vmatmul.bf16.gmra.mxu0 %v496
      %v753 = vpop.f32.mrf.mxu0
      %v754 = vadd.f32 %v665, %v753
      %v755 = vpop.f32.mrf.mxu0
      %v756 = vadd.f32 %v667, %v755
      %757 = vmatmul.bf16.gmra.mxu0 %v498
      %v758 = vpop.f32.mrf.mxu0
      %v759 = vadd.f32 %v670, %v758
      %v760 = vpop.f32.mrf.mxu0
      %v761 = vadd.f32 %v672, %v760
      %762 = vmatmul.bf16.gmra.mxu0 %v500
      %v763 = vpop.f32.mrf.mxu0
      %v764 = vadd.f32 %v675, %v763
      %v765 = vpop.f32.mrf.mxu0
      %v766 = vadd.f32 %v677, %v765
      %767 = vmatmul.bf16.gmra.mxu0 %v502
      %v768 = vpop.f32.mrf.mxu0
      %v769 = vadd.f32 %v680, %v768
      %v770 = vpop.f32.mrf.mxu0
      %v771 = vadd.f32 %v682, %v770
      %772 = vmatmul.bf16.gmra.mxu0 %v504
      %v773 = vpop.f32.mrf.mxu0
      %v774 = vadd.f32 %v685, %v773
      %v775 = vpop.f32.mrf.mxu0
      %v776 = vadd.f32 %v687, %v775
      %777 = vmatmul.bf16.gmra.mxu0 %v506
      %v778 = vpop.f32.mrf.mxu0
      %v779 = vadd.f32 %v690, %v778
      %v780 = vpop.f32.mrf.mxu0
      %v781 = vadd.f32 %v692, %v780
      %782 = vmatmul.bf16.gmra.mxu0 %v508
      %v783 = vpop.f32.mrf.mxu0
      %v784 = vadd.f32 %v695, %v783
      %v785 = vpop.f32.mrf.mxu0
      %v786 = vadd.f32 %v697, %v785
      %787 = vmatmul.bf16.gmra.mxu0 %v510
      %v788 = vpop.f32.mrf.mxu0
      %v789 = vadd.f32 %v700, %v788
      %v790 = vpop.f32.mrf.mxu0
      %v791 = vadd.f32 %v702, %v790
      %792 = vmatmul.bf16.gmra.mxu0 %v512
      %v793 = vpop.f32.mrf.mxu0
      %v794 = vadd.f32 %v705, %v793
      %v795 = vpop.f32.mrf.mxu0
      %v796 = vadd.f32 %v707, %v795
      %797 = vmatmul.bf16.gmra.mxu0 %v514
      %v798 = vpop.f32.mrf.mxu0
      %v799 = vadd.f32 %v710, %v798
      %v800 = vpop.f32.mrf.mxu0
      %v801 = vadd.f32 %v712, %v800
      %802 = vmatmul.bf16.gmra.mxu0 %v516
      %v803 = vpop.f32.mrf.mxu0
      %v804 = vadd.f32 %v715, %v803
      %v805 = vpop.f32.mrf.mxu0
      %v806 = vadd.f32 %v717, %v805
      %807 = vmatmul.bf16.gmra.mxu0 %v518
      %v808 = vpop.f32.mrf.mxu0
      %v809 = vadd.f32 %v720, %v808
      %v810 = vpop.f32.mrf.mxu0
      %v811 = vadd.f32 %v722, %v810
      %812 = vmatmul.bf16.gmra.mxu0 %v520
      %v813 = vpop.f32.mrf.mxu0
      %v814 = vadd.f32 %v725, %v813
      %v815 = vpop.f32.mrf.mxu0
      %v816 = vadd.f32 %v727, %v815
      %817 = vmatmul.bf16.gmra.mxu0 %v522
      %v818 = vpop.f32.mrf.mxu0
      %v819 = vadd.f32 %v730, %v818
      %v820 = vpop.f32.mrf.mxu0
      %v821 = vadd.f32 %v732, %v820
      %822 = vmatmul.bf16.gmra.mxu0 %v524
      %v823 = vpop.f32.mrf.mxu0
      %v824 = vadd.f32 %v735, %v823
      %v825 = vpop.f32.mrf.mxu0
      %v826 = vadd.f32 %v737, %v825
      %827 = vmatmul.bf16.gmra.mxu0 %v526
      %v828 = vpop.f32.mrf.mxu0
      %v829 = vadd.f32 %v740, %v828
      %v830 = vpop.f32.mrf.mxu0
      %v831 = vadd.f32 %v742, %v830
      %832 = vdwg.mxu0
      %v833 = vadd.f32 %v335, %v754
      %v834 = vadd.f32 %v336, %v756
      %v835 = vadd.f32 %v337, %v759
      %v836 = vadd.f32 %v338, %v761
      %v837 = vadd.f32 %v339, %v764
      %v838 = vadd.f32 %v340, %v766
      %v839 = vadd.f32 %v341, %v769
      %v840 = vadd.f32 %v342, %v771
      %v841 = vadd.f32 %v343, %v774
      %v842 = vadd.f32 %v344, %v776
      %v843 = vadd.f32 %v345, %v779
      %v844 = vadd.f32 %v346, %v781
      %v845 = vadd.f32 %v347, %v784
      %v846 = vadd.f32 %v348, %v786
      %v847 = vadd.f32 %v349, %v789
      %v848 = vadd.f32 %v350, %v791
      %v849 = vadd.f32 %v351, %v794
      %v850 = vadd.f32 %v352, %v796
      %v851 = vadd.f32 %v353, %v799
      %v852 = vadd.f32 %v354, %v801
      %v853 = vadd.f32 %v355, %v804
      %v854 = vadd.f32 %v356, %v806
      %v855 = vadd.f32 %v357, %v809
      %v856 = vadd.f32 %v358, %v811
      %v857 = vadd.f32 %v359, %v814
      %v858 = vadd.f32 %v360, %v816
      %v859 = vadd.f32 %v361, %v819
      %v860 = vadd.f32 %v362, %v821
      %v861 = vadd.f32 %v363, %v824
      %v862 = vadd.f32 %v364, %v826
      %v863 = vadd.f32 %v365, %v829
      %v864 = vadd.f32 %v366, %v831
      %865 = vst [vmem:[#allocation2] sm:$0xff] %v833
      %866 = vst [vmem:[#allocation2 + $0x8] sm:$0xff] %v834
      %867 = vst [vmem:[#allocation2 + $0x10] sm:$0xff] %v835
      %868 = vst [vmem:[#allocation2 + $0x18] sm:$0xff] %v836
      %869 = vst [vmem:[#allocation2 + $0x20] sm:$0xff] %v837
      %870 = vst [vmem:[#allocation2 + $0x28] sm:$0xff] %v838
      %871 = vst [vmem:[#allocation2 + $0x30] sm:$0xff] %v839
      %872 = vst [vmem:[#allocation2 + $0x38] sm:$0xff] %v840
      %873 = vst [vmem:[#allocation2 + $0x40] sm:$0xff] %v841
      %874 = vst [vmem:[#allocation2 + $0x48] sm:$0xff] %v842
      %875 = vst [vmem:[#allocation2 + $0x50] sm:$0xff] %v843
      %876 = vst [vmem:[#allocation2 + $0x58] sm:$0xff] %v844
      %877 = vst [vmem:[#allocation2 + $0x60] sm:$0xff] %v845
      %878 = vst [vmem:[#allocation2 + $0x68] sm:$0xff] %v846
      %879 = vst [vmem:[#allocation2 + $0x70] sm:$0xff] %v847
      %880 = vst [vmem:[#allocation2 + $0x78] sm:$0xff] %v848
      %881 = vst [vmem:[#allocation2 + $0x80] sm:$0xff] %v849
      %882 = vst [vmem:[#allocation2 + $0x88] sm:$0xff] %v850
      %883 = vst [vmem:[#allocation2 + $0x90] sm:$0xff] %v851
      %884 = vst [vmem:[#allocation2 + $0x98] sm:$0xff] %v852
      %885 = vst [vmem:[#allocation2 + $0xa0] sm:$0xff] %v853
      %886 = vst [vmem:[#allocation2 + $0xa8] sm:$0xff] %v854
      %887 = vst [vmem:[#allocation2 + $0xb0] sm:$0xff] %v855
      %888 = vst [vmem:[#allocation2 + $0xb8] sm:$0xff] %v856
      %889 = vst [vmem:[#allocation2 + $0xc0] sm:$0xff] %v857
      %890 = vst [vmem:[#allocation2 + $0xc8] sm:$0xff] %v858
      %891 = vst [vmem:[#allocation2 + $0xd0] sm:$0xff] %v859
      %892 = vst [vmem:[#allocation2 + $0xd8] sm:$0xff] %v860
      %893 = vst [vmem:[#allocation2 + $0xe0] sm:$0xff] %v861
      %894 = vst [vmem:[#allocation2 + $0xe8] sm:$0xff] %v862
      %895 = vst [vmem:[#allocation2 + $0xf0] sm:$0xff] %v863
      %896 = vst [vmem:[#allocation2 + $0xf8] sm:$0xff] %v864
      // Predicated region
      $region37: #{dalle_encoder_forward.24} parent=31 // pred_check
        %p897 = pneg %p267
      $region38: #{dalle_encoder_forward.24} parent=31 // pred_check_branch
        %899 = sbr.rel (%p897) target = $region40
      $region39: #{dalle_encoder_forward.24} parent=31 // pred_region
        %v900 = vld [vmem:[#allocation2] sm:$0xff]
        %v901 = vld [vmem:[#allocation2 + $0x8] sm:$0xff]
        %v902 = vld [vmem:[#allocation2 + $0x10] sm:$0xff]
        %v903 = vld [vmem:[#allocation2 + $0x18] sm:$0xff]
        %v904 = vld [vmem:[#allocation2 + $0x20] sm:$0xff]
        %v905 = vld [vmem:[#allocation2 + $0x28] sm:$0xff]
        %v906 = vld [vmem:[#allocation2 + $0x30] sm:$0xff]
        %v907 = vld [vmem:[#allocation2 + $0x38] sm:$0xff]
        %v908 = vld [vmem:[#allocation2 + $0x40] sm:$0xff]
        %v909 = vld [vmem:[#allocation2 + $0x48] sm:$0xff]
        %v910 = vld [vmem:[#allocation2 + $0x50] sm:$0xff]
        %v911 = vld [vmem:[#allocation2 + $0x58] sm:$0xff]
        %v912 = vld [vmem:[#allocation2 + $0x60] sm:$0xff]
        %v913 = vld [vmem:[#allocation2 + $0x68] sm:$0xff]
        %v914 = vld [vmem:[#allocation2 + $0x70] sm:$0xff]
        %v915 = vld [vmem:[#allocation2 + $0x78] sm:$0xff]
        %v916 = vld [vmem:[#allocation2 + $0x80] sm:$0xff]
        %v917 = vld [vmem:[#allocation2 + $0x88] sm:$0xff]
        %v918 = vld [vmem:[#allocation2 + $0x90] sm:$0xff]
        %v919 = vld [vmem:[#allocation2 + $0x98] sm:$0xff]
        %v920 = vld [vmem:[#allocation2 + $0xa0] sm:$0xff]
        %v921 = vld [vmem:[#allocation2 + $0xa8] sm:$0xff]
        %v922 = vld [vmem:[#allocation2 + $0xb0] sm:$0xff]
        %v923 = vld [vmem:[#allocation2 + $0xb8] sm:$0xff]
        %v924 = vld [vmem:[#allocation2 + $0xc0] sm:$0xff]
        %v925 = vld [vmem:[#allocation2 + $0xc8] sm:$0xff]
        %v926 = vld [vmem:[#allocation2 + $0xd0] sm:$0xff]
        %v927 = vld [vmem:[#allocation2 + $0xd8] sm:$0xff]
        %v928 = vld [vmem:[#allocation2 + $0xe0] sm:$0xff]
        %v929 = vld [vmem:[#allocation2 + $0xe8] sm:$0xff]
        %v930 = vld [vmem:[#allocation2 + $0xf0] sm:$0xff]
        %v931 = vld [vmem:[#allocation2 + $0xf8] sm:$0xff]
        %v932 = vld [vmem:[%s257] sm:$0x1]
        %v934 = vperm.slane %v932, 0
        %v936 = vadd.f32 %v900, %v934
        %v937 = vadd.f32 %v901, %v934
        %v938 = vadd.f32 %v902, %v934
        %v939 = vadd.f32 %v903, %v934
        %v940 = vadd.f32 %v904, %v934
        %v941 = vadd.f32 %v905, %v934
        %v942 = vadd.f32 %v906, %v934
        %v943 = vadd.f32 %v907, %v934
        %v944 = vadd.f32 %v908, %v934
        %v945 = vadd.f32 %v909, %v934
        %v946 = vadd.f32 %v910, %v934
        %v947 = vadd.f32 %v911, %v934
        %v948 = vadd.f32 %v912, %v934
        %v949 = vadd.f32 %v913, %v934
        %v950 = vadd.f32 %v914, %v934
        %v951 = vadd.f32 %v915, %v934
        %v952 = vadd.f32 %v916, %v934
        %v953 = vadd.f32 %v917, %v934
        %v954 = vadd.f32 %v918, %v934
        %v955 = vadd.f32 %v919, %v934
        %v956 = vadd.f32 %v920, %v934
        %v957 = vadd.f32 %v921, %v934
        %v958 = vadd.f32 %v922, %v934
        %v959 = vadd.f32 %v923, %v934
        %v960 = vadd.f32 %v924, %v934
        %v961 = vadd.f32 %v925, %v934
        %v962 = vadd.f32 %v926, %v934
        %v963 = vadd.f32 %v927, %v934
        %v964 = vadd.f32 %v928, %v934
        %v965 = vadd.f32 %v929, %v934
        %v966 = vadd.f32 %v930, %v934
        %v967 = vadd.f32 %v931, %v934
        %v968 = vpack.c.bf16 %v936, %v936
        %v969 = vpack.c.bf16 %v937, %v937
        %v970 = vpack.c.bf16 %v938, %v938
        %v971 = vpack.c.bf16 %v939, %v939
        %v972 = vpack.c.bf16 %v940, %v940
        %v973 = vpack.c.bf16 %v941, %v941
        %v974 = vpack.c.bf16 %v942, %v942
        %v975 = vpack.c.bf16 %v943, %v943
        %v976 = vpack.c.bf16 %v944, %v944
        %v977 = vpack.c.bf16 %v945, %v945
        %v978 = vpack.c.bf16 %v946, %v946
        %v979 = vpack.c.bf16 %v947, %v947
        %v980 = vpack.c.bf16 %v948, %v948
        %v981 = vpack.c.bf16 %v949, %v949
        %v982 = vpack.c.bf16 %v950, %v950
        %v983 = vpack.c.bf16 %v951, %v951
        %v984 = vpack.c.bf16 %v952, %v952
        %v985 = vpack.c.bf16 %v953, %v953
        %v986 = vpack.c.bf16 %v954, %v954
        %v987 = vpack.c.bf16 %v955, %v955
        %v988 = vpack.c.bf16 %v956, %v956
        %v989 = vpack.c.bf16 %v957, %v957
        %v990 = vpack.c.bf16 %v958, %v958
        %v991 = vpack.c.bf16 %v959, %v959
        %v992 = vpack.c.bf16 %v960, %v960
        %v993 = vpack.c.bf16 %v961, %v961
        %v994 = vpack.c.bf16 %v962, %v962
        %v995 = vpack.c.bf16 %v963, %v963
        %v996 = vpack.c.bf16 %v964, %v964
        %v997 = vpack.c.bf16 %v965, %v965
        %v998 = vpack.c.bf16 %v966, %v966
        %v999 = vpack.c.bf16 %v967, %v967
        %1000 = vst [vmem:[%s265] sm:$0xf] %v968
        %1001 = vst [vmem:[%s265 + $0x4] sm:$0xf] %v969
        %1002 = vst [vmem:[%s265 + $0x8] sm:$0xf] %v970
        %1003 = vst [vmem:[%s265 + $0xc] sm:$0xf] %v971
        %1004 = vst [vmem:[%s265 + $0x10] sm:$0xf] %v972
        %1005 = vst [vmem:[%s265 + $0x14] sm:$0xf] %v973
        %1006 = vst [vmem:[%s265 + $0x18] sm:$0xf] %v974
        %1007 = vst [vmem:[%s265 + $0x1c] sm:$0xf] %v975
        %1008 = vst [vmem:[%s265 + $0x20] sm:$0xf] %v976
        %1009 = vst [vmem:[%s265 + $0x24] sm:$0xf] %v977
        %1010 = vst [vmem:[%s265 + $0x28] sm:$0xf] %v978
        %1011 = vst [vmem:[%s265 + $0x2c] sm:$0xf] %v979
        %1012 = vst [vmem:[%s265 + $0x30] sm:$0xf] %v980
        %1013 = vst [vmem:[%s265 + $0x34] sm:$0xf] %v981
        %1014 = vst [vmem:[%s265 + $0x38] sm:$0xf] %v982
        %1015 = vst [vmem:[%s265 + $0x3c] sm:$0xf] %v983
        %1016 = vst [vmem:[%s265 + $0x40] sm:$0xf] %v984
        %1017 = vst [vmem:[%s265 + $0x44] sm:$0xf] %v985
        %1018 = vst [vmem:[%s265 + $0x48] sm:$0xf] %v986
        %1019 = vst [vmem:[%s265 + $0x4c] sm:$0xf] %v987
        %1020 = vst [vmem:[%s265 + $0x50] sm:$0xf] %v988
        %1021 = vst [vmem:[%s265 + $0x54] sm:$0xf] %v989
        %1022 = vst [vmem:[%s265 + $0x58] sm:$0xf] %v990
        %1023 = vst [vmem:[%s265 + $0x5c] sm:$0xf] %v991
        %1024 = vst [vmem:[%s265 + $0x60] sm:$0xf] %v992
        %1025 = vst [vmem:[%s265 + $0x64] sm:$0xf] %v993
        %1026 = vst [vmem:[%s265 + $0x68] sm:$0xf] %v994
        %1027 = vst [vmem:[%s265 + $0x6c] sm:$0xf] %v995
        %1028 = vst [vmem:[%s265 + $0x70] sm:$0xf] %v996
        %1029 = vst [vmem:[%s265 + $0x74] sm:$0xf] %v997
        %1030 = vst [vmem:[%s265 + $0x78] sm:$0xf] %v998
        %1031 = vst [vmem:[%s265 + $0x7c] sm:$0xf] %v999
      $region40: #{dalle_encoder_forward.24} parent=31 // pred_fallthru
        _
      %s1032 = smul.u32 32, %s19
      %p1033 = scmp.lt.s32.totalorder %s1032, 63
      %s1034 = scalar_select %p1033, %s1032, 63
      %p1035 = scmp.lt.s32.totalorder %s20, 0
      %s1036 = scalar_select %p1035, %s20, 0
      %s1037 = sadd.s32 %s1036, %s1034
      %s1038 = smul.addr %s1037, 4
      %s1039 = scalar_lea.vmem %s3, %s1038
      // Predicated region
      $region41: #{dalle_encoder_forward.24} parent=31 // pred_check
        %p1040 = pneg %p135
      $region42: #{dalle_encoder_forward.24} parent=31 // pred_check_branch
        %1042 = sbr.rel (%p1040) target = $region44
      $region43: #{dalle_encoder_forward.24} parent=31 // pred_region
        %s1043 = smul.u32 32, %s19
      $region44: #{dalle_encoder_forward.24} parent=31 // pred_fallthru
        _
    $region32: #{dalle_encoder_forward.24} parent=5 // pred_fallthru
      _
    %p1044 = scmp.le.s32.totalorder 2, %s9
    // Predicated region
    $region45: #{dalle_encoder_forward.24} parent=5 // pred_check
      %p1045 = pneg %p1044
    $region46: #{dalle_encoder_forward.24} parent=5 // pred_check_branch
      %1047 = sbr.rel (%p1045) target = $region48
    $region47: #{dalle_encoder_forward.24} parent=5 // pred_region
      %s1048 = ssub.s32 %s9, 2
      // Predicated region
      $region49: #{dalle_encoder_forward.24} parent=47 // pred_check
        %p1049 = pneg %p141
      $region50: #{dalle_encoder_forward.24} parent=47 // pred_check_branch
        %1051 = sbr.rel (%p1049) target = $region52
      $region51: #{dalle_encoder_forward.24} parent=47 // pred_region
        %s1052 = smul.u32 32, %s22
        %p1053 = scmp.lt.s32.totalorder %s1052, 63
        %s1054 = scalar_select %p1053, %s1052, 63
        %p1055 = scmp.lt.s32.totalorder %s23, 0
        %s1056 = scalar_select %p1055, %s23, 0
        %s1057 = sadd.s32 %s1056, %s1054
        %s1058 = smul.addr %s1057, 4
        %s1059 = scalar_lea.vmem %s3, %s1058
      $region52: #{dalle_encoder_forward.24} parent=47 // pred_fallthru
        _
    $region48: #{dalle_encoder_forward.24} parent=5 // pred_fallthru
      _
  $region6: #{dalle_encoder_forward.24} parent=0 // loop_footer
    %s13 = sadd.s32 1, %s9
  $region7: #{dalle_encoder_forward.24} parent=0 // loop_footer_branch
    %8 = sbr.rel target = $region3
  $region8: #{dalle_encoder_forward.24} parent=0 // loop_exit
    _

// kernel: dalle_encoder_forward.25
$region0: #{dalle_encoder_forward.25}
  #allocation0 [shape = 'u32[]', space=smem, size = 0x4, offset = 0x4, fixed_abs, tag = 'smem constant byte address 0x4 - core index']
  #allocation1 [shape = 'u32[72,128]{1,0:T(1,128)}', space=vmem, size = 0x9000, scoped, tag = 'internal scratch']
  #allocation2 [shape = 'f32[256,128]{1,0:T(8,128)}', space=vmem, size = 0x20000, scoped, tag = 'scratch operand']
  %s0 = inlined_call_operand.vmem [shape: bf16[512,256], index: 0, kind: input, shape index: {}]
  %s1 = inlined_call_operand.vmem [shape: bf16[256,128], index: 1, kind: input, shape index: {}]
  %s2 = inlined_call_operand.vmem [shape: f32[1,128], index: 2, kind: input, shape index: {}]
  %s3 = inlined_call_operand.vmem [shape: bf16[512,128], index: 3, kind: output, shape index: {}]
  %s4 = sld [smem:[#allocation0]]
  $region53: #{dalle_encoder_forward.25} parent=0
    _
  %s6 = ssub.s32 1, %s4
  %s7 = scalar_select 0, %s6, %s4
  loop: start=0, step=1, limit=4
  $region2: #{dalle_encoder_forward.25} parent=0 // loop_pre_header
    _
  $region3: #{dalle_encoder_forward.25} parent=0 // loop_header
    %s9 = sphi 0, %s13
    %p10 = scmp.ge.s32.totalorder %s9, 4
    %s16 = sphi 0, %s35
    %s17 = sphi 0, %s31
    %s18 = sphi 0, %s27
    %s19 = sphi 0, %s16
    %s20 = sphi 0, %s17
    %s21 = sphi 0, %s18
    %s22 = sphi 0, %s19
    %s23 = sphi 0, %s20
    %s24 = sphi 0, %s21
    %s40 = sphi 0, %s42
    %s43 = sphi 0, %s40
    %s44 = sphi 0, %s43
    %s60 = sphi 0, %s44
    %s68 = sphi 0, %s70
    %s71 = sphi 0, %s68
    %s72 = sphi 0, %s71
    %s88 = sphi 0, %s72
    %s94 = sphi 0, %s96
    %s97 = sphi 0, %s94
    %s98 = sphi 0, %s97
    %s114 = sphi 0, %s98
    %s122 = sphi 0, %s124
    %s125 = sphi 0, %s122
    %s126 = sphi 0, %s125
    %s142 = sphi 0, %s126
  $region4: #{dalle_encoder_forward.25} parent=0 // loop_header_branch
    %12 = sbr.rel (%p10) target = $region8
  $region5: #{dalle_encoder_forward.25} parent=0 // loop_body
    %s14 = ssub.s32 %s9, 1
    %s15 = ssub.s32 %s9, 2
    %s25 = sadd.s32 1, %s18
    %p26 = scmp.ge.s32.totalorder %s25, 1
    %s27 = scalar_select %p26, 0, %s25
    %s28 = sadd.s32 1, %s17
    %s29 = scalar_select %p26, %s28, %s17
    %p30 = scmp.ge.s32.totalorder %s29, 1
    %s31 = scalar_select %p30, 0, %s29
    %s32 = sadd.s32 1, %s16
    %s33 = scalar_select %p30, %s32, %s16
    %p34 = scmp.ge.s32.totalorder %s33, 2
    %s35 = scalar_select %p34, 0, %s33
    %s36 = ssub.s32 %s16, %s35
    %s37 = ssub.s32 %s18, %s27
    %s38 = sor.u32 %s36, %s37
    %p39 = scmp.eq.s32.totalorder %s38, 0
    %s41 = sadd.s32 %s40, 1
    %s42 = scalar_select %p39, %s40, %s41
    %p45 = pneg %p39
    %p46 = scmp.eq.s32.totalorder %s9, 1
    %p47 = por %p45, %p46
    %p48 = scmp.ne.s32.totalorder %s40, %s43
    %p49 = scmp.eq.s32.totalorder %s9, 0
    %p50 = por %p48, %p49
    %p51 = scmp.ne.s32.totalorder %s40, %s43
    %p52 = scmp.eq.s32.totalorder %s14, 1
    %p53 = por %p51, %p52
    %p54 = scmp.ne.s32.totalorder %s43, %s44
    %p55 = scmp.eq.s32.totalorder %s14, 0
    %p56 = por %p54, %p55
    %p57 = scmp.ne.s32.totalorder %s43, %s44
    %p58 = scmp.eq.s32.totalorder %s15, 1
    %p59 = por %p57, %p58
    %p61 = scmp.ne.s32.totalorder %s44, %s60
    %p62 = scmp.eq.s32.totalorder %s15, 0
    %p63 = por %p61, %p62
    %s64 = ssub.s32 %s18, %s27
    %s65 = ssub.s32 %s17, %s31
    %s66 = sor.u32 %s64, %s65
    %p67 = scmp.eq.s32.totalorder %s66, 0
    %s69 = sadd.s32 %s68, 1
    %s70 = scalar_select %p67, %s68, %s69
    %p73 = pneg %p67
    %p74 = scmp.eq.s32.totalorder %s9, 1
    %p75 = por %p73, %p74
    %p76 = scmp.ne.s32.totalorder %s68, %s71
    %p77 = scmp.eq.s32.totalorder %s9, 0
    %p78 = por %p76, %p77
    %p79 = scmp.ne.s32.totalorder %s68, %s71
    %p80 = scmp.eq.s32.totalorder %s14, 1
    %p81 = por %p79, %p80
    %p82 = scmp.ne.s32.totalorder %s71, %s72
    %p83 = scmp.eq.s32.totalorder %s14, 0
    %p84 = por %p82, %p83
    %p85 = scmp.ne.s32.totalorder %s71, %s72
    %p86 = scmp.eq.s32.totalorder %s15, 1
    %p87 = por %p85, %p86
    %p89 = scmp.ne.s32.totalorder %s72, %s88
    %p90 = scmp.eq.s32.totalorder %s15, 0
    %p91 = por %p89, %p90
    %s92 = ssub.s32 %s17, %s31
    %p93 = scmp.eq.s32.totalorder %s92, 0
    %s95 = sadd.s32 %s94, 1
    %s96 = scalar_select %p93, %s94, %s95
    %p99 = pneg %p93
    %p100 = scmp.eq.s32.totalorder %s9, 1
    %p101 = por %p99, %p100
    %p102 = scmp.ne.s32.totalorder %s94, %s97
    %p103 = scmp.eq.s32.totalorder %s9, 0
    %p104 = por %p102, %p103
    %p105 = scmp.ne.s32.totalorder %s94, %s97
    %p106 = scmp.eq.s32.totalorder %s14, 1
    %p107 = por %p105, %p106
    %p108 = scmp.ne.s32.totalorder %s97, %s98
    %p109 = scmp.eq.s32.totalorder %s14, 0
    %p110 = por %p108, %p109
    %p111 = scmp.ne.s32.totalorder %s97, %s98
    %p112 = scmp.eq.s32.totalorder %s15, 1
    %p113 = por %p111, %p112
    %p115 = scmp.ne.s32.totalorder %s98, %s114
    %p116 = scmp.eq.s32.totalorder %s15, 0
    %p117 = por %p115, %p116
    %s118 = ssub.s32 %s16, %s35
    %s119 = ssub.s32 %s17, %s31
    %s120 = sor.u32 %s118, %s119
    %p121 = scmp.eq.s32.totalorder %s120, 0
    %s123 = sadd.s32 %s122, 1
    %s124 = scalar_select %p121, %s122, %s123
    %p127 = pneg %p121
    %p128 = scmp.eq.s32.totalorder %s9, 1
    %p129 = por %p127, %p128
    %p130 = scmp.ne.s32.totalorder %s122, %s125
    %p131 = scmp.eq.s32.totalorder %s9, 0
    %p132 = por %p130, %p131
    %p133 = scmp.ne.s32.totalorder %s122, %s125
    %p134 = scmp.eq.s32.totalorder %s14, 1
    %p135 = por %p133, %p134
    %p136 = scmp.ne.s32.totalorder %s125, %s126
    %p137 = scmp.eq.s32.totalorder %s14, 0
    %p138 = por %p136, %p137
    %p139 = scmp.ne.s32.totalorder %s125, %s126
    %p140 = scmp.eq.s32.totalorder %s15, 1
    %p141 = por %p139, %p140
    %p143 = scmp.ne.s32.totalorder %s126, %s142
    %p144 = scmp.eq.s32.totalorder %s15, 0
    %p145 = por %p143, %p144
    %p146 = scmp.le.s32.totalorder 1, %s9
    %p147 = scmp.lt.s32.totalorder %s9, 3
    %p148 = pnand %p146, %p147
    %p149 = pneg %p148
    // Predicated region
    $region9: #{dalle_encoder_forward.25} parent=5 // pred_check
      _
    $region10: #{dalle_encoder_forward.25} parent=5 // pred_check_branch
      %151 = sbr.rel (%p148) target = $region12
    $region11: #{dalle_encoder_forward.25} parent=5 // pred_region
      %s152 = ssub.s32 %s9, 1
      // Predicated region
      $region13: #{dalle_encoder_forward.25} parent=11 // pred_check
        %p153 = pneg %p84
      $region14: #{dalle_encoder_forward.25} parent=11 // pred_check_branch
        %155 = sbr.rel (%p153) target = $region16
      $region15: #{dalle_encoder_forward.25} parent=11 // pred_region
        %s156 = smul.u32 32, %s21
        %p157 = scmp.lt.s32.totalorder %s156, 31
        %s158 = scalar_select %p157, %s156, 31
        %p159 = scmp.lt.s32.totalorder %s20, 0
        %s160 = scalar_select %p159, %s20, 0
        %s161 = sadd.s32 %s160, %s158
        %s162 = smul.addr %s161, 4
        %s163 = scalar_lea.vmem %s1, %s162
        %s164 = smul.u32 32, %s21
      $region16: #{dalle_encoder_forward.25} parent=11 // pred_fallthru
        _
      // Predicated region
      $region17: #{dalle_encoder_forward.25} parent=11 // pred_check
        %p165 = pneg %p110
      $region18: #{dalle_encoder_forward.25} parent=11 // pred_check_branch
        %167 = sbr.rel (%p165) target = $region20
      $region19: #{dalle_encoder_forward.25} parent=11 // pred_region
        %p168 = scmp.lt.s32.totalorder %s20, 0
        %s169 = scalar_select %p168, %s20, 0
        %s170 = scalar_lea.vmem %s2, %s169
      $region20: #{dalle_encoder_forward.25} parent=11 // pred_fallthru
        _
    $region12: #{dalle_encoder_forward.25} parent=5 // pred_fallthru
      _
    %p171 = scmp.lt.s32.totalorder %s9, 2
    // Predicated region
    $region21: #{dalle_encoder_forward.25} parent=5 // pred_check
      %p172 = pneg %p171
    $region22: #{dalle_encoder_forward.25} parent=5 // pred_check_branch
      %174 = sbr.rel (%p172) target = $region24
    $region23: #{dalle_encoder_forward.25} parent=5 // pred_region
      // Predicated region
      $region25: #{dalle_encoder_forward.25} parent=23 // pred_check
        %p175 = pneg %p50
      $region26: #{dalle_encoder_forward.25} parent=23 // pred_check_branch
        %177 = sbr.rel (%p175) target = $region28
      $region27: #{dalle_encoder_forward.25} parent=23 // pred_region
        %s178 = smul.u32 32, %s16
        %s179 = smul.u32 2, %s18
        %p180 = scmp.lt.s32.totalorder %s178, 63
        %s181 = scalar_select %p180, %s178, 63
        %p182 = scmp.lt.s32.totalorder %s179, 1
        %s183 = scalar_select %p182, %s179, 1
        %s184 = smul.addr %s181, 2
        %s185 = sadd.s32 %s183, %s184
        %s186 = smul.addr %s185, 4
        %s187 = scalar_lea.vmem %s0, %s186
        %s188 = smul.u32 32, %s16
        %s189 = smul.u32 2, %s18
      $region28: #{dalle_encoder_forward.25} parent=23 // pred_fallthru
        _
    $region24: #{dalle_encoder_forward.25} parent=5 // pred_fallthru
      _
    %p190 = scmp.le.s32.totalorder 1, %s9
    %p191 = scmp.lt.s32.totalorder %s9, 3
    %p192 = pnand %p190, %p191
    %p193 = pneg %p192
    // Predicated region
    $region29: #{dalle_encoder_forward.25} parent=5 // pred_check
      _
    $region30: #{dalle_encoder_forward.25} parent=5 // pred_check_branch
      %195 = sbr.rel (%p192) target = $region32
    $region31: #{dalle_encoder_forward.25} parent=5 // pred_region
      %s196 = ssub.s32 %s9, 1
      %s197 = smul.u32 32, %s19
      %s198 = smul.u32 2, %s21
      %p199 = scmp.lt.s32.totalorder %s197, 63
      %s200 = scalar_select %p199, %s197, 63
      %p201 = scmp.lt.s32.totalorder %s198, 1
      %s202 = scalar_select %p201, %s198, 1
      %s203 = smul.addr %s200, 2
      %s204 = sadd.s32 %s202, %s203
      %s205 = smul.addr %s204, 4
      %s206 = scalar_lea.vmem %s0, %s205
      %p207 = pneg %p56
      %p208 = pneg %p53
      %s209 = smul.u32 32, %s21
      %p210 = scmp.lt.s32.totalorder %s209, 31
      %s211 = scalar_select %p210, %s209, 31
      %p212 = scmp.lt.s32.totalorder %s20, 0
      %s213 = scalar_select %p212, %s20, 0
      %s214 = sadd.s32 %s213, %s211
      %s215 = smul.addr %s214, 4
      %s216 = scalar_lea.vmem %s1, %s215
      %p217 = pneg %p84
      %p218 = pneg %p81
      %p219 = scmp.lt.s32.totalorder %s20, 0
      %s220 = scalar_select %p219, %s20, 0
      %s221 = scalar_lea.vmem %s2, %s220
      %p222 = pneg %p110
      %p223 = pneg %p107
      %p224 = pneg %p138
      %p225 = pneg %p135
      %s226 = smul.u32 32, %s19
      %p227 = scmp.lt.s32.totalorder %s226, 63
      %s228 = scalar_select %p227, %s226, 63
      %p229 = scmp.lt.s32.totalorder %s20, 0
      %s230 = scalar_select %p229, %s20, 0
      %s231 = sadd.s32 %s230, %s228
      %s232 = smul.addr %s231, 4
      %s233 = scalar_lea.vmem %s3, %s232
      %s234 = smul.u32 32, %s19
      %s235 = smul.u32 2, %s21
      %p236 = scmp.lt.s32.totalorder %s234, 63
      %s237 = scalar_select %p236, %s234, 63
      %p238 = scmp.lt.s32.totalorder %s235, 1
      %s239 = scalar_select %p238, %s235, 1
      %s240 = smul.addr %s237, 2
      %s241 = sadd.s32 %s239, %s240
      %s242 = smul.addr %s241, 4
      %s243 = scalar_lea.vmem %s0, %s242
      %s244 = smul.u32 32, %s19
      %s245 = smul.u32 2, %s21
      %s246 = smul.u32 32, %s21
      %p247 = scmp.lt.s32.totalorder %s246, 31
      %s248 = scalar_select %p247, %s246, 31
      %p249 = scmp.lt.s32.totalorder %s20, 0
      %s250 = scalar_select %p249, %s20, 0
      %s251 = sadd.s32 %s250, %s248
      %s252 = smul.addr %s251, 4
      %s253 = scalar_lea.vmem %s1, %s252
      %s254 = smul.u32 32, %s21
      %p255 = scmp.lt.s32.totalorder %s20, 0
      %s256 = scalar_select %p255, %s20, 0
      %s257 = scalar_lea.vmem %s2, %s256
      %s258 = smul.u32 32, %s19
      %p259 = scmp.lt.s32.totalorder %s258, 63
      %s260 = scalar_select %p259, %s258, 63
      %p261 = scmp.lt.s32.totalorder %s20, 0
      %s262 = scalar_select %p261, %s20, 0
      %s263 = sadd.s32 %s262, %s260
      %s264 = smul.addr %s263, 4
      %s265 = scalar_lea.vmem %s3, %s264
      %s266 = smul.u32 32, %s19
      %p267 = scmp.eq.s32.totalorder %s21, 0
      // Predicated region
      $region33: #{dalle_encoder_forward.25} parent=31 // pred_check
        %p268 = pneg %p267
      $region34: #{dalle_encoder_forward.25} parent=31 // pred_check_branch
        %270 = sbr.rel (%p268) target = $region36
      $region35: #{dalle_encoder_forward.25} parent=31 // pred_region
        %271 = vst [vmem:[#allocation2] sm:$0xff] 0.0
        %272 = vst [vmem:[#allocation2 + $0x8] sm:$0xff] 0.0
        %273 = vst [vmem:[#allocation2 + $0x10] sm:$0xff] 0.0
        %274 = vst [vmem:[#allocation2 + $0x18] sm:$0xff] 0.0
        %275 = vst [vmem:[#allocation2 + $0x20] sm:$0xff] 0.0
        %276 = vst [vmem:[#allocation2 + $0x28] sm:$0xff] 0.0
        %277 = vst [vmem:[#allocation2 + $0x30] sm:$0xff] 0.0
        %278 = vst [vmem:[#allocation2 + $0x38] sm:$0xff] 0.0
        %279 = vst [vmem:[#allocation2 + $0x40] sm:$0xff] 0.0
        %280 = vst [vmem:[#allocation2 + $0x48] sm:$0xff] 0.0
        %281 = vst [vmem:[#allocation2 + $0x50] sm:$0xff] 0.0
        %282 = vst [vmem:[#allocation2 + $0x58] sm:$0xff] 0.0
        %283 = vst [vmem:[#allocation2 + $0x60] sm:$0xff] 0.0
        %284 = vst [vmem:[#allocation2 + $0x68] sm:$0xff] 0.0
        %285 = vst [vmem:[#allocation2 + $0x70] sm:$0xff] 0.0
        %286 = vst [vmem:[#allocation2 + $0x78] sm:$0xff] 0.0
        %287 = vst [vmem:[#allocation2 + $0x80] sm:$0xff] 0.0
        %288 = vst [vmem:[#allocation2 + $0x88] sm:$0xff] 0.0
        %289 = vst [vmem:[#allocation2 + $0x90] sm:$0xff] 0.0
        %290 = vst [vmem:[#allocation2 + $0x98] sm:$0xff] 0.0
        %291 = vst [vmem:[#allocation2 + $0xa0] sm:$0xff] 0.0
        %292 = vst [vmem:[#allocation2 + $0xa8] sm:$0xff] 0.0
        %293 = vst [vmem:[#allocation2 + $0xb0] sm:$0xff] 0.0
        %294 = vst [vmem:[#allocation2 + $0xb8] sm:$0xff] 0.0
        %295 = vst [vmem:[#allocation2 + $0xc0] sm:$0xff] 0.0
        %296 = vst [vmem:[#allocation2 + $0xc8] sm:$0xff] 0.0
        %297 = vst [vmem:[#allocation2 + $0xd0] sm:$0xff] 0.0
        %298 = vst [vmem:[#allocation2 + $0xd8] sm:$0xff] 0.0
        %299 = vst [vmem:[#allocation2 + $0xe0] sm:$0xff] 0.0
        %300 = vst [vmem:[#allocation2 + $0xe8] sm:$0xff] 0.0
        %301 = vst [vmem:[#allocation2 + $0xf0] sm:$0xff] 0.0
        %302 = vst [vmem:[#allocation2 + $0xf8] sm:$0xff] 0.0
      $region36: #{dalle_encoder_forward.25} parent=31 // pred_fallthru
        _
      %v303 = vld [vmem:[%s243] sm:$0xff]
      %v304 = vld [vmem:[%s243 + $0x8] sm:$0xff]
      %v305 = vld [vmem:[%s243 + $0x10] sm:$0xff]
      %v306 = vld [vmem:[%s243 + $0x18] sm:$0xff]
      %v307 = vld [vmem:[%s243 + $0x20] sm:$0xff]
      %v308 = vld [vmem:[%s243 + $0x28] sm:$0xff]
      %v309 = vld [vmem:[%s243 + $0x30] sm:$0xff]
      %v310 = vld [vmem:[%s243 + $0x38] sm:$0xff]
      %v311 = vld [vmem:[%s243 + $0x40] sm:$0xff]
      %v312 = vld [vmem:[%s243 + $0x48] sm:$0xff]
      %v313 = vld [vmem:[%s243 + $0x50] sm:$0xff]
      %v314 = vld [vmem:[%s243 + $0x58] sm:$0xff]
      %v315 = vld [vmem:[%s243 + $0x60] sm:$0xff]
      %v316 = vld [vmem:[%s243 + $0x68] sm:$0xff]
      %v317 = vld [vmem:[%s243 + $0x70] sm:$0xff]
      %v318 = vld [vmem:[%s243 + $0x78] sm:$0xff]
      %v319 = vld [vmem:[%s243 + $0x80] sm:$0xff]
      %v320 = vld [vmem:[%s243 + $0x88] sm:$0xff]
      %v321 = vld [vmem:[%s243 + $0x90] sm:$0xff]
      %v322 = vld [vmem:[%s243 + $0x98] sm:$0xff]
      %v323 = vld [vmem:[%s243 + $0xa0] sm:$0xff]
      %v324 = vld [vmem:[%s243 + $0xa8] sm:$0xff]
      %v325 = vld [vmem:[%s243 + $0xb0] sm:$0xff]
      %v326 = vld [vmem:[%s243 + $0xb8] sm:$0xff]
      %v327 = vld [vmem:[%s243 + $0xc0] sm:$0xff]
      %v328 = vld [vmem:[%s243 + $0xc8] sm:$0xff]
      %v329 = vld [vmem:[%s243 + $0xd0] sm:$0xff]
      %v330 = vld [vmem:[%s243 + $0xd8] sm:$0xff]
      %v331 = vld [vmem:[%s243 + $0xe0] sm:$0xff]
      %v332 = vld [vmem:[%s243 + $0xe8] sm:$0xff]
      %v333 = vld [vmem:[%s243 + $0xf0] sm:$0xff]
      %v334 = vld [vmem:[%s243 + $0xf8] sm:$0xff]
      %v335 = vunpack.c.l.bf16 %v303
      %v336 = vunpack.c.h.bf16 %v303
      %v337 = vunpack.c.l.bf16 %v304
      %v338 = vunpack.c.h.bf16 %v304
      %v339 = vunpack.c.l.bf16 %v305
      %v340 = vunpack.c.h.bf16 %v305
      %v341 = vunpack.c.l.bf16 %v306
      %v342 = vunpack.c.h.bf16 %v306
      %v343 = vunpack.c.l.bf16 %v307
      %v344 = vunpack.c.h.bf16 %v307
      %v345 = vunpack.c.l.bf16 %v308
      %v346 = vunpack.c.h.bf16 %v308
      %v347 = vunpack.c.l.bf16 %v309
      %v348 = vunpack.c.h.bf16 %v309
      %v349 = vunpack.c.l.bf16 %v310
      %v350 = vunpack.c.h.bf16 %v310
      %v351 = vunpack.c.l.bf16 %v311
      %v352 = vunpack.c.h.bf16 %v311
      %v353 = vunpack.c.l.bf16 %v312
      %v354 = vunpack.c.h.bf16 %v312
      %v355 = vunpack.c.l.bf16 %v313
      %v356 = vunpack.c.h.bf16 %v313
      %v357 = vunpack.c.l.bf16 %v314
      %v358 = vunpack.c.h.bf16 %v314
      %v359 = vunpack.c.l.bf16 %v315
      %v360 = vunpack.c.h.bf16 %v315
      %v361 = vunpack.c.l.bf16 %v316
      %v362 = vunpack.c.h.bf16 %v316
      %v363 = vunpack.c.l.bf16 %v317
      %v364 = vunpack.c.h.bf16 %v317
      %v365 = vunpack.c.l.bf16 %v318
      %v366 = vunpack.c.h.bf16 %v318
      %v367 = vunpack.c.l.bf16 %v319
      %v368 = vunpack.c.h.bf16 %v319
      %v369 = vunpack.c.l.bf16 %v320
      %v370 = vunpack.c.h.bf16 %v320
      %v371 = vunpack.c.l.bf16 %v321
      %v372 = vunpack.c.h.bf16 %v321
      %v373 = vunpack.c.l.bf16 %v322
      %v374 = vunpack.c.h.bf16 %v322
      %v375 = vunpack.c.l.bf16 %v323
      %v376 = vunpack.c.h.bf16 %v323
      %v377 = vunpack.c.l.bf16 %v324
      %v378 = vunpack.c.h.bf16 %v324
      %v379 = vunpack.c.l.bf16 %v325
      %v380 = vunpack.c.h.bf16 %v325
      %v381 = vunpack.c.l.bf16 %v326
      %v382 = vunpack.c.h.bf16 %v326
      %v383 = vunpack.c.l.bf16 %v327
      %v384 = vunpack.c.h.bf16 %v327
      %v385 = vunpack.c.l.bf16 %v328
      %v386 = vunpack.c.h.bf16 %v328
      %v387 = vunpack.c.l.bf16 %v329
      %v388 = vunpack.c.h.bf16 %v329
      %v389 = vunpack.c.l.bf16 %v330
      %v390 = vunpack.c.h.bf16 %v330
      %v391 = vunpack.c.l.bf16 %v331
      %v392 = vunpack.c.h.bf16 %v331
      %v393 = vunpack.c.l.bf16 %v332
      %v394 = vunpack.c.h.bf16 %v332
      %v395 = vunpack.c.l.bf16 %v333
      %v396 = vunpack.c.h.bf16 %v333
      %v397 = vunpack.c.l.bf16 %v334
      %v398 = vunpack.c.h.bf16 %v334
      %v399 = vmax.f32 %v335, 0.0
      %v400 = vmax.f32 %v336, 0.0
      %v401 = vmax.f32 %v337, 0.0
      %v402 = vmax.f32 %v338, 0.0
      %v403 = vmax.f32 %v339, 0.0
      %v404 = vmax.f32 %v340, 0.0
      %v405 = vmax.f32 %v341, 0.0
      %v406 = vmax.f32 %v342, 0.0
      %v407 = vmax.f32 %v343, 0.0
      %v408 = vmax.f32 %v344, 0.0
      %v409 = vmax.f32 %v345, 0.0
      %v410 = vmax.f32 %v346, 0.0
      %v411 = vmax.f32 %v347, 0.0
      %v412 = vmax.f32 %v348, 0.0
      %v413 = vmax.f32 %v349, 0.0
      %v414 = vmax.f32 %v350, 0.0
      %v415 = vmax.f32 %v351, 0.0
      %v416 = vmax.f32 %v352, 0.0
      %v417 = vmax.f32 %v353, 0.0
      %v418 = vmax.f32 %v354, 0.0
      %v419 = vmax.f32 %v355, 0.0
      %v420 = vmax.f32 %v356, 0.0
      %v421 = vmax.f32 %v357, 0.0
      %v422 = vmax.f32 %v358, 0.0
      %v423 = vmax.f32 %v359, 0.0
      %v424 = vmax.f32 %v360, 0.0
      %v425 = vmax.f32 %v361, 0.0
      %v426 = vmax.f32 %v362, 0.0
      %v427 = vmax.f32 %v363, 0.0
      %v428 = vmax.f32 %v364, 0.0
      %v429 = vmax.f32 %v365, 0.0
      %v430 = vmax.f32 %v366, 0.0
      %v431 = vmax.f32 %v367, 0.0
      %v432 = vmax.f32 %v368, 0.0
      %v433 = vmax.f32 %v369, 0.0
      %v434 = vmax.f32 %v370, 0.0
      %v435 = vmax.f32 %v371, 0.0
      %v436 = vmax.f32 %v372, 0.0
      %v437 = vmax.f32 %v373, 0.0
      %v438 = vmax.f32 %v374, 0.0
      %v439 = vmax.f32 %v375, 0.0
      %v440 = vmax.f32 %v376, 0.0
      %v441 = vmax.f32 %v377, 0.0
      %v442 = vmax.f32 %v378, 0.0
      %v443 = vmax.f32 %v379, 0.0
      %v444 = vmax.f32 %v380, 0.0
      %v445 = vmax.f32 %v381, 0.0
      %v446 = vmax.f32 %v382, 0.0
      %v447 = vmax.f32 %v383, 0.0
      %v448 = vmax.f32 %v384, 0.0
      %v449 = vmax.f32 %v385, 0.0
      %v450 = vmax.f32 %v386, 0.0
      %v451 = vmax.f32 %v387, 0.0
      %v452 = vmax.f32 %v388, 0.0
      %v453 = vmax.f32 %v389, 0.0
      %v454 = vmax.f32 %v390, 0.0
      %v455 = vmax.f32 %v391, 0.0
      %v456 = vmax.f32 %v392, 0.0
      %v457 = vmax.f32 %v393, 0.0
      %v458 = vmax.f32 %v394, 0.0
      %v459 = vmax.f32 %v395, 0.0
      %v460 = vmax.f32 %v396, 0.0
      %v461 = vmax.f32 %v397, 0.0
      %v462 = vmax.f32 %v398, 0.0
      %v463 = vpack.c.bf16 %v401, %v399
      %v464 = vpack.c.bf16 %v402, %v400
      %v465 = vpack.c.bf16 %v405, %v403
      %v466 = vpack.c.bf16 %v406, %v404
      %v467 = vpack.c.bf16 %v409, %v407
      %v468 = vpack.c.bf16 %v410, %v408
      %v469 = vpack.c.bf16 %v413, %v411
      %v470 = vpack.c.bf16 %v414, %v412
      %v471 = vpack.c.bf16 %v417, %v415
      %v472 = vpack.c.bf16 %v418, %v416
      %v473 = vpack.c.bf16 %v421, %v419
      %v474 = vpack.c.bf16 %v422, %v420
      %v475 = vpack.c.bf16 %v425, %v423
      %v476 = vpack.c.bf16 %v426, %v424
      %v477 = vpack.c.bf16 %v429, %v427
      %v478 = vpack.c.bf16 %v430, %v428
      %v479 = vpack.c.bf16 %v433, %v431
      %v480 = vpack.c.bf16 %v434, %v432
      %v481 = vpack.c.bf16 %v437, %v435
      %v482 = vpack.c.bf16 %v438, %v436
      %v483 = vpack.c.bf16 %v441, %v439
      %v484 = vpack.c.bf16 %v442, %v440
      %v485 = vpack.c.bf16 %v445, %v443
      %v486 = vpack.c.bf16 %v446, %v444
      %v487 = vpack.c.bf16 %v449, %v447
      %v488 = vpack.c.bf16 %v450, %v448
      %v489 = vpack.c.bf16 %v453, %v451
      %v490 = vpack.c.bf16 %v454, %v452
      %v491 = vpack.c.bf16 %v457, %v455
      %v492 = vpack.c.bf16 %v458, %v456
      %v493 = vpack.c.bf16 %v461, %v459
      %v494 = vpack.c.bf16 %v462, %v460
      %v495 = vld [vmem:[#allocation2] sm:$0xff]
      %v496 = vld [vmem:[#allocation2 + $0x8] sm:$0xff]
      %v497 = vld [vmem:[#allocation2 + $0x10] sm:$0xff]
      %v498 = vld [vmem:[#allocation2 + $0x18] sm:$0xff]
      %v499 = vld [vmem:[#allocation2 + $0x20] sm:$0xff]
      %v500 = vld [vmem:[#allocation2 + $0x28] sm:$0xff]
      %v501 = vld [vmem:[#allocation2 + $0x30] sm:$0xff]
      %v502 = vld [vmem:[#allocation2 + $0x38] sm:$0xff]
      %v503 = vld [vmem:[#allocation2 + $0x40] sm:$0xff]
      %v504 = vld [vmem:[#allocation2 + $0x48] sm:$0xff]
      %v505 = vld [vmem:[#allocation2 + $0x50] sm:$0xff]
      %v506 = vld [vmem:[#allocation2 + $0x58] sm:$0xff]
      %v507 = vld [vmem:[#allocation2 + $0x60] sm:$0xff]
      %v508 = vld [vmem:[#allocation2 + $0x68] sm:$0xff]
      %v509 = vld [vmem:[#allocation2 + $0x70] sm:$0xff]
      %v510 = vld [vmem:[#allocation2 + $0x78] sm:$0xff]
      %v511 = vld [vmem:[#allocation2 + $0x80] sm:$0xff]
      %v512 = vld [vmem:[#allocation2 + $0x88] sm:$0xff]
      %v513 = vld [vmem:[#allocation2 + $0x90] sm:$0xff]
      %v514 = vld [vmem:[#allocation2 + $0x98] sm:$0xff]
      %v515 = vld [vmem:[#allocation2 + $0xa0] sm:$0xff]
      %v516 = vld [vmem:[#allocation2 + $0xa8] sm:$0xff]
      %v517 = vld [vmem:[#allocation2 + $0xb0] sm:$0xff]
      %v518 = vld [vmem:[#allocation2 + $0xb8] sm:$0xff]
      %v519 = vld [vmem:[#allocation2 + $0xc0] sm:$0xff]
      %v520 = vld [vmem:[#allocation2 + $0xc8] sm:$0xff]
      %v521 = vld [vmem:[#allocation2 + $0xd0] sm:$0xff]
      %v522 = vld [vmem:[#allocation2 + $0xd8] sm:$0xff]
      %v523 = vld [vmem:[#allocation2 + $0xe0] sm:$0xff]
      %v524 = vld [vmem:[#allocation2 + $0xe8] sm:$0xff]
      %v525 = vld [vmem:[#allocation2 + $0xf0] sm:$0xff]
      %v526 = vld [vmem:[#allocation2 + $0xf8] sm:$0xff]
      %v527 = vld [vmem:[%s253] sm:$0xf]
      %v528 = vld [vmem:[%s253 + $0x4] sm:$0xf]
      %v529 = vld [vmem:[%s253 + $0x8] sm:$0xf]
      %v530 = vld [vmem:[%s253 + $0xc] sm:$0xf]
      %v531 = vld [vmem:[%s253 + $0x10] sm:$0xf]
      %v532 = vld [vmem:[%s253 + $0x14] sm:$0xf]
      %v533 = vld [vmem:[%s253 + $0x18] sm:$0xf]
      %v534 = vld [vmem:[%s253 + $0x1c] sm:$0xf]
      %v535 = vld [vmem:[%s253 + $0x20] sm:$0xf]
      %v536 = vld [vmem:[%s253 + $0x24] sm:$0xf]
      %v537 = vld [vmem:[%s253 + $0x28] sm:$0xf]
      %v538 = vld [vmem:[%s253 + $0x2c] sm:$0xf]
      %v539 = vld [vmem:[%s253 + $0x30] sm:$0xf]
      %v540 = vld [vmem:[%s253 + $0x34] sm:$0xf]
      %v541 = vld [vmem:[%s253 + $0x38] sm:$0xf]
      %v542 = vld [vmem:[%s253 + $0x3c] sm:$0xf]
      %v543 = vld [vmem:[%s253 + $0x40] sm:$0xf]
      %v544 = vld [vmem:[%s253 + $0x44] sm:$0xf]
      %v545 = vld [vmem:[%s253 + $0x48] sm:$0xf]
      %v546 = vld [vmem:[%s253 + $0x4c] sm:$0xf]
      %v547 = vld [vmem:[%s253 + $0x50] sm:$0xf]
      %v548 = vld [vmem:[%s253 + $0x54] sm:$0xf]
      %v549 = vld [vmem:[%s253 + $0x58] sm:$0xf]
      %v550 = vld [vmem:[%s253 + $0x5c] sm:$0xf]
      %v551 = vld [vmem:[%s253 + $0x60] sm:$0xf]
      %v552 = vld [vmem:[%s253 + $0x64] sm:$0xf]
      %v553 = vld [vmem:[%s253 + $0x68] sm:$0xf]
      %v554 = vld [vmem:[%s253 + $0x6c] sm:$0xf]
      %v555 = vld [vmem:[%s253 + $0x70] sm:$0xf]
      %v556 = vld [vmem:[%s253 + $0x74] sm:$0xf]
      %v557 = vld [vmem:[%s253 + $0x78] sm:$0xf]
      %v558 = vld [vmem:[%s253 + $0x7c] sm:$0xf]
      %v591 = vunpack.c.l.b16 %v527
      %v592 = vunpack.c.l.b16 %v528
      %v593 = vunpack.c.l.b16 %v529
      %v594 = vunpack.c.l.b16 %v530
      %v595 = vunpack.c.l.b16 %v531
      %v596 = vunpack.c.l.b16 %v532
      %v597 = vunpack.c.l.b16 %v533
      %v598 = vunpack.c.l.b16 %v534
      %v599 = vunpack.c.l.b16 %v535
      %v600 = vunpack.c.l.b16 %v536
      %v601 = vunpack.c.l.b16 %v537
      %v602 = vunpack.c.l.b16 %v538
      %v603 = vunpack.c.l.b16 %v539
      %v604 = vunpack.c.l.b16 %v540
      %v605 = vunpack.c.l.b16 %v541
      %v606 = vunpack.c.l.b16 %v542
      %v607 = vunpack.c.l.b16 %v543
      %v608 = vunpack.c.l.b16 %v544
      %v609 = vunpack.c.l.b16 %v545
      %v610 = vunpack.c.l.b16 %v546
      %v611 = vunpack.c.l.b16 %v547
      %v612 = vunpack.c.l.b16 %v548
      %v613 = vunpack.c.l.b16 %v549
      %v614 = vunpack.c.l.b16 %v550
      %v615 = vunpack.c.l.b16 %v551
      %v616 = vunpack.c.l.b16 %v552
      %v617 = vunpack.c.l.b16 %v553
      %v618 = vunpack.c.l.b16 %v554
      %v619 = vunpack.c.l.b16 %v555
      %v620 = vunpack.c.l.b16 %v556
      %v621 = vunpack.c.l.b16 %v557
      %v622 = vunpack.c.l.b16 %v558
      %v623 = vpack.c.b16 %v592, %v591
      %v624 = vpack.c.b16 %v594, %v593
      %v625 = vpack.c.b16 %v596, %v595
      %v626 = vpack.c.b16 %v598, %v597
      %v627 = vpack.c.b16 %v600, %v599
      %v628 = vpack.c.b16 %v602, %v601
      %v629 = vpack.c.b16 %v604, %v603
      %v630 = vpack.c.b16 %v606, %v605
      %v631 = vpack.c.b16 %v608, %v607
      %v632 = vpack.c.b16 %v610, %v609
      %v633 = vpack.c.b16 %v612, %v611
      %v634 = vpack.c.b16 %v614, %v613
      %v635 = vpack.c.b16 %v616, %v615
      %v636 = vpack.c.b16 %v618, %v617
      %v637 = vpack.c.b16 %v620, %v619
      %v638 = vpack.c.b16 %v622, %v621
      %655 = vmatpush.bf16.msra.mxu0 %v630
      %656 = vmatpush.bf16.msra.mxu0 %v629
      %657 = vmatpush.bf16.msra.mxu0 %v628
      %658 = vmatpush.bf16.msra.mxu0 %v627
      %659 = vmatpush.bf16.msra.mxu0 %v626
      %660 = vmatpush.bf16.msra.mxu0 %v625
      %661 = vmatpush.bf16.msra.mxu0 %v624
      %662 = vmatpush.bf16.msra.mxu0 %v623
      %663 = vmatmul.bf16.gmra.mxu0 %v463
      %v664 = vpop.f32.mrf.mxu0
      %v665 = vadd.f32 0.0, %v664
      %v666 = vpop.f32.mrf.mxu0
      %v667 = vadd.f32 0.0, %v666
      %668 = vmatmul.bf16.gmra.mxu0 %v465
      %v669 = vpop.f32.mrf.mxu0
      %v670 = vadd.f32 0.0, %v669
      %v671 = vpop.f32.mrf.mxu0
      %v672 = vadd.f32 0.0, %v671
      %673 = vmatmul.bf16.gmra.mxu0 %v467
      %v674 = vpop.f32.mrf.mxu0
      %v675 = vadd.f32 0.0, %v674
      %v676 = vpop.f32.mrf.mxu0
      %v677 = vadd.f32 0.0, %v676
      %678 = vmatmul.bf16.gmra.mxu0 %v469
      %v679 = vpop.f32.mrf.mxu0
      %v680 = vadd.f32 0.0, %v679
      %v681 = vpop.f32.mrf.mxu0
      %v682 = vadd.f32 0.0, %v681
      %683 = vmatmul.bf16.gmra.mxu0 %v471
      %v684 = vpop.f32.mrf.mxu0
      %v685 = vadd.f32 0.0, %v684
      %v686 = vpop.f32.mrf.mxu0
      %v687 = vadd.f32 0.0, %v686
      %688 = vmatmul.bf16.gmra.mxu0 %v473
      %v689 = vpop.f32.mrf.mxu0
      %v690 = vadd.f32 0.0, %v689
      %v691 = vpop.f32.mrf.mxu0
      %v692 = vadd.f32 0.0, %v691
      %693 = vmatmul.bf16.gmra.mxu0 %v475
      %v694 = vpop.f32.mrf.mxu0
      %v695 = vadd.f32 0.0, %v694
      %v696 = vpop.f32.mrf.mxu0
      %v697 = vadd.f32 0.0, %v696
      %698 = vmatmul.bf16.gmra.mxu0 %v477
      %v699 = vpop.f32.mrf.mxu0
      %v700 = vadd.f32 0.0, %v699
      %v701 = vpop.f32.mrf.mxu0
      %v702 = vadd.f32 0.0, %v701
      %703 = vmatmul.bf16.gmra.mxu0 %v479
      %v704 = vpop.f32.mrf.mxu0
      %v705 = vadd.f32 0.0, %v704
      %v706 = vpop.f32.mrf.mxu0
      %v707 = vadd.f32 0.0, %v706
      %708 = vmatmul.bf16.gmra.mxu0 %v481
      %v709 = vpop.f32.mrf.mxu0
      %v710 = vadd.f32 0.0, %v709
      %v711 = vpop.f32.mrf.mxu0
      %v712 = vadd.f32 0.0, %v711
      %713 = vmatmul.bf16.gmra.mxu0 %v483
      %v714 = vpop.f32.mrf.mxu0
      %v715 = vadd.f32 0.0, %v714
      %v716 = vpop.f32.mrf.mxu0
      %v717 = vadd.f32 0.0, %v716
      %718 = vmatmul.bf16.gmra.mxu0 %v485
      %v719 = vpop.f32.mrf.mxu0
      %v720 = vadd.f32 0.0, %v719
      %v721 = vpop.f32.mrf.mxu0
      %v722 = vadd.f32 0.0, %v721
      %723 = vmatmul.bf16.gmra.mxu0 %v487
      %v724 = vpop.f32.mrf.mxu0
      %v725 = vadd.f32 0.0, %v724
      %v726 = vpop.f32.mrf.mxu0
      %v727 = vadd.f32 0.0, %v726
      %728 = vmatmul.bf16.gmra.mxu0 %v489
      %v729 = vpop.f32.mrf.mxu0
      %v730 = vadd.f32 0.0, %v729
      %v731 = vpop.f32.mrf.mxu0
      %v732 = vadd.f32 0.0, %v731
      %733 = vmatmul.bf16.gmra.mxu0 %v491
      %v734 = vpop.f32.mrf.mxu0
      %v735 = vadd.f32 0.0, %v734
      %v736 = vpop.f32.mrf.mxu0
      %v737 = vadd.f32 0.0, %v736
      %738 = vmatmul.bf16.gmra.mxu0 %v493
      %v739 = vpop.f32.mrf.mxu0
      %v740 = vadd.f32 0.0, %v739
      %v741 = vpop.f32.mrf.mxu0
      %v742 = vadd.f32 0.0, %v741
      %743 = vdwg.mxu0
      %744 = vmatpush.bf16.msra.mxu0 %v638
      %745 = vmatpush.bf16.msra.mxu0 %v637
      %746 = vmatpush.bf16.msra.mxu0 %v636
      %747 = vmatpush.bf16.msra.mxu0 %v635
      %748 = vmatpush.bf16.msra.mxu0 %v634
      %749 = vmatpush.bf16.msra.mxu0 %v633
      %750 = vmatpush.bf16.msra.mxu0 %v632
      %751 = vmatpush.bf16.msra.mxu0 %v631
      %752 = vmatmul.bf16.gmra.mxu0 %v464
      %v753 = vpop.f32.mrf.mxu0
      %v754 = vadd.f32 %v665, %v753
      %v755 = vpop.f32.mrf.mxu0
      %v756 = vadd.f32 %v667, %v755
      %757 = vmatmul.bf16.gmra.mxu0 %v466
      %v758 = vpop.f32.mrf.mxu0
      %v759 = vadd.f32 %v670, %v758
      %v760 = vpop.f32.mrf.mxu0
      %v761 = vadd.f32 %v672, %v760
      %762 = vmatmul.bf16.gmra.mxu0 %v468
      %v763 = vpop.f32.mrf.mxu0
      %v764 = vadd.f32 %v675, %v763
      %v765 = vpop.f32.mrf.mxu0
      %v766 = vadd.f32 %v677, %v765
      %767 = vmatmul.bf16.gmra.mxu0 %v470
      %v768 = vpop.f32.mrf.mxu0
      %v769 = vadd.f32 %v680, %v768
      %v770 = vpop.f32.mrf.mxu0
      %v771 = vadd.f32 %v682, %v770
      %772 = vmatmul.bf16.gmra.mxu0 %v472
      %v773 = vpop.f32.mrf.mxu0
      %v774 = vadd.f32 %v685, %v773
      %v775 = vpop.f32.mrf.mxu0
      %v776 = vadd.f32 %v687, %v775
      %777 = vmatmul.bf16.gmra.mxu0 %v474
      %v778 = vpop.f32.mrf.mxu0
      %v779 = vadd.f32 %v690, %v778
      %v780 = vpop.f32.mrf.mxu0
      %v781 = vadd.f32 %v692, %v780
      %782 = vmatmul.bf16.gmra.mxu0 %v476
      %v783 = vpop.f32.mrf.mxu0
      %v784 = vadd.f32 %v695, %v783
      %v785 = vpop.f32.mrf.mxu0
      %v786 = vadd.f32 %v697, %v785
      %787 = vmatmul.bf16.gmra.mxu0 %v478
      %v788 = vpop.f32.mrf.mxu0
      %v789 = vadd.f32 %v700, %v788
      %v790 = vpop.f32.mrf.mxu0
      %v791 = vadd.f32 %v702, %v790
      %792 = vmatmul.bf16.gmra.mxu0 %v480
      %v793 = vpop.f32.mrf.mxu0
      %v794 = vadd.f32 %v705, %v793
      %v795 = vpop.f32.mrf.mxu0
      %v796 = vadd.f32 %v707, %v795
      %797 = vmatmul.bf16.gmra.mxu0 %v482
      %v798 = vpop.f32.mrf.mxu0
      %v799 = vadd.f32 %v710, %v798
      %v800 = vpop.f32.mrf.mxu0
      %v801 = vadd.f32 %v712, %v800
      %802 = vmatmul.bf16.gmra.mxu0 %v484
      %v803 = vpop.f32.mrf.mxu0
      %v804 = vadd.f32 %v715, %v803
      %v805 = vpop.f32.mrf.mxu0
      %v806 = vadd.f32 %v717, %v805
      %807 = vmatmul.bf16.gmra.mxu0 %v486
      %v808 = vpop.f32.mrf.mxu0
      %v809 = vadd.f32 %v720, %v808
      %v810 = vpop.f32.mrf.mxu0
      %v811 = vadd.f32 %v722, %v810
      %812 = vmatmul.bf16.gmra.mxu0 %v488
      %v813 = vpop.f32.mrf.mxu0
      %v814 = vadd.f32 %v725, %v813
      %v815 = vpop.f32.mrf.mxu0
      %v816 = vadd.f32 %v727, %v815
      %817 = vmatmul.bf16.gmra.mxu0 %v490
      %v818 = vpop.f32.mrf.mxu0
      %v819 = vadd.f32 %v730, %v818
      %v820 = vpop.f32.mrf.mxu0
      %v821 = vadd.f32 %v732, %v820
      %822 = vmatmul.bf16.gmra.mxu0 %v492
      %v823 = vpop.f32.mrf.mxu0
      %v824 = vadd.f32 %v735, %v823
      %v825 = vpop.f32.mrf.mxu0
      %v826 = vadd.f32 %v737, %v825
      %827 = vmatmul.bf16.gmra.mxu0 %v494
      %v828 = vpop.f32.mrf.mxu0
      %v829 = vadd.f32 %v740, %v828
      %v830 = vpop.f32.mrf.mxu0
      %v831 = vadd.f32 %v742, %v830
      %832 = vdwg.mxu0
      %v833 = vadd.f32 %v495, %v754
      %v834 = vadd.f32 %v496, %v756
      %v835 = vadd.f32 %v497, %v759
      %v836 = vadd.f32 %v498, %v761
      %v837 = vadd.f32 %v499, %v764
      %v838 = vadd.f32 %v500, %v766
      %v839 = vadd.f32 %v501, %v769
      %v840 = vadd.f32 %v502, %v771
      %v841 = vadd.f32 %v503, %v774
      %v842 = vadd.f32 %v504, %v776
      %v843 = vadd.f32 %v505, %v779
      %v844 = vadd.f32 %v506, %v781
      %v845 = vadd.f32 %v507, %v784
      %v846 = vadd.f32 %v508, %v786
      %v847 = vadd.f32 %v509, %v789
      %v848 = vadd.f32 %v510, %v791
      %v849 = vadd.f32 %v511, %v794
      %v850 = vadd.f32 %v512, %v796
      %v851 = vadd.f32 %v513, %v799
      %v852 = vadd.f32 %v514, %v801
      %v853 = vadd.f32 %v515, %v804
      %v854 = vadd.f32 %v516, %v806
      %v855 = vadd.f32 %v517, %v809
      %v856 = vadd.f32 %v518, %v811
      %v857 = vadd.f32 %v519, %v814
      %v858 = vadd.f32 %v520, %v816
      %v859 = vadd.f32 %v521, %v819
      %v860 = vadd.f32 %v522, %v821
      %v861 = vadd.f32 %v523, %v824
      %v862 = vadd.f32 %v524, %v826
      %v863 = vadd.f32 %v525, %v829
      %v864 = vadd.f32 %v526, %v831
      %865 = vst [vmem:[#allocation2] sm:$0xff] %v833
      %866 = vst [vmem:[#allocation2 + $0x8] sm:$0xff] %v834
      %867 = vst [vmem:[#allocation2 + $0x10] sm:$0xff] %v835
      %868 = vst [vmem:[#allocation2 + $0x18] sm:$0xff] %v836
      %869 = vst [vmem:[#allocation2 + $0x20] sm:$0xff] %v837
      %870 = vst [vmem:[#allocation2 + $0x28] sm:$0xff] %v838
      %871 = vst [vmem:[#allocation2 + $0x30] sm:$0xff] %v839
      %872 = vst [vmem:[#allocation2 + $0x38] sm:$0xff] %v840
      %873 = vst [vmem:[#allocation2 + $0x40] sm:$0xff] %v841
      %874 = vst [vmem:[#allocation2 + $0x48] sm:$0xff] %v842
      %875 = vst [vmem:[#allocation2 + $0x50] sm:$0xff] %v843
      %876 = vst [vmem:[#allocation2 + $0x58] sm:$0xff] %v844
      %877 = vst [vmem:[#allocation2 + $0x60] sm:$0xff] %v845
      %878 = vst [vmem:[#allocation2 + $0x68] sm:$0xff] %v846
      %879 = vst [vmem:[#allocation2 + $0x70] sm:$0xff] %v847
      %880 = vst [vmem:[#allocation2 + $0x78] sm:$0xff] %v848
      %881 = vst [vmem:[#allocation2 + $0x80] sm:$0xff] %v849
      %882 = vst [vmem:[#allocation2 + $0x88] sm:$0xff] %v850
      %883 = vst [vmem:[#allocation2 + $0x90] sm:$0xff] %v851
      %884 = vst [vmem:[#allocation2 + $0x98] sm:$0xff] %v852
      %885 = vst [vmem:[#allocation2 + $0xa0] sm:$0xff] %v853
      %886 = vst [vmem:[#allocation2 + $0xa8] sm:$0xff] %v854
      %887 = vst [vmem:[#allocation2 + $0xb0] sm:$0xff] %v855
      %888 = vst [vmem:[#allocation2 + $0xb8] sm:$0xff] %v856
      %889 = vst [vmem:[#allocation2 + $0xc0] sm:$0xff] %v857
      %890 = vst [vmem:[#allocation2 + $0xc8] sm:$0xff] %v858
      %891 = vst [vmem:[#allocation2 + $0xd0] sm:$0xff] %v859
      %892 = vst [vmem:[#allocation2 + $0xd8] sm:$0xff] %v860
      %893 = vst [vmem:[#allocation2 + $0xe0] sm:$0xff] %v861
      %894 = vst [vmem:[#allocation2 + $0xe8] sm:$0xff] %v862
      %895 = vst [vmem:[#allocation2 + $0xf0] sm:$0xff] %v863
      %896 = vst [vmem:[#allocation2 + $0xf8] sm:$0xff] %v864
      // Predicated region
      $region37: #{dalle_encoder_forward.25} parent=31 // pred_check
        %p897 = pneg %p267
      $region38: #{dalle_encoder_forward.25} parent=31 // pred_check_branch
        %899 = sbr.rel (%p897) target = $region40
      $region39: #{dalle_encoder_forward.25} parent=31 // pred_region
        %v900 = vld [vmem:[#allocation2] sm:$0xff]
        %v901 = vld [vmem:[#allocation2 + $0x8] sm:$0xff]
        %v902 = vld [vmem:[#allocation2 + $0x10] sm:$0xff]
        %v903 = vld [vmem:[#allocation2 + $0x18] sm:$0xff]
        %v904 = vld [vmem:[#allocation2 + $0x20] sm:$0xff]
        %v905 = vld [vmem:[#allocation2 + $0x28] sm:$0xff]
        %v906 = vld [vmem:[#allocation2 + $0x30] sm:$0xff]
        %v907 = vld [vmem:[#allocation2 + $0x38] sm:$0xff]
        %v908 = vld [vmem:[#allocation2 + $0x40] sm:$0xff]
        %v909 = vld [vmem:[#allocation2 + $0x48] sm:$0xff]
        %v910 = vld [vmem:[#allocation2 + $0x50] sm:$0xff]
        %v911 = vld [vmem:[#allocation2 + $0x58] sm:$0xff]
        %v912 = vld [vmem:[#allocation2 + $0x60] sm:$0xff]
        %v913 = vld [vmem:[#allocation2 + $0x68] sm:$0xff]
        %v914 = vld [vmem:[#allocation2 + $0x70] sm:$0xff]
        %v915 = vld [vmem:[#allocation2 + $0x78] sm:$0xff]
        %v916 = vld [vmem:[#allocation2 + $0x80] sm:$0xff]
        %v917 = vld [vmem:[#allocation2 + $0x88] sm:$0xff]
        %v918 = vld [vmem:[#allocation2 + $0x90] sm:$0xff]
        %v919 = vld [vmem:[#allocation2 + $0x98] sm:$0xff]
        %v920 = vld [vmem:[#allocation2 + $0xa0] sm:$0xff]
        %v921 = vld [vmem:[#allocation2 + $0xa8] sm:$0xff]
        %v922 = vld [vmem:[#allocation2 + $0xb0] sm:$0xff]
        %v923 = vld [vmem:[#allocation2 + $0xb8] sm:$0xff]
        %v924 = vld [vmem:[#allocation2 + $0xc0] sm:$0xff]
        %v925 = vld [vmem:[#allocation2 + $0xc8] sm:$0xff]
        %v926 = vld [vmem:[#allocation2 + $0xd0] sm:$0xff]
        %v927 = vld [vmem:[#allocation2 + $0xd8] sm:$0xff]
        %v928 = vld [vmem:[#allocation2 + $0xe0] sm:$0xff]
        %v929 = vld [vmem:[#allocation2 + $0xe8] sm:$0xff]
        %v930 = vld [vmem:[#allocation2 + $0xf0] sm:$0xff]
        %v931 = vld [vmem:[#allocation2 + $0xf8] sm:$0xff]
        %v932 = vld [vmem:[%s257] sm:$0x1]
        %v934 = vperm.slane %v932, 0
        %v936 = vadd.f32 %v900, %v934
        %v937 = vadd.f32 %v901, %v934
        %v938 = vadd.f32 %v902, %v934
        %v939 = vadd.f32 %v903, %v934
        %v940 = vadd.f32 %v904, %v934
        %v941 = vadd.f32 %v905, %v934
        %v942 = vadd.f32 %v906, %v934
        %v943 = vadd.f32 %v907, %v934
        %v944 = vadd.f32 %v908, %v934
        %v945 = vadd.f32 %v909, %v934
        %v946 = vadd.f32 %v910, %v934
        %v947 = vadd.f32 %v911, %v934
        %v948 = vadd.f32 %v912, %v934
        %v949 = vadd.f32 %v913, %v934
        %v950 = vadd.f32 %v914, %v934
        %v951 = vadd.f32 %v915, %v934
        %v952 = vadd.f32 %v916, %v934
        %v953 = vadd.f32 %v917, %v934
        %v954 = vadd.f32 %v918, %v934
        %v955 = vadd.f32 %v919, %v934
        %v956 = vadd.f32 %v920, %v934
        %v957 = vadd.f32 %v921, %v934
        %v958 = vadd.f32 %v922, %v934
        %v959 = vadd.f32 %v923, %v934
        %v960 = vadd.f32 %v924, %v934
        %v961 = vadd.f32 %v925, %v934
        %v962 = vadd.f32 %v926, %v934
        %v963 = vadd.f32 %v927, %v934
        %v964 = vadd.f32 %v928, %v934
        %v965 = vadd.f32 %v929, %v934
        %v966 = vadd.f32 %v930, %v934
        %v967 = vadd.f32 %v931, %v934
        %v968 = vpack.c.bf16 %v936, %v936
        %v969 = vpack.c.bf16 %v937, %v937
        %v970 = vpack.c.bf16 %v938, %v938
        %v971 = vpack.c.bf16 %v939, %v939
        %v972 = vpack.c.bf16 %v940, %v940
        %v973 = vpack.c.bf16 %v941, %v941
        %v974 = vpack.c.bf16 %v942, %v942
        %v975 = vpack.c.bf16 %v943, %v943
        %v976 = vpack.c.bf16 %v944, %v944
        %v977 = vpack.c.bf16 %v945, %v945
        %v978 = vpack.c.bf16 %v946, %v946
        %v979 = vpack.c.bf16 %v947, %v947
        %v980 = vpack.c.bf16 %v948, %v948
        %v981 = vpack.c.bf16 %v949, %v949
        %v982 = vpack.c.bf16 %v950, %v950
        %v983 = vpack.c.bf16 %v951, %v951
        %v984 = vpack.c.bf16 %v952, %v952
        %v985 = vpack.c.bf16 %v953, %v953
        %v986 = vpack.c.bf16 %v954, %v954
        %v987 = vpack.c.bf16 %v955, %v955
        %v988 = vpack.c.bf16 %v956, %v956
        %v989 = vpack.c.bf16 %v957, %v957
        %v990 = vpack.c.bf16 %v958, %v958
        %v991 = vpack.c.bf16 %v959, %v959
        %v992 = vpack.c.bf16 %v960, %v960
        %v993 = vpack.c.bf16 %v961, %v961
        %v994 = vpack.c.bf16 %v962, %v962
        %v995 = vpack.c.bf16 %v963, %v963
        %v996 = vpack.c.bf16 %v964, %v964
        %v997 = vpack.c.bf16 %v965, %v965
        %v998 = vpack.c.bf16 %v966, %v966
        %v999 = vpack.c.bf16 %v967, %v967
        %1000 = vst [vmem:[%s265] sm:$0xf] %v968
        %1001 = vst [vmem:[%s265 + $0x4] sm:$0xf] %v969
        %1002 = vst [vmem:[%s265 + $0x8] sm:$0xf] %v970
        %1003 = vst [vmem:[%s265 + $0xc] sm:$0xf] %v971
        %1004 = vst [vmem:[%s265 + $0x10] sm:$0xf] %v972
        %1005 = vst [vmem:[%s265 + $0x14] sm:$0xf] %v973
        %1006 = vst [vmem:[%s265 + $0x18] sm:$0xf] %v974
        %1007 = vst [vmem:[%s265 + $0x1c] sm:$0xf] %v975
        %1008 = vst [vmem:[%s265 + $0x20] sm:$0xf] %v976
        %1009 = vst [vmem:[%s265 + $0x24] sm:$0xf] %v977
        %1010 = vst [vmem:[%s265 + $0x28] sm:$0xf] %v978
        %1011 = vst [vmem:[%s265 + $0x2c] sm:$0xf] %v979
        %1012 = vst [vmem:[%s265 + $0x30] sm:$0xf] %v980
        %1013 = vst [vmem:[%s265 + $0x34] sm:$0xf] %v981
        %1014 = vst [vmem:[%s265 + $0x38] sm:$0xf] %v982
        %1015 = vst [vmem:[%s265 + $0x3c] sm:$0xf] %v983
        %1016 = vst [vmem:[%s265 + $0x40] sm:$0xf] %v984
        %1017 = vst [vmem:[%s265 + $0x44] sm:$0xf] %v985
        %1018 = vst [vmem:[%s265 + $0x48] sm:$0xf] %v986
        %1019 = vst [vmem:[%s265 + $0x4c] sm:$0xf] %v987
        %1020 = vst [vmem:[%s265 + $0x50] sm:$0xf] %v988
        %1021 = vst [vmem:[%s265 + $0x54] sm:$0xf] %v989
        %1022 = vst [vmem:[%s265 + $0x58] sm:$0xf] %v990
        %1023 = vst [vmem:[%s265 + $0x5c] sm:$0xf] %v991
        %1024 = vst [vmem:[%s265 + $0x60] sm:$0xf] %v992
        %1025 = vst [vmem:[%s265 + $0x64] sm:$0xf] %v993
        %1026 = vst [vmem:[%s265 + $0x68] sm:$0xf] %v994
        %1027 = vst [vmem:[%s265 + $0x6c] sm:$0xf] %v995
        %1028 = vst [vmem:[%s265 + $0x70] sm:$0xf] %v996
        %1029 = vst [vmem:[%s265 + $0x74] sm:$0xf] %v997
        %1030 = vst [vmem:[%s265 + $0x78] sm:$0xf] %v998
        %1031 = vst [vmem:[%s265 + $0x7c] sm:$0xf] %v999
      $region40: #{dalle_encoder_forward.25} parent=31 // pred_fallthru
        _
      %s1032 = smul.u32 32, %s19
      %p1033 = scmp.lt.s32.totalorder %s1032, 63
      %s1034 = scalar_select %p1033, %s1032, 63
      %p1035 = scmp.lt.s32.totalorder %s20, 0
      %s1036 = scalar_select %p1035, %s20, 0
      %s1037 = sadd.s32 %s1036, %s1034
      %s1038 = smul.addr %s1037, 4
      %s1039 = scalar_lea.vmem %s3, %s1038
      // Predicated region
      $region41: #{dalle_encoder_forward.25} parent=31 // pred_check
        %p1040 = pneg %p135
      $region42: #{dalle_encoder_forward.25} parent=31 // pred_check_branch
        %1042 = sbr.rel (%p1040) target = $region44
      $region43: #{dalle_encoder_forward.25} parent=31 // pred_region
        %s1043 = smul.u32 32, %s19
      $region44: #{dalle_encoder_forward.25} parent=31 // pred_fallthru
        _
    $region32: #{dalle_encoder_forward.25} parent=5 // pred_fallthru
      _
    %p1044 = scmp.le.s32.totalorder 2, %s9
    // Predicated region
    $region45: #{dalle_encoder_forward.25} parent=5 // pred_check
      %p1045 = pneg %p1044
    $region46: #{dalle_encoder_forward.25} parent=5 // pred_check_branch
      %1047 = sbr.rel (%p1045) target = $region48
    $region47: #{dalle_encoder_forward.25} parent=5 // pred_region
      %s1048 = ssub.s32 %s9, 2
      // Predicated region
      $region49: #{dalle_encoder_forward.25} parent=47 // pred_check
        %p1049 = pneg %p141
      $region50: #{dalle_encoder_forward.25} parent=47 // pred_check_branch
        %1051 = sbr.rel (%p1049) target = $region52
      $region51: #{dalle_encoder_forward.25} parent=47 // pred_region
        %s1052 = smul.u32 32, %s22
        %p1053 = scmp.lt.s32.totalorder %s1052, 63
        %s1054 = scalar_select %p1053, %s1052, 63
        %p1055 = scmp.lt.s32.totalorder %s23, 0
        %s1056 = scalar_select %p1055, %s23, 0
        %s1057 = sadd.s32 %s1056, %s1054
        %s1058 = smul.addr %s1057, 4
        %s1059 = scalar_lea.vmem %s3, %s1058
      $region52: #{dalle_encoder_forward.25} parent=47 // pred_fallthru
        _
    $region48: #{dalle_encoder_forward.25} parent=5 // pred_fallthru
      _
  $region6: #{dalle_encoder_forward.25} parent=0 // loop_footer
    %s13 = sadd.s32 1, %s9
  $region7: #{dalle_encoder_forward.25} parent=0 // loop_footer_branch
    %8 = sbr.rel target = $region3
  $region8: #{dalle_encoder_forward.25} parent=0 // loop_exit
    _

// kernel: dalle_encoder_forward.26
$region0: #{dalle_encoder_forward.26}
  #allocation0 [shape = 'u32[]', space=smem, size = 0x4, offset = 0x4, fixed_abs, tag = 'smem constant byte address 0x4 - core index']
  #allocation1 [shape = 'u32[72,128]{1,0:T(1,128)}', space=vmem, size = 0x9000, scoped, tag = 'internal scratch']
  #allocation2 [shape = 'f32[256,128]{1,0:T(8,128)}', space=vmem, size = 0x20000, scoped, tag = 'scratch operand']
  %s0 = inlined_call_operand.vmem [shape: bf16[512,128], index: 0, kind: input, shape index: {}]
  %s1 = inlined_call_operand.vmem [shape: bf16[128,128], index: 1, kind: input, shape index: {}]
  %s2 = inlined_call_operand.vmem [shape: f32[1,128], index: 2, kind: input, shape index: {}]
  %s3 = inlined_call_operand.vmem [shape: bf16[512,128], index: 3, kind: output, shape index: {}]
  %s4 = sld [smem:[#allocation0]]
  $region53: #{dalle_encoder_forward.26} parent=0
    _
  %s6 = ssub.s32 1, %s4
  %s7 = scalar_select 0, %s6, %s4
  loop: start=0, step=1, limit=4
  $region2: #{dalle_encoder_forward.26} parent=0 // loop_pre_header
    _
  $region3: #{dalle_encoder_forward.26} parent=0 // loop_header
    %s9 = sphi 0, %s13
    %p10 = scmp.ge.s32.totalorder %s9, 4
    %s16 = sphi 0, %s35
    %s17 = sphi 0, %s31
    %s18 = sphi 0, %s27
    %s19 = sphi 0, %s16
    %s20 = sphi 0, %s17
    %s21 = sphi 0, %s18
    %s22 = sphi 0, %s19
    %s23 = sphi 0, %s20
    %s24 = sphi 0, %s21
    %s40 = sphi 0, %s42
    %s43 = sphi 0, %s40
    %s44 = sphi 0, %s43
    %s60 = sphi 0, %s44
    %s68 = sphi 0, %s70
    %s71 = sphi 0, %s68
    %s72 = sphi 0, %s71
    %s88 = sphi 0, %s72
    %s94 = sphi 0, %s96
    %s97 = sphi 0, %s94
    %s98 = sphi 0, %s97
    %s114 = sphi 0, %s98
    %s122 = sphi 0, %s124
    %s125 = sphi 0, %s122
    %s126 = sphi 0, %s125
    %s142 = sphi 0, %s126
  $region4: #{dalle_encoder_forward.26} parent=0 // loop_header_branch
    %12 = sbr.rel (%p10) target = $region8
  $region5: #{dalle_encoder_forward.26} parent=0 // loop_body
    %s14 = ssub.s32 %s9, 1
    %s15 = ssub.s32 %s9, 2
    %s25 = sadd.s32 1, %s18
    %p26 = scmp.ge.s32.totalorder %s25, 1
    %s27 = scalar_select %p26, 0, %s25
    %s28 = sadd.s32 1, %s17
    %s29 = scalar_select %p26, %s28, %s17
    %p30 = scmp.ge.s32.totalorder %s29, 1
    %s31 = scalar_select %p30, 0, %s29
    %s32 = sadd.s32 1, %s16
    %s33 = scalar_select %p30, %s32, %s16
    %p34 = scmp.ge.s32.totalorder %s33, 2
    %s35 = scalar_select %p34, 0, %s33
    %s36 = ssub.s32 %s16, %s35
    %s37 = ssub.s32 %s18, %s27
    %s38 = sor.u32 %s36, %s37
    %p39 = scmp.eq.s32.totalorder %s38, 0
    %s41 = sadd.s32 %s40, 1
    %s42 = scalar_select %p39, %s40, %s41
    %p45 = pneg %p39
    %p46 = scmp.eq.s32.totalorder %s9, 1
    %p47 = por %p45, %p46
    %p48 = scmp.ne.s32.totalorder %s40, %s43
    %p49 = scmp.eq.s32.totalorder %s9, 0
    %p50 = por %p48, %p49
    %p51 = scmp.ne.s32.totalorder %s40, %s43
    %p52 = scmp.eq.s32.totalorder %s14, 1
    %p53 = por %p51, %p52
    %p54 = scmp.ne.s32.totalorder %s43, %s44
    %p55 = scmp.eq.s32.totalorder %s14, 0
    %p56 = por %p54, %p55
    %p57 = scmp.ne.s32.totalorder %s43, %s44
    %p58 = scmp.eq.s32.totalorder %s15, 1
    %p59 = por %p57, %p58
    %p61 = scmp.ne.s32.totalorder %s44, %s60
    %p62 = scmp.eq.s32.totalorder %s15, 0
    %p63 = por %p61, %p62
    %s64 = ssub.s32 %s18, %s27
    %s65 = ssub.s32 %s17, %s31
    %s66 = sor.u32 %s64, %s65
    %p67 = scmp.eq.s32.totalorder %s66, 0
    %s69 = sadd.s32 %s68, 1
    %s70 = scalar_select %p67, %s68, %s69
    %p73 = pneg %p67
    %p74 = scmp.eq.s32.totalorder %s9, 1
    %p75 = por %p73, %p74
    %p76 = scmp.ne.s32.totalorder %s68, %s71
    %p77 = scmp.eq.s32.totalorder %s9, 0
    %p78 = por %p76, %p77
    %p79 = scmp.ne.s32.totalorder %s68, %s71
    %p80 = scmp.eq.s32.totalorder %s14, 1
    %p81 = por %p79, %p80
    %p82 = scmp.ne.s32.totalorder %s71, %s72
    %p83 = scmp.eq.s32.totalorder %s14, 0
    %p84 = por %p82, %p83
    %p85 = scmp.ne.s32.totalorder %s71, %s72
    %p86 = scmp.eq.s32.totalorder %s15, 1
    %p87 = por %p85, %p86
    %p89 = scmp.ne.s32.totalorder %s72, %s88
    %p90 = scmp.eq.s32.totalorder %s15, 0
    %p91 = por %p89, %p90
    %s92 = ssub.s32 %s17, %s31
    %p93 = scmp.eq.s32.totalorder %s92, 0
    %s95 = sadd.s32 %s94, 1
    %s96 = scalar_select %p93, %s94, %s95
    %p99 = pneg %p93
    %p100 = scmp.eq.s32.totalorder %s9, 1
    %p101 = por %p99, %p100
    %p102 = scmp.ne.s32.totalorder %s94, %s97
    %p103 = scmp.eq.s32.totalorder %s9, 0
    %p104 = por %p102, %p103
    %p105 = scmp.ne.s32.totalorder %s94, %s97
    %p106 = scmp.eq.s32.totalorder %s14, 1
    %p107 = por %p105, %p106
    %p108 = scmp.ne.s32.totalorder %s97, %s98
    %p109 = scmp.eq.s32.totalorder %s14, 0
    %p110 = por %p108, %p109
    %p111 = scmp.ne.s32.totalorder %s97, %s98
    %p112 = scmp.eq.s32.totalorder %s15, 1
    %p113 = por %p111, %p112
    %p115 = scmp.ne.s32.totalorder %s98, %s114
    %p116 = scmp.eq.s32.totalorder %s15, 0
    %p117 = por %p115, %p116
    %s118 = ssub.s32 %s16, %s35
    %s119 = ssub.s32 %s17, %s31
    %s120 = sor.u32 %s118, %s119
    %p121 = scmp.eq.s32.totalorder %s120, 0
    %s123 = sadd.s32 %s122, 1
    %s124 = scalar_select %p121, %s122, %s123
    %p127 = pneg %p121
    %p128 = scmp.eq.s32.totalorder %s9, 1
    %p129 = por %p127, %p128
    %p130 = scmp.ne.s32.totalorder %s122, %s125
    %p131 = scmp.eq.s32.totalorder %s9, 0
    %p132 = por %p130, %p131
    %p133 = scmp.ne.s32.totalorder %s122, %s125
    %p134 = scmp.eq.s32.totalorder %s14, 1
    %p135 = por %p133, %p134
    %p136 = scmp.ne.s32.totalorder %s125, %s126
    %p137 = scmp.eq.s32.totalorder %s14, 0
    %p138 = por %p136, %p137
    %p139 = scmp.ne.s32.totalorder %s125, %s126
    %p140 = scmp.eq.s32.totalorder %s15, 1
    %p141 = por %p139, %p140
    %p143 = scmp.ne.s32.totalorder %s126, %s142
    %p144 = scmp.eq.s32.totalorder %s15, 0
    %p145 = por %p143, %p144
    %p146 = scmp.le.s32.totalorder 1, %s9
    %p147 = scmp.lt.s32.totalorder %s9, 3
    %p148 = pnand %p146, %p147
    %p149 = pneg %p148
    // Predicated region
    $region9: #{dalle_encoder_forward.26} parent=5 // pred_check
      _
    $region10: #{dalle_encoder_forward.26} parent=5 // pred_check_branch
      %151 = sbr.rel (%p148) target = $region12
    $region11: #{dalle_encoder_forward.26} parent=5 // pred_region
      %s152 = ssub.s32 %s9, 1
      // Predicated region
      $region13: #{dalle_encoder_forward.26} parent=11 // pred_check
        %p153 = pneg %p84
      $region14: #{dalle_encoder_forward.26} parent=11 // pred_check_branch
        %155 = sbr.rel (%p153) target = $region16
      $region15: #{dalle_encoder_forward.26} parent=11 // pred_region
        %s156 = smul.u32 16, %s21
        %p157 = scmp.lt.s32.totalorder %s156, 15
        %s158 = scalar_select %p157, %s156, 15
        %p159 = scmp.lt.s32.totalorder %s20, 0
        %s160 = scalar_select %p159, %s20, 0
        %s161 = sadd.s32 %s160, %s158
        %s162 = smul.addr %s161, 4
        %s163 = scalar_lea.vmem %s1, %s162
        %s164 = smul.u32 16, %s21
      $region16: #{dalle_encoder_forward.26} parent=11 // pred_fallthru
        _
      // Predicated region
      $region17: #{dalle_encoder_forward.26} parent=11 // pred_check
        %p165 = pneg %p110
      $region18: #{dalle_encoder_forward.26} parent=11 // pred_check_branch
        %167 = sbr.rel (%p165) target = $region20
      $region19: #{dalle_encoder_forward.26} parent=11 // pred_region
        %p168 = scmp.lt.s32.totalorder %s20, 0
        %s169 = scalar_select %p168, %s20, 0
        %s170 = scalar_lea.vmem %s2, %s169
      $region20: #{dalle_encoder_forward.26} parent=11 // pred_fallthru
        _
    $region12: #{dalle_encoder_forward.26} parent=5 // pred_fallthru
      _
    %p171 = scmp.lt.s32.totalorder %s9, 2
    // Predicated region
    $region21: #{dalle_encoder_forward.26} parent=5 // pred_check
      %p172 = pneg %p171
    $region22: #{dalle_encoder_forward.26} parent=5 // pred_check_branch
      %174 = sbr.rel (%p172) target = $region24
    $region23: #{dalle_encoder_forward.26} parent=5 // pred_region
      // Predicated region
      $region25: #{dalle_encoder_forward.26} parent=23 // pred_check
        %p175 = pneg %p50
      $region26: #{dalle_encoder_forward.26} parent=23 // pred_check_branch
        %177 = sbr.rel (%p175) target = $region28
      $region27: #{dalle_encoder_forward.26} parent=23 // pred_region
        %s178 = smul.u32 32, %s16
        %p179 = scmp.lt.s32.totalorder %s178, 63
        %s180 = scalar_select %p179, %s178, 63
        %p181 = scmp.lt.s32.totalorder %s18, 0
        %s182 = scalar_select %p181, %s18, 0
        %s183 = sadd.s32 %s182, %s180
        %s184 = smul.addr %s183, 4
        %s185 = scalar_lea.vmem %s0, %s184
        %s186 = smul.u32 32, %s16
      $region28: #{dalle_encoder_forward.26} parent=23 // pred_fallthru
        _
    $region24: #{dalle_encoder_forward.26} parent=5 // pred_fallthru
      _
    %p187 = scmp.le.s32.totalorder 1, %s9
    %p188 = scmp.lt.s32.totalorder %s9, 3
    %p189 = pnand %p187, %p188
    %p190 = pneg %p189
    // Predicated region
    $region29: #{dalle_encoder_forward.26} parent=5 // pred_check
      _
    $region30: #{dalle_encoder_forward.26} parent=5 // pred_check_branch
      %192 = sbr.rel (%p189) target = $region32
    $region31: #{dalle_encoder_forward.26} parent=5 // pred_region
      %s193 = ssub.s32 %s9, 1
      %s194 = smul.u32 32, %s19
      %p195 = scmp.lt.s32.totalorder %s194, 63
      %s196 = scalar_select %p195, %s194, 63
      %p197 = scmp.lt.s32.totalorder %s21, 0
      %s198 = scalar_select %p197, %s21, 0
      %s199 = sadd.s32 %s198, %s196
      %s200 = smul.addr %s199, 4
      %s201 = scalar_lea.vmem %s0, %s200
      %p202 = pneg %p56
      %p203 = pneg %p53
      %s204 = smul.u32 16, %s21
      %p205 = scmp.lt.s32.totalorder %s204, 15
      %s206 = scalar_select %p205, %s204, 15
      %p207 = scmp.lt.s32.totalorder %s20, 0
      %s208 = scalar_select %p207, %s20, 0
      %s209 = sadd.s32 %s208, %s206
      %s210 = smul.addr %s209, 4
      %s211 = scalar_lea.vmem %s1, %s210
      %p212 = pneg %p84
      %p213 = pneg %p81
      %p214 = scmp.lt.s32.totalorder %s20, 0
      %s215 = scalar_select %p214, %s20, 0
      %s216 = scalar_lea.vmem %s2, %s215
      %p217 = pneg %p110
      %p218 = pneg %p107
      %p219 = pneg %p138
      %p220 = pneg %p135
      %s221 = smul.u32 32, %s19
      %p222 = scmp.lt.s32.totalorder %s221, 63
      %s223 = scalar_select %p222, %s221, 63
      %p224 = scmp.lt.s32.totalorder %s20, 0
      %s225 = scalar_select %p224, %s20, 0
      %s226 = sadd.s32 %s225, %s223
      %s227 = smul.addr %s226, 4
      %s228 = scalar_lea.vmem %s3, %s227
      %s229 = smul.u32 32, %s19
      %p230 = scmp.lt.s32.totalorder %s229, 63
      %s231 = scalar_select %p230, %s229, 63
      %p232 = scmp.lt.s32.totalorder %s21, 0
      %s233 = scalar_select %p232, %s21, 0
      %s234 = sadd.s32 %s233, %s231
      %s235 = smul.addr %s234, 4
      %s236 = scalar_lea.vmem %s0, %s235
      %s237 = smul.u32 32, %s19
      %s238 = smul.u32 16, %s21
      %p239 = scmp.lt.s32.totalorder %s238, 15
      %s240 = scalar_select %p239, %s238, 15
      %p241 = scmp.lt.s32.totalorder %s20, 0
      %s242 = scalar_select %p241, %s20, 0
      %s243 = sadd.s32 %s242, %s240
      %s244 = smul.addr %s243, 4
      %s245 = scalar_lea.vmem %s1, %s244
      %s246 = smul.u32 16, %s21
      %p247 = scmp.lt.s32.totalorder %s20, 0
      %s248 = scalar_select %p247, %s20, 0
      %s249 = scalar_lea.vmem %s2, %s248
      %s250 = smul.u32 32, %s19
      %p251 = scmp.lt.s32.totalorder %s250, 63
      %s252 = scalar_select %p251, %s250, 63
      %p253 = scmp.lt.s32.totalorder %s20, 0
      %s254 = scalar_select %p253, %s20, 0
      %s255 = sadd.s32 %s254, %s252
      %s256 = smul.addr %s255, 4
      %s257 = scalar_lea.vmem %s3, %s256
      %s258 = smul.u32 32, %s19
      %p259 = scmp.eq.s32.totalorder %s21, 0
      // Predicated region
      $region33: #{dalle_encoder_forward.26} parent=31 // pred_check
        %p260 = pneg %p259
      $region34: #{dalle_encoder_forward.26} parent=31 // pred_check_branch
        %262 = sbr.rel (%p260) target = $region36
      $region35: #{dalle_encoder_forward.26} parent=31 // pred_region
        %263 = vst [vmem:[#allocation2] sm:$0xff] 0.0
        %264 = vst [vmem:[#allocation2 + $0x8] sm:$0xff] 0.0
        %265 = vst [vmem:[#allocation2 + $0x10] sm:$0xff] 0.0
        %266 = vst [vmem:[#allocation2 + $0x18] sm:$0xff] 0.0
        %267 = vst [vmem:[#allocation2 + $0x20] sm:$0xff] 0.0
        %268 = vst [vmem:[#allocation2 + $0x28] sm:$0xff] 0.0
        %269 = vst [vmem:[#allocation2 + $0x30] sm:$0xff] 0.0
        %270 = vst [vmem:[#allocation2 + $0x38] sm:$0xff] 0.0
        %271 = vst [vmem:[#allocation2 + $0x40] sm:$0xff] 0.0
        %272 = vst [vmem:[#allocation2 + $0x48] sm:$0xff] 0.0
        %273 = vst [vmem:[#allocation2 + $0x50] sm:$0xff] 0.0
        %274 = vst [vmem:[#allocation2 + $0x58] sm:$0xff] 0.0
        %275 = vst [vmem:[#allocation2 + $0x60] sm:$0xff] 0.0
        %276 = vst [vmem:[#allocation2 + $0x68] sm:$0xff] 0.0
        %277 = vst [vmem:[#allocation2 + $0x70] sm:$0xff] 0.0
        %278 = vst [vmem:[#allocation2 + $0x78] sm:$0xff] 0.0
        %279 = vst [vmem:[#allocation2 + $0x80] sm:$0xff] 0.0
        %280 = vst [vmem:[#allocation2 + $0x88] sm:$0xff] 0.0
        %281 = vst [vmem:[#allocation2 + $0x90] sm:$0xff] 0.0
        %282 = vst [vmem:[#allocation2 + $0x98] sm:$0xff] 0.0
        %283 = vst [vmem:[#allocation2 + $0xa0] sm:$0xff] 0.0
        %284 = vst [vmem:[#allocation2 + $0xa8] sm:$0xff] 0.0
        %285 = vst [vmem:[#allocation2 + $0xb0] sm:$0xff] 0.0
        %286 = vst [vmem:[#allocation2 + $0xb8] sm:$0xff] 0.0
        %287 = vst [vmem:[#allocation2 + $0xc0] sm:$0xff] 0.0
        %288 = vst [vmem:[#allocation2 + $0xc8] sm:$0xff] 0.0
        %289 = vst [vmem:[#allocation2 + $0xd0] sm:$0xff] 0.0
        %290 = vst [vmem:[#allocation2 + $0xd8] sm:$0xff] 0.0
        %291 = vst [vmem:[#allocation2 + $0xe0] sm:$0xff] 0.0
        %292 = vst [vmem:[#allocation2 + $0xe8] sm:$0xff] 0.0
        %293 = vst [vmem:[#allocation2 + $0xf0] sm:$0xff] 0.0
        %294 = vst [vmem:[#allocation2 + $0xf8] sm:$0xff] 0.0
      $region36: #{dalle_encoder_forward.26} parent=31 // pred_fallthru
        _
      %v295 = vld [vmem:[%s236] sm:$0xf]
      %v296 = vld [vmem:[%s236 + $0x4] sm:$0xf]
      %v297 = vld [vmem:[%s236 + $0x8] sm:$0xf]
      %v298 = vld [vmem:[%s236 + $0xc] sm:$0xf]
      %v299 = vld [vmem:[%s236 + $0x10] sm:$0xf]
      %v300 = vld [vmem:[%s236 + $0x14] sm:$0xf]
      %v301 = vld [vmem:[%s236 + $0x18] sm:$0xf]
      %v302 = vld [vmem:[%s236 + $0x1c] sm:$0xf]
      %v303 = vld [vmem:[%s236 + $0x20] sm:$0xf]
      %v304 = vld [vmem:[%s236 + $0x24] sm:$0xf]
      %v305 = vld [vmem:[%s236 + $0x28] sm:$0xf]
      %v306 = vld [vmem:[%s236 + $0x2c] sm:$0xf]
      %v307 = vld [vmem:[%s236 + $0x30] sm:$0xf]
      %v308 = vld [vmem:[%s236 + $0x34] sm:$0xf]
      %v309 = vld [vmem:[%s236 + $0x38] sm:$0xf]
      %v310 = vld [vmem:[%s236 + $0x3c] sm:$0xf]
      %v311 = vld [vmem:[%s236 + $0x40] sm:$0xf]
      %v312 = vld [vmem:[%s236 + $0x44] sm:$0xf]
      %v313 = vld [vmem:[%s236 + $0x48] sm:$0xf]
      %v314 = vld [vmem:[%s236 + $0x4c] sm:$0xf]
      %v315 = vld [vmem:[%s236 + $0x50] sm:$0xf]
      %v316 = vld [vmem:[%s236 + $0x54] sm:$0xf]
      %v317 = vld [vmem:[%s236 + $0x58] sm:$0xf]
      %v318 = vld [vmem:[%s236 + $0x5c] sm:$0xf]
      %v319 = vld [vmem:[%s236 + $0x60] sm:$0xf]
      %v320 = vld [vmem:[%s236 + $0x64] sm:$0xf]
      %v321 = vld [vmem:[%s236 + $0x68] sm:$0xf]
      %v322 = vld [vmem:[%s236 + $0x6c] sm:$0xf]
      %v323 = vld [vmem:[%s236 + $0x70] sm:$0xf]
      %v324 = vld [vmem:[%s236 + $0x74] sm:$0xf]
      %v325 = vld [vmem:[%s236 + $0x78] sm:$0xf]
      %v326 = vld [vmem:[%s236 + $0x7c] sm:$0xf]
      %v327 = vunpack.c.l.bf16 %v295
      %v328 = vunpack.c.l.bf16 %v296
      %v329 = vunpack.c.l.bf16 %v297
      %v330 = vunpack.c.l.bf16 %v298
      %v331 = vunpack.c.l.bf16 %v299
      %v332 = vunpack.c.l.bf16 %v300
      %v333 = vunpack.c.l.bf16 %v301
      %v334 = vunpack.c.l.bf16 %v302
      %v335 = vunpack.c.l.bf16 %v303
      %v336 = vunpack.c.l.bf16 %v304
      %v337 = vunpack.c.l.bf16 %v305
      %v338 = vunpack.c.l.bf16 %v306
      %v339 = vunpack.c.l.bf16 %v307
      %v340 = vunpack.c.l.bf16 %v308
      %v341 = vunpack.c.l.bf16 %v309
      %v342 = vunpack.c.l.bf16 %v310
      %v343 = vunpack.c.l.bf16 %v311
      %v344 = vunpack.c.l.bf16 %v312
      %v345 = vunpack.c.l.bf16 %v313
      %v346 = vunpack.c.l.bf16 %v314
      %v347 = vunpack.c.l.bf16 %v315
      %v348 = vunpack.c.l.bf16 %v316
      %v349 = vunpack.c.l.bf16 %v317
      %v350 = vunpack.c.l.bf16 %v318
      %v351 = vunpack.c.l.bf16 %v319
      %v352 = vunpack.c.l.bf16 %v320
      %v353 = vunpack.c.l.bf16 %v321
      %v354 = vunpack.c.l.bf16 %v322
      %v355 = vunpack.c.l.bf16 %v323
      %v356 = vunpack.c.l.bf16 %v324
      %v357 = vunpack.c.l.bf16 %v325
      %v358 = vunpack.c.l.bf16 %v326
      %v359 = vmax.f32 %v327, 0.0
      %v360 = vmax.f32 %v328, 0.0
      %v361 = vmax.f32 %v329, 0.0
      %v362 = vmax.f32 %v330, 0.0
      %v363 = vmax.f32 %v331, 0.0
      %v364 = vmax.f32 %v332, 0.0
      %v365 = vmax.f32 %v333, 0.0
      %v366 = vmax.f32 %v334, 0.0
      %v367 = vmax.f32 %v335, 0.0
      %v368 = vmax.f32 %v336, 0.0
      %v369 = vmax.f32 %v337, 0.0
      %v370 = vmax.f32 %v338, 0.0
      %v371 = vmax.f32 %v339, 0.0
      %v372 = vmax.f32 %v340, 0.0
      %v373 = vmax.f32 %v341, 0.0
      %v374 = vmax.f32 %v342, 0.0
      %v375 = vmax.f32 %v343, 0.0
      %v376 = vmax.f32 %v344, 0.0
      %v377 = vmax.f32 %v345, 0.0
      %v378 = vmax.f32 %v346, 0.0
      %v379 = vmax.f32 %v347, 0.0
      %v380 = vmax.f32 %v348, 0.0
      %v381 = vmax.f32 %v349, 0.0
      %v382 = vmax.f32 %v350, 0.0
      %v383 = vmax.f32 %v351, 0.0
      %v384 = vmax.f32 %v352, 0.0
      %v385 = vmax.f32 %v353, 0.0
      %v386 = vmax.f32 %v354, 0.0
      %v387 = vmax.f32 %v355, 0.0
      %v388 = vmax.f32 %v356, 0.0
      %v389 = vmax.f32 %v357, 0.0
      %v390 = vmax.f32 %v358, 0.0
      %v391 = vpack.c.bf16 %v360, %v359
      %v392 = vpack.c.bf16 %v362, %v361
      %v393 = vpack.c.bf16 %v364, %v363
      %v394 = vpack.c.bf16 %v366, %v365
      %v395 = vpack.c.bf16 %v368, %v367
      %v396 = vpack.c.bf16 %v370, %v369
      %v397 = vpack.c.bf16 %v372, %v371
      %v398 = vpack.c.bf16 %v374, %v373
      %v399 = vpack.c.bf16 %v376, %v375
      %v400 = vpack.c.bf16 %v378, %v377
      %v401 = vpack.c.bf16 %v380, %v379
      %v402 = vpack.c.bf16 %v382, %v381
      %v403 = vpack.c.bf16 %v384, %v383
      %v404 = vpack.c.bf16 %v386, %v385
      %v405 = vpack.c.bf16 %v388, %v387
      %v406 = vpack.c.bf16 %v390, %v389
      %v407 = vld [vmem:[#allocation2] sm:$0xff]
      %v408 = vld [vmem:[#allocation2 + $0x8] sm:$0xff]
      %v409 = vld [vmem:[#allocation2 + $0x10] sm:$0xff]
      %v410 = vld [vmem:[#allocation2 + $0x18] sm:$0xff]
      %v411 = vld [vmem:[#allocation2 + $0x20] sm:$0xff]
      %v412 = vld [vmem:[#allocation2 + $0x28] sm:$0xff]
      %v413 = vld [vmem:[#allocation2 + $0x30] sm:$0xff]
      %v414 = vld [vmem:[#allocation2 + $0x38] sm:$0xff]
      %v415 = vld [vmem:[#allocation2 + $0x40] sm:$0xff]
      %v416 = vld [vmem:[#allocation2 + $0x48] sm:$0xff]
      %v417 = vld [vmem:[#allocation2 + $0x50] sm:$0xff]
      %v418 = vld [vmem:[#allocation2 + $0x58] sm:$0xff]
      %v419 = vld [vmem:[#allocation2 + $0x60] sm:$0xff]
      %v420 = vld [vmem:[#allocation2 + $0x68] sm:$0xff]
      %v421 = vld [vmem:[#allocation2 + $0x70] sm:$0xff]
      %v422 = vld [vmem:[#allocation2 + $0x78] sm:$0xff]
      %v423 = vld [vmem:[#allocation2 + $0x80] sm:$0xff]
      %v424 = vld [vmem:[#allocation2 + $0x88] sm:$0xff]
      %v425 = vld [vmem:[#allocation2 + $0x90] sm:$0xff]
      %v426 = vld [vmem:[#allocation2 + $0x98] sm:$0xff]
      %v427 = vld [vmem:[#allocation2 + $0xa0] sm:$0xff]
      %v428 = vld [vmem:[#allocation2 + $0xa8] sm:$0xff]
      %v429 = vld [vmem:[#allocation2 + $0xb0] sm:$0xff]
      %v430 = vld [vmem:[#allocation2 + $0xb8] sm:$0xff]
      %v431 = vld [vmem:[#allocation2 + $0xc0] sm:$0xff]
      %v432 = vld [vmem:[#allocation2 + $0xc8] sm:$0xff]
      %v433 = vld [vmem:[#allocation2 + $0xd0] sm:$0xff]
      %v434 = vld [vmem:[#allocation2 + $0xd8] sm:$0xff]
      %v435 = vld [vmem:[#allocation2 + $0xe0] sm:$0xff]
      %v436 = vld [vmem:[#allocation2 + $0xe8] sm:$0xff]
      %v437 = vld [vmem:[#allocation2 + $0xf0] sm:$0xff]
      %v438 = vld [vmem:[#allocation2 + $0xf8] sm:$0xff]
      %v439 = vld [vmem:[%s245] sm:$0xf]
      %v440 = vld [vmem:[%s245 + $0x4] sm:$0xf]
      %v441 = vld [vmem:[%s245 + $0x8] sm:$0xf]
      %v442 = vld [vmem:[%s245 + $0xc] sm:$0xf]
      %v443 = vld [vmem:[%s245 + $0x10] sm:$0xf]
      %v444 = vld [vmem:[%s245 + $0x14] sm:$0xf]
      %v445 = vld [vmem:[%s245 + $0x18] sm:$0xf]
      %v446 = vld [vmem:[%s245 + $0x1c] sm:$0xf]
      %v447 = vld [vmem:[%s245 + $0x20] sm:$0xf]
      %v448 = vld [vmem:[%s245 + $0x24] sm:$0xf]
      %v449 = vld [vmem:[%s245 + $0x28] sm:$0xf]
      %v450 = vld [vmem:[%s245 + $0x2c] sm:$0xf]
      %v451 = vld [vmem:[%s245 + $0x30] sm:$0xf]
      %v452 = vld [vmem:[%s245 + $0x34] sm:$0xf]
      %v453 = vld [vmem:[%s245 + $0x38] sm:$0xf]
      %v454 = vld [vmem:[%s245 + $0x3c] sm:$0xf]
      %v471 = vunpack.c.l.b16 %v439
      %v472 = vunpack.c.l.b16 %v440
      %v473 = vunpack.c.l.b16 %v441
      %v474 = vunpack.c.l.b16 %v442
      %v475 = vunpack.c.l.b16 %v443
      %v476 = vunpack.c.l.b16 %v444
      %v477 = vunpack.c.l.b16 %v445
      %v478 = vunpack.c.l.b16 %v446
      %v479 = vunpack.c.l.b16 %v447
      %v480 = vunpack.c.l.b16 %v448
      %v481 = vunpack.c.l.b16 %v449
      %v482 = vunpack.c.l.b16 %v450
      %v483 = vunpack.c.l.b16 %v451
      %v484 = vunpack.c.l.b16 %v452
      %v485 = vunpack.c.l.b16 %v453
      %v486 = vunpack.c.l.b16 %v454
      %v487 = vpack.c.b16 %v472, %v471
      %v488 = vpack.c.b16 %v474, %v473
      %v489 = vpack.c.b16 %v476, %v475
      %v490 = vpack.c.b16 %v478, %v477
      %v491 = vpack.c.b16 %v480, %v479
      %v492 = vpack.c.b16 %v482, %v481
      %v493 = vpack.c.b16 %v484, %v483
      %v494 = vpack.c.b16 %v486, %v485
      %503 = vmatpush.bf16.msra.mxu0 %v494
      %504 = vmatpush.bf16.msra.mxu0 %v493
      %505 = vmatpush.bf16.msra.mxu0 %v492
      %506 = vmatpush.bf16.msra.mxu0 %v491
      %507 = vmatpush.bf16.msra.mxu0 %v490
      %508 = vmatpush.bf16.msra.mxu0 %v489
      %509 = vmatpush.bf16.msra.mxu0 %v488
      %510 = vmatpush.bf16.msra.mxu0 %v487
      %511 = vmatmul.bf16.gmra.mxu0 %v391
      %v512 = vpop.f32.mrf.mxu0
      %v513 = vadd.f32 0.0, %v512
      %v514 = vpop.f32.mrf.mxu0
      %v515 = vadd.f32 0.0, %v514
      %516 = vmatmul.bf16.gmra.mxu0 %v392
      %v517 = vpop.f32.mrf.mxu0
      %v518 = vadd.f32 0.0, %v517
      %v519 = vpop.f32.mrf.mxu0
      %v520 = vadd.f32 0.0, %v519
      %521 = vmatmul.bf16.gmra.mxu0 %v393
      %v522 = vpop.f32.mrf.mxu0
      %v523 = vadd.f32 0.0, %v522
      %v524 = vpop.f32.mrf.mxu0
      %v525 = vadd.f32 0.0, %v524
      %526 = vmatmul.bf16.gmra.mxu0 %v394
      %v527 = vpop.f32.mrf.mxu0
      %v528 = vadd.f32 0.0, %v527
      %v529 = vpop.f32.mrf.mxu0
      %v530 = vadd.f32 0.0, %v529
      %531 = vmatmul.bf16.gmra.mxu0 %v395
      %v532 = vpop.f32.mrf.mxu0
      %v533 = vadd.f32 0.0, %v532
      %v534 = vpop.f32.mrf.mxu0
      %v535 = vadd.f32 0.0, %v534
      %536 = vmatmul.bf16.gmra.mxu0 %v396
      %v537 = vpop.f32.mrf.mxu0
      %v538 = vadd.f32 0.0, %v537
      %v539 = vpop.f32.mrf.mxu0
      %v540 = vadd.f32 0.0, %v539
      %541 = vmatmul.bf16.gmra.mxu0 %v397
      %v542 = vpop.f32.mrf.mxu0
      %v543 = vadd.f32 0.0, %v542
      %v544 = vpop.f32.mrf.mxu0
      %v545 = vadd.f32 0.0, %v544
      %546 = vmatmul.bf16.gmra.mxu0 %v398
      %v547 = vpop.f32.mrf.mxu0
      %v548 = vadd.f32 0.0, %v547
      %v549 = vpop.f32.mrf.mxu0
      %v550 = vadd.f32 0.0, %v549
      %551 = vmatmul.bf16.gmra.mxu0 %v399
      %v552 = vpop.f32.mrf.mxu0
      %v553 = vadd.f32 0.0, %v552
      %v554 = vpop.f32.mrf.mxu0
      %v555 = vadd.f32 0.0, %v554
      %556 = vmatmul.bf16.gmra.mxu0 %v400
      %v557 = vpop.f32.mrf.mxu0
      %v558 = vadd.f32 0.0, %v557
      %v559 = vpop.f32.mrf.mxu0
      %v560 = vadd.f32 0.0, %v559
      %561 = vmatmul.bf16.gmra.mxu0 %v401
      %v562 = vpop.f32.mrf.mxu0
      %v563 = vadd.f32 0.0, %v562
      %v564 = vpop.f32.mrf.mxu0
      %v565 = vadd.f32 0.0, %v564
      %566 = vmatmul.bf16.gmra.mxu0 %v402
      %v567 = vpop.f32.mrf.mxu0
      %v568 = vadd.f32 0.0, %v567
      %v569 = vpop.f32.mrf.mxu0
      %v570 = vadd.f32 0.0, %v569
      %571 = vmatmul.bf16.gmra.mxu0 %v403
      %v572 = vpop.f32.mrf.mxu0
      %v573 = vadd.f32 0.0, %v572
      %v574 = vpop.f32.mrf.mxu0
      %v575 = vadd.f32 0.0, %v574
      %576 = vmatmul.bf16.gmra.mxu0 %v404
      %v577 = vpop.f32.mrf.mxu0
      %v578 = vadd.f32 0.0, %v577
      %v579 = vpop.f32.mrf.mxu0
      %v580 = vadd.f32 0.0, %v579
      %581 = vmatmul.bf16.gmra.mxu0 %v405
      %v582 = vpop.f32.mrf.mxu0
      %v583 = vadd.f32 0.0, %v582
      %v584 = vpop.f32.mrf.mxu0
      %v585 = vadd.f32 0.0, %v584
      %586 = vmatmul.bf16.gmra.mxu0 %v406
      %v587 = vpop.f32.mrf.mxu0
      %v588 = vadd.f32 0.0, %v587
      %v589 = vpop.f32.mrf.mxu0
      %v590 = vadd.f32 0.0, %v589
      %591 = vdwg.mxu0
      %v592 = vadd.f32 %v407, %v513
      %v593 = vadd.f32 %v408, %v515
      %v594 = vadd.f32 %v409, %v518
      %v595 = vadd.f32 %v410, %v520
      %v596 = vadd.f32 %v411, %v523
      %v597 = vadd.f32 %v412, %v525
      %v598 = vadd.f32 %v413, %v528
      %v599 = vadd.f32 %v414, %v530
      %v600 = vadd.f32 %v415, %v533
      %v601 = vadd.f32 %v416, %v535
      %v602 = vadd.f32 %v417, %v538
      %v603 = vadd.f32 %v418, %v540
      %v604 = vadd.f32 %v419, %v543
      %v605 = vadd.f32 %v420, %v545
      %v606 = vadd.f32 %v421, %v548
      %v607 = vadd.f32 %v422, %v550
      %v608 = vadd.f32 %v423, %v553
      %v609 = vadd.f32 %v424, %v555
      %v610 = vadd.f32 %v425, %v558
      %v611 = vadd.f32 %v426, %v560
      %v612 = vadd.f32 %v427, %v563
      %v613 = vadd.f32 %v428, %v565
      %v614 = vadd.f32 %v429, %v568
      %v615 = vadd.f32 %v430, %v570
      %v616 = vadd.f32 %v431, %v573
      %v617 = vadd.f32 %v432, %v575
      %v618 = vadd.f32 %v433, %v578
      %v619 = vadd.f32 %v434, %v580
      %v620 = vadd.f32 %v435, %v583
      %v621 = vadd.f32 %v436, %v585
      %v622 = vadd.f32 %v437, %v588
      %v623 = vadd.f32 %v438, %v590
      %624 = vst [vmem:[#allocation2] sm:$0xff] %v592
      %625 = vst [vmem:[#allocation2 + $0x8] sm:$0xff] %v593
      %626 = vst [vmem:[#allocation2 + $0x10] sm:$0xff] %v594
      %627 = vst [vmem:[#allocation2 + $0x18] sm:$0xff] %v595
      %628 = vst [vmem:[#allocation2 + $0x20] sm:$0xff] %v596
      %629 = vst [vmem:[#allocation2 + $0x28] sm:$0xff] %v597
      %630 = vst [vmem:[#allocation2 + $0x30] sm:$0xff] %v598
      %631 = vst [vmem:[#allocation2 + $0x38] sm:$0xff] %v599
      %632 = vst [vmem:[#allocation2 + $0x40] sm:$0xff] %v600
      %633 = vst [vmem:[#allocation2 + $0x48] sm:$0xff] %v601
      %634 = vst [vmem:[#allocation2 + $0x50] sm:$0xff] %v602
      %635 = vst [vmem:[#allocation2 + $0x58] sm:$0xff] %v603
      %636 = vst [vmem:[#allocation2 + $0x60] sm:$0xff] %v604
      %637 = vst [vmem:[#allocation2 + $0x68] sm:$0xff] %v605
      %638 = vst [vmem:[#allocation2 + $0x70] sm:$0xff] %v606
      %639 = vst [vmem:[#allocation2 + $0x78] sm:$0xff] %v607
      %640 = vst [vmem:[#allocation2 + $0x80] sm:$0xff] %v608
      %641 = vst [vmem:[#allocation2 + $0x88] sm:$0xff] %v609
      %642 = vst [vmem:[#allocation2 + $0x90] sm:$0xff] %v610
      %643 = vst [vmem:[#allocation2 + $0x98] sm:$0xff] %v611
      %644 = vst [vmem:[#allocation2 + $0xa0] sm:$0xff] %v612
      %645 = vst [vmem:[#allocation2 + $0xa8] sm:$0xff] %v613
      %646 = vst [vmem:[#allocation2 + $0xb0] sm:$0xff] %v614
      %647 = vst [vmem:[#allocation2 + $0xb8] sm:$0xff] %v615
      %648 = vst [vmem:[#allocation2 + $0xc0] sm:$0xff] %v616
      %649 = vst [vmem:[#allocation2 + $0xc8] sm:$0xff] %v617
      %650 = vst [vmem:[#allocation2 + $0xd0] sm:$0xff] %v618
      %651 = vst [vmem:[#allocation2 + $0xd8] sm:$0xff] %v619
      %652 = vst [vmem:[#allocation2 + $0xe0] sm:$0xff] %v620
      %653 = vst [vmem:[#allocation2 + $0xe8] sm:$0xff] %v621
      %654 = vst [vmem:[#allocation2 + $0xf0] sm:$0xff] %v622
      %655 = vst [vmem:[#allocation2 + $0xf8] sm:$0xff] %v623
      // Predicated region
      $region37: #{dalle_encoder_forward.26} parent=31 // pred_check
        %p656 = pneg %p259
      $region38: #{dalle_encoder_forward.26} parent=31 // pred_check_branch
        %658 = sbr.rel (%p656) target = $region40
      $region39: #{dalle_encoder_forward.26} parent=31 // pred_region
        %v659 = vld [vmem:[#allocation2] sm:$0xff]
        %v660 = vld [vmem:[#allocation2 + $0x8] sm:$0xff]
        %v661 = vld [vmem:[#allocation2 + $0x10] sm:$0xff]
        %v662 = vld [vmem:[#allocation2 + $0x18] sm:$0xff]
        %v663 = vld [vmem:[#allocation2 + $0x20] sm:$0xff]
        %v664 = vld [vmem:[#allocation2 + $0x28] sm:$0xff]
        %v665 = vld [vmem:[#allocation2 + $0x30] sm:$0xff]
        %v666 = vld [vmem:[#allocation2 + $0x38] sm:$0xff]
        %v667 = vld [vmem:[#allocation2 + $0x40] sm:$0xff]
        %v668 = vld [vmem:[#allocation2 + $0x48] sm:$0xff]
        %v669 = vld [vmem:[#allocation2 + $0x50] sm:$0xff]
        %v670 = vld [vmem:[#allocation2 + $0x58] sm:$0xff]
        %v671 = vld [vmem:[#allocation2 + $0x60] sm:$0xff]
        %v672 = vld [vmem:[#allocation2 + $0x68] sm:$0xff]
        %v673 = vld [vmem:[#allocation2 + $0x70] sm:$0xff]
        %v674 = vld [vmem:[#allocation2 + $0x78] sm:$0xff]
        %v675 = vld [vmem:[#allocation2 + $0x80] sm:$0xff]
        %v676 = vld [vmem:[#allocation2 + $0x88] sm:$0xff]
        %v677 = vld [vmem:[#allocation2 + $0x90] sm:$0xff]
        %v678 = vld [vmem:[#allocation2 + $0x98] sm:$0xff]
        %v679 = vld [vmem:[#allocation2 + $0xa0] sm:$0xff]
        %v680 = vld [vmem:[#allocation2 + $0xa8] sm:$0xff]
        %v681 = vld [vmem:[#allocation2 + $0xb0] sm:$0xff]
        %v682 = vld [vmem:[#allocation2 + $0xb8] sm:$0xff]
        %v683 = vld [vmem:[#allocation2 + $0xc0] sm:$0xff]
        %v684 = vld [vmem:[#allocation2 + $0xc8] sm:$0xff]
        %v685 = vld [vmem:[#allocation2 + $0xd0] sm:$0xff]
        %v686 = vld [vmem:[#allocation2 + $0xd8] sm:$0xff]
        %v687 = vld [vmem:[#allocation2 + $0xe0] sm:$0xff]
        %v688 = vld [vmem:[#allocation2 + $0xe8] sm:$0xff]
        %v689 = vld [vmem:[#allocation2 + $0xf0] sm:$0xff]
        %v690 = vld [vmem:[#allocation2 + $0xf8] sm:$0xff]
        %v691 = vld [vmem:[%s249] sm:$0x1]
        %v693 = vperm.slane %v691, 0
        %v695 = vadd.f32 %v659, %v693
        %v696 = vadd.f32 %v660, %v693
        %v697 = vadd.f32 %v661, %v693
        %v698 = vadd.f32 %v662, %v693
        %v699 = vadd.f32 %v663, %v693
        %v700 = vadd.f32 %v664, %v693
        %v701 = vadd.f32 %v665, %v693
        %v702 = vadd.f32 %v666, %v693
        %v703 = vadd.f32 %v667, %v693
        %v704 = vadd.f32 %v668, %v693
        %v705 = vadd.f32 %v669, %v693
        %v706 = vadd.f32 %v670, %v693
        %v707 = vadd.f32 %v671, %v693
        %v708 = vadd.f32 %v672, %v693
        %v709 = vadd.f32 %v673, %v693
        %v710 = vadd.f32 %v674, %v693
        %v711 = vadd.f32 %v675, %v693
        %v712 = vadd.f32 %v676, %v693
        %v713 = vadd.f32 %v677, %v693
        %v714 = vadd.f32 %v678, %v693
        %v715 = vadd.f32 %v679, %v693
        %v716 = vadd.f32 %v680, %v693
        %v717 = vadd.f32 %v681, %v693
        %v718 = vadd.f32 %v682, %v693
        %v719 = vadd.f32 %v683, %v693
        %v720 = vadd.f32 %v684, %v693
        %v721 = vadd.f32 %v685, %v693
        %v722 = vadd.f32 %v686, %v693
        %v723 = vadd.f32 %v687, %v693
        %v724 = vadd.f32 %v688, %v693
        %v725 = vadd.f32 %v689, %v693
        %v726 = vadd.f32 %v690, %v693
        %v727 = vpack.c.bf16 %v695, %v695
        %v728 = vpack.c.bf16 %v696, %v696
        %v729 = vpack.c.bf16 %v697, %v697
        %v730 = vpack.c.bf16 %v698, %v698
        %v731 = vpack.c.bf16 %v699, %v699
        %v732 = vpack.c.bf16 %v700, %v700
        %v733 = vpack.c.bf16 %v701, %v701
        %v734 = vpack.c.bf16 %v702, %v702
        %v735 = vpack.c.bf16 %v703, %v703
        %v736 = vpack.c.bf16 %v704, %v704
        %v737 = vpack.c.bf16 %v705, %v705
        %v738 = vpack.c.bf16 %v706, %v706
        %v739 = vpack.c.bf16 %v707, %v707
        %v740 = vpack.c.bf16 %v708, %v708
        %v741 = vpack.c.bf16 %v709, %v709
        %v742 = vpack.c.bf16 %v710, %v710
        %v743 = vpack.c.bf16 %v711, %v711
        %v744 = vpack.c.bf16 %v712, %v712
        %v745 = vpack.c.bf16 %v713, %v713
        %v746 = vpack.c.bf16 %v714, %v714
        %v747 = vpack.c.bf16 %v715, %v715
        %v748 = vpack.c.bf16 %v716, %v716
        %v749 = vpack.c.bf16 %v717, %v717
        %v750 = vpack.c.bf16 %v718, %v718
        %v751 = vpack.c.bf16 %v719, %v719
        %v752 = vpack.c.bf16 %v720, %v720
        %v753 = vpack.c.bf16 %v721, %v721
        %v754 = vpack.c.bf16 %v722, %v722
        %v755 = vpack.c.bf16 %v723, %v723
        %v756 = vpack.c.bf16 %v724, %v724
        %v757 = vpack.c.bf16 %v725, %v725
        %v758 = vpack.c.bf16 %v726, %v726
        %759 = vst [vmem:[%s257] sm:$0xf] %v727
        %760 = vst [vmem:[%s257 + $0x4] sm:$0xf] %v728
        %761 = vst [vmem:[%s257 + $0x8] sm:$0xf] %v729
        %762 = vst [vmem:[%s257 + $0xc] sm:$0xf] %v730
        %763 = vst [vmem:[%s257 + $0x10] sm:$0xf] %v731
        %764 = vst [vmem:[%s257 + $0x14] sm:$0xf] %v732
        %765 = vst [vmem:[%s257 + $0x18] sm:$0xf] %v733
        %766 = vst [vmem:[%s257 + $0x1c] sm:$0xf] %v734
        %767 = vst [vmem:[%s257 + $0x20] sm:$0xf] %v735
        %768 = vst [vmem:[%s257 + $0x24] sm:$0xf] %v736
        %769 = vst [vmem:[%s257 + $0x28] sm:$0xf] %v737
        %770 = vst [vmem:[%s257 + $0x2c] sm:$0xf] %v738
        %771 = vst [vmem:[%s257 + $0x30] sm:$0xf] %v739
        %772 = vst [vmem:[%s257 + $0x34] sm:$0xf] %v740
        %773 = vst [vmem:[%s257 + $0x38] sm:$0xf] %v741
        %774 = vst [vmem:[%s257 + $0x3c] sm:$0xf] %v742
        %775 = vst [vmem:[%s257 + $0x40] sm:$0xf] %v743
        %776 = vst [vmem:[%s257 + $0x44] sm:$0xf] %v744
        %777 = vst [vmem:[%s257 + $0x48] sm:$0xf] %v745
        %778 = vst [vmem:[%s257 + $0x4c] sm:$0xf] %v746
        %779 = vst [vmem:[%s257 + $0x50] sm:$0xf] %v747
        %780 = vst [vmem:[%s257 + $0x54] sm:$0xf] %v748
        %781 = vst [vmem:[%s257 + $0x58] sm:$0xf] %v749
        %782 = vst [vmem:[%s257 + $0x5c] sm:$0xf] %v750
        %783 = vst [vmem:[%s257 + $0x60] sm:$0xf] %v751
        %784 = vst [vmem:[%s257 + $0x64] sm:$0xf] %v752
        %785 = vst [vmem:[%s257 + $0x68] sm:$0xf] %v753
        %786 = vst [vmem:[%s257 + $0x6c] sm:$0xf] %v754
        %787 = vst [vmem:[%s257 + $0x70] sm:$0xf] %v755
        %788 = vst [vmem:[%s257 + $0x74] sm:$0xf] %v756
        %789 = vst [vmem:[%s257 + $0x78] sm:$0xf] %v757
        %790 = vst [vmem:[%s257 + $0x7c] sm:$0xf] %v758
      $region40: #{dalle_encoder_forward.26} parent=31 // pred_fallthru
        _
      %s791 = smul.u32 32, %s19
      %p792 = scmp.lt.s32.totalorder %s791, 63
      %s793 = scalar_select %p792, %s791, 63
      %p794 = scmp.lt.s32.totalorder %s20, 0
      %s795 = scalar_select %p794, %s20, 0
      %s796 = sadd.s32 %s795, %s793
      %s797 = smul.addr %s796, 4
      %s798 = scalar_lea.vmem %s3, %s797
      // Predicated region
      $region41: #{dalle_encoder_forward.26} parent=31 // pred_check
        %p799 = pneg %p135
      $region42: #{dalle_encoder_forward.26} parent=31 // pred_check_branch
        %801 = sbr.rel (%p799) target = $region44
      $region43: #{dalle_encoder_forward.26} parent=31 // pred_region
        %s802 = smul.u32 32, %s19
      $region44: #{dalle_encoder_forward.26} parent=31 // pred_fallthru
        _
    $region32: #{dalle_encoder_forward.26} parent=5 // pred_fallthru
      _
    %p803 = scmp.le.s32.totalorder 2, %s9
    // Predicated region
    $region45: #{dalle_encoder_forward.26} parent=5 // pred_check
      %p804 = pneg %p803
    $region46: #{dalle_encoder_forward.26} parent=5 // pred_check_branch
      %806 = sbr.rel (%p804) target = $region48
    $region47: #{dalle_encoder_forward.26} parent=5 // pred_region
      %s807 = ssub.s32 %s9, 2
      // Predicated region
      $region49: #{dalle_encoder_forward.26} parent=47 // pred_check
        %p808 = pneg %p141
      $region50: #{dalle_encoder_forward.26} parent=47 // pred_check_branch
        %810 = sbr.rel (%p808) target = $region52
      $region51: #{dalle_encoder_forward.26} parent=47 // pred_region
        %s811 = smul.u32 32, %s22
        %p812 = scmp.lt.s32.totalorder %s811, 63
        %s813 = scalar_select %p812, %s811, 63
        %p814 = scmp.lt.s32.totalorder %s23, 0
        %s815 = scalar_select %p814, %s23, 0
        %s816 = sadd.s32 %s815, %s813
        %s817 = smul.addr %s816, 4
        %s818 = scalar_lea.vmem %s3, %s817
      $region52: #{dalle_encoder_forward.26} parent=47 // pred_fallthru
        _
    $region48: #{dalle_encoder_forward.26} parent=5 // pred_fallthru
      _
  $region6: #{dalle_encoder_forward.26} parent=0 // loop_footer
    %s13 = sadd.s32 1, %s9
  $region7: #{dalle_encoder_forward.26} parent=0 // loop_footer_branch
    %8 = sbr.rel target = $region3
  $region8: #{dalle_encoder_forward.26} parent=0 // loop_exit
    _

// kernel: dalle_encoder_forward.28
$region0: #{dalle_encoder_forward.28}
  #allocation0 [shape = 'u32[]', space=smem, size = 0x4, offset = 0x4, fixed_abs, tag = 'smem constant byte address 0x4 - core index']
  #allocation1 [shape = 'u32[72,128]{1,0:T(1,128)}', space=vmem, size = 0x9000, scoped, tag = 'internal scratch']
  #allocation2 [shape = 'f32[256,128]{1,0:T(8,128)}', space=vmem, size = 0x20000, scoped, tag = 'scratch operand']
  %s0 = inlined_call_operand.vmem [shape: bf16[512,128], index: 0, kind: input, shape index: {}]
  %s1 = inlined_call_operand.vmem [shape: bf16[128,128], index: 1, kind: input, shape index: {}]
  %s2 = inlined_call_operand.vmem [shape: f32[1,128], index: 2, kind: input, shape index: {}]
  %s3 = inlined_call_operand.vmem [shape: bf16[512,128], index: 3, kind: input, shape index: {}]
  %s4 = inlined_call_operand.vmem [shape: bf16[512,128], index: 4, kind: output, shape index: {}]
  %s5 = sld [smem:[#allocation0]]
  $region57: #{dalle_encoder_forward.28} parent=0
    _
  %s7 = ssub.s32 1, %s5
  %s8 = scalar_select 0, %s7, %s5
  loop: start=0, step=1, limit=4
  $region2: #{dalle_encoder_forward.28} parent=0 // loop_pre_header
    _
  $region3: #{dalle_encoder_forward.28} parent=0 // loop_header
    %s10 = sphi 0, %s14
    %p11 = scmp.ge.s32.totalorder %s10, 4
    %s17 = sphi 0, %s36
    %s18 = sphi 0, %s32
    %s19 = sphi 0, %s28
    %s20 = sphi 0, %s17
    %s21 = sphi 0, %s18
    %s22 = sphi 0, %s19
    %s23 = sphi 0, %s20
    %s24 = sphi 0, %s21
    %s25 = sphi 0, %s22
    %s41 = sphi 0, %s43
    %s44 = sphi 0, %s41
    %s45 = sphi 0, %s44
    %s61 = sphi 0, %s45
    %s69 = sphi 0, %s71
    %s72 = sphi 0, %s69
    %s73 = sphi 0, %s72
    %s89 = sphi 0, %s73
    %s95 = sphi 0, %s97
    %s98 = sphi 0, %s95
    %s99 = sphi 0, %s98
    %s115 = sphi 0, %s99
    %s123 = sphi 0, %s125
    %s126 = sphi 0, %s123
    %s127 = sphi 0, %s126
    %s143 = sphi 0, %s127
    %s151 = sphi 0, %s153
    %s154 = sphi 0, %s151
    %s155 = sphi 0, %s154
    %s171 = sphi 0, %s155
  $region4: #{dalle_encoder_forward.28} parent=0 // loop_header_branch
    %13 = sbr.rel (%p11) target = $region8
  $region5: #{dalle_encoder_forward.28} parent=0 // loop_body
    %s15 = ssub.s32 %s10, 1
    %s16 = ssub.s32 %s10, 2
    %s26 = sadd.s32 1, %s19
    %p27 = scmp.ge.s32.totalorder %s26, 1
    %s28 = scalar_select %p27, 0, %s26
    %s29 = sadd.s32 1, %s18
    %s30 = scalar_select %p27, %s29, %s18
    %p31 = scmp.ge.s32.totalorder %s30, 1
    %s32 = scalar_select %p31, 0, %s30
    %s33 = sadd.s32 1, %s17
    %s34 = scalar_select %p31, %s33, %s17
    %p35 = scmp.ge.s32.totalorder %s34, 2
    %s36 = scalar_select %p35, 0, %s34
    %s37 = ssub.s32 %s17, %s36
    %s38 = ssub.s32 %s19, %s28
    %s39 = sor.u32 %s37, %s38
    %p40 = scmp.eq.s32.totalorder %s39, 0
    %s42 = sadd.s32 %s41, 1
    %s43 = scalar_select %p40, %s41, %s42
    %p46 = pneg %p40
    %p47 = scmp.eq.s32.totalorder %s10, 1
    %p48 = por %p46, %p47
    %p49 = scmp.ne.s32.totalorder %s41, %s44
    %p50 = scmp.eq.s32.totalorder %s10, 0
    %p51 = por %p49, %p50
    %p52 = scmp.ne.s32.totalorder %s41, %s44
    %p53 = scmp.eq.s32.totalorder %s15, 1
    %p54 = por %p52, %p53
    %p55 = scmp.ne.s32.totalorder %s44, %s45
    %p56 = scmp.eq.s32.totalorder %s15, 0
    %p57 = por %p55, %p56
    %p58 = scmp.ne.s32.totalorder %s44, %s45
    %p59 = scmp.eq.s32.totalorder %s16, 1
    %p60 = por %p58, %p59
    %p62 = scmp.ne.s32.totalorder %s45, %s61
    %p63 = scmp.eq.s32.totalorder %s16, 0
    %p64 = por %p62, %p63
    %s65 = ssub.s32 %s19, %s28
    %s66 = ssub.s32 %s18, %s32
    %s67 = sor.u32 %s65, %s66
    %p68 = scmp.eq.s32.totalorder %s67, 0
    %s70 = sadd.s32 %s69, 1
    %s71 = scalar_select %p68, %s69, %s70
    %p74 = pneg %p68
    %p75 = scmp.eq.s32.totalorder %s10, 1
    %p76 = por %p74, %p75
    %p77 = scmp.ne.s32.totalorder %s69, %s72
    %p78 = scmp.eq.s32.totalorder %s10, 0
    %p79 = por %p77, %p78
    %p80 = scmp.ne.s32.totalorder %s69, %s72
    %p81 = scmp.eq.s32.totalorder %s15, 1
    %p82 = por %p80, %p81
    %p83 = scmp.ne.s32.totalorder %s72, %s73
    %p84 = scmp.eq.s32.totalorder %s15, 0
    %p85 = por %p83, %p84
    %p86 = scmp.ne.s32.totalorder %s72, %s73
    %p87 = scmp.eq.s32.totalorder %s16, 1
    %p88 = por %p86, %p87
    %p90 = scmp.ne.s32.totalorder %s73, %s89
    %p91 = scmp.eq.s32.totalorder %s16, 0
    %p92 = por %p90, %p91
    %s93 = ssub.s32 %s18, %s32
    %p94 = scmp.eq.s32.totalorder %s93, 0
    %s96 = sadd.s32 %s95, 1
    %s97 = scalar_select %p94, %s95, %s96
    %p100 = pneg %p94
    %p101 = scmp.eq.s32.totalorder %s10, 1
    %p102 = por %p100, %p101
    %p103 = scmp.ne.s32.totalorder %s95, %s98
    %p104 = scmp.eq.s32.totalorder %s10, 0
    %p105 = por %p103, %p104
    %p106 = scmp.ne.s32.totalorder %s95, %s98
    %p107 = scmp.eq.s32.totalorder %s15, 1
    %p108 = por %p106, %p107
    %p109 = scmp.ne.s32.totalorder %s98, %s99
    %p110 = scmp.eq.s32.totalorder %s15, 0
    %p111 = por %p109, %p110
    %p112 = scmp.ne.s32.totalorder %s98, %s99
    %p113 = scmp.eq.s32.totalorder %s16, 1
    %p114 = por %p112, %p113
    %p116 = scmp.ne.s32.totalorder %s99, %s115
    %p117 = scmp.eq.s32.totalorder %s16, 0
    %p118 = por %p116, %p117
    %s119 = ssub.s32 %s17, %s36
    %s120 = ssub.s32 %s18, %s32
    %s121 = sor.u32 %s119, %s120
    %p122 = scmp.eq.s32.totalorder %s121, 0
    %s124 = sadd.s32 %s123, 1
    %s125 = scalar_select %p122, %s123, %s124
    %p128 = pneg %p122
    %p129 = scmp.eq.s32.totalorder %s10, 1
    %p130 = por %p128, %p129
    %p131 = scmp.ne.s32.totalorder %s123, %s126
    %p132 = scmp.eq.s32.totalorder %s10, 0
    %p133 = por %p131, %p132
    %p134 = scmp.ne.s32.totalorder %s123, %s126
    %p135 = scmp.eq.s32.totalorder %s15, 1
    %p136 = por %p134, %p135
    %p137 = scmp.ne.s32.totalorder %s126, %s127
    %p138 = scmp.eq.s32.totalorder %s15, 0
    %p139 = por %p137, %p138
    %p140 = scmp.ne.s32.totalorder %s126, %s127
    %p141 = scmp.eq.s32.totalorder %s16, 1
    %p142 = por %p140, %p141
    %p144 = scmp.ne.s32.totalorder %s127, %s143
    %p145 = scmp.eq.s32.totalorder %s16, 0
    %p146 = por %p144, %p145
    %s147 = ssub.s32 %s17, %s36
    %s148 = ssub.s32 %s18, %s32
    %s149 = sor.u32 %s147, %s148
    %p150 = scmp.eq.s32.totalorder %s149, 0
    %s152 = sadd.s32 %s151, 1
    %s153 = scalar_select %p150, %s151, %s152
    %p156 = pneg %p150
    %p157 = scmp.eq.s32.totalorder %s10, 1
    %p158 = por %p156, %p157
    %p159 = scmp.ne.s32.totalorder %s151, %s154
    %p160 = scmp.eq.s32.totalorder %s10, 0
    %p161 = por %p159, %p160
    %p162 = scmp.ne.s32.totalorder %s151, %s154
    %p163 = scmp.eq.s32.totalorder %s15, 1
    %p164 = por %p162, %p163
    %p165 = scmp.ne.s32.totalorder %s154, %s155
    %p166 = scmp.eq.s32.totalorder %s15, 0
    %p167 = por %p165, %p166
    %p168 = scmp.ne.s32.totalorder %s154, %s155
    %p169 = scmp.eq.s32.totalorder %s16, 1
    %p170 = por %p168, %p169
    %p172 = scmp.ne.s32.totalorder %s155, %s171
    %p173 = scmp.eq.s32.totalorder %s16, 0
    %p174 = por %p172, %p173
    %p175 = scmp.le.s32.totalorder 1, %s10
    %p176 = scmp.lt.s32.totalorder %s10, 3
    %p177 = pnand %p175, %p176
    %p178 = pneg %p177
    // Predicated region
    $region9: #{dalle_encoder_forward.28} parent=5 // pred_check
      _
    $region10: #{dalle_encoder_forward.28} parent=5 // pred_check_branch
      %180 = sbr.rel (%p177) target = $region12
    $region11: #{dalle_encoder_forward.28} parent=5 // pred_region
      %s181 = ssub.s32 %s10, 1
      // Predicated region
      $region13: #{dalle_encoder_forward.28} parent=11 // pred_check
        %p182 = pneg %p85
      $region14: #{dalle_encoder_forward.28} parent=11 // pred_check_branch
        %184 = sbr.rel (%p182) target = $region16
      $region15: #{dalle_encoder_forward.28} parent=11 // pred_region
        %s185 = smul.u32 16, %s22
        %p186 = scmp.lt.s32.totalorder %s185, 15
        %s187 = scalar_select %p186, %s185, 15
        %p188 = scmp.lt.s32.totalorder %s21, 0
        %s189 = scalar_select %p188, %s21, 0
        %s190 = sadd.s32 %s189, %s187
        %s191 = smul.addr %s190, 4
        %s192 = scalar_lea.vmem %s1, %s191
        %s193 = smul.u32 16, %s22
      $region16: #{dalle_encoder_forward.28} parent=11 // pred_fallthru
        _
      // Predicated region
      $region17: #{dalle_encoder_forward.28} parent=11 // pred_check
        %p194 = pneg %p111
      $region18: #{dalle_encoder_forward.28} parent=11 // pred_check_branch
        %196 = sbr.rel (%p194) target = $region20
      $region19: #{dalle_encoder_forward.28} parent=11 // pred_region
        %p197 = scmp.lt.s32.totalorder %s21, 0
        %s198 = scalar_select %p197, %s21, 0
        %s199 = scalar_lea.vmem %s2, %s198
      $region20: #{dalle_encoder_forward.28} parent=11 // pred_fallthru
        _
    $region12: #{dalle_encoder_forward.28} parent=5 // pred_fallthru
      _
    %p200 = scmp.lt.s32.totalorder %s10, 2
    // Predicated region
    $region21: #{dalle_encoder_forward.28} parent=5 // pred_check
      %p201 = pneg %p200
    $region22: #{dalle_encoder_forward.28} parent=5 // pred_check_branch
      %203 = sbr.rel (%p201) target = $region24
    $region23: #{dalle_encoder_forward.28} parent=5 // pred_region
      // Predicated region
      $region25: #{dalle_encoder_forward.28} parent=23 // pred_check
        %p204 = pneg %p51
      $region26: #{dalle_encoder_forward.28} parent=23 // pred_check_branch
        %206 = sbr.rel (%p204) target = $region28
      $region27: #{dalle_encoder_forward.28} parent=23 // pred_region
        %s207 = smul.u32 32, %s17
        %p208 = scmp.lt.s32.totalorder %s207, 63
        %s209 = scalar_select %p208, %s207, 63
        %p210 = scmp.lt.s32.totalorder %s19, 0
        %s211 = scalar_select %p210, %s19, 0
        %s212 = sadd.s32 %s211, %s209
        %s213 = smul.addr %s212, 4
        %s214 = scalar_lea.vmem %s0, %s213
        %s215 = smul.u32 32, %s17
      $region28: #{dalle_encoder_forward.28} parent=23 // pred_fallthru
        _
      // Predicated region
      $region29: #{dalle_encoder_forward.28} parent=23 // pred_check
        %p216 = pneg %p133
      $region30: #{dalle_encoder_forward.28} parent=23 // pred_check_branch
        %218 = sbr.rel (%p216) target = $region32
      $region31: #{dalle_encoder_forward.28} parent=23 // pred_region
        %s219 = smul.u32 32, %s17
        %p220 = scmp.lt.s32.totalorder %s219, 63
        %s221 = scalar_select %p220, %s219, 63
        %p222 = scmp.lt.s32.totalorder %s18, 0
        %s223 = scalar_select %p222, %s18, 0
        %s224 = sadd.s32 %s223, %s221
        %s225 = smul.addr %s224, 4
        %s226 = scalar_lea.vmem %s3, %s225
        %s227 = smul.u32 32, %s17
      $region32: #{dalle_encoder_forward.28} parent=23 // pred_fallthru
        _
    $region24: #{dalle_encoder_forward.28} parent=5 // pred_fallthru
      _
    %p228 = scmp.le.s32.totalorder 1, %s10
    %p229 = scmp.lt.s32.totalorder %s10, 3
    %p230 = pnand %p228, %p229
    %p231 = pneg %p230
    // Predicated region
    $region33: #{dalle_encoder_forward.28} parent=5 // pred_check
      _
    $region34: #{dalle_encoder_forward.28} parent=5 // pred_check_branch
      %233 = sbr.rel (%p230) target = $region36
    $region35: #{dalle_encoder_forward.28} parent=5 // pred_region
      %s234 = ssub.s32 %s10, 1
      %s235 = smul.u32 32, %s20
      %p236 = scmp.lt.s32.totalorder %s235, 63
      %s237 = scalar_select %p236, %s235, 63
      %p238 = scmp.lt.s32.totalorder %s22, 0
      %s239 = scalar_select %p238, %s22, 0
      %s240 = sadd.s32 %s239, %s237
      %s241 = smul.addr %s240, 4
      %s242 = scalar_lea.vmem %s0, %s241
      %p243 = pneg %p57
      %p244 = pneg %p54
      %s245 = smul.u32 16, %s22
      %p246 = scmp.lt.s32.totalorder %s245, 15
      %s247 = scalar_select %p246, %s245, 15
      %p248 = scmp.lt.s32.totalorder %s21, 0
      %s249 = scalar_select %p248, %s21, 0
      %s250 = sadd.s32 %s249, %s247
      %s251 = smul.addr %s250, 4
      %s252 = scalar_lea.vmem %s1, %s251
      %p253 = pneg %p85
      %p254 = pneg %p82
      %p255 = scmp.lt.s32.totalorder %s21, 0
      %s256 = scalar_select %p255, %s21, 0
      %s257 = scalar_lea.vmem %s2, %s256
      %p258 = pneg %p111
      %p259 = pneg %p108
      %s260 = smul.u32 32, %s20
      %p261 = scmp.lt.s32.totalorder %s260, 63
      %s262 = scalar_select %p261, %s260, 63
      %p263 = scmp.lt.s32.totalorder %s21, 0
      %s264 = scalar_select %p263, %s21, 0
      %s265 = sadd.s32 %s264, %s262
      %s266 = smul.addr %s265, 4
      %s267 = scalar_lea.vmem %s3, %s266
      %p268 = pneg %p139
      %p269 = pneg %p136
      %p270 = pneg %p167
      %p271 = pneg %p164
      %s272 = smul.u32 32, %s20
      %p273 = scmp.lt.s32.totalorder %s272, 63
      %s274 = scalar_select %p273, %s272, 63
      %p275 = scmp.lt.s32.totalorder %s21, 0
      %s276 = scalar_select %p275, %s21, 0
      %s277 = sadd.s32 %s276, %s274
      %s278 = smul.addr %s277, 4
      %s279 = scalar_lea.vmem %s4, %s278
      %s280 = smul.u32 32, %s20
      %p281 = scmp.lt.s32.totalorder %s280, 63
      %s282 = scalar_select %p281, %s280, 63
      %p283 = scmp.lt.s32.totalorder %s22, 0
      %s284 = scalar_select %p283, %s22, 0
      %s285 = sadd.s32 %s284, %s282
      %s286 = smul.addr %s285, 4
      %s287 = scalar_lea.vmem %s0, %s286
      %s288 = smul.u32 32, %s20
      %s289 = smul.u32 16, %s22
      %p290 = scmp.lt.s32.totalorder %s289, 15
      %s291 = scalar_select %p290, %s289, 15
      %p292 = scmp.lt.s32.totalorder %s21, 0
      %s293 = scalar_select %p292, %s21, 0
      %s294 = sadd.s32 %s293, %s291
      %s295 = smul.addr %s294, 4
      %s296 = scalar_lea.vmem %s1, %s295
      %s297 = smul.u32 16, %s22
      %p298 = scmp.lt.s32.totalorder %s21, 0
      %s299 = scalar_select %p298, %s21, 0
      %s300 = scalar_lea.vmem %s2, %s299
      %s301 = smul.u32 32, %s20
      %p302 = scmp.lt.s32.totalorder %s301, 63
      %s303 = scalar_select %p302, %s301, 63
      %p304 = scmp.lt.s32.totalorder %s21, 0
      %s305 = scalar_select %p304, %s21, 0
      %s306 = sadd.s32 %s305, %s303
      %s307 = smul.addr %s306, 4
      %s308 = scalar_lea.vmem %s3, %s307
      %s309 = smul.u32 32, %s20
      %s310 = smul.u32 32, %s20
      %p311 = scmp.lt.s32.totalorder %s310, 63
      %s312 = scalar_select %p311, %s310, 63
      %p313 = scmp.lt.s32.totalorder %s21, 0
      %s314 = scalar_select %p313, %s21, 0
      %s315 = sadd.s32 %s314, %s312
      %s316 = smul.addr %s315, 4
      %s317 = scalar_lea.vmem %s4, %s316
      %s318 = smul.u32 32, %s20
      %p319 = scmp.eq.s32.totalorder %s22, 0
      // Predicated region
      $region37: #{dalle_encoder_forward.28} parent=35 // pred_check
        %p320 = pneg %p319
      $region38: #{dalle_encoder_forward.28} parent=35 // pred_check_branch
        %322 = sbr.rel (%p320) target = $region40
      $region39: #{dalle_encoder_forward.28} parent=35 // pred_region
        %323 = vst [vmem:[#allocation2] sm:$0xff] 0.0
        %324 = vst [vmem:[#allocation2 + $0x8] sm:$0xff] 0.0
        %325 = vst [vmem:[#allocation2 + $0x10] sm:$0xff] 0.0
        %326 = vst [vmem:[#allocation2 + $0x18] sm:$0xff] 0.0
        %327 = vst [vmem:[#allocation2 + $0x20] sm:$0xff] 0.0
        %328 = vst [vmem:[#allocation2 + $0x28] sm:$0xff] 0.0
        %329 = vst [vmem:[#allocation2 + $0x30] sm:$0xff] 0.0
        %330 = vst [vmem:[#allocation2 + $0x38] sm:$0xff] 0.0
        %331 = vst [vmem:[#allocation2 + $0x40] sm:$0xff] 0.0
        %332 = vst [vmem:[#allocation2 + $0x48] sm:$0xff] 0.0
        %333 = vst [vmem:[#allocation2 + $0x50] sm:$0xff] 0.0
        %334 = vst [vmem:[#allocation2 + $0x58] sm:$0xff] 0.0
        %335 = vst [vmem:[#allocation2 + $0x60] sm:$0xff] 0.0
        %336 = vst [vmem:[#allocation2 + $0x68] sm:$0xff] 0.0
        %337 = vst [vmem:[#allocation2 + $0x70] sm:$0xff] 0.0
        %338 = vst [vmem:[#allocation2 + $0x78] sm:$0xff] 0.0
        %339 = vst [vmem:[#allocation2 + $0x80] sm:$0xff] 0.0
        %340 = vst [vmem:[#allocation2 + $0x88] sm:$0xff] 0.0
        %341 = vst [vmem:[#allocation2 + $0x90] sm:$0xff] 0.0
        %342 = vst [vmem:[#allocation2 + $0x98] sm:$0xff] 0.0
        %343 = vst [vmem:[#allocation2 + $0xa0] sm:$0xff] 0.0
        %344 = vst [vmem:[#allocation2 + $0xa8] sm:$0xff] 0.0
        %345 = vst [vmem:[#allocation2 + $0xb0] sm:$0xff] 0.0
        %346 = vst [vmem:[#allocation2 + $0xb8] sm:$0xff] 0.0
        %347 = vst [vmem:[#allocation2 + $0xc0] sm:$0xff] 0.0
        %348 = vst [vmem:[#allocation2 + $0xc8] sm:$0xff] 0.0
        %349 = vst [vmem:[#allocation2 + $0xd0] sm:$0xff] 0.0
        %350 = vst [vmem:[#allocation2 + $0xd8] sm:$0xff] 0.0
        %351 = vst [vmem:[#allocation2 + $0xe0] sm:$0xff] 0.0
        %352 = vst [vmem:[#allocation2 + $0xe8] sm:$0xff] 0.0
        %353 = vst [vmem:[#allocation2 + $0xf0] sm:$0xff] 0.0
        %354 = vst [vmem:[#allocation2 + $0xf8] sm:$0xff] 0.0
      $region40: #{dalle_encoder_forward.28} parent=35 // pred_fallthru
        _
      %v355 = vld [vmem:[%s287] sm:$0xf]
      %v356 = vld [vmem:[%s287 + $0x4] sm:$0xf]
      %v357 = vld [vmem:[%s287 + $0x8] sm:$0xf]
      %v358 = vld [vmem:[%s287 + $0xc] sm:$0xf]
      %v359 = vld [vmem:[%s287 + $0x10] sm:$0xf]
      %v360 = vld [vmem:[%s287 + $0x14] sm:$0xf]
      %v361 = vld [vmem:[%s287 + $0x18] sm:$0xf]
      %v362 = vld [vmem:[%s287 + $0x1c] sm:$0xf]
      %v363 = vld [vmem:[%s287 + $0x20] sm:$0xf]
      %v364 = vld [vmem:[%s287 + $0x24] sm:$0xf]
      %v365 = vld [vmem:[%s287 + $0x28] sm:$0xf]
      %v366 = vld [vmem:[%s287 + $0x2c] sm:$0xf]
      %v367 = vld [vmem:[%s287 + $0x30] sm:$0xf]
      %v368 = vld [vmem:[%s287 + $0x34] sm:$0xf]
      %v369 = vld [vmem:[%s287 + $0x38] sm:$0xf]
      %v370 = vld [vmem:[%s287 + $0x3c] sm:$0xf]
      %v371 = vld [vmem:[%s287 + $0x40] sm:$0xf]
      %v372 = vld [vmem:[%s287 + $0x44] sm:$0xf]
      %v373 = vld [vmem:[%s287 + $0x48] sm:$0xf]
      %v374 = vld [vmem:[%s287 + $0x4c] sm:$0xf]
      %v375 = vld [vmem:[%s287 + $0x50] sm:$0xf]
      %v376 = vld [vmem:[%s287 + $0x54] sm:$0xf]
      %v377 = vld [vmem:[%s287 + $0x58] sm:$0xf]
      %v378 = vld [vmem:[%s287 + $0x5c] sm:$0xf]
      %v379 = vld [vmem:[%s287 + $0x60] sm:$0xf]
      %v380 = vld [vmem:[%s287 + $0x64] sm:$0xf]
      %v381 = vld [vmem:[%s287 + $0x68] sm:$0xf]
      %v382 = vld [vmem:[%s287 + $0x6c] sm:$0xf]
      %v383 = vld [vmem:[%s287 + $0x70] sm:$0xf]
      %v384 = vld [vmem:[%s287 + $0x74] sm:$0xf]
      %v385 = vld [vmem:[%s287 + $0x78] sm:$0xf]
      %v386 = vld [vmem:[%s287 + $0x7c] sm:$0xf]
      %v387 = vunpack.c.l.bf16 %v355
      %v388 = vunpack.c.l.bf16 %v356
      %v389 = vunpack.c.l.bf16 %v357
      %v390 = vunpack.c.l.bf16 %v358
      %v391 = vunpack.c.l.bf16 %v359
      %v392 = vunpack.c.l.bf16 %v360
      %v393 = vunpack.c.l.bf16 %v361
      %v394 = vunpack.c.l.bf16 %v362
      %v395 = vunpack.c.l.bf16 %v363
      %v396 = vunpack.c.l.bf16 %v364
      %v397 = vunpack.c.l.bf16 %v365
      %v398 = vunpack.c.l.bf16 %v366
      %v399 = vunpack.c.l.bf16 %v367
      %v400 = vunpack.c.l.bf16 %v368
      %v401 = vunpack.c.l.bf16 %v369
      %v402 = vunpack.c.l.bf16 %v370
      %v403 = vunpack.c.l.bf16 %v371
      %v404 = vunpack.c.l.bf16 %v372
      %v405 = vunpack.c.l.bf16 %v373
      %v406 = vunpack.c.l.bf16 %v374
      %v407 = vunpack.c.l.bf16 %v375
      %v408 = vunpack.c.l.bf16 %v376
      %v409 = vunpack.c.l.bf16 %v377
      %v410 = vunpack.c.l.bf16 %v378
      %v411 = vunpack.c.l.bf16 %v379
      %v412 = vunpack.c.l.bf16 %v380
      %v413 = vunpack.c.l.bf16 %v381
      %v414 = vunpack.c.l.bf16 %v382
      %v415 = vunpack.c.l.bf16 %v383
      %v416 = vunpack.c.l.bf16 %v384
      %v417 = vunpack.c.l.bf16 %v385
      %v418 = vunpack.c.l.bf16 %v386
      %v419 = vmax.f32 %v387, 0.0
      %v420 = vmax.f32 %v388, 0.0
      %v421 = vmax.f32 %v389, 0.0
      %v422 = vmax.f32 %v390, 0.0
      %v423 = vmax.f32 %v391, 0.0
      %v424 = vmax.f32 %v392, 0.0
      %v425 = vmax.f32 %v393, 0.0
      %v426 = vmax.f32 %v394, 0.0
      %v427 = vmax.f32 %v395, 0.0
      %v428 = vmax.f32 %v396, 0.0
      %v429 = vmax.f32 %v397, 0.0
      %v430 = vmax.f32 %v398, 0.0
      %v431 = vmax.f32 %v399, 0.0
      %v432 = vmax.f32 %v400, 0.0
      %v433 = vmax.f32 %v401, 0.0
      %v434 = vmax.f32 %v402, 0.0
      %v435 = vmax.f32 %v403, 0.0
      %v436 = vmax.f32 %v404, 0.0
      %v437 = vmax.f32 %v405, 0.0
      %v438 = vmax.f32 %v406, 0.0
      %v439 = vmax.f32 %v407, 0.0
      %v440 = vmax.f32 %v408, 0.0
      %v441 = vmax.f32 %v409, 0.0
      %v442 = vmax.f32 %v410, 0.0
      %v443 = vmax.f32 %v411, 0.0
      %v444 = vmax.f32 %v412, 0.0
      %v445 = vmax.f32 %v413, 0.0
      %v446 = vmax.f32 %v414, 0.0
      %v447 = vmax.f32 %v415, 0.0
      %v448 = vmax.f32 %v416, 0.0
      %v449 = vmax.f32 %v417, 0.0
      %v450 = vmax.f32 %v418, 0.0
      %v451 = vpack.c.bf16 %v420, %v419
      %v452 = vpack.c.bf16 %v422, %v421
      %v453 = vpack.c.bf16 %v424, %v423
      %v454 = vpack.c.bf16 %v426, %v425
      %v455 = vpack.c.bf16 %v428, %v427
      %v456 = vpack.c.bf16 %v430, %v429
      %v457 = vpack.c.bf16 %v432, %v431
      %v458 = vpack.c.bf16 %v434, %v433
      %v459 = vpack.c.bf16 %v436, %v435
      %v460 = vpack.c.bf16 %v438, %v437
      %v461 = vpack.c.bf16 %v440, %v439
      %v462 = vpack.c.bf16 %v442, %v441
      %v463 = vpack.c.bf16 %v444, %v443
      %v464 = vpack.c.bf16 %v446, %v445
      %v465 = vpack.c.bf16 %v448, %v447
      %v466 = vpack.c.bf16 %v450, %v449
      %v467 = vld [vmem:[#allocation2] sm:$0xff]
      %v468 = vld [vmem:[#allocation2 + $0x8] sm:$0xff]
      %v469 = vld [vmem:[#allocation2 + $0x10] sm:$0xff]
      %v470 = vld [vmem:[#allocation2 + $0x18] sm:$0xff]
      %v471 = vld [vmem:[#allocation2 + $0x20] sm:$0xff]
      %v472 = vld [vmem:[#allocation2 + $0x28] sm:$0xff]
      %v473 = vld [vmem:[#allocation2 + $0x30] sm:$0xff]
      %v474 = vld [vmem:[#allocation2 + $0x38] sm:$0xff]
      %v475 = vld [vmem:[#allocation2 + $0x40] sm:$0xff]
      %v476 = vld [vmem:[#allocation2 + $0x48] sm:$0xff]
      %v477 = vld [vmem:[#allocation2 + $0x50] sm:$0xff]
      %v478 = vld [vmem:[#allocation2 + $0x58] sm:$0xff]
      %v479 = vld [vmem:[#allocation2 + $0x60] sm:$0xff]
      %v480 = vld [vmem:[#allocation2 + $0x68] sm:$0xff]
      %v481 = vld [vmem:[#allocation2 + $0x70] sm:$0xff]
      %v482 = vld [vmem:[#allocation2 + $0x78] sm:$0xff]
      %v483 = vld [vmem:[#allocation2 + $0x80] sm:$0xff]
      %v484 = vld [vmem:[#allocation2 + $0x88] sm:$0xff]
      %v485 = vld [vmem:[#allocation2 + $0x90] sm:$0xff]
      %v486 = vld [vmem:[#allocation2 + $0x98] sm:$0xff]
      %v487 = vld [vmem:[#allocation2 + $0xa0] sm:$0xff]
      %v488 = vld [vmem:[#allocation2 + $0xa8] sm:$0xff]
      %v489 = vld [vmem:[#allocation2 + $0xb0] sm:$0xff]
      %v490 = vld [vmem:[#allocation2 + $0xb8] sm:$0xff]
      %v491 = vld [vmem:[#allocation2 + $0xc0] sm:$0xff]
      %v492 = vld [vmem:[#allocation2 + $0xc8] sm:$0xff]
      %v493 = vld [vmem:[#allocation2 + $0xd0] sm:$0xff]
      %v494 = vld [vmem:[#allocation2 + $0xd8] sm:$0xff]
      %v495 = vld [vmem:[#allocation2 + $0xe0] sm:$0xff]
      %v496 = vld [vmem:[#allocation2 + $0xe8] sm:$0xff]
      %v497 = vld [vmem:[#allocation2 + $0xf0] sm:$0xff]
      %v498 = vld [vmem:[#allocation2 + $0xf8] sm:$0xff]
      %v499 = vld [vmem:[%s296] sm:$0xf]
      %v500 = vld [vmem:[%s296 + $0x4] sm:$0xf]
      %v501 = vld [vmem:[%s296 + $0x8] sm:$0xf]
      %v502 = vld [vmem:[%s296 + $0xc] sm:$0xf]
      %v503 = vld [vmem:[%s296 + $0x10] sm:$0xf]
      %v504 = vld [vmem:[%s296 + $0x14] sm:$0xf]
      %v505 = vld [vmem:[%s296 + $0x18] sm:$0xf]
      %v506 = vld [vmem:[%s296 + $0x1c] sm:$0xf]
      %v507 = vld [vmem:[%s296 + $0x20] sm:$0xf]
      %v508 = vld [vmem:[%s296 + $0x24] sm:$0xf]
      %v509 = vld [vmem:[%s296 + $0x28] sm:$0xf]
      %v510 = vld [vmem:[%s296 + $0x2c] sm:$0xf]
      %v511 = vld [vmem:[%s296 + $0x30] sm:$0xf]
      %v512 = vld [vmem:[%s296 + $0x34] sm:$0xf]
      %v513 = vld [vmem:[%s296 + $0x38] sm:$0xf]
      %v514 = vld [vmem:[%s296 + $0x3c] sm:$0xf]
      %v531 = vunpack.c.l.b16 %v499
      %v532 = vunpack.c.l.b16 %v500
      %v533 = vunpack.c.l.b16 %v501
      %v534 = vunpack.c.l.b16 %v502
      %v535 = vunpack.c.l.b16 %v503
      %v536 = vunpack.c.l.b16 %v504
      %v537 = vunpack.c.l.b16 %v505
      %v538 = vunpack.c.l.b16 %v506
      %v539 = vunpack.c.l.b16 %v507
      %v540 = vunpack.c.l.b16 %v508
      %v541 = vunpack.c.l.b16 %v509
      %v542 = vunpack.c.l.b16 %v510
      %v543 = vunpack.c.l.b16 %v511
      %v544 = vunpack.c.l.b16 %v512
      %v545 = vunpack.c.l.b16 %v513
      %v546 = vunpack.c.l.b16 %v514
      %v547 = vpack.c.b16 %v532, %v531
      %v548 = vpack.c.b16 %v534, %v533
      %v549 = vpack.c.b16 %v536, %v535
      %v550 = vpack.c.b16 %v538, %v537
      %v551 = vpack.c.b16 %v540, %v539
      %v552 = vpack.c.b16 %v542, %v541
      %v553 = vpack.c.b16 %v544, %v543
      %v554 = vpack.c.b16 %v546, %v545
      %563 = vmatpush.bf16.msra.mxu0 %v554
      %564 = vmatpush.bf16.msra.mxu0 %v553
      %565 = vmatpush.bf16.msra.mxu0 %v552
      %566 = vmatpush.bf16.msra.mxu0 %v551
      %567 = vmatpush.bf16.msra.mxu0 %v550
      %568 = vmatpush.bf16.msra.mxu0 %v549
      %569 = vmatpush.bf16.msra.mxu0 %v548
      %570 = vmatpush.bf16.msra.mxu0 %v547
      %571 = vmatmul.bf16.gmra.mxu0 %v451
      %v572 = vpop.f32.mrf.mxu0
      %v573 = vadd.f32 0.0, %v572
      %v574 = vpop.f32.mrf.mxu0
      %v575 = vadd.f32 0.0, %v574
      %576 = vmatmul.bf16.gmra.mxu0 %v452
      %v577 = vpop.f32.mrf.mxu0
      %v578 = vadd.f32 0.0, %v577
      %v579 = vpop.f32.mrf.mxu0
      %v580 = vadd.f32 0.0, %v579
      %581 = vmatmul.bf16.gmra.mxu0 %v453
      %v582 = vpop.f32.mrf.mxu0
      %v583 = vadd.f32 0.0, %v582
      %v584 = vpop.f32.mrf.mxu0
      %v585 = vadd.f32 0.0, %v584
      %586 = vmatmul.bf16.gmra.mxu0 %v454
      %v587 = vpop.f32.mrf.mxu0
      %v588 = vadd.f32 0.0, %v587
      %v589 = vpop.f32.mrf.mxu0
      %v590 = vadd.f32 0.0, %v589
      %591 = vmatmul.bf16.gmra.mxu0 %v455
      %v592 = vpop.f32.mrf.mxu0
      %v593 = vadd.f32 0.0, %v592
      %v594 = vpop.f32.mrf.mxu0
      %v595 = vadd.f32 0.0, %v594
      %596 = vmatmul.bf16.gmra.mxu0 %v456
      %v597 = vpop.f32.mrf.mxu0
      %v598 = vadd.f32 0.0, %v597
      %v599 = vpop.f32.mrf.mxu0
      %v600 = vadd.f32 0.0, %v599
      %601 = vmatmul.bf16.gmra.mxu0 %v457
      %v602 = vpop.f32.mrf.mxu0
      %v603 = vadd.f32 0.0, %v602
      %v604 = vpop.f32.mrf.mxu0
      %v605 = vadd.f32 0.0, %v604
      %606 = vmatmul.bf16.gmra.mxu0 %v458
      %v607 = vpop.f32.mrf.mxu0
      %v608 = vadd.f32 0.0, %v607
      %v609 = vpop.f32.mrf.mxu0
      %v610 = vadd.f32 0.0, %v609
      %611 = vmatmul.bf16.gmra.mxu0 %v459
      %v612 = vpop.f32.mrf.mxu0
      %v613 = vadd.f32 0.0, %v612
      %v614 = vpop.f32.mrf.mxu0
      %v615 = vadd.f32 0.0, %v614
      %616 = vmatmul.bf16.gmra.mxu0 %v460
      %v617 = vpop.f32.mrf.mxu0
      %v618 = vadd.f32 0.0, %v617
      %v619 = vpop.f32.mrf.mxu0
      %v620 = vadd.f32 0.0, %v619
      %621 = vmatmul.bf16.gmra.mxu0 %v461
      %v622 = vpop.f32.mrf.mxu0
      %v623 = vadd.f32 0.0, %v622
      %v624 = vpop.f32.mrf.mxu0
      %v625 = vadd.f32 0.0, %v624
      %626 = vmatmul.bf16.gmra.mxu0 %v462
      %v627 = vpop.f32.mrf.mxu0
      %v628 = vadd.f32 0.0, %v627
      %v629 = vpop.f32.mrf.mxu0
      %v630 = vadd.f32 0.0, %v629
      %631 = vmatmul.bf16.gmra.mxu0 %v463
      %v632 = vpop.f32.mrf.mxu0
      %v633 = vadd.f32 0.0, %v632
      %v634 = vpop.f32.mrf.mxu0
      %v635 = vadd.f32 0.0, %v634
      %636 = vmatmul.bf16.gmra.mxu0 %v464
      %v637 = vpop.f32.mrf.mxu0
      %v638 = vadd.f32 0.0, %v637
      %v639 = vpop.f32.mrf.mxu0
      %v640 = vadd.f32 0.0, %v639
      %641 = vmatmul.bf16.gmra.mxu0 %v465
      %v642 = vpop.f32.mrf.mxu0
      %v643 = vadd.f32 0.0, %v642
      %v644 = vpop.f32.mrf.mxu0
      %v645 = vadd.f32 0.0, %v644
      %646 = vmatmul.bf16.gmra.mxu0 %v466
      %v647 = vpop.f32.mrf.mxu0
      %v648 = vadd.f32 0.0, %v647
      %v649 = vpop.f32.mrf.mxu0
      %v650 = vadd.f32 0.0, %v649
      %651 = vdwg.mxu0
      %v652 = vadd.f32 %v467, %v573
      %v653 = vadd.f32 %v468, %v575
      %v654 = vadd.f32 %v469, %v578
      %v655 = vadd.f32 %v470, %v580
      %v656 = vadd.f32 %v471, %v583
      %v657 = vadd.f32 %v472, %v585
      %v658 = vadd.f32 %v473, %v588
      %v659 = vadd.f32 %v474, %v590
      %v660 = vadd.f32 %v475, %v593
      %v661 = vadd.f32 %v476, %v595
      %v662 = vadd.f32 %v477, %v598
      %v663 = vadd.f32 %v478, %v600
      %v664 = vadd.f32 %v479, %v603
      %v665 = vadd.f32 %v480, %v605
      %v666 = vadd.f32 %v481, %v608
      %v667 = vadd.f32 %v482, %v610
      %v668 = vadd.f32 %v483, %v613
      %v669 = vadd.f32 %v484, %v615
      %v670 = vadd.f32 %v485, %v618
      %v671 = vadd.f32 %v486, %v620
      %v672 = vadd.f32 %v487, %v623
      %v673 = vadd.f32 %v488, %v625
      %v674 = vadd.f32 %v489, %v628
      %v675 = vadd.f32 %v490, %v630
      %v676 = vadd.f32 %v491, %v633
      %v677 = vadd.f32 %v492, %v635
      %v678 = vadd.f32 %v493, %v638
      %v679 = vadd.f32 %v494, %v640
      %v680 = vadd.f32 %v495, %v643
      %v681 = vadd.f32 %v496, %v645
      %v682 = vadd.f32 %v497, %v648
      %v683 = vadd.f32 %v498, %v650
      %684 = vst [vmem:[#allocation2] sm:$0xff] %v652
      %685 = vst [vmem:[#allocation2 + $0x8] sm:$0xff] %v653
      %686 = vst [vmem:[#allocation2 + $0x10] sm:$0xff] %v654
      %687 = vst [vmem:[#allocation2 + $0x18] sm:$0xff] %v655
      %688 = vst [vmem:[#allocation2 + $0x20] sm:$0xff] %v656
      %689 = vst [vmem:[#allocation2 + $0x28] sm:$0xff] %v657
      %690 = vst [vmem:[#allocation2 + $0x30] sm:$0xff] %v658
      %691 = vst [vmem:[#allocation2 + $0x38] sm:$0xff] %v659
      %692 = vst [vmem:[#allocation2 + $0x40] sm:$0xff] %v660
      %693 = vst [vmem:[#allocation2 + $0x48] sm:$0xff] %v661
      %694 = vst [vmem:[#allocation2 + $0x50] sm:$0xff] %v662
      %695 = vst [vmem:[#allocation2 + $0x58] sm:$0xff] %v663
      %696 = vst [vmem:[#allocation2 + $0x60] sm:$0xff] %v664
      %697 = vst [vmem:[#allocation2 + $0x68] sm:$0xff] %v665
      %698 = vst [vmem:[#allocation2 + $0x70] sm:$0xff] %v666
      %699 = vst [vmem:[#allocation2 + $0x78] sm:$0xff] %v667
      %700 = vst [vmem:[#allocation2 + $0x80] sm:$0xff] %v668
      %701 = vst [vmem:[#allocation2 + $0x88] sm:$0xff] %v669
      %702 = vst [vmem:[#allocation2 + $0x90] sm:$0xff] %v670
      %703 = vst [vmem:[#allocation2 + $0x98] sm:$0xff] %v671
      %704 = vst [vmem:[#allocation2 + $0xa0] sm:$0xff] %v672
      %705 = vst [vmem:[#allocation2 + $0xa8] sm:$0xff] %v673
      %706 = vst [vmem:[#allocation2 + $0xb0] sm:$0xff] %v674
      %707 = vst [vmem:[#allocation2 + $0xb8] sm:$0xff] %v675
      %708 = vst [vmem:[#allocation2 + $0xc0] sm:$0xff] %v676
      %709 = vst [vmem:[#allocation2 + $0xc8] sm:$0xff] %v677
      %710 = vst [vmem:[#allocation2 + $0xd0] sm:$0xff] %v678
      %711 = vst [vmem:[#allocation2 + $0xd8] sm:$0xff] %v679
      %712 = vst [vmem:[#allocation2 + $0xe0] sm:$0xff] %v680
      %713 = vst [vmem:[#allocation2 + $0xe8] sm:$0xff] %v681
      %714 = vst [vmem:[#allocation2 + $0xf0] sm:$0xff] %v682
      %715 = vst [vmem:[#allocation2 + $0xf8] sm:$0xff] %v683
      // Predicated region
      $region41: #{dalle_encoder_forward.28} parent=35 // pred_check
        %p716 = pneg %p319
      $region42: #{dalle_encoder_forward.28} parent=35 // pred_check_branch
        %718 = sbr.rel (%p716) target = $region44
      $region43: #{dalle_encoder_forward.28} parent=35 // pred_region
        %v719 = vld [vmem:[#allocation2] sm:$0xff]
        %v720 = vld [vmem:[#allocation2 + $0x8] sm:$0xff]
        %v721 = vld [vmem:[#allocation2 + $0x10] sm:$0xff]
        %v722 = vld [vmem:[#allocation2 + $0x18] sm:$0xff]
        %v723 = vld [vmem:[#allocation2 + $0x20] sm:$0xff]
        %v724 = vld [vmem:[#allocation2 + $0x28] sm:$0xff]
        %v725 = vld [vmem:[#allocation2 + $0x30] sm:$0xff]
        %v726 = vld [vmem:[#allocation2 + $0x38] sm:$0xff]
        %v727 = vld [vmem:[#allocation2 + $0x40] sm:$0xff]
        %v728 = vld [vmem:[#allocation2 + $0x48] sm:$0xff]
        %v729 = vld [vmem:[#allocation2 + $0x50] sm:$0xff]
        %v730 = vld [vmem:[#allocation2 + $0x58] sm:$0xff]
        %v731 = vld [vmem:[#allocation2 + $0x60] sm:$0xff]
        %v732 = vld [vmem:[#allocation2 + $0x68] sm:$0xff]
        %v733 = vld [vmem:[#allocation2 + $0x70] sm:$0xff]
        %v734 = vld [vmem:[#allocation2 + $0x78] sm:$0xff]
        %v735 = vld [vmem:[#allocation2 + $0x80] sm:$0xff]
        %v736 = vld [vmem:[#allocation2 + $0x88] sm:$0xff]
        %v737 = vld [vmem:[#allocation2 + $0x90] sm:$0xff]
        %v738 = vld [vmem:[#allocation2 + $0x98] sm:$0xff]
        %v739 = vld [vmem:[#allocation2 + $0xa0] sm:$0xff]
        %v740 = vld [vmem:[#allocation2 + $0xa8] sm:$0xff]
        %v741 = vld [vmem:[#allocation2 + $0xb0] sm:$0xff]
        %v742 = vld [vmem:[#allocation2 + $0xb8] sm:$0xff]
        %v743 = vld [vmem:[#allocation2 + $0xc0] sm:$0xff]
        %v744 = vld [vmem:[#allocation2 + $0xc8] sm:$0xff]
        %v745 = vld [vmem:[#allocation2 + $0xd0] sm:$0xff]
        %v746 = vld [vmem:[#allocation2 + $0xd8] sm:$0xff]
        %v747 = vld [vmem:[#allocation2 + $0xe0] sm:$0xff]
        %v748 = vld [vmem:[#allocation2 + $0xe8] sm:$0xff]
        %v749 = vld [vmem:[#allocation2 + $0xf0] sm:$0xff]
        %v750 = vld [vmem:[#allocation2 + $0xf8] sm:$0xff]
        %v751 = vld [vmem:[%s300] sm:$0x1]
        %v753 = vperm.slane %v751, 0
        %v755 = vadd.f32 %v719, %v753
        %v756 = vadd.f32 %v720, %v753
        %v757 = vadd.f32 %v721, %v753
        %v758 = vadd.f32 %v722, %v753
        %v759 = vadd.f32 %v723, %v753
        %v760 = vadd.f32 %v724, %v753
        %v761 = vadd.f32 %v725, %v753
        %v762 = vadd.f32 %v726, %v753
        %v763 = vadd.f32 %v727, %v753
        %v764 = vadd.f32 %v728, %v753
        %v765 = vadd.f32 %v729, %v753
        %v766 = vadd.f32 %v730, %v753
        %v767 = vadd.f32 %v731, %v753
        %v768 = vadd.f32 %v732, %v753
        %v769 = vadd.f32 %v733, %v753
        %v770 = vadd.f32 %v734, %v753
        %v771 = vadd.f32 %v735, %v753
        %v772 = vadd.f32 %v736, %v753
        %v773 = vadd.f32 %v737, %v753
        %v774 = vadd.f32 %v738, %v753
        %v775 = vadd.f32 %v739, %v753
        %v776 = vadd.f32 %v740, %v753
        %v777 = vadd.f32 %v741, %v753
        %v778 = vadd.f32 %v742, %v753
        %v779 = vadd.f32 %v743, %v753
        %v780 = vadd.f32 %v744, %v753
        %v781 = vadd.f32 %v745, %v753
        %v782 = vadd.f32 %v746, %v753
        %v783 = vadd.f32 %v747, %v753
        %v784 = vadd.f32 %v748, %v753
        %v785 = vadd.f32 %v749, %v753
        %v786 = vadd.f32 %v750, %v753
        %v787 = vld [vmem:[%s308] sm:$0xf]
        %v788 = vld [vmem:[%s308 + $0x4] sm:$0xf]
        %v789 = vld [vmem:[%s308 + $0x8] sm:$0xf]
        %v790 = vld [vmem:[%s308 + $0xc] sm:$0xf]
        %v791 = vld [vmem:[%s308 + $0x10] sm:$0xf]
        %v792 = vld [vmem:[%s308 + $0x14] sm:$0xf]
        %v793 = vld [vmem:[%s308 + $0x18] sm:$0xf]
        %v794 = vld [vmem:[%s308 + $0x1c] sm:$0xf]
        %v795 = vld [vmem:[%s308 + $0x20] sm:$0xf]
        %v796 = vld [vmem:[%s308 + $0x24] sm:$0xf]
        %v797 = vld [vmem:[%s308 + $0x28] sm:$0xf]
        %v798 = vld [vmem:[%s308 + $0x2c] sm:$0xf]
        %v799 = vld [vmem:[%s308 + $0x30] sm:$0xf]
        %v800 = vld [vmem:[%s308 + $0x34] sm:$0xf]
        %v801 = vld [vmem:[%s308 + $0x38] sm:$0xf]
        %v802 = vld [vmem:[%s308 + $0x3c] sm:$0xf]
        %v803 = vld [vmem:[%s308 + $0x40] sm:$0xf]
        %v804 = vld [vmem:[%s308 + $0x44] sm:$0xf]
        %v805 = vld [vmem:[%s308 + $0x48] sm:$0xf]
        %v806 = vld [vmem:[%s308 + $0x4c] sm:$0xf]
        %v807 = vld [vmem:[%s308 + $0x50] sm:$0xf]
        %v808 = vld [vmem:[%s308 + $0x54] sm:$0xf]
        %v809 = vld [vmem:[%s308 + $0x58] sm:$0xf]
        %v810 = vld [vmem:[%s308 + $0x5c] sm:$0xf]
        %v811 = vld [vmem:[%s308 + $0x60] sm:$0xf]
        %v812 = vld [vmem:[%s308 + $0x64] sm:$0xf]
        %v813 = vld [vmem:[%s308 + $0x68] sm:$0xf]
        %v814 = vld [vmem:[%s308 + $0x6c] sm:$0xf]
        %v815 = vld [vmem:[%s308 + $0x70] sm:$0xf]
        %v816 = vld [vmem:[%s308 + $0x74] sm:$0xf]
        %v817 = vld [vmem:[%s308 + $0x78] sm:$0xf]
        %v818 = vld [vmem:[%s308 + $0x7c] sm:$0xf]
        %v819 = vunpack.c.l.bf16 %v787
        %v820 = vunpack.c.l.bf16 %v788
        %v821 = vunpack.c.l.bf16 %v789
        %v822 = vunpack.c.l.bf16 %v790
        %v823 = vunpack.c.l.bf16 %v791
        %v824 = vunpack.c.l.bf16 %v792
        %v825 = vunpack.c.l.bf16 %v793
        %v826 = vunpack.c.l.bf16 %v794
        %v827 = vunpack.c.l.bf16 %v795
        %v828 = vunpack.c.l.bf16 %v796
        %v829 = vunpack.c.l.bf16 %v797
        %v830 = vunpack.c.l.bf16 %v798
        %v831 = vunpack.c.l.bf16 %v799
        %v832 = vunpack.c.l.bf16 %v800
        %v833 = vunpack.c.l.bf16 %v801
        %v834 = vunpack.c.l.bf16 %v802
        %v835 = vunpack.c.l.bf16 %v803
        %v836 = vunpack.c.l.bf16 %v804
        %v837 = vunpack.c.l.bf16 %v805
        %v838 = vunpack.c.l.bf16 %v806
        %v839 = vunpack.c.l.bf16 %v807
        %v840 = vunpack.c.l.bf16 %v808
        %v841 = vunpack.c.l.bf16 %v809
        %v842 = vunpack.c.l.bf16 %v810
        %v843 = vunpack.c.l.bf16 %v811
        %v844 = vunpack.c.l.bf16 %v812
        %v845 = vunpack.c.l.bf16 %v813
        %v846 = vunpack.c.l.bf16 %v814
        %v847 = vunpack.c.l.bf16 %v815
        %v848 = vunpack.c.l.bf16 %v816
        %v849 = vunpack.c.l.bf16 %v817
        %v850 = vunpack.c.l.bf16 %v818
        %v851 = vmul.f32 %v755, 0.0625
        %v852 = vmul.f32 %v756, 0.0625
        %v853 = vmul.f32 %v757, 0.0625
        %v854 = vmul.f32 %v758, 0.0625
        %v855 = vmul.f32 %v759, 0.0625
        %v856 = vmul.f32 %v760, 0.0625
        %v857 = vmul.f32 %v761, 0.0625
        %v858 = vmul.f32 %v762, 0.0625
        %v859 = vmul.f32 %v763, 0.0625
        %v860 = vmul.f32 %v764, 0.0625
        %v861 = vmul.f32 %v765, 0.0625
        %v862 = vmul.f32 %v766, 0.0625
        %v863 = vmul.f32 %v767, 0.0625
        %v864 = vmul.f32 %v768, 0.0625
        %v865 = vmul.f32 %v769, 0.0625
        %v866 = vmul.f32 %v770, 0.0625
        %v867 = vmul.f32 %v771, 0.0625
        %v868 = vmul.f32 %v772, 0.0625
        %v869 = vmul.f32 %v773, 0.0625
        %v870 = vmul.f32 %v774, 0.0625
        %v871 = vmul.f32 %v775, 0.0625
        %v872 = vmul.f32 %v776, 0.0625
        %v873 = vmul.f32 %v777, 0.0625
        %v874 = vmul.f32 %v778, 0.0625
        %v875 = vmul.f32 %v779, 0.0625
        %v876 = vmul.f32 %v780, 0.0625
        %v877 = vmul.f32 %v781, 0.0625
        %v878 = vmul.f32 %v782, 0.0625
        %v879 = vmul.f32 %v783, 0.0625
        %v880 = vmul.f32 %v784, 0.0625
        %v881 = vmul.f32 %v785, 0.0625
        %v882 = vmul.f32 %v786, 0.0625
        %v883 = vadd.f32 %v819, %v851
        %v884 = vadd.f32 %v820, %v852
        %v885 = vadd.f32 %v821, %v853
        %v886 = vadd.f32 %v822, %v854
        %v887 = vadd.f32 %v823, %v855
        %v888 = vadd.f32 %v824, %v856
        %v889 = vadd.f32 %v825, %v857
        %v890 = vadd.f32 %v826, %v858
        %v891 = vadd.f32 %v827, %v859
        %v892 = vadd.f32 %v828, %v860
        %v893 = vadd.f32 %v829, %v861
        %v894 = vadd.f32 %v830, %v862
        %v895 = vadd.f32 %v831, %v863
        %v896 = vadd.f32 %v832, %v864
        %v897 = vadd.f32 %v833, %v865
        %v898 = vadd.f32 %v834, %v866
        %v899 = vadd.f32 %v835, %v867
        %v900 = vadd.f32 %v836, %v868
        %v901 = vadd.f32 %v837, %v869
        %v902 = vadd.f32 %v838, %v870
        %v903 = vadd.f32 %v839, %v871
        %v904 = vadd.f32 %v840, %v872
        %v905 = vadd.f32 %v841, %v873
        %v906 = vadd.f32 %v842, %v874
        %v907 = vadd.f32 %v843, %v875
        %v908 = vadd.f32 %v844, %v876
        %v909 = vadd.f32 %v845, %v877
        %v910 = vadd.f32 %v846, %v878
        %v911 = vadd.f32 %v847, %v879
        %v912 = vadd.f32 %v848, %v880
        %v913 = vadd.f32 %v849, %v881
        %v914 = vadd.f32 %v850, %v882
        %v915 = vpack.c.bf16 %v883, %v883
        %v916 = vpack.c.bf16 %v884, %v884
        %v917 = vpack.c.bf16 %v885, %v885
        %v918 = vpack.c.bf16 %v886, %v886
        %v919 = vpack.c.bf16 %v887, %v887
        %v920 = vpack.c.bf16 %v888, %v888
        %v921 = vpack.c.bf16 %v889, %v889
        %v922 = vpack.c.bf16 %v890, %v890
        %v923 = vpack.c.bf16 %v891, %v891
        %v924 = vpack.c.bf16 %v892, %v892
        %v925 = vpack.c.bf16 %v893, %v893
        %v926 = vpack.c.bf16 %v894, %v894
        %v927 = vpack.c.bf16 %v895, %v895
        %v928 = vpack.c.bf16 %v896, %v896
        %v929 = vpack.c.bf16 %v897, %v897
        %v930 = vpack.c.bf16 %v898, %v898
        %v931 = vpack.c.bf16 %v899, %v899
        %v932 = vpack.c.bf16 %v900, %v900
        %v933 = vpack.c.bf16 %v901, %v901
        %v934 = vpack.c.bf16 %v902, %v902
        %v935 = vpack.c.bf16 %v903, %v903
        %v936 = vpack.c.bf16 %v904, %v904
        %v937 = vpack.c.bf16 %v905, %v905
        %v938 = vpack.c.bf16 %v906, %v906
        %v939 = vpack.c.bf16 %v907, %v907
        %v940 = vpack.c.bf16 %v908, %v908
        %v941 = vpack.c.bf16 %v909, %v909
        %v942 = vpack.c.bf16 %v910, %v910
        %v943 = vpack.c.bf16 %v911, %v911
        %v944 = vpack.c.bf16 %v912, %v912
        %v945 = vpack.c.bf16 %v913, %v913
        %v946 = vpack.c.bf16 %v914, %v914
        %947 = vst [vmem:[%s317] sm:$0xf] %v915
        %948 = vst [vmem:[%s317 + $0x4] sm:$0xf] %v916
        %949 = vst [vmem:[%s317 + $0x8] sm:$0xf] %v917
        %950 = vst [vmem:[%s317 + $0xc] sm:$0xf] %v918
        %951 = vst [vmem:[%s317 + $0x10] sm:$0xf] %v919
        %952 = vst [vmem:[%s317 + $0x14] sm:$0xf] %v920
        %953 = vst [vmem:[%s317 + $0x18] sm:$0xf] %v921
        %954 = vst [vmem:[%s317 + $0x1c] sm:$0xf] %v922
        %955 = vst [vmem:[%s317 + $0x20] sm:$0xf] %v923
        %956 = vst [vmem:[%s317 + $0x24] sm:$0xf] %v924
        %957 = vst [vmem:[%s317 + $0x28] sm:$0xf] %v925
        %958 = vst [vmem:[%s317 + $0x2c] sm:$0xf] %v926
        %959 = vst [vmem:[%s317 + $0x30] sm:$0xf] %v927
        %960 = vst [vmem:[%s317 + $0x34] sm:$0xf] %v928
        %961 = vst [vmem:[%s317 + $0x38] sm:$0xf] %v929
        %962 = vst [vmem:[%s317 + $0x3c] sm:$0xf] %v930
        %963 = vst [vmem:[%s317 + $0x40] sm:$0xf] %v931
        %964 = vst [vmem:[%s317 + $0x44] sm:$0xf] %v932
        %965 = vst [vmem:[%s317 + $0x48] sm:$0xf] %v933
        %966 = vst [vmem:[%s317 + $0x4c] sm:$0xf] %v934
        %967 = vst [vmem:[%s317 + $0x50] sm:$0xf] %v935
        %968 = vst [vmem:[%s317 + $0x54] sm:$0xf] %v936
        %969 = vst [vmem:[%s317 + $0x58] sm:$0xf] %v937
        %970 = vst [vmem:[%s317 + $0x5c] sm:$0xf] %v938
        %971 = vst [vmem:[%s317 + $0x60] sm:$0xf] %v939
        %972 = vst [vmem:[%s317 + $0x64] sm:$0xf] %v940
        %973 = vst [vmem:[%s317 + $0x68] sm:$0xf] %v941
        %974 = vst [vmem:[%s317 + $0x6c] sm:$0xf] %v942
        %975 = vst [vmem:[%s317 + $0x70] sm:$0xf] %v943
        %976 = vst [vmem:[%s317 + $0x74] sm:$0xf] %v944
        %977 = vst [vmem:[%s317 + $0x78] sm:$0xf] %v945
        %978 = vst [vmem:[%s317 + $0x7c] sm:$0xf] %v946
      $region44: #{dalle_encoder_forward.28} parent=35 // pred_fallthru
        _
      %s979 = smul.u32 32, %s20
      %p980 = scmp.lt.s32.totalorder %s979, 63
      %s981 = scalar_select %p980, %s979, 63
      %p982 = scmp.lt.s32.totalorder %s21, 0
      %s983 = scalar_select %p982, %s21, 0
      %s984 = sadd.s32 %s983, %s981
      %s985 = smul.addr %s984, 4
      %s986 = scalar_lea.vmem %s4, %s985
      // Predicated region
      $region45: #{dalle_encoder_forward.28} parent=35 // pred_check
        %p987 = pneg %p164
      $region46: #{dalle_encoder_forward.28} parent=35 // pred_check_branch
        %989 = sbr.rel (%p987) target = $region48
      $region47: #{dalle_encoder_forward.28} parent=35 // pred_region
        %s990 = smul.u32 32, %s20
      $region48: #{dalle_encoder_forward.28} parent=35 // pred_fallthru
        _
    $region36: #{dalle_encoder_forward.28} parent=5 // pred_fallthru
      _
    %p991 = scmp.le.s32.totalorder 2, %s10
    // Predicated region
    $region49: #{dalle_encoder_forward.28} parent=5 // pred_check
      %p992 = pneg %p991
    $region50: #{dalle_encoder_forward.28} parent=5 // pred_check_branch
      %994 = sbr.rel (%p992) target = $region52
    $region51: #{dalle_encoder_forward.28} parent=5 // pred_region
      %s995 = ssub.s32 %s10, 2
      // Predicated region
      $region53: #{dalle_encoder_forward.28} parent=51 // pred_check
        %p996 = pneg %p170
      $region54: #{dalle_encoder_forward.28} parent=51 // pred_check_branch
        %998 = sbr.rel (%p996) target = $region56
      $region55: #{dalle_encoder_forward.28} parent=51 // pred_region
        %s999 = smul.u32 32, %s23
        %p1000 = scmp.lt.s32.totalorder %s999, 63
        %s1001 = scalar_select %p1000, %s999, 63
        %p1002 = scmp.lt.s32.totalorder %s24, 0
        %s1003 = scalar_select %p1002, %s24, 0
        %s1004 = sadd.s32 %s1003, %s1001
        %s1005 = smul.addr %s1004, 4
        %s1006 = scalar_lea.vmem %s4, %s1005
      $region56: #{dalle_encoder_forward.28} parent=51 // pred_fallthru
        _
    $region52: #{dalle_encoder_forward.28} parent=5 // pred_fallthru
      _
  $region6: #{dalle_encoder_forward.28} parent=0 // loop_footer
    %s14 = sadd.s32 1, %s10
  $region7: #{dalle_encoder_forward.28} parent=0 // loop_footer_branch
    %9 = sbr.rel target = $region3
  $region8: #{dalle_encoder_forward.28} parent=0 // loop_exit
    _

// kernel: dalle_encoder_forward.29
$region0: #{dalle_encoder_forward.29}
  #allocation0 [shape = 'u32[]', space=smem, size = 0x4, offset = 0x4, fixed_abs, tag = 'smem constant byte address 0x4 - core index']
  #allocation1 [shape = 'u32[72,128]{1,0:T(1,128)}', space=vmem, size = 0x9000, scoped, tag = 'internal scratch']
  %s0 = inlined_call_operand.vmem [shape: bf16[2,8,2,8,32], index: 0, kind: input, shape index: {}]
  %s1 = inlined_call_operand.vmem [shape: bf16[2,8,8,16], index: 1, kind: output, shape index: {}]
  %s2 = sld [smem:[#allocation0]]
  $region37: #{dalle_encoder_forward.29} parent=0
    _
  %s4 = ssub.s32 1, %s2
  %s5 = scalar_select 0, %s4, %s2
  loop: start=0, step=1, limit=4
  $region2: #{dalle_encoder_forward.29} parent=0 // loop_pre_header
    _
  $region3: #{dalle_encoder_forward.29} parent=0 // loop_header
    %s7 = sphi 0, %s11
    %p8 = scmp.ge.s32.totalorder %s7, 4
    %s14 = sphi 0, %s26
    %s15 = sphi 0, %s22
    %s16 = sphi 0, %s14
    %s17 = sphi 0, %s15
    %s18 = sphi 0, %s16
    %s19 = sphi 0, %s17
    %s31 = sphi 0, %s33
    %s34 = sphi 0, %s31
    %s35 = sphi 0, %s34
    %s51 = sphi 0, %s35
    %s59 = sphi 0, %s61
    %s62 = sphi 0, %s59
    %s63 = sphi 0, %s62
    %s79 = sphi 0, %s63
  $region4: #{dalle_encoder_forward.29} parent=0 // loop_header_branch
    %10 = sbr.rel (%p8) target = $region8
  $region5: #{dalle_encoder_forward.29} parent=0 // loop_body
    %s12 = ssub.s32 %s7, 1
    %s13 = ssub.s32 %s7, 2
    %s20 = sadd.s32 1, %s15
    %p21 = scmp.ge.s32.totalorder %s20, 1
    %s22 = scalar_select %p21, 0, %s20
    %s23 = sadd.s32 1, %s14
    %s24 = scalar_select %p21, %s23, %s14
    %p25 = scmp.ge.s32.totalorder %s24, 2
    %s26 = scalar_select %p25, 0, %s24
    %s27 = ssub.s32 %s14, %s26
    %s28 = ssub.s32 %s15, %s22
    %s29 = sor.u32 %s27, %s28
    %p30 = scmp.eq.s32.totalorder %s29, 0
    %s32 = sadd.s32 %s31, 1
    %s33 = scalar_select %p30, %s31, %s32
    %p36 = pneg %p30
    %p37 = scmp.eq.s32.totalorder %s7, 1
    %p38 = por %p36, %p37
    %p39 = scmp.ne.s32.totalorder %s31, %s34
    %p40 = scmp.eq.s32.totalorder %s7, 0
    %p41 = por %p39, %p40
    %p42 = scmp.ne.s32.totalorder %s31, %s34
    %p43 = scmp.eq.s32.totalorder %s12, 1
    %p44 = por %p42, %p43
    %p45 = scmp.ne.s32.totalorder %s34, %s35
    %p46 = scmp.eq.s32.totalorder %s12, 0
    %p47 = por %p45, %p46
    %p48 = scmp.ne.s32.totalorder %s34, %s35
    %p49 = scmp.eq.s32.totalorder %s13, 1
    %p50 = por %p48, %p49
    %p52 = scmp.ne.s32.totalorder %s35, %s51
    %p53 = scmp.eq.s32.totalorder %s13, 0
    %p54 = por %p52, %p53
    %s55 = ssub.s32 %s14, %s26
    %s56 = ssub.s32 %s15, %s22
    %s57 = sor.u32 %s55, %s56
    %p58 = scmp.eq.s32.totalorder %s57, 0
    %s60 = sadd.s32 %s59, 1
    %s61 = scalar_select %p58, %s59, %s60
    %p64 = pneg %p58
    %p65 = scmp.eq.s32.totalorder %s7, 1
    %p66 = por %p64, %p65
    %p67 = scmp.ne.s32.totalorder %s59, %s62
    %p68 = scmp.eq.s32.totalorder %s7, 0
    %p69 = por %p67, %p68
    %p70 = scmp.ne.s32.totalorder %s59, %s62
    %p71 = scmp.eq.s32.totalorder %s12, 1
    %p72 = por %p70, %p71
    %p73 = scmp.ne.s32.totalorder %s62, %s63
    %p74 = scmp.eq.s32.totalorder %s12, 0
    %p75 = por %p73, %p74
    %p76 = scmp.ne.s32.totalorder %s62, %s63
    %p77 = scmp.eq.s32.totalorder %s13, 1
    %p78 = por %p76, %p77
    %p80 = scmp.ne.s32.totalorder %s63, %s79
    %p81 = scmp.eq.s32.totalorder %s13, 0
    %p82 = por %p80, %p81
    %p83 = scmp.le.s32.totalorder 1, %s7
    %p84 = scmp.lt.s32.totalorder %s7, 3
    %p85 = pnand %p83, %p84
    %p86 = pneg %p85
    // Predicated region
    $region9: #{dalle_encoder_forward.29} parent=5 // pred_check
      _
    $region10: #{dalle_encoder_forward.29} parent=5 // pred_check_branch
      %88 = sbr.rel (%p85) target = $region12
    $region11: #{dalle_encoder_forward.29} parent=5 // pred_region
      %s89 = ssub.s32 %s7, 1
    $region12: #{dalle_encoder_forward.29} parent=5 // pred_fallthru
      _
    %p90 = scmp.lt.s32.totalorder %s7, 2
    // Predicated region
    $region13: #{dalle_encoder_forward.29} parent=5 // pred_check
      %p91 = pneg %p90
    $region14: #{dalle_encoder_forward.29} parent=5 // pred_check_branch
      %93 = sbr.rel (%p91) target = $region16
    $region15: #{dalle_encoder_forward.29} parent=5 // pred_region
      // Predicated region
      $region17: #{dalle_encoder_forward.29} parent=15 // pred_check
        %p94 = pneg %p41
      $region18: #{dalle_encoder_forward.29} parent=15 // pred_check_branch
        %96 = sbr.rel (%p94) target = $region20
      $region19: #{dalle_encoder_forward.29} parent=15 // pred_region
        %s97 = smul.u32 8, %s15
        %p98 = scmp.lt.s32.totalorder %s14, 1
        %s99 = scalar_select %p98, %s14, 1
        %p100 = scmp.lt.s32.totalorder %s97, 7
        %s101 = scalar_select %p100, %s97, 7
        %s102 = smul.addr %s101, 2
        %s103 = smul.addr %s99, 16
        %s104 = sadd.s32 %s102, %s103
        %s105 = smul.addr %s104, 4
        %s106 = scalar_lea.vmem %s0, %s105
        %s107 = smul.u32 8, %s15
      $region20: #{dalle_encoder_forward.29} parent=15 // pred_fallthru
        _
    $region16: #{dalle_encoder_forward.29} parent=5 // pred_fallthru
      _
    %p108 = scmp.le.s32.totalorder 1, %s7
    %p109 = scmp.lt.s32.totalorder %s7, 3
    %p110 = pnand %p108, %p109
    %p111 = pneg %p110
    // Predicated region
    $region21: #{dalle_encoder_forward.29} parent=5 // pred_check
      _
    $region22: #{dalle_encoder_forward.29} parent=5 // pred_check_branch
      %113 = sbr.rel (%p110) target = $region24
    $region23: #{dalle_encoder_forward.29} parent=5 // pred_region
      %s114 = ssub.s32 %s7, 1
      %s115 = smul.u32 8, %s17
      %p116 = scmp.lt.s32.totalorder %s16, 1
      %s117 = scalar_select %p116, %s16, 1
      %p118 = scmp.lt.s32.totalorder %s115, 7
      %s119 = scalar_select %p118, %s115, 7
      %s120 = smul.addr %s119, 2
      %s121 = smul.addr %s117, 16
      %s122 = sadd.s32 %s120, %s121
      %s123 = smul.addr %s122, 4
      %s124 = scalar_lea.vmem %s0, %s123
      %p125 = pneg %p47
      %p126 = pneg %p44
      %p127 = pneg %p75
      %p128 = pneg %p72
      %s129 = smul.u32 8, %s17
      %p130 = scmp.lt.s32.totalorder %s16, 1
      %s131 = scalar_select %p130, %s16, 1
      %p132 = scmp.lt.s32.totalorder %s129, 7
      %s133 = scalar_select %p132, %s129, 7
      %s134 = smul.addr %s131, 8
      %s135 = sadd.s32 %s133, %s134
      %s136 = smul.addr %s135, 4
      %s137 = scalar_lea.vmem %s1, %s136
      %s138 = smul.u32 8, %s17
      %p139 = scmp.lt.s32.totalorder %s16, 1
      %s140 = scalar_select %p139, %s16, 1
      %p141 = scmp.lt.s32.totalorder %s138, 7
      %s142 = scalar_select %p141, %s138, 7
      %s143 = smul.addr %s142, 2
      %s144 = smul.addr %s140, 16
      %s145 = sadd.s32 %s143, %s144
      %s146 = smul.addr %s145, 4
      %s147 = scalar_lea.vmem %s0, %s146
      %s148 = smul.u32 8, %s17
      %s149 = smul.u32 8, %s17
      %p150 = scmp.lt.s32.totalorder %s16, 1
      %s151 = scalar_select %p150, %s16, 1
      %p152 = scmp.lt.s32.totalorder %s149, 7
      %s153 = scalar_select %p152, %s149, 7
      %s154 = smul.addr %s151, 8
      %s155 = sadd.s32 %s153, %s154
      %s156 = smul.addr %s155, 4
      %s157 = scalar_lea.vmem %s1, %s156
      %s158 = smul.u32 8, %s17
      %v159 = vld [vmem:[%s147] sm:$0xf]
      %v160 = vld [vmem:[%s147 + $0x4] sm:$0xf]
      %v161 = vld [vmem:[%s147 + $0x8] sm:$0xf]
      %v162 = vld [vmem:[%s147 + $0xc] sm:$0xf]
      %v163 = vld [vmem:[%s147 + $0x10] sm:$0xf]
      %v164 = vld [vmem:[%s147 + $0x14] sm:$0xf]
      %v165 = vld [vmem:[%s147 + $0x18] sm:$0xf]
      %v166 = vld [vmem:[%s147 + $0x1c] sm:$0xf]
      %v167 = vld [vmem:[%s147 + $0x20] sm:$0xf]
      %v168 = vld [vmem:[%s147 + $0x24] sm:$0xf]
      %v169 = vld [vmem:[%s147 + $0x28] sm:$0xf]
      %v170 = vld [vmem:[%s147 + $0x2c] sm:$0xf]
      %v171 = vld [vmem:[%s147 + $0x30] sm:$0xf]
      %v172 = vld [vmem:[%s147 + $0x34] sm:$0xf]
      %v173 = vld [vmem:[%s147 + $0x38] sm:$0xf]
      %v174 = vld [vmem:[%s147 + $0x3c] sm:$0xf]
      %v175 = vunpack.c.l.bf16 %v159
      %v176 = vunpack.c.l.bf16 %v161
      %v177 = vunpack.c.l.bf16 %v163
      %v178 = vunpack.c.l.bf16 %v165
      %v179 = vunpack.c.l.bf16 %v167
      %v180 = vunpack.c.l.bf16 %v169
      %v181 = vunpack.c.l.bf16 %v171
      %v182 = vunpack.c.l.bf16 %v173
      %v183 = vunpack.c.l.bf16 %v160
      %v184 = vunpack.c.l.bf16 %v162
      %v185 = vunpack.c.l.bf16 %v164
      %v186 = vunpack.c.l.bf16 %v166
      %v187 = vunpack.c.l.bf16 %v168
      %v188 = vunpack.c.l.bf16 %v170
      %v189 = vunpack.c.l.bf16 %v172
      %v190 = vunpack.c.l.bf16 %v174
      %v191 = vmax.f32 %v175, %v183
      %v192 = vmax.f32 %v176, %v184
      %v193 = vmax.f32 %v177, %v185
      %v194 = vmax.f32 %v178, %v186
      %v195 = vmax.f32 %v179, %v187
      %v196 = vmax.f32 %v180, %v188
      %v197 = vmax.f32 %v181, %v189
      %v198 = vmax.f32 %v182, %v190
      %v199 = vpack.c.bf16 %v191, %v191
      %v200 = vpack.c.bf16 %v192, %v192
      %v201 = vpack.c.bf16 %v193, %v193
      %v202 = vpack.c.bf16 %v194, %v194
      %v203 = vpack.c.bf16 %v195, %v195
      %v204 = vpack.c.bf16 %v196, %v196
      %v205 = vpack.c.bf16 %v197, %v197
      %v206 = vpack.c.bf16 %v198, %v198
      %v207 = vunpack.c.l.bf16 %v199
      %v208 = vunpack.c.l.bf16 %v200
      %v209 = vunpack.c.l.bf16 %v201
      %v210 = vunpack.c.l.bf16 %v202
      %v211 = vunpack.c.l.bf16 %v203
      %v212 = vunpack.c.l.bf16 %v204
      %v213 = vunpack.c.l.bf16 %v205
      %v214 = vunpack.c.l.bf16 %v206
      %223 = vrot.lane.b32.xlu0 %v207, 112
      %v224 = vpop.permute.xlu0 %223
      %225 = vrot.lane.b32.xlu0 %v208, 112
      %v226 = vpop.permute.xlu0 %225
      %227 = vrot.lane.b32.xlu0 %v209, 112
      %v228 = vpop.permute.xlu0 %227
      %229 = vrot.lane.b32.xlu0 %v210, 112
      %v230 = vpop.permute.xlu0 %229
      %231 = vrot.lane.b32.xlu0 %v211, 112
      %v232 = vpop.permute.xlu0 %231
      %233 = vrot.lane.b32.xlu0 %v212, 112
      %v234 = vpop.permute.xlu0 %233
      %235 = vrot.lane.b32.xlu0 %v213, 112
      %v236 = vpop.permute.xlu0 %235
      %237 = vrot.lane.b32.xlu0 %v214, 112
      %v238 = vpop.permute.xlu0 %237
      %v247 = vmax.f32 %v207, %v224
      %v248 = vmax.f32 %v208, %v226
      %v249 = vmax.f32 %v209, %v228
      %v250 = vmax.f32 %v210, %v230
      %v251 = vmax.f32 %v211, %v232
      %v252 = vmax.f32 %v212, %v234
      %v253 = vmax.f32 %v213, %v236
      %v254 = vmax.f32 %v214, %v238
      %v255 = vpack.c.bf16 %v247, %v247
      %v256 = vpack.c.bf16 %v248, %v248
      %v257 = vpack.c.bf16 %v249, %v249
      %v258 = vpack.c.bf16 %v250, %v250
      %v259 = vpack.c.bf16 %v251, %v251
      %v260 = vpack.c.bf16 %v252, %v252
      %v261 = vpack.c.bf16 %v253, %v253
      %v262 = vpack.c.bf16 %v254, %v254
      %vm263 = vcmask 125952
      %264 = vst.msk [vmem:[%s157] sm:$0xf] %vm263, %v255
      %265 = vst.msk [vmem:[%s157 + $0x4] sm:$0xf] %vm263, %v256
      %266 = vst.msk [vmem:[%s157 + $0x8] sm:$0xf] %vm263, %v257
      %267 = vst.msk [vmem:[%s157 + $0xc] sm:$0xf] %vm263, %v258
      %268 = vst.msk [vmem:[%s157 + $0x10] sm:$0xf] %vm263, %v259
      %269 = vst.msk [vmem:[%s157 + $0x14] sm:$0xf] %vm263, %v260
      %270 = vst.msk [vmem:[%s157 + $0x18] sm:$0xf] %vm263, %v261
      %271 = vst.msk [vmem:[%s157 + $0x1c] sm:$0xf] %vm263, %v262
      %s272 = smul.u32 8, %s17
      %p273 = scmp.lt.s32.totalorder %s16, 1
      %s274 = scalar_select %p273, %s16, 1
      %p275 = scmp.lt.s32.totalorder %s272, 7
      %s276 = scalar_select %p275, %s272, 7
      %s277 = smul.addr %s274, 8
      %s278 = sadd.s32 %s276, %s277
      %s279 = smul.addr %s278, 4
      %s280 = scalar_lea.vmem %s1, %s279
      // Predicated region
      $region25: #{dalle_encoder_forward.29} parent=23 // pred_check
        %p281 = pneg %p72
      $region26: #{dalle_encoder_forward.29} parent=23 // pred_check_branch
        %283 = sbr.rel (%p281) target = $region28
      $region27: #{dalle_encoder_forward.29} parent=23 // pred_region
        %s284 = smul.u32 8, %s17
      $region28: #{dalle_encoder_forward.29} parent=23 // pred_fallthru
        _
    $region24: #{dalle_encoder_forward.29} parent=5 // pred_fallthru
      _
    %p285 = scmp.le.s32.totalorder 2, %s7
    // Predicated region
    $region29: #{dalle_encoder_forward.29} parent=5 // pred_check
      %p286 = pneg %p285
    $region30: #{dalle_encoder_forward.29} parent=5 // pred_check_branch
      %288 = sbr.rel (%p286) target = $region32
    $region31: #{dalle_encoder_forward.29} parent=5 // pred_region
      %s289 = ssub.s32 %s7, 2
      // Predicated region
      $region33: #{dalle_encoder_forward.29} parent=31 // pred_check
        %p290 = pneg %p78
      $region34: #{dalle_encoder_forward.29} parent=31 // pred_check_branch
        %292 = sbr.rel (%p290) target = $region36
      $region35: #{dalle_encoder_forward.29} parent=31 // pred_region
        %s293 = smul.u32 8, %s19
        %p294 = scmp.lt.s32.totalorder %s18, 1
        %s295 = scalar_select %p294, %s18, 1
        %p296 = scmp.lt.s32.totalorder %s293, 7
        %s297 = scalar_select %p296, %s293, 7
        %s298 = smul.addr %s295, 8
        %s299 = sadd.s32 %s297, %s298
        %s300 = smul.addr %s299, 4
        %s301 = scalar_lea.vmem %s1, %s300
      $region36: #{dalle_encoder_forward.29} parent=31 // pred_fallthru
        _
    $region32: #{dalle_encoder_forward.29} parent=5 // pred_fallthru
      _
  $region6: #{dalle_encoder_forward.29} parent=0 // loop_footer
    %s11 = sadd.s32 1, %s7
  $region7: #{dalle_encoder_forward.29} parent=0 // loop_footer_branch
    %6 = sbr.rel target = $region3
  $region8: #{dalle_encoder_forward.29} parent=0 // loop_exit
    _

// kernel: dalle_encoder_forward.31
$region0: #{dalle_encoder_forward.31}
  #allocation0 [shape = 'u32[]', space=smem, size = 0x4, offset = 0x4, fixed_abs, tag = 'smem constant byte address 0x4 - core index']
  #allocation1 [shape = 'u32[72,128]{1,0:T(1,128)}', space=vmem, size = 0x9000, scoped, tag = 'internal scratch']
  #allocation2 [shape = 'f32[128,128]{1,0:T(8,128)}', space=vmem, size = 0x10000, scoped, tag = 'scratch operand']
  %s0 = inlined_call_operand.vmem [shape: bf16[128,256], index: 0, kind: input, shape index: {}]
  %s1 = inlined_call_operand.vmem [shape: bf16[256,128], index: 1, kind: input, shape index: {}]
  %s2 = inlined_call_operand.vmem [shape: f32[1,128], index: 2, kind: input, shape index: {}]
  %s3 = inlined_call_operand.vmem [shape: bf16[128,128], index: 3, kind: output, shape index: {}]
  %s4 = sld [smem:[#allocation0]]
  $region30: #{dalle_encoder_forward.31} parent=0
    _
  %s6 = ssub.s32 1, %s4
  %s7 = scalar_select 0, %s6, %s4
  // Predicated region
  $region2: #{dalle_encoder_forward.31} parent=0 // pred_check
    _
  $region3: #{dalle_encoder_forward.31} parent=0 // pred_check_branch
    %9 = sbr.rel (0) target = $region5
  $region4: #{dalle_encoder_forward.31} parent=0 // pred_region
    _
  $region5: #{dalle_encoder_forward.31} parent=0 // pred_fallthru
    _
  // Predicated region
  $region6: #{dalle_encoder_forward.31} parent=0 // pred_check
    _
  $region7: #{dalle_encoder_forward.31} parent=0 // pred_check_branch
    %11 = sbr.rel (0) target = $region9
  $region8: #{dalle_encoder_forward.31} parent=0 // pred_region
    _
  $region9: #{dalle_encoder_forward.31} parent=0 // pred_fallthru
    _
  // Predicated region
  $region10: #{dalle_encoder_forward.31} parent=0 // pred_check
    _
  $region11: #{dalle_encoder_forward.31} parent=0 // pred_check_branch
    %13 = sbr.rel (0) target = $region13
  $region12: #{dalle_encoder_forward.31} parent=0 // pred_region
    _
  $region13: #{dalle_encoder_forward.31} parent=0 // pred_fallthru
    _
  %p14 = scmp.eq.s32.totalorder 0, 0
  // Predicated region
  $region14: #{dalle_encoder_forward.31} parent=0 // pred_check
    %p15 = pneg %p14
  $region15: #{dalle_encoder_forward.31} parent=0 // pred_check_branch
    %17 = sbr.rel (%p15) target = $region17
  $region16: #{dalle_encoder_forward.31} parent=0 // pred_region
    %18 = vst [vmem:[#allocation2] sm:$0xff] 0.0
    %19 = vst [vmem:[#allocation2 + $0x8] sm:$0xff] 0.0
    %20 = vst [vmem:[#allocation2 + $0x10] sm:$0xff] 0.0
    %21 = vst [vmem:[#allocation2 + $0x18] sm:$0xff] 0.0
    %22 = vst [vmem:[#allocation2 + $0x20] sm:$0xff] 0.0
    %23 = vst [vmem:[#allocation2 + $0x28] sm:$0xff] 0.0
    %24 = vst [vmem:[#allocation2 + $0x30] sm:$0xff] 0.0
    %25 = vst [vmem:[#allocation2 + $0x38] sm:$0xff] 0.0
    %26 = vst [vmem:[#allocation2 + $0x40] sm:$0xff] 0.0
    %27 = vst [vmem:[#allocation2 + $0x48] sm:$0xff] 0.0
    %28 = vst [vmem:[#allocation2 + $0x50] sm:$0xff] 0.0
    %29 = vst [vmem:[#allocation2 + $0x58] sm:$0xff] 0.0
    %30 = vst [vmem:[#allocation2 + $0x60] sm:$0xff] 0.0
    %31 = vst [vmem:[#allocation2 + $0x68] sm:$0xff] 0.0
    %32 = vst [vmem:[#allocation2 + $0x70] sm:$0xff] 0.0
    %33 = vst [vmem:[#allocation2 + $0x78] sm:$0xff] 0.0
  $region17: #{dalle_encoder_forward.31} parent=0 // pred_fallthru
    _
  %v34 = vld [vmem:[%s0] sm:$0xff]
  %v35 = vld [vmem:[%s0 + $0x8] sm:$0xff]
  %v36 = vld [vmem:[%s0 + $0x10] sm:$0xff]
  %v37 = vld [vmem:[%s0 + $0x18] sm:$0xff]
  %v38 = vld [vmem:[%s0 + $0x20] sm:$0xff]
  %v39 = vld [vmem:[%s0 + $0x28] sm:$0xff]
  %v40 = vld [vmem:[%s0 + $0x30] sm:$0xff]
  %v41 = vld [vmem:[%s0 + $0x38] sm:$0xff]
  %v42 = vld [vmem:[%s0 + $0x40] sm:$0xff]
  %v43 = vld [vmem:[%s0 + $0x48] sm:$0xff]
  %v44 = vld [vmem:[%s0 + $0x50] sm:$0xff]
  %v45 = vld [vmem:[%s0 + $0x58] sm:$0xff]
  %v46 = vld [vmem:[%s0 + $0x60] sm:$0xff]
  %v47 = vld [vmem:[%s0 + $0x68] sm:$0xff]
  %v48 = vld [vmem:[%s0 + $0x70] sm:$0xff]
  %v49 = vld [vmem:[%s0 + $0x78] sm:$0xff]
  %v50 = vunpack.c.l.bf16 %v34
  %v51 = vunpack.c.h.bf16 %v34
  %v52 = vunpack.c.l.bf16 %v35
  %v53 = vunpack.c.h.bf16 %v35
  %v54 = vunpack.c.l.bf16 %v36
  %v55 = vunpack.c.h.bf16 %v36
  %v56 = vunpack.c.l.bf16 %v37
  %v57 = vunpack.c.h.bf16 %v37
  %v58 = vunpack.c.l.bf16 %v38
  %v59 = vunpack.c.h.bf16 %v38
  %v60 = vunpack.c.l.bf16 %v39
  %v61 = vunpack.c.h.bf16 %v39
  %v62 = vunpack.c.l.bf16 %v40
  %v63 = vunpack.c.h.bf16 %v40
  %v64 = vunpack.c.l.bf16 %v41
  %v65 = vunpack.c.h.bf16 %v41
  %v66 = vunpack.c.l.bf16 %v42
  %v67 = vunpack.c.h.bf16 %v42
  %v68 = vunpack.c.l.bf16 %v43
  %v69 = vunpack.c.h.bf16 %v43
  %v70 = vunpack.c.l.bf16 %v44
  %v71 = vunpack.c.h.bf16 %v44
  %v72 = vunpack.c.l.bf16 %v45
  %v73 = vunpack.c.h.bf16 %v45
  %v74 = vunpack.c.l.bf16 %v46
  %v75 = vunpack.c.h.bf16 %v46
  %v76 = vunpack.c.l.bf16 %v47
  %v77 = vunpack.c.h.bf16 %v47
  %v78 = vunpack.c.l.bf16 %v48
  %v79 = vunpack.c.h.bf16 %v48
  %v80 = vunpack.c.l.bf16 %v49
  %v81 = vunpack.c.h.bf16 %v49
  %v82 = vmax.f32 %v50, 0.0
  %v83 = vmax.f32 %v51, 0.0
  %v84 = vmax.f32 %v52, 0.0
  %v85 = vmax.f32 %v53, 0.0
  %v86 = vmax.f32 %v54, 0.0
  %v87 = vmax.f32 %v55, 0.0
  %v88 = vmax.f32 %v56, 0.0
  %v89 = vmax.f32 %v57, 0.0
  %v90 = vmax.f32 %v58, 0.0
  %v91 = vmax.f32 %v59, 0.0
  %v92 = vmax.f32 %v60, 0.0
  %v93 = vmax.f32 %v61, 0.0
  %v94 = vmax.f32 %v62, 0.0
  %v95 = vmax.f32 %v63, 0.0
  %v96 = vmax.f32 %v64, 0.0
  %v97 = vmax.f32 %v65, 0.0
  %v98 = vmax.f32 %v66, 0.0
  %v99 = vmax.f32 %v67, 0.0
  %v100 = vmax.f32 %v68, 0.0
  %v101 = vmax.f32 %v69, 0.0
  %v102 = vmax.f32 %v70, 0.0
  %v103 = vmax.f32 %v71, 0.0
  %v104 = vmax.f32 %v72, 0.0
  %v105 = vmax.f32 %v73, 0.0
  %v106 = vmax.f32 %v74, 0.0
  %v107 = vmax.f32 %v75, 0.0
  %v108 = vmax.f32 %v76, 0.0
  %v109 = vmax.f32 %v77, 0.0
  %v110 = vmax.f32 %v78, 0.0
  %v111 = vmax.f32 %v79, 0.0
  %v112 = vmax.f32 %v80, 0.0
  %v113 = vmax.f32 %v81, 0.0
  %v114 = vpack.c.bf16 %v84, %v82
  %v115 = vpack.c.bf16 %v85, %v83
  %v116 = vpack.c.bf16 %v88, %v86
  %v117 = vpack.c.bf16 %v89, %v87
  %v118 = vpack.c.bf16 %v92, %v90
  %v119 = vpack.c.bf16 %v93, %v91
  %v120 = vpack.c.bf16 %v96, %v94
  %v121 = vpack.c.bf16 %v97, %v95
  %v122 = vpack.c.bf16 %v100, %v98
  %v123 = vpack.c.bf16 %v101, %v99
  %v124 = vpack.c.bf16 %v104, %v102
  %v125 = vpack.c.bf16 %v105, %v103
  %v126 = vpack.c.bf16 %v108, %v106
  %v127 = vpack.c.bf16 %v109, %v107
  %v128 = vpack.c.bf16 %v112, %v110
  %v129 = vpack.c.bf16 %v113, %v111
  %v130 = vld [vmem:[#allocation2] sm:$0xff]
  %v131 = vld [vmem:[#allocation2 + $0x8] sm:$0xff]
  %v132 = vld [vmem:[#allocation2 + $0x10] sm:$0xff]
  %v133 = vld [vmem:[#allocation2 + $0x18] sm:$0xff]
  %v134 = vld [vmem:[#allocation2 + $0x20] sm:$0xff]
  %v135 = vld [vmem:[#allocation2 + $0x28] sm:$0xff]
  %v136 = vld [vmem:[#allocation2 + $0x30] sm:$0xff]
  %v137 = vld [vmem:[#allocation2 + $0x38] sm:$0xff]
  %v138 = vld [vmem:[#allocation2 + $0x40] sm:$0xff]
  %v139 = vld [vmem:[#allocation2 + $0x48] sm:$0xff]
  %v140 = vld [vmem:[#allocation2 + $0x50] sm:$0xff]
  %v141 = vld [vmem:[#allocation2 + $0x58] sm:$0xff]
  %v142 = vld [vmem:[#allocation2 + $0x60] sm:$0xff]
  %v143 = vld [vmem:[#allocation2 + $0x68] sm:$0xff]
  %v144 = vld [vmem:[#allocation2 + $0x70] sm:$0xff]
  %v145 = vld [vmem:[#allocation2 + $0x78] sm:$0xff]
  %v146 = vld [vmem:[%s1] sm:$0xf]
  %v147 = vld [vmem:[%s1 + $0x4] sm:$0xf]
  %v148 = vld [vmem:[%s1 + $0x8] sm:$0xf]
  %v149 = vld [vmem:[%s1 + $0xc] sm:$0xf]
  %v150 = vld [vmem:[%s1 + $0x10] sm:$0xf]
  %v151 = vld [vmem:[%s1 + $0x14] sm:$0xf]
  %v152 = vld [vmem:[%s1 + $0x18] sm:$0xf]
  %v153 = vld [vmem:[%s1 + $0x1c] sm:$0xf]
  %v154 = vld [vmem:[%s1 + $0x20] sm:$0xf]
  %v155 = vld [vmem:[%s1 + $0x24] sm:$0xf]
  %v156 = vld [vmem:[%s1 + $0x28] sm:$0xf]
  %v157 = vld [vmem:[%s1 + $0x2c] sm:$0xf]
  %v158 = vld [vmem:[%s1 + $0x30] sm:$0xf]
  %v159 = vld [vmem:[%s1 + $0x34] sm:$0xf]
  %v160 = vld [vmem:[%s1 + $0x38] sm:$0xf]
  %v161 = vld [vmem:[%s1 + $0x3c] sm:$0xf]
  %v162 = vld [vmem:[%s1 + $0x40] sm:$0xf]
  %v163 = vld [vmem:[%s1 + $0x44] sm:$0xf]
  %v164 = vld [vmem:[%s1 + $0x48] sm:$0xf]
  %v165 = vld [vmem:[%s1 + $0x4c] sm:$0xf]
  %v166 = vld [vmem:[%s1 + $0x50] sm:$0xf]
  %v167 = vld [vmem:[%s1 + $0x54] sm:$0xf]
  %v168 = vld [vmem:[%s1 + $0x58] sm:$0xf]
  %v169 = vld [vmem:[%s1 + $0x5c] sm:$0xf]
  %v170 = vld [vmem:[%s1 + $0x60] sm:$0xf]
  %v171 = vld [vmem:[%s1 + $0x64] sm:$0xf]
  %v172 = vld [vmem:[%s1 + $0x68] sm:$0xf]
  %v173 = vld [vmem:[%s1 + $0x6c] sm:$0xf]
  %v174 = vld [vmem:[%s1 + $0x70] sm:$0xf]
  %v175 = vld [vmem:[%s1 + $0x74] sm:$0xf]
  %v176 = vld [vmem:[%s1 + $0x78] sm:$0xf]
  %v177 = vld [vmem:[%s1 + $0x7c] sm:$0xf]
  %v210 = vunpack.c.l.b16 %v146
  %v211 = vunpack.c.l.b16 %v147
  %v212 = vunpack.c.l.b16 %v148
  %v213 = vunpack.c.l.b16 %v149
  %v214 = vunpack.c.l.b16 %v150
  %v215 = vunpack.c.l.b16 %v151
  %v216 = vunpack.c.l.b16 %v152
  %v217 = vunpack.c.l.b16 %v153
  %v218 = vunpack.c.l.b16 %v154
  %v219 = vunpack.c.l.b16 %v155
  %v220 = vunpack.c.l.b16 %v156
  %v221 = vunpack.c.l.b16 %v157
  %v222 = vunpack.c.l.b16 %v158
  %v223 = vunpack.c.l.b16 %v159
  %v224 = vunpack.c.l.b16 %v160
  %v225 = vunpack.c.l.b16 %v161
  %v226 = vunpack.c.l.b16 %v162
  %v227 = vunpack.c.l.b16 %v163
  %v228 = vunpack.c.l.b16 %v164
  %v229 = vunpack.c.l.b16 %v165
  %v230 = vunpack.c.l.b16 %v166
  %v231 = vunpack.c.l.b16 %v167
  %v232 = vunpack.c.l.b16 %v168
  %v233 = vunpack.c.l.b16 %v169
  %v234 = vunpack.c.l.b16 %v170
  %v235 = vunpack.c.l.b16 %v171
  %v236 = vunpack.c.l.b16 %v172
  %v237 = vunpack.c.l.b16 %v173
  %v238 = vunpack.c.l.b16 %v174
  %v239 = vunpack.c.l.b16 %v175
  %v240 = vunpack.c.l.b16 %v176
  %v241 = vunpack.c.l.b16 %v177
  %v242 = vpack.c.b16 %v211, %v210
  %v243 = vpack.c.b16 %v213, %v212
  %v244 = vpack.c.b16 %v215, %v214
  %v245 = vpack.c.b16 %v217, %v216
  %v246 = vpack.c.b16 %v219, %v218
  %v247 = vpack.c.b16 %v221, %v220
  %v248 = vpack.c.b16 %v223, %v222
  %v249 = vpack.c.b16 %v225, %v224
  %v250 = vpack.c.b16 %v227, %v226
  %v251 = vpack.c.b16 %v229, %v228
  %v252 = vpack.c.b16 %v231, %v230
  %v253 = vpack.c.b16 %v233, %v232
  %v254 = vpack.c.b16 %v235, %v234
  %v255 = vpack.c.b16 %v237, %v236
  %v256 = vpack.c.b16 %v239, %v238
  %v257 = vpack.c.b16 %v241, %v240
  %274 = vmatpush.bf16.msra.mxu0 %v249
  %275 = vmatpush.bf16.msra.mxu0 %v248
  %276 = vmatpush.bf16.msra.mxu0 %v247
  %277 = vmatpush.bf16.msra.mxu0 %v246
  %278 = vmatpush.bf16.msra.mxu0 %v245
  %279 = vmatpush.bf16.msra.mxu0 %v244
  %280 = vmatpush.bf16.msra.mxu0 %v243
  %281 = vmatpush.bf16.msra.mxu0 %v242
  %282 = vmatmul.bf16.gmra.mxu0 %v114
  %v283 = vpop.f32.mrf.mxu0
  %v284 = vadd.f32 0.0, %v283
  %v285 = vpop.f32.mrf.mxu0
  %v286 = vadd.f32 0.0, %v285
  %287 = vmatmul.bf16.gmra.mxu0 %v116
  %v288 = vpop.f32.mrf.mxu0
  %v289 = vadd.f32 0.0, %v288
  %v290 = vpop.f32.mrf.mxu0
  %v291 = vadd.f32 0.0, %v290
  %292 = vmatmul.bf16.gmra.mxu0 %v118
  %v293 = vpop.f32.mrf.mxu0
  %v294 = vadd.f32 0.0, %v293
  %v295 = vpop.f32.mrf.mxu0
  %v296 = vadd.f32 0.0, %v295
  %297 = vmatmul.bf16.gmra.mxu0 %v120
  %v298 = vpop.f32.mrf.mxu0
  %v299 = vadd.f32 0.0, %v298
  %v300 = vpop.f32.mrf.mxu0
  %v301 = vadd.f32 0.0, %v300
  %302 = vmatmul.bf16.gmra.mxu0 %v122
  %v303 = vpop.f32.mrf.mxu0
  %v304 = vadd.f32 0.0, %v303
  %v305 = vpop.f32.mrf.mxu0
  %v306 = vadd.f32 0.0, %v305
  %307 = vmatmul.bf16.gmra.mxu0 %v124
  %v308 = vpop.f32.mrf.mxu0
  %v309 = vadd.f32 0.0, %v308
  %v310 = vpop.f32.mrf.mxu0
  %v311 = vadd.f32 0.0, %v310
  %312 = vmatmul.bf16.gmra.mxu0 %v126
  %v313 = vpop.f32.mrf.mxu0
  %v314 = vadd.f32 0.0, %v313
  %v315 = vpop.f32.mrf.mxu0
  %v316 = vadd.f32 0.0, %v315
  %317 = vmatmul.bf16.gmra.mxu0 %v128
  %v318 = vpop.f32.mrf.mxu0
  %v319 = vadd.f32 0.0, %v318
  %v320 = vpop.f32.mrf.mxu0
  %v321 = vadd.f32 0.0, %v320
  %322 = vdwg.mxu0
  %323 = vmatpush.bf16.msra.mxu0 %v257
  %324 = vmatpush.bf16.msra.mxu0 %v256
  %325 = vmatpush.bf16.msra.mxu0 %v255
  %326 = vmatpush.bf16.msra.mxu0 %v254
  %327 = vmatpush.bf16.msra.mxu0 %v253
  %328 = vmatpush.bf16.msra.mxu0 %v252
  %329 = vmatpush.bf16.msra.mxu0 %v251
  %330 = vmatpush.bf16.msra.mxu0 %v250
  %331 = vmatmul.bf16.gmra.mxu0 %v115
  %v332 = vpop.f32.mrf.mxu0
  %v333 = vadd.f32 %v284, %v332
  %v334 = vpop.f32.mrf.mxu0
  %v335 = vadd.f32 %v286, %v334
  %336 = vmatmul.bf16.gmra.mxu0 %v117
  %v337 = vpop.f32.mrf.mxu0
  %v338 = vadd.f32 %v289, %v337
  %v339 = vpop.f32.mrf.mxu0
  %v340 = vadd.f32 %v291, %v339
  %341 = vmatmul.bf16.gmra.mxu0 %v119
  %v342 = vpop.f32.mrf.mxu0
  %v343 = vadd.f32 %v294, %v342
  %v344 = vpop.f32.mrf.mxu0
  %v345 = vadd.f32 %v296, %v344
  %346 = vmatmul.bf16.gmra.mxu0 %v121
  %v347 = vpop.f32.mrf.mxu0
  %v348 = vadd.f32 %v299, %v347
  %v349 = vpop.f32.mrf.mxu0
  %v350 = vadd.f32 %v301, %v349
  %351 = vmatmul.bf16.gmra.mxu0 %v123
  %v352 = vpop.f32.mrf.mxu0
  %v353 = vadd.f32 %v304, %v352
  %v354 = vpop.f32.mrf.mxu0
  %v355 = vadd.f32 %v306, %v354
  %356 = vmatmul.bf16.gmra.mxu0 %v125
  %v357 = vpop.f32.mrf.mxu0
  %v358 = vadd.f32 %v309, %v357
  %v359 = vpop.f32.mrf.mxu0
  %v360 = vadd.f32 %v311, %v359
  %361 = vmatmul.bf16.gmra.mxu0 %v127
  %v362 = vpop.f32.mrf.mxu0
  %v363 = vadd.f32 %v314, %v362
  %v364 = vpop.f32.mrf.mxu0
  %v365 = vadd.f32 %v316, %v364
  %366 = vmatmul.bf16.gmra.mxu0 %v129
  %v367 = vpop.f32.mrf.mxu0
  %v368 = vadd.f32 %v319, %v367
  %v369 = vpop.f32.mrf.mxu0
  %v370 = vadd.f32 %v321, %v369
  %371 = vdwg.mxu0
  %v372 = vadd.f32 %v130, %v333
  %v373 = vadd.f32 %v131, %v335
  %v374 = vadd.f32 %v132, %v338
  %v375 = vadd.f32 %v133, %v340
  %v376 = vadd.f32 %v134, %v343
  %v377 = vadd.f32 %v135, %v345
  %v378 = vadd.f32 %v136, %v348
  %v379 = vadd.f32 %v137, %v350
  %v380 = vadd.f32 %v138, %v353
  %v381 = vadd.f32 %v139, %v355
  %v382 = vadd.f32 %v140, %v358
  %v383 = vadd.f32 %v141, %v360
  %v384 = vadd.f32 %v142, %v363
  %v385 = vadd.f32 %v143, %v365
  %v386 = vadd.f32 %v144, %v368
  %v387 = vadd.f32 %v145, %v370
  %388 = vst [vmem:[#allocation2] sm:$0xff] %v372
  %389 = vst [vmem:[#allocation2 + $0x8] sm:$0xff] %v373
  %390 = vst [vmem:[#allocation2 + $0x10] sm:$0xff] %v374
  %391 = vst [vmem:[#allocation2 + $0x18] sm:$0xff] %v375
  %392 = vst [vmem:[#allocation2 + $0x20] sm:$0xff] %v376
  %393 = vst [vmem:[#allocation2 + $0x28] sm:$0xff] %v377
  %394 = vst [vmem:[#allocation2 + $0x30] sm:$0xff] %v378
  %395 = vst [vmem:[#allocation2 + $0x38] sm:$0xff] %v379
  %396 = vst [vmem:[#allocation2 + $0x40] sm:$0xff] %v380
  %397 = vst [vmem:[#allocation2 + $0x48] sm:$0xff] %v381
  %398 = vst [vmem:[#allocation2 + $0x50] sm:$0xff] %v382
  %399 = vst [vmem:[#allocation2 + $0x58] sm:$0xff] %v383
  %400 = vst [vmem:[#allocation2 + $0x60] sm:$0xff] %v384
  %401 = vst [vmem:[#allocation2 + $0x68] sm:$0xff] %v385
  %402 = vst [vmem:[#allocation2 + $0x70] sm:$0xff] %v386
  %403 = vst [vmem:[#allocation2 + $0x78] sm:$0xff] %v387
  // Predicated region
  $region18: #{dalle_encoder_forward.31} parent=0 // pred_check
    %p404 = pneg %p14
  $region19: #{dalle_encoder_forward.31} parent=0 // pred_check_branch
    %406 = sbr.rel (%p404) target = $region21
  $region20: #{dalle_encoder_forward.31} parent=0 // pred_region
    %v407 = vld [vmem:[#allocation2] sm:$0xff]
    %v408 = vld [vmem:[#allocation2 + $0x8] sm:$0xff]
    %v409 = vld [vmem:[#allocation2 + $0x10] sm:$0xff]
    %v410 = vld [vmem:[#allocation2 + $0x18] sm:$0xff]
    %v411 = vld [vmem:[#allocation2 + $0x20] sm:$0xff]
    %v412 = vld [vmem:[#allocation2 + $0x28] sm:$0xff]
    %v413 = vld [vmem:[#allocation2 + $0x30] sm:$0xff]
    %v414 = vld [vmem:[#allocation2 + $0x38] sm:$0xff]
    %v415 = vld [vmem:[#allocation2 + $0x40] sm:$0xff]
    %v416 = vld [vmem:[#allocation2 + $0x48] sm:$0xff]
    %v417 = vld [vmem:[#allocation2 + $0x50] sm:$0xff]
    %v418 = vld [vmem:[#allocation2 + $0x58] sm:$0xff]
    %v419 = vld [vmem:[#allocation2 + $0x60] sm:$0xff]
    %v420 = vld [vmem:[#allocation2 + $0x68] sm:$0xff]
    %v421 = vld [vmem:[#allocation2 + $0x70] sm:$0xff]
    %v422 = vld [vmem:[#allocation2 + $0x78] sm:$0xff]
    %v423 = vld [vmem:[%s2] sm:$0x1]
    %v425 = vperm.slane %v423, 0
    %v427 = vadd.f32 %v407, %v425
    %v428 = vadd.f32 %v408, %v425
    %v429 = vadd.f32 %v409, %v425
    %v430 = vadd.f32 %v410, %v425
    %v431 = vadd.f32 %v411, %v425
    %v432 = vadd.f32 %v412, %v425
    %v433 = vadd.f32 %v413, %v425
    %v434 = vadd.f32 %v414, %v425
    %v435 = vadd.f32 %v415, %v425
    %v436 = vadd.f32 %v416, %v425
    %v437 = vadd.f32 %v417, %v425
    %v438 = vadd.f32 %v418, %v425
    %v439 = vadd.f32 %v419, %v425
    %v440 = vadd.f32 %v420, %v425
    %v441 = vadd.f32 %v421, %v425
    %v442 = vadd.f32 %v422, %v425
    %v443 = vpack.c.bf16 %v427, %v427
    %v444 = vpack.c.bf16 %v428, %v428
    %v445 = vpack.c.bf16 %v429, %v429
    %v446 = vpack.c.bf16 %v430, %v430
    %v447 = vpack.c.bf16 %v431, %v431
    %v448 = vpack.c.bf16 %v432, %v432
    %v449 = vpack.c.bf16 %v433, %v433
    %v450 = vpack.c.bf16 %v434, %v434
    %v451 = vpack.c.bf16 %v435, %v435
    %v452 = vpack.c.bf16 %v436, %v436
    %v453 = vpack.c.bf16 %v437, %v437
    %v454 = vpack.c.bf16 %v438, %v438
    %v455 = vpack.c.bf16 %v439, %v439
    %v456 = vpack.c.bf16 %v440, %v440
    %v457 = vpack.c.bf16 %v441, %v441
    %v458 = vpack.c.bf16 %v442, %v442
    %459 = vst [vmem:[%s3] sm:$0xf] %v443
    %460 = vst [vmem:[%s3 + $0x4] sm:$0xf] %v444
    %461 = vst [vmem:[%s3 + $0x8] sm:$0xf] %v445
    %462 = vst [vmem:[%s3 + $0xc] sm:$0xf] %v446
    %463 = vst [vmem:[%s3 + $0x10] sm:$0xf] %v447
    %464 = vst [vmem:[%s3 + $0x14] sm:$0xf] %v448
    %465 = vst [vmem:[%s3 + $0x18] sm:$0xf] %v449
    %466 = vst [vmem:[%s3 + $0x1c] sm:$0xf] %v450
    %467 = vst [vmem:[%s3 + $0x20] sm:$0xf] %v451
    %468 = vst [vmem:[%s3 + $0x24] sm:$0xf] %v452
    %469 = vst [vmem:[%s3 + $0x28] sm:$0xf] %v453
    %470 = vst [vmem:[%s3 + $0x2c] sm:$0xf] %v454
    %471 = vst [vmem:[%s3 + $0x30] sm:$0xf] %v455
    %472 = vst [vmem:[%s3 + $0x34] sm:$0xf] %v456
    %473 = vst [vmem:[%s3 + $0x38] sm:$0xf] %v457
    %474 = vst [vmem:[%s3 + $0x3c] sm:$0xf] %v458
  $region21: #{dalle_encoder_forward.31} parent=0 // pred_fallthru
    _
  // Predicated region
  $region22: #{dalle_encoder_forward.31} parent=0 // pred_check
    _
  $region23: #{dalle_encoder_forward.31} parent=0 // pred_check_branch
    %476 = sbr.rel (0) target = $region25
  $region24: #{dalle_encoder_forward.31} parent=0 // pred_region
    _
  $region25: #{dalle_encoder_forward.31} parent=0 // pred_fallthru
    _
  // Predicated region
  $region26: #{dalle_encoder_forward.31} parent=0 // pred_check
    _
  $region27: #{dalle_encoder_forward.31} parent=0 // pred_check_branch
    %478 = sbr.rel (0) target = $region29
  $region28: #{dalle_encoder_forward.31} parent=0 // pred_region
    _
  $region29: #{dalle_encoder_forward.31} parent=0 // pred_fallthru
    _

// kernel: dalle_encoder_forward.30
$region0: #{dalle_encoder_forward.30}
  #allocation0 [shape = 'u32[]', space=smem, size = 0x4, offset = 0x4, fixed_abs, tag = 'smem constant byte address 0x4 - core index']
  #allocation1 [shape = 'u32[72,128]{1,0:T(1,128)}', space=vmem, size = 0x9000, scoped, tag = 'internal scratch']
  #allocation2 [shape = 'f32[128,128]{1,0:T(8,128)}', space=vmem, size = 0x10000, scoped, tag = 'scratch operand']
  %s0 = inlined_call_operand.vmem [shape: bf16[128,128], index: 0, kind: input, shape index: {}]
  %s1 = inlined_call_operand.vmem [shape: bf16[128,128], index: 1, kind: input, shape index: {}]
  %s2 = inlined_call_operand.vmem [shape: f32[1,128], index: 2, kind: input, shape index: {}]
  %s3 = inlined_call_operand.vmem [shape: bf16[128,128], index: 3, kind: output, shape index: {}]
  %s4 = sld [smem:[#allocation0]]
  $region30: #{dalle_encoder_forward.30} parent=0
    _
  %s6 = ssub.s32 1, %s4
  %s7 = scalar_select 0, %s6, %s4
  // Predicated region
  $region2: #{dalle_encoder_forward.30} parent=0 // pred_check
    _
  $region3: #{dalle_encoder_forward.30} parent=0 // pred_check_branch
    %9 = sbr.rel (0) target = $region5
  $region4: #{dalle_encoder_forward.30} parent=0 // pred_region
    _
  $region5: #{dalle_encoder_forward.30} parent=0 // pred_fallthru
    _
  // Predicated region
  $region6: #{dalle_encoder_forward.30} parent=0 // pred_check
    _
  $region7: #{dalle_encoder_forward.30} parent=0 // pred_check_branch
    %11 = sbr.rel (0) target = $region9
  $region8: #{dalle_encoder_forward.30} parent=0 // pred_region
    _
  $region9: #{dalle_encoder_forward.30} parent=0 // pred_fallthru
    _
  // Predicated region
  $region10: #{dalle_encoder_forward.30} parent=0 // pred_check
    _
  $region11: #{dalle_encoder_forward.30} parent=0 // pred_check_branch
    %13 = sbr.rel (0) target = $region13
  $region12: #{dalle_encoder_forward.30} parent=0 // pred_region
    _
  $region13: #{dalle_encoder_forward.30} parent=0 // pred_fallthru
    _
  %p14 = scmp.eq.s32.totalorder 0, 0
  // Predicated region
  $region14: #{dalle_encoder_forward.30} parent=0 // pred_check
    %p15 = pneg %p14
  $region15: #{dalle_encoder_forward.30} parent=0 // pred_check_branch
    %17 = sbr.rel (%p15) target = $region17
  $region16: #{dalle_encoder_forward.30} parent=0 // pred_region
    %18 = vst [vmem:[#allocation2] sm:$0xff] 0.0
    %19 = vst [vmem:[#allocation2 + $0x8] sm:$0xff] 0.0
    %20 = vst [vmem:[#allocation2 + $0x10] sm:$0xff] 0.0
    %21 = vst [vmem:[#allocation2 + $0x18] sm:$0xff] 0.0
    %22 = vst [vmem:[#allocation2 + $0x20] sm:$0xff] 0.0
    %23 = vst [vmem:[#allocation2 + $0x28] sm:$0xff] 0.0
    %24 = vst [vmem:[#allocation2 + $0x30] sm:$0xff] 0.0
    %25 = vst [vmem:[#allocation2 + $0x38] sm:$0xff] 0.0
    %26 = vst [vmem:[#allocation2 + $0x40] sm:$0xff] 0.0
    %27 = vst [vmem:[#allocation2 + $0x48] sm:$0xff] 0.0
    %28 = vst [vmem:[#allocation2 + $0x50] sm:$0xff] 0.0
    %29 = vst [vmem:[#allocation2 + $0x58] sm:$0xff] 0.0
    %30 = vst [vmem:[#allocation2 + $0x60] sm:$0xff] 0.0
    %31 = vst [vmem:[#allocation2 + $0x68] sm:$0xff] 0.0
    %32 = vst [vmem:[#allocation2 + $0x70] sm:$0xff] 0.0
    %33 = vst [vmem:[#allocation2 + $0x78] sm:$0xff] 0.0
  $region17: #{dalle_encoder_forward.30} parent=0 // pred_fallthru
    _
  %v34 = vld [vmem:[%s0] sm:$0xf]
  %v35 = vld [vmem:[%s0 + $0x4] sm:$0xf]
  %v36 = vld [vmem:[%s0 + $0x8] sm:$0xf]
  %v37 = vld [vmem:[%s0 + $0xc] sm:$0xf]
  %v38 = vld [vmem:[%s0 + $0x10] sm:$0xf]
  %v39 = vld [vmem:[%s0 + $0x14] sm:$0xf]
  %v40 = vld [vmem:[%s0 + $0x18] sm:$0xf]
  %v41 = vld [vmem:[%s0 + $0x1c] sm:$0xf]
  %v42 = vld [vmem:[%s0 + $0x20] sm:$0xf]
  %v43 = vld [vmem:[%s0 + $0x24] sm:$0xf]
  %v44 = vld [vmem:[%s0 + $0x28] sm:$0xf]
  %v45 = vld [vmem:[%s0 + $0x2c] sm:$0xf]
  %v46 = vld [vmem:[%s0 + $0x30] sm:$0xf]
  %v47 = vld [vmem:[%s0 + $0x34] sm:$0xf]
  %v48 = vld [vmem:[%s0 + $0x38] sm:$0xf]
  %v49 = vld [vmem:[%s0 + $0x3c] sm:$0xf]
  %v50 = vld [vmem:[#allocation2] sm:$0xff]
  %v51 = vld [vmem:[#allocation2 + $0x8] sm:$0xff]
  %v52 = vld [vmem:[#allocation2 + $0x10] sm:$0xff]
  %v53 = vld [vmem:[#allocation2 + $0x18] sm:$0xff]
  %v54 = vld [vmem:[#allocation2 + $0x20] sm:$0xff]
  %v55 = vld [vmem:[#allocation2 + $0x28] sm:$0xff]
  %v56 = vld [vmem:[#allocation2 + $0x30] sm:$0xff]
  %v57 = vld [vmem:[#allocation2 + $0x38] sm:$0xff]
  %v58 = vld [vmem:[#allocation2 + $0x40] sm:$0xff]
  %v59 = vld [vmem:[#allocation2 + $0x48] sm:$0xff]
  %v60 = vld [vmem:[#allocation2 + $0x50] sm:$0xff]
  %v61 = vld [vmem:[#allocation2 + $0x58] sm:$0xff]
  %v62 = vld [vmem:[#allocation2 + $0x60] sm:$0xff]
  %v63 = vld [vmem:[#allocation2 + $0x68] sm:$0xff]
  %v64 = vld [vmem:[#allocation2 + $0x70] sm:$0xff]
  %v65 = vld [vmem:[#allocation2 + $0x78] sm:$0xff]
  %v66 = vld [vmem:[%s1] sm:$0xf]
  %v67 = vld [vmem:[%s1 + $0x4] sm:$0xf]
  %v68 = vld [vmem:[%s1 + $0x8] sm:$0xf]
  %v69 = vld [vmem:[%s1 + $0xc] sm:$0xf]
  %v70 = vld [vmem:[%s1 + $0x10] sm:$0xf]
  %v71 = vld [vmem:[%s1 + $0x14] sm:$0xf]
  %v72 = vld [vmem:[%s1 + $0x18] sm:$0xf]
  %v73 = vld [vmem:[%s1 + $0x1c] sm:$0xf]
  %v74 = vld [vmem:[%s1 + $0x20] sm:$0xf]
  %v75 = vld [vmem:[%s1 + $0x24] sm:$0xf]
  %v76 = vld [vmem:[%s1 + $0x28] sm:$0xf]
  %v77 = vld [vmem:[%s1 + $0x2c] sm:$0xf]
  %v78 = vld [vmem:[%s1 + $0x30] sm:$0xf]
  %v79 = vld [vmem:[%s1 + $0x34] sm:$0xf]
  %v80 = vld [vmem:[%s1 + $0x38] sm:$0xf]
  %v81 = vld [vmem:[%s1 + $0x3c] sm:$0xf]
  %v98 = vunpack.c.l.b16 %v34
  %v99 = vunpack.c.l.b16 %v35
  %v100 = vunpack.c.l.b16 %v36
  %v101 = vunpack.c.l.b16 %v37
  %v102 = vunpack.c.l.b16 %v38
  %v103 = vunpack.c.l.b16 %v39
  %v104 = vunpack.c.l.b16 %v40
  %v105 = vunpack.c.l.b16 %v41
  %v106 = vunpack.c.l.b16 %v42
  %v107 = vunpack.c.l.b16 %v43
  %v108 = vunpack.c.l.b16 %v44
  %v109 = vunpack.c.l.b16 %v45
  %v110 = vunpack.c.l.b16 %v46
  %v111 = vunpack.c.l.b16 %v47
  %v112 = vunpack.c.l.b16 %v48
  %v113 = vunpack.c.l.b16 %v49
  %v114 = vpack.c.b16 %v99, %v98
  %v115 = vpack.c.b16 %v101, %v100
  %v116 = vpack.c.b16 %v103, %v102
  %v117 = vpack.c.b16 %v105, %v104
  %v118 = vpack.c.b16 %v107, %v106
  %v119 = vpack.c.b16 %v109, %v108
  %v120 = vpack.c.b16 %v111, %v110
  %v121 = vpack.c.b16 %v113, %v112
  %v146 = vunpack.c.l.b16 %v66
  %v147 = vunpack.c.l.b16 %v67
  %v148 = vunpack.c.l.b16 %v68
  %v149 = vunpack.c.l.b16 %v69
  %v150 = vunpack.c.l.b16 %v70
  %v151 = vunpack.c.l.b16 %v71
  %v152 = vunpack.c.l.b16 %v72
  %v153 = vunpack.c.l.b16 %v73
  %v154 = vunpack.c.l.b16 %v74
  %v155 = vunpack.c.l.b16 %v75
  %v156 = vunpack.c.l.b16 %v76
  %v157 = vunpack.c.l.b16 %v77
  %v158 = vunpack.c.l.b16 %v78
  %v159 = vunpack.c.l.b16 %v79
  %v160 = vunpack.c.l.b16 %v80
  %v161 = vunpack.c.l.b16 %v81
  %v162 = vpack.c.b16 %v147, %v146
  %v163 = vpack.c.b16 %v149, %v148
  %v164 = vpack.c.b16 %v151, %v150
  %v165 = vpack.c.b16 %v153, %v152
  %v166 = vpack.c.b16 %v155, %v154
  %v167 = vpack.c.b16 %v157, %v156
  %v168 = vpack.c.b16 %v159, %v158
  %v169 = vpack.c.b16 %v161, %v160
  %178 = vmatpush.bf16.msra.mxu0 %v169
  %179 = vmatpush.bf16.msra.mxu0 %v168
  %180 = vmatpush.bf16.msra.mxu0 %v167
  %181 = vmatpush.bf16.msra.mxu0 %v166
  %182 = vmatpush.bf16.msra.mxu0 %v165
  %183 = vmatpush.bf16.msra.mxu0 %v164
  %184 = vmatpush.bf16.msra.mxu0 %v163
  %185 = vmatpush.bf16.msra.mxu0 %v162
  %186 = vmatmul.bf16.gmra.mxu0 %v114
  %v187 = vpop.f32.mrf.mxu0
  %v188 = vadd.f32 0.0, %v187
  %v189 = vpop.f32.mrf.mxu0
  %v190 = vadd.f32 0.0, %v189
  %191 = vmatmul.bf16.gmra.mxu0 %v115
  %v192 = vpop.f32.mrf.mxu0
  %v193 = vadd.f32 0.0, %v192
  %v194 = vpop.f32.mrf.mxu0
  %v195 = vadd.f32 0.0, %v194
  %196 = vmatmul.bf16.gmra.mxu0 %v116
  %v197 = vpop.f32.mrf.mxu0
  %v198 = vadd.f32 0.0, %v197
  %v199 = vpop.f32.mrf.mxu0
  %v200 = vadd.f32 0.0, %v199
  %201 = vmatmul.bf16.gmra.mxu0 %v117
  %v202 = vpop.f32.mrf.mxu0
  %v203 = vadd.f32 0.0, %v202
  %v204 = vpop.f32.mrf.mxu0
  %v205 = vadd.f32 0.0, %v204
  %206 = vmatmul.bf16.gmra.mxu0 %v118
  %v207 = vpop.f32.mrf.mxu0
  %v208 = vadd.f32 0.0, %v207
  %v209 = vpop.f32.mrf.mxu0
  %v210 = vadd.f32 0.0, %v209
  %211 = vmatmul.bf16.gmra.mxu0 %v119
  %v212 = vpop.f32.mrf.mxu0
  %v213 = vadd.f32 0.0, %v212
  %v214 = vpop.f32.mrf.mxu0
  %v215 = vadd.f32 0.0, %v214
  %216 = vmatmul.bf16.gmra.mxu0 %v120
  %v217 = vpop.f32.mrf.mxu0
  %v218 = vadd.f32 0.0, %v217
  %v219 = vpop.f32.mrf.mxu0
  %v220 = vadd.f32 0.0, %v219
  %221 = vmatmul.bf16.gmra.mxu0 %v121
  %v222 = vpop.f32.mrf.mxu0
  %v223 = vadd.f32 0.0, %v222
  %v224 = vpop.f32.mrf.mxu0
  %v225 = vadd.f32 0.0, %v224
  %226 = vdwg.mxu0
  %v227 = vadd.f32 %v50, %v188
  %v228 = vadd.f32 %v51, %v190
  %v229 = vadd.f32 %v52, %v193
  %v230 = vadd.f32 %v53, %v195
  %v231 = vadd.f32 %v54, %v198
  %v232 = vadd.f32 %v55, %v200
  %v233 = vadd.f32 %v56, %v203
  %v234 = vadd.f32 %v57, %v205
  %v235 = vadd.f32 %v58, %v208
  %v236 = vadd.f32 %v59, %v210
  %v237 = vadd.f32 %v60, %v213
  %v238 = vadd.f32 %v61, %v215
  %v239 = vadd.f32 %v62, %v218
  %v240 = vadd.f32 %v63, %v220
  %v241 = vadd.f32 %v64, %v223
  %v242 = vadd.f32 %v65, %v225
  %243 = vst [vmem:[#allocation2] sm:$0xff] %v227
  %244 = vst [vmem:[#allocation2 + $0x8] sm:$0xff] %v228
  %245 = vst [vmem:[#allocation2 + $0x10] sm:$0xff] %v229
  %246 = vst [vmem:[#allocation2 + $0x18] sm:$0xff] %v230
  %247 = vst [vmem:[#allocation2 + $0x20] sm:$0xff] %v231
  %248 = vst [vmem:[#allocation2 + $0x28] sm:$0xff] %v232
  %249 = vst [vmem:[#allocation2 + $0x30] sm:$0xff] %v233
  %250 = vst [vmem:[#allocation2 + $0x38] sm:$0xff] %v234
  %251 = vst [vmem:[#allocation2 + $0x40] sm:$0xff] %v235
  %252 = vst [vmem:[#allocation2 + $0x48] sm:$0xff] %v236
  %253 = vst [vmem:[#allocation2 + $0x50] sm:$0xff] %v237
  %254 = vst [vmem:[#allocation2 + $0x58] sm:$0xff] %v238
  %255 = vst [vmem:[#allocation2 + $0x60] sm:$0xff] %v239
  %256 = vst [vmem:[#allocation2 + $0x68] sm:$0xff] %v240
  %257 = vst [vmem:[#allocation2 + $0x70] sm:$0xff] %v241
  %258 = vst [vmem:[#allocation2 + $0x78] sm:$0xff] %v242
  // Predicated region
  $region18: #{dalle_encoder_forward.30} parent=0 // pred_check
    %p259 = pneg %p14
  $region19: #{dalle_encoder_forward.30} parent=0 // pred_check_branch
    %261 = sbr.rel (%p259) target = $region21
  $region20: #{dalle_encoder_forward.30} parent=0 // pred_region
    %v262 = vld [vmem:[#allocation2] sm:$0xff]
    %v263 = vld [vmem:[#allocation2 + $0x8] sm:$0xff]
    %v264 = vld [vmem:[#allocation2 + $0x10] sm:$0xff]
    %v265 = vld [vmem:[#allocation2 + $0x18] sm:$0xff]
    %v266 = vld [vmem:[#allocation2 + $0x20] sm:$0xff]
    %v267 = vld [vmem:[#allocation2 + $0x28] sm:$0xff]
    %v268 = vld [vmem:[#allocation2 + $0x30] sm:$0xff]
    %v269 = vld [vmem:[#allocation2 + $0x38] sm:$0xff]
    %v270 = vld [vmem:[#allocation2 + $0x40] sm:$0xff]
    %v271 = vld [vmem:[#allocation2 + $0x48] sm:$0xff]
    %v272 = vld [vmem:[#allocation2 + $0x50] sm:$0xff]
    %v273 = vld [vmem:[#allocation2 + $0x58] sm:$0xff]
    %v274 = vld [vmem:[#allocation2 + $0x60] sm:$0xff]
    %v275 = vld [vmem:[#allocation2 + $0x68] sm:$0xff]
    %v276 = vld [vmem:[#allocation2 + $0x70] sm:$0xff]
    %v277 = vld [vmem:[#allocation2 + $0x78] sm:$0xff]
    %v278 = vld [vmem:[%s2] sm:$0x1]
    %v280 = vperm.slane %v278, 0
    %v282 = vadd.f32 %v262, %v280
    %v283 = vadd.f32 %v263, %v280
    %v284 = vadd.f32 %v264, %v280
    %v285 = vadd.f32 %v265, %v280
    %v286 = vadd.f32 %v266, %v280
    %v287 = vadd.f32 %v267, %v280
    %v288 = vadd.f32 %v268, %v280
    %v289 = vadd.f32 %v269, %v280
    %v290 = vadd.f32 %v270, %v280
    %v291 = vadd.f32 %v271, %v280
    %v292 = vadd.f32 %v272, %v280
    %v293 = vadd.f32 %v273, %v280
    %v294 = vadd.f32 %v274, %v280
    %v295 = vadd.f32 %v275, %v280
    %v296 = vadd.f32 %v276, %v280
    %v297 = vadd.f32 %v277, %v280
    %v298 = vpack.c.bf16 %v282, %v282
    %v299 = vpack.c.bf16 %v283, %v283
    %v300 = vpack.c.bf16 %v284, %v284
    %v301 = vpack.c.bf16 %v285, %v285
    %v302 = vpack.c.bf16 %v286, %v286
    %v303 = vpack.c.bf16 %v287, %v287
    %v304 = vpack.c.bf16 %v288, %v288
    %v305 = vpack.c.bf16 %v289, %v289
    %v306 = vpack.c.bf16 %v290, %v290
    %v307 = vpack.c.bf16 %v291, %v291
    %v308 = vpack.c.bf16 %v292, %v292
    %v309 = vpack.c.bf16 %v293, %v293
    %v310 = vpack.c.bf16 %v294, %v294
    %v311 = vpack.c.bf16 %v295, %v295
    %v312 = vpack.c.bf16 %v296, %v296
    %v313 = vpack.c.bf16 %v297, %v297
    %314 = vst [vmem:[%s3] sm:$0xf] %v298
    %315 = vst [vmem:[%s3 + $0x4] sm:$0xf] %v299
    %316 = vst [vmem:[%s3 + $0x8] sm:$0xf] %v300
    %317 = vst [vmem:[%s3 + $0xc] sm:$0xf] %v301
    %318 = vst [vmem:[%s3 + $0x10] sm:$0xf] %v302
    %319 = vst [vmem:[%s3 + $0x14] sm:$0xf] %v303
    %320 = vst [vmem:[%s3 + $0x18] sm:$0xf] %v304
    %321 = vst [vmem:[%s3 + $0x1c] sm:$0xf] %v305
    %322 = vst [vmem:[%s3 + $0x20] sm:$0xf] %v306
    %323 = vst [vmem:[%s3 + $0x24] sm:$0xf] %v307
    %324 = vst [vmem:[%s3 + $0x28] sm:$0xf] %v308
    %325 = vst [vmem:[%s3 + $0x2c] sm:$0xf] %v309
    %326 = vst [vmem:[%s3 + $0x30] sm:$0xf] %v310
    %327 = vst [vmem:[%s3 + $0x34] sm:$0xf] %v311
    %328 = vst [vmem:[%s3 + $0x38] sm:$0xf] %v312
    %329 = vst [vmem:[%s3 + $0x3c] sm:$0xf] %v313
  $region21: #{dalle_encoder_forward.30} parent=0 // pred_fallthru
    _
  // Predicated region
  $region22: #{dalle_encoder_forward.30} parent=0 // pred_check
    _
  $region23: #{dalle_encoder_forward.30} parent=0 // pred_check_branch
    %331 = sbr.rel (0) target = $region25
  $region24: #{dalle_encoder_forward.30} parent=0 // pred_region
    _
  $region25: #{dalle_encoder_forward.30} parent=0 // pred_fallthru
    _
  // Predicated region
  $region26: #{dalle_encoder_forward.30} parent=0 // pred_check
    _
  $region27: #{dalle_encoder_forward.30} parent=0 // pred_check_branch
    %333 = sbr.rel (0) target = $region29
  $region28: #{dalle_encoder_forward.30} parent=0 // pred_region
    _
  $region29: #{dalle_encoder_forward.30} parent=0 // pred_fallthru
    _

// kernel: dalle_encoder_forward.35
$region0: #{dalle_encoder_forward.35}
  #allocation0 [shape = 'u32[]', space=smem, size = 0x4, offset = 0x4, fixed_abs, tag = 'smem constant byte address 0x4 - core index']
  #allocation1 [shape = 'u32[72,128]{1,0:T(1,128)}', space=vmem, size = 0x9000, scoped, tag = 'internal scratch']
  %s0 = inlined_call_operand.vmem [shape: bf16[2,4,2,4,64], index: 0, kind: input, shape index: {}]
  %s1 = inlined_call_operand.vmem [shape: bf16[2,4,4,32], index: 1, kind: output, shape index: {}]
  %s2 = sld [smem:[#allocation0]]
  $region37: #{dalle_encoder_forward.35} parent=0
    _
  %s4 = ssub.s32 1, %s2
  %s5 = scalar_select 0, %s4, %s2
  loop: start=0, step=1, limit=4
  $region2: #{dalle_encoder_forward.35} parent=0 // loop_pre_header
    _
  $region3: #{dalle_encoder_forward.35} parent=0 // loop_header
    %s7 = sphi 0, %s11
    %p8 = scmp.ge.s32.totalorder %s7, 4
    %s14 = sphi 0, %s26
    %s15 = sphi 0, %s22
    %s16 = sphi 0, %s14
    %s17 = sphi 0, %s15
    %s18 = sphi 0, %s16
    %s19 = sphi 0, %s17
    %s31 = sphi 0, %s33
    %s34 = sphi 0, %s31
    %s35 = sphi 0, %s34
    %s51 = sphi 0, %s35
    %s59 = sphi 0, %s61
    %s62 = sphi 0, %s59
    %s63 = sphi 0, %s62
    %s79 = sphi 0, %s63
  $region4: #{dalle_encoder_forward.35} parent=0 // loop_header_branch
    %10 = sbr.rel (%p8) target = $region8
  $region5: #{dalle_encoder_forward.35} parent=0 // loop_body
    %s12 = ssub.s32 %s7, 1
    %s13 = ssub.s32 %s7, 2
    %s20 = sadd.s32 1, %s15
    %p21 = scmp.ge.s32.totalorder %s20, 1
    %s22 = scalar_select %p21, 0, %s20
    %s23 = sadd.s32 1, %s14
    %s24 = scalar_select %p21, %s23, %s14
    %p25 = scmp.ge.s32.totalorder %s24, 2
    %s26 = scalar_select %p25, 0, %s24
    %s27 = ssub.s32 %s14, %s26
    %s28 = ssub.s32 %s15, %s22
    %s29 = sor.u32 %s27, %s28
    %p30 = scmp.eq.s32.totalorder %s29, 0
    %s32 = sadd.s32 %s31, 1
    %s33 = scalar_select %p30, %s31, %s32
    %p36 = pneg %p30
    %p37 = scmp.eq.s32.totalorder %s7, 1
    %p38 = por %p36, %p37
    %p39 = scmp.ne.s32.totalorder %s31, %s34
    %p40 = scmp.eq.s32.totalorder %s7, 0
    %p41 = por %p39, %p40
    %p42 = scmp.ne.s32.totalorder %s31, %s34
    %p43 = scmp.eq.s32.totalorder %s12, 1
    %p44 = por %p42, %p43
    %p45 = scmp.ne.s32.totalorder %s34, %s35
    %p46 = scmp.eq.s32.totalorder %s12, 0
    %p47 = por %p45, %p46
    %p48 = scmp.ne.s32.totalorder %s34, %s35
    %p49 = scmp.eq.s32.totalorder %s13, 1
    %p50 = por %p48, %p49
    %p52 = scmp.ne.s32.totalorder %s35, %s51
    %p53 = scmp.eq.s32.totalorder %s13, 0
    %p54 = por %p52, %p53
    %s55 = ssub.s32 %s14, %s26
    %s56 = ssub.s32 %s15, %s22
    %s57 = sor.u32 %s55, %s56
    %p58 = scmp.eq.s32.totalorder %s57, 0
    %s60 = sadd.s32 %s59, 1
    %s61 = scalar_select %p58, %s59, %s60
    %p64 = pneg %p58
    %p65 = scmp.eq.s32.totalorder %s7, 1
    %p66 = por %p64, %p65
    %p67 = scmp.ne.s32.totalorder %s59, %s62
    %p68 = scmp.eq.s32.totalorder %s7, 0
    %p69 = por %p67, %p68
    %p70 = scmp.ne.s32.totalorder %s59, %s62
    %p71 = scmp.eq.s32.totalorder %s12, 1
    %p72 = por %p70, %p71
    %p73 = scmp.ne.s32.totalorder %s62, %s63
    %p74 = scmp.eq.s32.totalorder %s12, 0
    %p75 = por %p73, %p74
    %p76 = scmp.ne.s32.totalorder %s62, %s63
    %p77 = scmp.eq.s32.totalorder %s13, 1
    %p78 = por %p76, %p77
    %p80 = scmp.ne.s32.totalorder %s63, %s79
    %p81 = scmp.eq.s32.totalorder %s13, 0
    %p82 = por %p80, %p81
    %p83 = scmp.le.s32.totalorder 1, %s7
    %p84 = scmp.lt.s32.totalorder %s7, 3
    %p85 = pnand %p83, %p84
    %p86 = pneg %p85
    // Predicated region
    $region9: #{dalle_encoder_forward.35} parent=5 // pred_check
      _
    $region10: #{dalle_encoder_forward.35} parent=5 // pred_check_branch
      %88 = sbr.rel (%p85) target = $region12
    $region11: #{dalle_encoder_forward.35} parent=5 // pred_region
      %s89 = ssub.s32 %s7, 1
    $region12: #{dalle_encoder_forward.35} parent=5 // pred_fallthru
      _
    %p90 = scmp.lt.s32.totalorder %s7, 2
    // Predicated region
    $region13: #{dalle_encoder_forward.35} parent=5 // pred_check
      %p91 = pneg %p90
    $region14: #{dalle_encoder_forward.35} parent=5 // pred_check_branch
      %93 = sbr.rel (%p91) target = $region16
    $region15: #{dalle_encoder_forward.35} parent=5 // pred_region
      // Predicated region
      $region17: #{dalle_encoder_forward.35} parent=15 // pred_check
        %p94 = pneg %p41
      $region18: #{dalle_encoder_forward.35} parent=15 // pred_check_branch
        %96 = sbr.rel (%p94) target = $region20
      $region19: #{dalle_encoder_forward.35} parent=15 // pred_region
        %s97 = smul.u32 4, %s15
        %p98 = scmp.lt.s32.totalorder %s14, 1
        %s99 = scalar_select %p98, %s14, 1
        %p100 = scmp.lt.s32.totalorder %s97, 3
        %s101 = scalar_select %p100, %s97, 3
        %s102 = smul.addr %s101, 2
        %s103 = smul.addr %s99, 8
        %s104 = sadd.s32 %s102, %s103
        %s105 = smul.addr %s104, 2
        %s106 = scalar_lea.vmem %s0, %s105
        %s107 = smul.u32 4, %s15
      $region20: #{dalle_encoder_forward.35} parent=15 // pred_fallthru
        _
    $region16: #{dalle_encoder_forward.35} parent=5 // pred_fallthru
      _
    %p108 = scmp.le.s32.totalorder 1, %s7
    %p109 = scmp.lt.s32.totalorder %s7, 3
    %p110 = pnand %p108, %p109
    %p111 = pneg %p110
    // Predicated region
    $region21: #{dalle_encoder_forward.35} parent=5 // pred_check
      _
    $region22: #{dalle_encoder_forward.35} parent=5 // pred_check_branch
      %113 = sbr.rel (%p110) target = $region24
    $region23: #{dalle_encoder_forward.35} parent=5 // pred_region
      %s114 = ssub.s32 %s7, 1
      %s115 = smul.u32 4, %s17
      %p116 = scmp.lt.s32.totalorder %s16, 1
      %s117 = scalar_select %p116, %s16, 1
      %p118 = scmp.lt.s32.totalorder %s115, 3
      %s119 = scalar_select %p118, %s115, 3
      %s120 = smul.addr %s119, 2
      %s121 = smul.addr %s117, 8
      %s122 = sadd.s32 %s120, %s121
      %s123 = smul.addr %s122, 2
      %s124 = scalar_lea.vmem %s0, %s123
      %p125 = pneg %p47
      %p126 = pneg %p44
      %p127 = pneg %p75
      %p128 = pneg %p72
      %s129 = smul.u32 4, %s17
      %p130 = scmp.lt.s32.totalorder %s16, 1
      %s131 = scalar_select %p130, %s16, 1
      %p132 = scmp.lt.s32.totalorder %s129, 3
      %s133 = scalar_select %p132, %s129, 3
      %s134 = smul.addr %s131, 4
      %s135 = sadd.s32 %s133, %s134
      %s136 = smul.addr %s135, 2
      %s137 = scalar_lea.vmem %s1, %s136
      %s138 = smul.u32 4, %s17
      %p139 = scmp.lt.s32.totalorder %s16, 1
      %s140 = scalar_select %p139, %s16, 1
      %p141 = scmp.lt.s32.totalorder %s138, 3
      %s142 = scalar_select %p141, %s138, 3
      %s143 = smul.addr %s142, 2
      %s144 = smul.addr %s140, 8
      %s145 = sadd.s32 %s143, %s144
      %s146 = smul.addr %s145, 2
      %s147 = scalar_lea.vmem %s0, %s146
      %s148 = smul.u32 4, %s17
      %s149 = smul.u32 4, %s17
      %p150 = scmp.lt.s32.totalorder %s16, 1
      %s151 = scalar_select %p150, %s16, 1
      %p152 = scmp.lt.s32.totalorder %s149, 3
      %s153 = scalar_select %p152, %s149, 3
      %s154 = smul.addr %s151, 4
      %s155 = sadd.s32 %s153, %s154
      %s156 = smul.addr %s155, 2
      %s157 = scalar_lea.vmem %s1, %s156
      %s158 = smul.u32 4, %s17
      %v159 = vld [vmem:[%s147] sm:$0x3]
      %v160 = vld [vmem:[%s147 + $0x2] sm:$0x3]
      %v161 = vld [vmem:[%s147 + $0x4] sm:$0x3]
      %v162 = vld [vmem:[%s147 + $0x6] sm:$0x3]
      %v163 = vld [vmem:[%s147 + $0x8] sm:$0x3]
      %v164 = vld [vmem:[%s147 + $0xa] sm:$0x3]
      %v165 = vld [vmem:[%s147 + $0xc] sm:$0x3]
      %v166 = vld [vmem:[%s147 + $0xe] sm:$0x3]
      %v167 = vunpack.c.l.bf16 %v159
      %v168 = vunpack.c.l.bf16 %v161
      %v169 = vunpack.c.l.bf16 %v163
      %v170 = vunpack.c.l.bf16 %v165
      %v171 = vunpack.c.l.bf16 %v160
      %v172 = vunpack.c.l.bf16 %v162
      %v173 = vunpack.c.l.bf16 %v164
      %v174 = vunpack.c.l.bf16 %v166
      %v175 = vmax.f32 %v167, %v171
      %v176 = vmax.f32 %v168, %v172
      %v177 = vmax.f32 %v169, %v173
      %v178 = vmax.f32 %v170, %v174
      %v179 = vpack.c.bf16 %v175, %v175
      %v180 = vpack.c.bf16 %v176, %v176
      %v181 = vpack.c.bf16 %v177, %v177
      %v182 = vpack.c.bf16 %v178, %v178
      %v183 = vunpack.c.l.bf16 %v179
      %v184 = vunpack.c.l.bf16 %v180
      %v185 = vunpack.c.l.bf16 %v181
      %v186 = vunpack.c.l.bf16 %v182
      %191 = vrot.lane.b32.xlu0 %v183, 96
      %v192 = vpop.permute.xlu0 %191
      %193 = vrot.lane.b32.xlu0 %v184, 96
      %v194 = vpop.permute.xlu0 %193
      %195 = vrot.lane.b32.xlu0 %v185, 96
      %v196 = vpop.permute.xlu0 %195
      %197 = vrot.lane.b32.xlu0 %v186, 96
      %v198 = vpop.permute.xlu0 %197
      %v203 = vmax.f32 %v183, %v192
      %v204 = vmax.f32 %v184, %v194
      %v205 = vmax.f32 %v185, %v196
      %v206 = vmax.f32 %v186, %v198
      %v207 = vpack.c.bf16 %v203, %v203
      %v208 = vpack.c.bf16 %v204, %v204
      %v209 = vpack.c.bf16 %v205, %v205
      %v210 = vpack.c.bf16 %v206, %v206
      %vm211 = vcmask 254976
      %212 = vst.msk [vmem:[%s157] sm:$0x3] %vm211, %v207
      %213 = vst.msk [vmem:[%s157 + $0x2] sm:$0x3] %vm211, %v208
      %214 = vst.msk [vmem:[%s157 + $0x4] sm:$0x3] %vm211, %v209
      %215 = vst.msk [vmem:[%s157 + $0x6] sm:$0x3] %vm211, %v210
      %s216 = smul.u32 4, %s17
      %p217 = scmp.lt.s32.totalorder %s16, 1
      %s218 = scalar_select %p217, %s16, 1
      %p219 = scmp.lt.s32.totalorder %s216, 3
      %s220 = scalar_select %p219, %s216, 3
      %s221 = smul.addr %s218, 4
      %s222 = sadd.s32 %s220, %s221
      %s223 = smul.addr %s222, 2
      %s224 = scalar_lea.vmem %s1, %s223
      // Predicated region
      $region25: #{dalle_encoder_forward.35} parent=23 // pred_check
        %p225 = pneg %p72
      $region26: #{dalle_encoder_forward.35} parent=23 // pred_check_branch
        %227 = sbr.rel (%p225) target = $region28
      $region27: #{dalle_encoder_forward.35} parent=23 // pred_region
        %s228 = smul.u32 4, %s17
      $region28: #{dalle_encoder_forward.35} parent=23 // pred_fallthru
        _
    $region24: #{dalle_encoder_forward.35} parent=5 // pred_fallthru
      _
    %p229 = scmp.le.s32.totalorder 2, %s7
    // Predicated region
    $region29: #{dalle_encoder_forward.35} parent=5 // pred_check
      %p230 = pneg %p229
    $region30: #{dalle_encoder_forward.35} parent=5 // pred_check_branch
      %232 = sbr.rel (%p230) target = $region32
    $region31: #{dalle_encoder_forward.35} parent=5 // pred_region
      %s233 = ssub.s32 %s7, 2
      // Predicated region
      $region33: #{dalle_encoder_forward.35} parent=31 // pred_check
        %p234 = pneg %p78
      $region34: #{dalle_encoder_forward.35} parent=31 // pred_check_branch
        %236 = sbr.rel (%p234) target = $region36
      $region35: #{dalle_encoder_forward.35} parent=31 // pred_region
        %s237 = smul.u32 4, %s19
        %p238 = scmp.lt.s32.totalorder %s18, 1
        %s239 = scalar_select %p238, %s18, 1
        %p240 = scmp.lt.s32.totalorder %s237, 3
        %s241 = scalar_select %p240, %s237, 3
        %s242 = smul.addr %s239, 4
        %s243 = sadd.s32 %s241, %s242
        %s244 = smul.addr %s243, 2
        %s245 = scalar_lea.vmem %s1, %s244
      $region36: #{dalle_encoder_forward.35} parent=31 // pred_fallthru
        _
    $region32: #{dalle_encoder_forward.35} parent=5 // pred_fallthru
      _
  $region6: #{dalle_encoder_forward.35} parent=0 // loop_footer
    %s11 = sadd.s32 1, %s7
  $region7: #{dalle_encoder_forward.35} parent=0 // loop_footer_branch
    %6 = sbr.rel target = $region3
  $region8: #{dalle_encoder_forward.35} parent=0 // loop_exit
    _

// kernel: dalle_encoder_forward.34
$region0: #{dalle_encoder_forward.34}
  #allocation0 [shape = 'u32[]', space=smem, size = 0x4, offset = 0x4, fixed_abs, tag = 'smem constant byte address 0x4 - core index']
  #allocation1 [shape = 'u32[72,128]{1,0:T(1,128)}', space=vmem, size = 0x9000, scoped, tag = 'internal scratch']
  #allocation2 [shape = 'f32[128,128]{1,0:T(8,128)}', space=vmem, size = 0x10000, scoped, tag = 'scratch operand']
  %s0 = inlined_call_operand.vmem [shape: bf16[128,128], index: 0, kind: input, shape index: {}]
  %s1 = inlined_call_operand.vmem [shape: bf16[128,128], index: 1, kind: input, shape index: {}]
  %s2 = inlined_call_operand.vmem [shape: f32[1,128], index: 2, kind: input, shape index: {}]
  %s3 = inlined_call_operand.vmem [shape: bf16[128,128], index: 3, kind: input, shape index: {}]
  %s4 = inlined_call_operand.vmem [shape: bf16[128,128], index: 4, kind: output, shape index: {}]
  %s5 = sld [smem:[#allocation0]]
  $region34: #{dalle_encoder_forward.34} parent=0
    _
  %s7 = ssub.s32 1, %s5
  %s8 = scalar_select 0, %s7, %s5
  // Predicated region
  $region2: #{dalle_encoder_forward.34} parent=0 // pred_check
    _
  $region3: #{dalle_encoder_forward.34} parent=0 // pred_check_branch
    %10 = sbr.rel (0) target = $region5
  $region4: #{dalle_encoder_forward.34} parent=0 // pred_region
    _
  $region5: #{dalle_encoder_forward.34} parent=0 // pred_fallthru
    _
  // Predicated region
  $region6: #{dalle_encoder_forward.34} parent=0 // pred_check
    _
  $region7: #{dalle_encoder_forward.34} parent=0 // pred_check_branch
    %12 = sbr.rel (0) target = $region9
  $region8: #{dalle_encoder_forward.34} parent=0 // pred_region
    _
  $region9: #{dalle_encoder_forward.34} parent=0 // pred_fallthru
    _
  // Predicated region
  $region10: #{dalle_encoder_forward.34} parent=0 // pred_check
    _
  $region11: #{dalle_encoder_forward.34} parent=0 // pred_check_branch
    %14 = sbr.rel (0) target = $region13
  $region12: #{dalle_encoder_forward.34} parent=0 // pred_region
    _
  $region13: #{dalle_encoder_forward.34} parent=0 // pred_fallthru
    _
  // Predicated region
  $region14: #{dalle_encoder_forward.34} parent=0 // pred_check
    _
  $region15: #{dalle_encoder_forward.34} parent=0 // pred_check_branch
    %16 = sbr.rel (0) target = $region17
  $region16: #{dalle_encoder_forward.34} parent=0 // pred_region
    _
  $region17: #{dalle_encoder_forward.34} parent=0 // pred_fallthru
    _
  %p17 = scmp.eq.s32.totalorder 0, 0
  // Predicated region
  $region18: #{dalle_encoder_forward.34} parent=0 // pred_check
    %p18 = pneg %p17
  $region19: #{dalle_encoder_forward.34} parent=0 // pred_check_branch
    %20 = sbr.rel (%p18) target = $region21
  $region20: #{dalle_encoder_forward.34} parent=0 // pred_region
    %21 = vst [vmem:[#allocation2] sm:$0xff] 0.0
    %22 = vst [vmem:[#allocation2 + $0x8] sm:$0xff] 0.0
    %23 = vst [vmem:[#allocation2 + $0x10] sm:$0xff] 0.0
    %24 = vst [vmem:[#allocation2 + $0x18] sm:$0xff] 0.0
    %25 = vst [vmem:[#allocation2 + $0x20] sm:$0xff] 0.0
    %26 = vst [vmem:[#allocation2 + $0x28] sm:$0xff] 0.0
    %27 = vst [vmem:[#allocation2 + $0x30] sm:$0xff] 0.0
    %28 = vst [vmem:[#allocation2 + $0x38] sm:$0xff] 0.0
    %29 = vst [vmem:[#allocation2 + $0x40] sm:$0xff] 0.0
    %30 = vst [vmem:[#allocation2 + $0x48] sm:$0xff] 0.0
    %31 = vst [vmem:[#allocation2 + $0x50] sm:$0xff] 0.0
    %32 = vst [vmem:[#allocation2 + $0x58] sm:$0xff] 0.0
    %33 = vst [vmem:[#allocation2 + $0x60] sm:$0xff] 0.0
    %34 = vst [vmem:[#allocation2 + $0x68] sm:$0xff] 0.0
    %35 = vst [vmem:[#allocation2 + $0x70] sm:$0xff] 0.0
    %36 = vst [vmem:[#allocation2 + $0x78] sm:$0xff] 0.0
  $region21: #{dalle_encoder_forward.34} parent=0 // pred_fallthru
    _
  %v37 = vld [vmem:[%s0] sm:$0xf]
  %v38 = vld [vmem:[%s0 + $0x4] sm:$0xf]
  %v39 = vld [vmem:[%s0 + $0x8] sm:$0xf]
  %v40 = vld [vmem:[%s0 + $0xc] sm:$0xf]
  %v41 = vld [vmem:[%s0 + $0x10] sm:$0xf]
  %v42 = vld [vmem:[%s0 + $0x14] sm:$0xf]
  %v43 = vld [vmem:[%s0 + $0x18] sm:$0xf]
  %v44 = vld [vmem:[%s0 + $0x1c] sm:$0xf]
  %v45 = vld [vmem:[%s0 + $0x20] sm:$0xf]
  %v46 = vld [vmem:[%s0 + $0x24] sm:$0xf]
  %v47 = vld [vmem:[%s0 + $0x28] sm:$0xf]
  %v48 = vld [vmem:[%s0 + $0x2c] sm:$0xf]
  %v49 = vld [vmem:[%s0 + $0x30] sm:$0xf]
  %v50 = vld [vmem:[%s0 + $0x34] sm:$0xf]
  %v51 = vld [vmem:[%s0 + $0x38] sm:$0xf]
  %v52 = vld [vmem:[%s0 + $0x3c] sm:$0xf]
  %v53 = vunpack.c.l.bf16 %v37
  %v54 = vunpack.c.l.bf16 %v38
  %v55 = vunpack.c.l.bf16 %v39
  %v56 = vunpack.c.l.bf16 %v40
  %v57 = vunpack.c.l.bf16 %v41
  %v58 = vunpack.c.l.bf16 %v42
  %v59 = vunpack.c.l.bf16 %v43
  %v60 = vunpack.c.l.bf16 %v44
  %v61 = vunpack.c.l.bf16 %v45
  %v62 = vunpack.c.l.bf16 %v46
  %v63 = vunpack.c.l.bf16 %v47
  %v64 = vunpack.c.l.bf16 %v48
  %v65 = vunpack.c.l.bf16 %v49
  %v66 = vunpack.c.l.bf16 %v50
  %v67 = vunpack.c.l.bf16 %v51
  %v68 = vunpack.c.l.bf16 %v52
  %v69 = vmax.f32 %v53, 0.0
  %v70 = vmax.f32 %v54, 0.0
  %v71 = vmax.f32 %v55, 0.0
  %v72 = vmax.f32 %v56, 0.0
  %v73 = vmax.f32 %v57, 0.0
  %v74 = vmax.f32 %v58, 0.0
  %v75 = vmax.f32 %v59, 0.0
  %v76 = vmax.f32 %v60, 0.0
  %v77 = vmax.f32 %v61, 0.0
  %v78 = vmax.f32 %v62, 0.0
  %v79 = vmax.f32 %v63, 0.0
  %v80 = vmax.f32 %v64, 0.0
  %v81 = vmax.f32 %v65, 0.0
  %v82 = vmax.f32 %v66, 0.0
  %v83 = vmax.f32 %v67, 0.0
  %v84 = vmax.f32 %v68, 0.0
  %v85 = vpack.c.bf16 %v70, %v69
  %v86 = vpack.c.bf16 %v72, %v71
  %v87 = vpack.c.bf16 %v74, %v73
  %v88 = vpack.c.bf16 %v76, %v75
  %v89 = vpack.c.bf16 %v78, %v77
  %v90 = vpack.c.bf16 %v80, %v79
  %v91 = vpack.c.bf16 %v82, %v81
  %v92 = vpack.c.bf16 %v84, %v83
  %v93 = vld [vmem:[#allocation2] sm:$0xff]
  %v94 = vld [vmem:[#allocation2 + $0x8] sm:$0xff]
  %v95 = vld [vmem:[#allocation2 + $0x10] sm:$0xff]
  %v96 = vld [vmem:[#allocation2 + $0x18] sm:$0xff]
  %v97 = vld [vmem:[#allocation2 + $0x20] sm:$0xff]
  %v98 = vld [vmem:[#allocation2 + $0x28] sm:$0xff]
  %v99 = vld [vmem:[#allocation2 + $0x30] sm:$0xff]
  %v100 = vld [vmem:[#allocation2 + $0x38] sm:$0xff]
  %v101 = vld [vmem:[#allocation2 + $0x40] sm:$0xff]
  %v102 = vld [vmem:[#allocation2 + $0x48] sm:$0xff]
  %v103 = vld [vmem:[#allocation2 + $0x50] sm:$0xff]
  %v104 = vld [vmem:[#allocation2 + $0x58] sm:$0xff]
  %v105 = vld [vmem:[#allocation2 + $0x60] sm:$0xff]
  %v106 = vld [vmem:[#allocation2 + $0x68] sm:$0xff]
  %v107 = vld [vmem:[#allocation2 + $0x70] sm:$0xff]
  %v108 = vld [vmem:[#allocation2 + $0x78] sm:$0xff]
  %v109 = vld [vmem:[%s1] sm:$0xf]
  %v110 = vld [vmem:[%s1 + $0x4] sm:$0xf]
  %v111 = vld [vmem:[%s1 + $0x8] sm:$0xf]
  %v112 = vld [vmem:[%s1 + $0xc] sm:$0xf]
  %v113 = vld [vmem:[%s1 + $0x10] sm:$0xf]
  %v114 = vld [vmem:[%s1 + $0x14] sm:$0xf]
  %v115 = vld [vmem:[%s1 + $0x18] sm:$0xf]
  %v116 = vld [vmem:[%s1 + $0x1c] sm:$0xf]
  %v117 = vld [vmem:[%s1 + $0x20] sm:$0xf]
  %v118 = vld [vmem:[%s1 + $0x24] sm:$0xf]
  %v119 = vld [vmem:[%s1 + $0x28] sm:$0xf]
  %v120 = vld [vmem:[%s1 + $0x2c] sm:$0xf]
  %v121 = vld [vmem:[%s1 + $0x30] sm:$0xf]
  %v122 = vld [vmem:[%s1 + $0x34] sm:$0xf]
  %v123 = vld [vmem:[%s1 + $0x38] sm:$0xf]
  %v124 = vld [vmem:[%s1 + $0x3c] sm:$0xf]
  %v141 = vunpack.c.l.b16 %v109
  %v142 = vunpack.c.l.b16 %v110
  %v143 = vunpack.c.l.b16 %v111
  %v144 = vunpack.c.l.b16 %v112
  %v145 = vunpack.c.l.b16 %v113
  %v146 = vunpack.c.l.b16 %v114
  %v147 = vunpack.c.l.b16 %v115
  %v148 = vunpack.c.l.b16 %v116
  %v149 = vunpack.c.l.b16 %v117
  %v150 = vunpack.c.l.b16 %v118
  %v151 = vunpack.c.l.b16 %v119
  %v152 = vunpack.c.l.b16 %v120
  %v153 = vunpack.c.l.b16 %v121
  %v154 = vunpack.c.l.b16 %v122
  %v155 = vunpack.c.l.b16 %v123
  %v156 = vunpack.c.l.b16 %v124
  %v157 = vpack.c.b16 %v142, %v141
  %v158 = vpack.c.b16 %v144, %v143
  %v159 = vpack.c.b16 %v146, %v145
  %v160 = vpack.c.b16 %v148, %v147
  %v161 = vpack.c.b16 %v150, %v149
  %v162 = vpack.c.b16 %v152, %v151
  %v163 = vpack.c.b16 %v154, %v153
  %v164 = vpack.c.b16 %v156, %v155
  %173 = vmatpush.bf16.msra.mxu0 %v164
  %174 = vmatpush.bf16.msra.mxu0 %v163
  %175 = vmatpush.bf16.msra.mxu0 %v162
  %176 = vmatpush.bf16.msra.mxu0 %v161
  %177 = vmatpush.bf16.msra.mxu0 %v160
  %178 = vmatpush.bf16.msra.mxu0 %v159
  %179 = vmatpush.bf16.msra.mxu0 %v158
  %180 = vmatpush.bf16.msra.mxu0 %v157
  %181 = vmatmul.bf16.gmra.mxu0 %v85
  %v182 = vpop.f32.mrf.mxu0
  %v183 = vadd.f32 0.0, %v182
  %v184 = vpop.f32.mrf.mxu0
  %v185 = vadd.f32 0.0, %v184
  %186 = vmatmul.bf16.gmra.mxu0 %v86
  %v187 = vpop.f32.mrf.mxu0
  %v188 = vadd.f32 0.0, %v187
  %v189 = vpop.f32.mrf.mxu0
  %v190 = vadd.f32 0.0, %v189
  %191 = vmatmul.bf16.gmra.mxu0 %v87
  %v192 = vpop.f32.mrf.mxu0
  %v193 = vadd.f32 0.0, %v192
  %v194 = vpop.f32.mrf.mxu0
  %v195 = vadd.f32 0.0, %v194
  %196 = vmatmul.bf16.gmra.mxu0 %v88
  %v197 = vpop.f32.mrf.mxu0
  %v198 = vadd.f32 0.0, %v197
  %v199 = vpop.f32.mrf.mxu0
  %v200 = vadd.f32 0.0, %v199
  %201 = vmatmul.bf16.gmra.mxu0 %v89
  %v202 = vpop.f32.mrf.mxu0
  %v203 = vadd.f32 0.0, %v202
  %v204 = vpop.f32.mrf.mxu0
  %v205 = vadd.f32 0.0, %v204
  %206 = vmatmul.bf16.gmra.mxu0 %v90
  %v207 = vpop.f32.mrf.mxu0
  %v208 = vadd.f32 0.0, %v207
  %v209 = vpop.f32.mrf.mxu0
  %v210 = vadd.f32 0.0, %v209
  %211 = vmatmul.bf16.gmra.mxu0 %v91
  %v212 = vpop.f32.mrf.mxu0
  %v213 = vadd.f32 0.0, %v212
  %v214 = vpop.f32.mrf.mxu0
  %v215 = vadd.f32 0.0, %v214
  %216 = vmatmul.bf16.gmra.mxu0 %v92
  %v217 = vpop.f32.mrf.mxu0
  %v218 = vadd.f32 0.0, %v217
  %v219 = vpop.f32.mrf.mxu0
  %v220 = vadd.f32 0.0, %v219
  %221 = vdwg.mxu0
  %v222 = vadd.f32 %v93, %v183
  %v223 = vadd.f32 %v94, %v185
  %v224 = vadd.f32 %v95, %v188
  %v225 = vadd.f32 %v96, %v190
  %v226 = vadd.f32 %v97, %v193
  %v227 = vadd.f32 %v98, %v195
  %v228 = vadd.f32 %v99, %v198
  %v229 = vadd.f32 %v100, %v200
  %v230 = vadd.f32 %v101, %v203
  %v231 = vadd.f32 %v102, %v205
  %v232 = vadd.f32 %v103, %v208
  %v233 = vadd.f32 %v104, %v210
  %v234 = vadd.f32 %v105, %v213
  %v235 = vadd.f32 %v106, %v215
  %v236 = vadd.f32 %v107, %v218
  %v237 = vadd.f32 %v108, %v220
  %238 = vst [vmem:[#allocation2] sm:$0xff] %v222
  %239 = vst [vmem:[#allocation2 + $0x8] sm:$0xff] %v223
  %240 = vst [vmem:[#allocation2 + $0x10] sm:$0xff] %v224
  %241 = vst [vmem:[#allocation2 + $0x18] sm:$0xff] %v225
  %242 = vst [vmem:[#allocation2 + $0x20] sm:$0xff] %v226
  %243 = vst [vmem:[#allocation2 + $0x28] sm:$0xff] %v227
  %244 = vst [vmem:[#allocation2 + $0x30] sm:$0xff] %v228
  %245 = vst [vmem:[#allocation2 + $0x38] sm:$0xff] %v229
  %246 = vst [vmem:[#allocation2 + $0x40] sm:$0xff] %v230
  %247 = vst [vmem:[#allocation2 + $0x48] sm:$0xff] %v231
  %248 = vst [vmem:[#allocation2 + $0x50] sm:$0xff] %v232
  %249 = vst [vmem:[#allocation2 + $0x58] sm:$0xff] %v233
  %250 = vst [vmem:[#allocation2 + $0x60] sm:$0xff] %v234
  %251 = vst [vmem:[#allocation2 + $0x68] sm:$0xff] %v235
  %252 = vst [vmem:[#allocation2 + $0x70] sm:$0xff] %v236
  %253 = vst [vmem:[#allocation2 + $0x78] sm:$0xff] %v237
  // Predicated region
  $region22: #{dalle_encoder_forward.34} parent=0 // pred_check
    %p254 = pneg %p17
  $region23: #{dalle_encoder_forward.34} parent=0 // pred_check_branch
    %256 = sbr.rel (%p254) target = $region25
  $region24: #{dalle_encoder_forward.34} parent=0 // pred_region
    %v257 = vld [vmem:[#allocation2] sm:$0xff]
    %v258 = vld [vmem:[#allocation2 + $0x8] sm:$0xff]
    %v259 = vld [vmem:[#allocation2 + $0x10] sm:$0xff]
    %v260 = vld [vmem:[#allocation2 + $0x18] sm:$0xff]
    %v261 = vld [vmem:[#allocation2 + $0x20] sm:$0xff]
    %v262 = vld [vmem:[#allocation2 + $0x28] sm:$0xff]
    %v263 = vld [vmem:[#allocation2 + $0x30] sm:$0xff]
    %v264 = vld [vmem:[#allocation2 + $0x38] sm:$0xff]
    %v265 = vld [vmem:[#allocation2 + $0x40] sm:$0xff]
    %v266 = vld [vmem:[#allocation2 + $0x48] sm:$0xff]
    %v267 = vld [vmem:[#allocation2 + $0x50] sm:$0xff]
    %v268 = vld [vmem:[#allocation2 + $0x58] sm:$0xff]
    %v269 = vld [vmem:[#allocation2 + $0x60] sm:$0xff]
    %v270 = vld [vmem:[#allocation2 + $0x68] sm:$0xff]
    %v271 = vld [vmem:[#allocation2 + $0x70] sm:$0xff]
    %v272 = vld [vmem:[#allocation2 + $0x78] sm:$0xff]
    %v273 = vld [vmem:[%s2] sm:$0x1]
    %v275 = vperm.slane %v273, 0
    %v277 = vadd.f32 %v257, %v275
    %v278 = vadd.f32 %v258, %v275
    %v279 = vadd.f32 %v259, %v275
    %v280 = vadd.f32 %v260, %v275
    %v281 = vadd.f32 %v261, %v275
    %v282 = vadd.f32 %v262, %v275
    %v283 = vadd.f32 %v263, %v275
    %v284 = vadd.f32 %v264, %v275
    %v285 = vadd.f32 %v265, %v275
    %v286 = vadd.f32 %v266, %v275
    %v287 = vadd.f32 %v267, %v275
    %v288 = vadd.f32 %v268, %v275
    %v289 = vadd.f32 %v269, %v275
    %v290 = vadd.f32 %v270, %v275
    %v291 = vadd.f32 %v271, %v275
    %v292 = vadd.f32 %v272, %v275
    %v293 = vld [vmem:[%s3] sm:$0xf]
    %v294 = vld [vmem:[%s3 + $0x4] sm:$0xf]
    %v295 = vld [vmem:[%s3 + $0x8] sm:$0xf]
    %v296 = vld [vmem:[%s3 + $0xc] sm:$0xf]
    %v297 = vld [vmem:[%s3 + $0x10] sm:$0xf]
    %v298 = vld [vmem:[%s3 + $0x14] sm:$0xf]
    %v299 = vld [vmem:[%s3 + $0x18] sm:$0xf]
    %v300 = vld [vmem:[%s3 + $0x1c] sm:$0xf]
    %v301 = vld [vmem:[%s3 + $0x20] sm:$0xf]
    %v302 = vld [vmem:[%s3 + $0x24] sm:$0xf]
    %v303 = vld [vmem:[%s3 + $0x28] sm:$0xf]
    %v304 = vld [vmem:[%s3 + $0x2c] sm:$0xf]
    %v305 = vld [vmem:[%s3 + $0x30] sm:$0xf]
    %v306 = vld [vmem:[%s3 + $0x34] sm:$0xf]
    %v307 = vld [vmem:[%s3 + $0x38] sm:$0xf]
    %v308 = vld [vmem:[%s3 + $0x3c] sm:$0xf]
    %v309 = vunpack.c.l.bf16 %v293
    %v310 = vunpack.c.l.bf16 %v294
    %v311 = vunpack.c.l.bf16 %v295
    %v312 = vunpack.c.l.bf16 %v296
    %v313 = vunpack.c.l.bf16 %v297
    %v314 = vunpack.c.l.bf16 %v298
    %v315 = vunpack.c.l.bf16 %v299
    %v316 = vunpack.c.l.bf16 %v300
    %v317 = vunpack.c.l.bf16 %v301
    %v318 = vunpack.c.l.bf16 %v302
    %v319 = vunpack.c.l.bf16 %v303
    %v320 = vunpack.c.l.bf16 %v304
    %v321 = vunpack.c.l.bf16 %v305
    %v322 = vunpack.c.l.bf16 %v306
    %v323 = vunpack.c.l.bf16 %v307
    %v324 = vunpack.c.l.bf16 %v308
    %v325 = vmul.f32 %v277, 0.0625
    %v326 = vmul.f32 %v278, 0.0625
    %v327 = vmul.f32 %v279, 0.0625
    %v328 = vmul.f32 %v280, 0.0625
    %v329 = vmul.f32 %v281, 0.0625
    %v330 = vmul.f32 %v282, 0.0625
    %v331 = vmul.f32 %v283, 0.0625
    %v332 = vmul.f32 %v284, 0.0625
    %v333 = vmul.f32 %v285, 0.0625
    %v334 = vmul.f32 %v286, 0.0625
    %v335 = vmul.f32 %v287, 0.0625
    %v336 = vmul.f32 %v288, 0.0625
    %v337 = vmul.f32 %v289, 0.0625
    %v338 = vmul.f32 %v290, 0.0625
    %v339 = vmul.f32 %v291, 0.0625
    %v340 = vmul.f32 %v292, 0.0625
    %v341 = vadd.f32 %v309, %v325
    %v342 = vadd.f32 %v310, %v326
    %v343 = vadd.f32 %v311, %v327
    %v344 = vadd.f32 %v312, %v328
    %v345 = vadd.f32 %v313, %v329
    %v346 = vadd.f32 %v314, %v330
    %v347 = vadd.f32 %v315, %v331
    %v348 = vadd.f32 %v316, %v332
    %v349 = vadd.f32 %v317, %v333
    %v350 = vadd.f32 %v318, %v334
    %v351 = vadd.f32 %v319, %v335
    %v352 = vadd.f32 %v320, %v336
    %v353 = vadd.f32 %v321, %v337
    %v354 = vadd.f32 %v322, %v338
    %v355 = vadd.f32 %v323, %v339
    %v356 = vadd.f32 %v324, %v340
    %v357 = vpack.c.bf16 %v341, %v341
    %v358 = vpack.c.bf16 %v342, %v342
    %v359 = vpack.c.bf16 %v343, %v343
    %v360 = vpack.c.bf16 %v344, %v344
    %v361 = vpack.c.bf16 %v345, %v345
    %v362 = vpack.c.bf16 %v346, %v346
    %v363 = vpack.c.bf16 %v347, %v347
    %v364 = vpack.c.bf16 %v348, %v348
    %v365 = vpack.c.bf16 %v349, %v349
    %v366 = vpack.c.bf16 %v350, %v350
    %v367 = vpack.c.bf16 %v351, %v351
    %v368 = vpack.c.bf16 %v352, %v352
    %v369 = vpack.c.bf16 %v353, %v353
    %v370 = vpack.c.bf16 %v354, %v354
    %v371 = vpack.c.bf16 %v355, %v355
    %v372 = vpack.c.bf16 %v356, %v356
    %373 = vst [vmem:[%s4] sm:$0xf] %v357
    %374 = vst [vmem:[%s4 + $0x4] sm:$0xf] %v358
    %375 = vst [vmem:[%s4 + $0x8] sm:$0xf] %v359
    %376 = vst [vmem:[%s4 + $0xc] sm:$0xf] %v360
    %377 = vst [vmem:[%s4 + $0x10] sm:$0xf] %v361
    %378 = vst [vmem:[%s4 + $0x14] sm:$0xf] %v362
    %379 = vst [vmem:[%s4 + $0x18] sm:$0xf] %v363
    %380 = vst [vmem:[%s4 + $0x1c] sm:$0xf] %v364
    %381 = vst [vmem:[%s4 + $0x20] sm:$0xf] %v365
    %382 = vst [vmem:[%s4 + $0x24] sm:$0xf] %v366
    %383 = vst [vmem:[%s4 + $0x28] sm:$0xf] %v367
    %384 = vst [vmem:[%s4 + $0x2c] sm:$0xf] %v368
    %385 = vst [vmem:[%s4 + $0x30] sm:$0xf] %v369
    %386 = vst [vmem:[%s4 + $0x34] sm:$0xf] %v370
    %387 = vst [vmem:[%s4 + $0x38] sm:$0xf] %v371
    %388 = vst [vmem:[%s4 + $0x3c] sm:$0xf] %v372
  $region25: #{dalle_encoder_forward.34} parent=0 // pred_fallthru
    _
  // Predicated region
  $region26: #{dalle_encoder_forward.34} parent=0 // pred_check
    _
  $region27: #{dalle_encoder_forward.34} parent=0 // pred_check_branch
    %390 = sbr.rel (0) target = $region29
  $region28: #{dalle_encoder_forward.34} parent=0 // pred_region
    _
  $region29: #{dalle_encoder_forward.34} parent=0 // pred_fallthru
    _
  // Predicated region
  $region30: #{dalle_encoder_forward.34} parent=0 // pred_check
    _
  $region31: #{dalle_encoder_forward.34} parent=0 // pred_check_branch
    %392 = sbr.rel (0) target = $region33
  $region32: #{dalle_encoder_forward.34} parent=0 // pred_region
    _
  $region33: #{dalle_encoder_forward.34} parent=0 // pred_fallthru
    _

// kernel: dalle_encoder_forward.32
$region0: #{dalle_encoder_forward.32}
  #allocation0 [shape = 'u32[]', space=smem, size = 0x4, offset = 0x4, fixed_abs, tag = 'smem constant byte address 0x4 - core index']
  #allocation1 [shape = 'u32[72,128]{1,0:T(1,128)}', space=vmem, size = 0x9000, scoped, tag = 'internal scratch']
  #allocation2 [shape = 'f32[128,128]{1,0:T(8,128)}', space=vmem, size = 0x10000, scoped, tag = 'scratch operand']
  %s0 = inlined_call_operand.vmem [shape: bf16[128,128], index: 0, kind: input, shape index: {}]
  %s1 = inlined_call_operand.vmem [shape: bf16[128,128], index: 1, kind: input, shape index: {}]
  %s2 = inlined_call_operand.vmem [shape: f32[1,128], index: 2, kind: input, shape index: {}]
  %s3 = inlined_call_operand.vmem [shape: bf16[128,128], index: 3, kind: output, shape index: {}]
  %s4 = sld [smem:[#allocation0]]
  $region30: #{dalle_encoder_forward.32} parent=0
    _
  %s6 = ssub.s32 1, %s4
  %s7 = scalar_select 0, %s6, %s4
  // Predicated region
  $region2: #{dalle_encoder_forward.32} parent=0 // pred_check
    _
  $region3: #{dalle_encoder_forward.32} parent=0 // pred_check_branch
    %9 = sbr.rel (0) target = $region5
  $region4: #{dalle_encoder_forward.32} parent=0 // pred_region
    _
  $region5: #{dalle_encoder_forward.32} parent=0 // pred_fallthru
    _
  // Predicated region
  $region6: #{dalle_encoder_forward.32} parent=0 // pred_check
    _
  $region7: #{dalle_encoder_forward.32} parent=0 // pred_check_branch
    %11 = sbr.rel (0) target = $region9
  $region8: #{dalle_encoder_forward.32} parent=0 // pred_region
    _
  $region9: #{dalle_encoder_forward.32} parent=0 // pred_fallthru
    _
  // Predicated region
  $region10: #{dalle_encoder_forward.32} parent=0 // pred_check
    _
  $region11: #{dalle_encoder_forward.32} parent=0 // pred_check_branch
    %13 = sbr.rel (0) target = $region13
  $region12: #{dalle_encoder_forward.32} parent=0 // pred_region
    _
  $region13: #{dalle_encoder_forward.32} parent=0 // pred_fallthru
    _
  %p14 = scmp.eq.s32.totalorder 0, 0
  // Predicated region
  $region14: #{dalle_encoder_forward.32} parent=0 // pred_check
    %p15 = pneg %p14
  $region15: #{dalle_encoder_forward.32} parent=0 // pred_check_branch
    %17 = sbr.rel (%p15) target = $region17
  $region16: #{dalle_encoder_forward.32} parent=0 // pred_region
    %18 = vst [vmem:[#allocation2] sm:$0xff] 0.0
    %19 = vst [vmem:[#allocation2 + $0x8] sm:$0xff] 0.0
    %20 = vst [vmem:[#allocation2 + $0x10] sm:$0xff] 0.0
    %21 = vst [vmem:[#allocation2 + $0x18] sm:$0xff] 0.0
    %22 = vst [vmem:[#allocation2 + $0x20] sm:$0xff] 0.0
    %23 = vst [vmem:[#allocation2 + $0x28] sm:$0xff] 0.0
    %24 = vst [vmem:[#allocation2 + $0x30] sm:$0xff] 0.0
    %25 = vst [vmem:[#allocation2 + $0x38] sm:$0xff] 0.0
    %26 = vst [vmem:[#allocation2 + $0x40] sm:$0xff] 0.0
    %27 = vst [vmem:[#allocation2 + $0x48] sm:$0xff] 0.0
    %28 = vst [vmem:[#allocation2 + $0x50] sm:$0xff] 0.0
    %29 = vst [vmem:[#allocation2 + $0x58] sm:$0xff] 0.0
    %30 = vst [vmem:[#allocation2 + $0x60] sm:$0xff] 0.0
    %31 = vst [vmem:[#allocation2 + $0x68] sm:$0xff] 0.0
    %32 = vst [vmem:[#allocation2 + $0x70] sm:$0xff] 0.0
    %33 = vst [vmem:[#allocation2 + $0x78] sm:$0xff] 0.0
  $region17: #{dalle_encoder_forward.32} parent=0 // pred_fallthru
    _
  %v34 = vld [vmem:[%s0] sm:$0xf]
  %v35 = vld [vmem:[%s0 + $0x4] sm:$0xf]
  %v36 = vld [vmem:[%s0 + $0x8] sm:$0xf]
  %v37 = vld [vmem:[%s0 + $0xc] sm:$0xf]
  %v38 = vld [vmem:[%s0 + $0x10] sm:$0xf]
  %v39 = vld [vmem:[%s0 + $0x14] sm:$0xf]
  %v40 = vld [vmem:[%s0 + $0x18] sm:$0xf]
  %v41 = vld [vmem:[%s0 + $0x1c] sm:$0xf]
  %v42 = vld [vmem:[%s0 + $0x20] sm:$0xf]
  %v43 = vld [vmem:[%s0 + $0x24] sm:$0xf]
  %v44 = vld [vmem:[%s0 + $0x28] sm:$0xf]
  %v45 = vld [vmem:[%s0 + $0x2c] sm:$0xf]
  %v46 = vld [vmem:[%s0 + $0x30] sm:$0xf]
  %v47 = vld [vmem:[%s0 + $0x34] sm:$0xf]
  %v48 = vld [vmem:[%s0 + $0x38] sm:$0xf]
  %v49 = vld [vmem:[%s0 + $0x3c] sm:$0xf]
  %v50 = vunpack.c.l.bf16 %v34
  %v51 = vunpack.c.l.bf16 %v35
  %v52 = vunpack.c.l.bf16 %v36
  %v53 = vunpack.c.l.bf16 %v37
  %v54 = vunpack.c.l.bf16 %v38
  %v55 = vunpack.c.l.bf16 %v39
  %v56 = vunpack.c.l.bf16 %v40
  %v57 = vunpack.c.l.bf16 %v41
  %v58 = vunpack.c.l.bf16 %v42
  %v59 = vunpack.c.l.bf16 %v43
  %v60 = vunpack.c.l.bf16 %v44
  %v61 = vunpack.c.l.bf16 %v45
  %v62 = vunpack.c.l.bf16 %v46
  %v63 = vunpack.c.l.bf16 %v47
  %v64 = vunpack.c.l.bf16 %v48
  %v65 = vunpack.c.l.bf16 %v49
  %v66 = vmax.f32 %v50, 0.0
  %v67 = vmax.f32 %v51, 0.0
  %v68 = vmax.f32 %v52, 0.0
  %v69 = vmax.f32 %v53, 0.0
  %v70 = vmax.f32 %v54, 0.0
  %v71 = vmax.f32 %v55, 0.0
  %v72 = vmax.f32 %v56, 0.0
  %v73 = vmax.f32 %v57, 0.0
  %v74 = vmax.f32 %v58, 0.0
  %v75 = vmax.f32 %v59, 0.0
  %v76 = vmax.f32 %v60, 0.0
  %v77 = vmax.f32 %v61, 0.0
  %v78 = vmax.f32 %v62, 0.0
  %v79 = vmax.f32 %v63, 0.0
  %v80 = vmax.f32 %v64, 0.0
  %v81 = vmax.f32 %v65, 0.0
  %v82 = vpack.c.bf16 %v67, %v66
  %v83 = vpack.c.bf16 %v69, %v68
  %v84 = vpack.c.bf16 %v71, %v70
  %v85 = vpack.c.bf16 %v73, %v72
  %v86 = vpack.c.bf16 %v75, %v74
  %v87 = vpack.c.bf16 %v77, %v76
  %v88 = vpack.c.bf16 %v79, %v78
  %v89 = vpack.c.bf16 %v81, %v80
  %v90 = vld [vmem:[#allocation2] sm:$0xff]
  %v91 = vld [vmem:[#allocation2 + $0x8] sm:$0xff]
  %v92 = vld [vmem:[#allocation2 + $0x10] sm:$0xff]
  %v93 = vld [vmem:[#allocation2 + $0x18] sm:$0xff]
  %v94 = vld [vmem:[#allocation2 + $0x20] sm:$0xff]
  %v95 = vld [vmem:[#allocation2 + $0x28] sm:$0xff]
  %v96 = vld [vmem:[#allocation2 + $0x30] sm:$0xff]
  %v97 = vld [vmem:[#allocation2 + $0x38] sm:$0xff]
  %v98 = vld [vmem:[#allocation2 + $0x40] sm:$0xff]
  %v99 = vld [vmem:[#allocation2 + $0x48] sm:$0xff]
  %v100 = vld [vmem:[#allocation2 + $0x50] sm:$0xff]
  %v101 = vld [vmem:[#allocation2 + $0x58] sm:$0xff]
  %v102 = vld [vmem:[#allocation2 + $0x60] sm:$0xff]
  %v103 = vld [vmem:[#allocation2 + $0x68] sm:$0xff]
  %v104 = vld [vmem:[#allocation2 + $0x70] sm:$0xff]
  %v105 = vld [vmem:[#allocation2 + $0x78] sm:$0xff]
  %v106 = vld [vmem:[%s1] sm:$0xf]
  %v107 = vld [vmem:[%s1 + $0x4] sm:$0xf]
  %v108 = vld [vmem:[%s1 + $0x8] sm:$0xf]
  %v109 = vld [vmem:[%s1 + $0xc] sm:$0xf]
  %v110 = vld [vmem:[%s1 + $0x10] sm:$0xf]
  %v111 = vld [vmem:[%s1 + $0x14] sm:$0xf]
  %v112 = vld [vmem:[%s1 + $0x18] sm:$0xf]
  %v113 = vld [vmem:[%s1 + $0x1c] sm:$0xf]
  %v114 = vld [vmem:[%s1 + $0x20] sm:$0xf]
  %v115 = vld [vmem:[%s1 + $0x24] sm:$0xf]
  %v116 = vld [vmem:[%s1 + $0x28] sm:$0xf]
  %v117 = vld [vmem:[%s1 + $0x2c] sm:$0xf]
  %v118 = vld [vmem:[%s1 + $0x30] sm:$0xf]
  %v119 = vld [vmem:[%s1 + $0x34] sm:$0xf]
  %v120 = vld [vmem:[%s1 + $0x38] sm:$0xf]
  %v121 = vld [vmem:[%s1 + $0x3c] sm:$0xf]
  %v138 = vunpack.c.l.b16 %v106
  %v139 = vunpack.c.l.b16 %v107
  %v140 = vunpack.c.l.b16 %v108
  %v141 = vunpack.c.l.b16 %v109
  %v142 = vunpack.c.l.b16 %v110
  %v143 = vunpack.c.l.b16 %v111
  %v144 = vunpack.c.l.b16 %v112
  %v145 = vunpack.c.l.b16 %v113
  %v146 = vunpack.c.l.b16 %v114
  %v147 = vunpack.c.l.b16 %v115
  %v148 = vunpack.c.l.b16 %v116
  %v149 = vunpack.c.l.b16 %v117
  %v150 = vunpack.c.l.b16 %v118
  %v151 = vunpack.c.l.b16 %v119
  %v152 = vunpack.c.l.b16 %v120
  %v153 = vunpack.c.l.b16 %v121
  %v154 = vpack.c.b16 %v139, %v138
  %v155 = vpack.c.b16 %v141, %v140
  %v156 = vpack.c.b16 %v143, %v142
  %v157 = vpack.c.b16 %v145, %v144
  %v158 = vpack.c.b16 %v147, %v146
  %v159 = vpack.c.b16 %v149, %v148
  %v160 = vpack.c.b16 %v151, %v150
  %v161 = vpack.c.b16 %v153, %v152
  %170 = vmatpush.bf16.msra.mxu0 %v161
  %171 = vmatpush.bf16.msra.mxu0 %v160
  %172 = vmatpush.bf16.msra.mxu0 %v159
  %173 = vmatpush.bf16.msra.mxu0 %v158
  %174 = vmatpush.bf16.msra.mxu0 %v157
  %175 = vmatpush.bf16.msra.mxu0 %v156
  %176 = vmatpush.bf16.msra.mxu0 %v155
  %177 = vmatpush.bf16.msra.mxu0 %v154
  %178 = vmatmul.bf16.gmra.mxu0 %v82
  %v179 = vpop.f32.mrf.mxu0
  %v180 = vadd.f32 0.0, %v179
  %v181 = vpop.f32.mrf.mxu0
  %v182 = vadd.f32 0.0, %v181
  %183 = vmatmul.bf16.gmra.mxu0 %v83
  %v184 = vpop.f32.mrf.mxu0
  %v185 = vadd.f32 0.0, %v184
  %v186 = vpop.f32.mrf.mxu0
  %v187 = vadd.f32 0.0, %v186
  %188 = vmatmul.bf16.gmra.mxu0 %v84
  %v189 = vpop.f32.mrf.mxu0
  %v190 = vadd.f32 0.0, %v189
  %v191 = vpop.f32.mrf.mxu0
  %v192 = vadd.f32 0.0, %v191
  %193 = vmatmul.bf16.gmra.mxu0 %v85
  %v194 = vpop.f32.mrf.mxu0
  %v195 = vadd.f32 0.0, %v194
  %v196 = vpop.f32.mrf.mxu0
  %v197 = vadd.f32 0.0, %v196
  %198 = vmatmul.bf16.gmra.mxu0 %v86
  %v199 = vpop.f32.mrf.mxu0
  %v200 = vadd.f32 0.0, %v199
  %v201 = vpop.f32.mrf.mxu0
  %v202 = vadd.f32 0.0, %v201
  %203 = vmatmul.bf16.gmra.mxu0 %v87
  %v204 = vpop.f32.mrf.mxu0
  %v205 = vadd.f32 0.0, %v204
  %v206 = vpop.f32.mrf.mxu0
  %v207 = vadd.f32 0.0, %v206
  %208 = vmatmul.bf16.gmra.mxu0 %v88
  %v209 = vpop.f32.mrf.mxu0
  %v210 = vadd.f32 0.0, %v209
  %v211 = vpop.f32.mrf.mxu0
  %v212 = vadd.f32 0.0, %v211
  %213 = vmatmul.bf16.gmra.mxu0 %v89
  %v214 = vpop.f32.mrf.mxu0
  %v215 = vadd.f32 0.0, %v214
  %v216 = vpop.f32.mrf.mxu0
  %v217 = vadd.f32 0.0, %v216
  %218 = vdwg.mxu0
  %v219 = vadd.f32 %v90, %v180
  %v220 = vadd.f32 %v91, %v182
  %v221 = vadd.f32 %v92, %v185
  %v222 = vadd.f32 %v93, %v187
  %v223 = vadd.f32 %v94, %v190
  %v224 = vadd.f32 %v95, %v192
  %v225 = vadd.f32 %v96, %v195
  %v226 = vadd.f32 %v97, %v197
  %v227 = vadd.f32 %v98, %v200
  %v228 = vadd.f32 %v99, %v202
  %v229 = vadd.f32 %v100, %v205
  %v230 = vadd.f32 %v101, %v207
  %v231 = vadd.f32 %v102, %v210
  %v232 = vadd.f32 %v103, %v212
  %v233 = vadd.f32 %v104, %v215
  %v234 = vadd.f32 %v105, %v217
  %235 = vst [vmem:[#allocation2] sm:$0xff] %v219
  %236 = vst [vmem:[#allocation2 + $0x8] sm:$0xff] %v220
  %237 = vst [vmem:[#allocation2 + $0x10] sm:$0xff] %v221
  %238 = vst [vmem:[#allocation2 + $0x18] sm:$0xff] %v222
  %239 = vst [vmem:[#allocation2 + $0x20] sm:$0xff] %v223
  %240 = vst [vmem:[#allocation2 + $0x28] sm:$0xff] %v224
  %241 = vst [vmem:[#allocation2 + $0x30] sm:$0xff] %v225
  %242 = vst [vmem:[#allocation2 + $0x38] sm:$0xff] %v226
  %243 = vst [vmem:[#allocation2 + $0x40] sm:$0xff] %v227
  %244 = vst [vmem:[#allocation2 + $0x48] sm:$0xff] %v228
  %245 = vst [vmem:[#allocation2 + $0x50] sm:$0xff] %v229
  %246 = vst [vmem:[#allocation2 + $0x58] sm:$0xff] %v230
  %247 = vst [vmem:[#allocation2 + $0x60] sm:$0xff] %v231
  %248 = vst [vmem:[#allocation2 + $0x68] sm:$0xff] %v232
  %249 = vst [vmem:[#allocation2 + $0x70] sm:$0xff] %v233
  %250 = vst [vmem:[#allocation2 + $0x78] sm:$0xff] %v234
  // Predicated region
  $region18: #{dalle_encoder_forward.32} parent=0 // pred_check
    %p251 = pneg %p14
  $region19: #{dalle_encoder_forward.32} parent=0 // pred_check_branch
    %253 = sbr.rel (%p251) target = $region21
  $region20: #{dalle_encoder_forward.32} parent=0 // pred_region
    %v254 = vld [vmem:[#allocation2] sm:$0xff]
    %v255 = vld [vmem:[#allocation2 + $0x8] sm:$0xff]
    %v256 = vld [vmem:[#allocation2 + $0x10] sm:$0xff]
    %v257 = vld [vmem:[#allocation2 + $0x18] sm:$0xff]
    %v258 = vld [vmem:[#allocation2 + $0x20] sm:$0xff]
    %v259 = vld [vmem:[#allocation2 + $0x28] sm:$0xff]
    %v260 = vld [vmem:[#allocation2 + $0x30] sm:$0xff]
    %v261 = vld [vmem:[#allocation2 + $0x38] sm:$0xff]
    %v262 = vld [vmem:[#allocation2 + $0x40] sm:$0xff]
    %v263 = vld [vmem:[#allocation2 + $0x48] sm:$0xff]
    %v264 = vld [vmem:[#allocation2 + $0x50] sm:$0xff]
    %v265 = vld [vmem:[#allocation2 + $0x58] sm:$0xff]
    %v266 = vld [vmem:[#allocation2 + $0x60] sm:$0xff]
    %v267 = vld [vmem:[#allocation2 + $0x68] sm:$0xff]
    %v268 = vld [vmem:[#allocation2 + $0x70] sm:$0xff]
    %v269 = vld [vmem:[#allocation2 + $0x78] sm:$0xff]
    %v270 = vld [vmem:[%s2] sm:$0x1]
    %v272 = vperm.slane %v270, 0
    %v274 = vadd.f32 %v254, %v272
    %v275 = vadd.f32 %v255, %v272
    %v276 = vadd.f32 %v256, %v272
    %v277 = vadd.f32 %v257, %v272
    %v278 = vadd.f32 %v258, %v272
    %v279 = vadd.f32 %v259, %v272
    %v280 = vadd.f32 %v260, %v272
    %v281 = vadd.f32 %v261, %v272
    %v282 = vadd.f32 %v262, %v272
    %v283 = vadd.f32 %v263, %v272
    %v284 = vadd.f32 %v264, %v272
    %v285 = vadd.f32 %v265, %v272
    %v286 = vadd.f32 %v266, %v272
    %v287 = vadd.f32 %v267, %v272
    %v288 = vadd.f32 %v268, %v272
    %v289 = vadd.f32 %v269, %v272
    %v290 = vpack.c.bf16 %v274, %v274
    %v291 = vpack.c.bf16 %v275, %v275
    %v292 = vpack.c.bf16 %v276, %v276
    %v293 = vpack.c.bf16 %v277, %v277
    %v294 = vpack.c.bf16 %v278, %v278
    %v295 = vpack.c.bf16 %v279, %v279
    %v296 = vpack.c.bf16 %v280, %v280
    %v297 = vpack.c.bf16 %v281, %v281
    %v298 = vpack.c.bf16 %v282, %v282
    %v299 = vpack.c.bf16 %v283, %v283
    %v300 = vpack.c.bf16 %v284, %v284
    %v301 = vpack.c.bf16 %v285, %v285
    %v302 = vpack.c.bf16 %v286, %v286
    %v303 = vpack.c.bf16 %v287, %v287
    %v304 = vpack.c.bf16 %v288, %v288
    %v305 = vpack.c.bf16 %v289, %v289
    %306 = vst [vmem:[%s3] sm:$0xf] %v290
    %307 = vst [vmem:[%s3 + $0x4] sm:$0xf] %v291
    %308 = vst [vmem:[%s3 + $0x8] sm:$0xf] %v292
    %309 = vst [vmem:[%s3 + $0xc] sm:$0xf] %v293
    %310 = vst [vmem:[%s3 + $0x10] sm:$0xf] %v294
    %311 = vst [vmem:[%s3 + $0x14] sm:$0xf] %v295
    %312 = vst [vmem:[%s3 + $0x18] sm:$0xf] %v296
    %313 = vst [vmem:[%s3 + $0x1c] sm:$0xf] %v297
    %314 = vst [vmem:[%s3 + $0x20] sm:$0xf] %v298
    %315 = vst [vmem:[%s3 + $0x24] sm:$0xf] %v299
    %316 = vst [vmem:[%s3 + $0x28] sm:$0xf] %v300
    %317 = vst [vmem:[%s3 + $0x2c] sm:$0xf] %v301
    %318 = vst [vmem:[%s3 + $0x30] sm:$0xf] %v302
    %319 = vst [vmem:[%s3 + $0x34] sm:$0xf] %v303
    %320 = vst [vmem:[%s3 + $0x38] sm:$0xf] %v304
    %321 = vst [vmem:[%s3 + $0x3c] sm:$0xf] %v305
  $region21: #{dalle_encoder_forward.32} parent=0 // pred_fallthru
    _
  // Predicated region
  $region22: #{dalle_encoder_forward.32} parent=0 // pred_check
    _
  $region23: #{dalle_encoder_forward.32} parent=0 // pred_check_branch
    %323 = sbr.rel (0) target = $region25
  $region24: #{dalle_encoder_forward.32} parent=0 // pred_region
    _
  $region25: #{dalle_encoder_forward.32} parent=0 // pred_fallthru
    _
  // Predicated region
  $region26: #{dalle_encoder_forward.32} parent=0 // pred_check
    _
  $region27: #{dalle_encoder_forward.32} parent=0 // pred_check_branch
    %325 = sbr.rel (0) target = $region29
  $region28: #{dalle_encoder_forward.32} parent=0 // pred_region
    _
  $region29: #{dalle_encoder_forward.32} parent=0 // pred_fallthru
    _

// kernel: dalle_encoder_forward.38
$region0: #{dalle_encoder_forward.38}
  #allocation0 [shape = 'u32[]', space=smem, size = 0x4, offset = 0x4, fixed_abs, tag = 'smem constant byte address 0x4 - core index']
  #allocation1 [shape = 'u32[72,128]{1,0:T(1,128)}', space=vmem, size = 0x9000, scoped, tag = 'internal scratch']
  #allocation2 [shape = 'f32[32,128]{1,0:T(8,128)}', space=vmem, size = 0x4000, scoped, tag = 'scratch operand']
  %s0 = inlined_call_operand.vmem [shape: bf16[32,256], index: 0, kind: input, shape index: {}]
  %s1 = inlined_call_operand.vmem [shape: bf16[256,128], index: 1, kind: input, shape index: {}]
  %s2 = inlined_call_operand.vmem [shape: f32[1,128], index: 2, kind: input, shape index: {}]
  %s3 = inlined_call_operand.vmem [shape: bf16[32,128], index: 3, kind: output, shape index: {}]
  %s4 = sld [smem:[#allocation0]]
  $region30: #{dalle_encoder_forward.38} parent=0
    _
  %s6 = ssub.s32 1, %s4
  %s7 = scalar_select 0, %s6, %s4
  // Predicated region
  $region2: #{dalle_encoder_forward.38} parent=0 // pred_check
    _
  $region3: #{dalle_encoder_forward.38} parent=0 // pred_check_branch
    %9 = sbr.rel (0) target = $region5
  $region4: #{dalle_encoder_forward.38} parent=0 // pred_region
    _
  $region5: #{dalle_encoder_forward.38} parent=0 // pred_fallthru
    _
  // Predicated region
  $region6: #{dalle_encoder_forward.38} parent=0 // pred_check
    _
  $region7: #{dalle_encoder_forward.38} parent=0 // pred_check_branch
    %11 = sbr.rel (0) target = $region9
  $region8: #{dalle_encoder_forward.38} parent=0 // pred_region
    _
  $region9: #{dalle_encoder_forward.38} parent=0 // pred_fallthru
    _
  // Predicated region
  $region10: #{dalle_encoder_forward.38} parent=0 // pred_check
    _
  $region11: #{dalle_encoder_forward.38} parent=0 // pred_check_branch
    %13 = sbr.rel (0) target = $region13
  $region12: #{dalle_encoder_forward.38} parent=0 // pred_region
    _
  $region13: #{dalle_encoder_forward.38} parent=0 // pred_fallthru
    _
  %p14 = scmp.eq.s32.totalorder 0, 0
  // Predicated region
  $region14: #{dalle_encoder_forward.38} parent=0 // pred_check
    %p15 = pneg %p14
  $region15: #{dalle_encoder_forward.38} parent=0 // pred_check_branch
    %17 = sbr.rel (%p15) target = $region17
  $region16: #{dalle_encoder_forward.38} parent=0 // pred_region
    %18 = vst [vmem:[#allocation2] sm:$0xff] 0.0
    %19 = vst [vmem:[#allocation2 + $0x8] sm:$0xff] 0.0
    %20 = vst [vmem:[#allocation2 + $0x10] sm:$0xff] 0.0
    %21 = vst [vmem:[#allocation2 + $0x18] sm:$0xff] 0.0
  $region17: #{dalle_encoder_forward.38} parent=0 // pred_fallthru
    _
  %v22 = vld [vmem:[%s0] sm:$0xff]
  %v23 = vld [vmem:[%s0 + $0x8] sm:$0xff]
  %v24 = vld [vmem:[%s0 + $0x10] sm:$0xff]
  %v25 = vld [vmem:[%s0 + $0x18] sm:$0xff]
  %v26 = vunpack.c.l.bf16 %v22
  %v27 = vunpack.c.h.bf16 %v22
  %v28 = vunpack.c.l.bf16 %v23
  %v29 = vunpack.c.h.bf16 %v23
  %v30 = vunpack.c.l.bf16 %v24
  %v31 = vunpack.c.h.bf16 %v24
  %v32 = vunpack.c.l.bf16 %v25
  %v33 = vunpack.c.h.bf16 %v25
  %v34 = vmax.f32 %v26, 0.0
  %v35 = vmax.f32 %v27, 0.0
  %v36 = vmax.f32 %v28, 0.0
  %v37 = vmax.f32 %v29, 0.0
  %v38 = vmax.f32 %v30, 0.0
  %v39 = vmax.f32 %v31, 0.0
  %v40 = vmax.f32 %v32, 0.0
  %v41 = vmax.f32 %v33, 0.0
  %v42 = vpack.c.bf16 %v36, %v34
  %v43 = vpack.c.bf16 %v37, %v35
  %v44 = vpack.c.bf16 %v40, %v38
  %v45 = vpack.c.bf16 %v41, %v39
  %v46 = vld [vmem:[#allocation2] sm:$0xff]
  %v47 = vld [vmem:[#allocation2 + $0x8] sm:$0xff]
  %v48 = vld [vmem:[#allocation2 + $0x10] sm:$0xff]
  %v49 = vld [vmem:[#allocation2 + $0x18] sm:$0xff]
  %v50 = vld [vmem:[%s1] sm:$0xf]
  %v51 = vld [vmem:[%s1 + $0x4] sm:$0xf]
  %v52 = vld [vmem:[%s1 + $0x8] sm:$0xf]
  %v53 = vld [vmem:[%s1 + $0xc] sm:$0xf]
  %v54 = vld [vmem:[%s1 + $0x10] sm:$0xf]
  %v55 = vld [vmem:[%s1 + $0x14] sm:$0xf]
  %v56 = vld [vmem:[%s1 + $0x18] sm:$0xf]
  %v57 = vld [vmem:[%s1 + $0x1c] sm:$0xf]
  %v58 = vld [vmem:[%s1 + $0x20] sm:$0xf]
  %v59 = vld [vmem:[%s1 + $0x24] sm:$0xf]
  %v60 = vld [vmem:[%s1 + $0x28] sm:$0xf]
  %v61 = vld [vmem:[%s1 + $0x2c] sm:$0xf]
  %v62 = vld [vmem:[%s1 + $0x30] sm:$0xf]
  %v63 = vld [vmem:[%s1 + $0x34] sm:$0xf]
  %v64 = vld [vmem:[%s1 + $0x38] sm:$0xf]
  %v65 = vld [vmem:[%s1 + $0x3c] sm:$0xf]
  %v66 = vld [vmem:[%s1 + $0x40] sm:$0xf]
  %v67 = vld [vmem:[%s1 + $0x44] sm:$0xf]
  %v68 = vld [vmem:[%s1 + $0x48] sm:$0xf]
  %v69 = vld [vmem:[%s1 + $0x4c] sm:$0xf]
  %v70 = vld [vmem:[%s1 + $0x50] sm:$0xf]
  %v71 = vld [vmem:[%s1 + $0x54] sm:$0xf]
  %v72 = vld [vmem:[%s1 + $0x58] sm:$0xf]
  %v73 = vld [vmem:[%s1 + $0x5c] sm:$0xf]
  %v74 = vld [vmem:[%s1 + $0x60] sm:$0xf]
  %v75 = vld [vmem:[%s1 + $0x64] sm:$0xf]
  %v76 = vld [vmem:[%s1 + $0x68] sm:$0xf]
  %v77 = vld [vmem:[%s1 + $0x6c] sm:$0xf]
  %v78 = vld [vmem:[%s1 + $0x70] sm:$0xf]
  %v79 = vld [vmem:[%s1 + $0x74] sm:$0xf]
  %v80 = vld [vmem:[%s1 + $0x78] sm:$0xf]
  %v81 = vld [vmem:[%s1 + $0x7c] sm:$0xf]
  %v114 = vunpack.c.l.b16 %v50
  %v115 = vunpack.c.l.b16 %v51
  %v116 = vunpack.c.l.b16 %v52
  %v117 = vunpack.c.l.b16 %v53
  %v118 = vunpack.c.l.b16 %v54
  %v119 = vunpack.c.l.b16 %v55
  %v120 = vunpack.c.l.b16 %v56
  %v121 = vunpack.c.l.b16 %v57
  %v122 = vunpack.c.l.b16 %v58
  %v123 = vunpack.c.l.b16 %v59
  %v124 = vunpack.c.l.b16 %v60
  %v125 = vunpack.c.l.b16 %v61
  %v126 = vunpack.c.l.b16 %v62
  %v127 = vunpack.c.l.b16 %v63
  %v128 = vunpack.c.l.b16 %v64
  %v129 = vunpack.c.l.b16 %v65
  %v130 = vunpack.c.l.b16 %v66
  %v131 = vunpack.c.l.b16 %v67
  %v132 = vunpack.c.l.b16 %v68
  %v133 = vunpack.c.l.b16 %v69
  %v134 = vunpack.c.l.b16 %v70
  %v135 = vunpack.c.l.b16 %v71
  %v136 = vunpack.c.l.b16 %v72
  %v137 = vunpack.c.l.b16 %v73
  %v138 = vunpack.c.l.b16 %v74
  %v139 = vunpack.c.l.b16 %v75
  %v140 = vunpack.c.l.b16 %v76
  %v141 = vunpack.c.l.b16 %v77
  %v142 = vunpack.c.l.b16 %v78
  %v143 = vunpack.c.l.b16 %v79
  %v144 = vunpack.c.l.b16 %v80
  %v145 = vunpack.c.l.b16 %v81
  %v146 = vpack.c.b16 %v115, %v114
  %v147 = vpack.c.b16 %v117, %v116
  %v148 = vpack.c.b16 %v119, %v118
  %v149 = vpack.c.b16 %v121, %v120
  %v150 = vpack.c.b16 %v123, %v122
  %v151 = vpack.c.b16 %v125, %v124
  %v152 = vpack.c.b16 %v127, %v126
  %v153 = vpack.c.b16 %v129, %v128
  %v154 = vpack.c.b16 %v131, %v130
  %v155 = vpack.c.b16 %v133, %v132
  %v156 = vpack.c.b16 %v135, %v134
  %v157 = vpack.c.b16 %v137, %v136
  %v158 = vpack.c.b16 %v139, %v138
  %v159 = vpack.c.b16 %v141, %v140
  %v160 = vpack.c.b16 %v143, %v142
  %v161 = vpack.c.b16 %v145, %v144
  %178 = vmatpush.bf16.msra.mxu0 %v153
  %179 = vmatpush.bf16.msra.mxu0 %v152
  %180 = vmatpush.bf16.msra.mxu0 %v151
  %181 = vmatpush.bf16.msra.mxu0 %v150
  %182 = vmatpush.bf16.msra.mxu0 %v149
  %183 = vmatpush.bf16.msra.mxu0 %v148
  %184 = vmatpush.bf16.msra.mxu0 %v147
  %185 = vmatpush.bf16.msra.mxu0 %v146
  %186 = vmatmul.bf16.gmra.mxu0 %v42
  %v187 = vpop.f32.mrf.mxu0
  %v188 = vadd.f32 0.0, %v187
  %v189 = vpop.f32.mrf.mxu0
  %v190 = vadd.f32 0.0, %v189
  %191 = vmatmul.bf16.gmra.mxu0 %v44
  %v192 = vpop.f32.mrf.mxu0
  %v193 = vadd.f32 0.0, %v192
  %v194 = vpop.f32.mrf.mxu0
  %v195 = vadd.f32 0.0, %v194
  %196 = vdwg.mxu0
  %197 = vmatpush.bf16.msra.mxu0 %v161
  %198 = vmatpush.bf16.msra.mxu0 %v160
  %199 = vmatpush.bf16.msra.mxu0 %v159
  %200 = vmatpush.bf16.msra.mxu0 %v158
  %201 = vmatpush.bf16.msra.mxu0 %v157
  %202 = vmatpush.bf16.msra.mxu0 %v156
  %203 = vmatpush.bf16.msra.mxu0 %v155
  %204 = vmatpush.bf16.msra.mxu0 %v154
  %205 = vmatmul.bf16.gmra.mxu0 %v43
  %v206 = vpop.f32.mrf.mxu0
  %v207 = vadd.f32 %v188, %v206
  %v208 = vpop.f32.mrf.mxu0
  %v209 = vadd.f32 %v190, %v208
  %210 = vmatmul.bf16.gmra.mxu0 %v45
  %v211 = vpop.f32.mrf.mxu0
  %v212 = vadd.f32 %v193, %v211
  %v213 = vpop.f32.mrf.mxu0
  %v214 = vadd.f32 %v195, %v213
  %215 = vdwg.mxu0
  %v216 = vadd.f32 %v46, %v207
  %v217 = vadd.f32 %v47, %v209
  %v218 = vadd.f32 %v48, %v212
  %v219 = vadd.f32 %v49, %v214
  %220 = vst [vmem:[#allocation2] sm:$0xff] %v216
  %221 = vst [vmem:[#allocation2 + $0x8] sm:$0xff] %v217
  %222 = vst [vmem:[#allocation2 + $0x10] sm:$0xff] %v218
  %223 = vst [vmem:[#allocation2 + $0x18] sm:$0xff] %v219
  // Predicated region
  $region18: #{dalle_encoder_forward.38} parent=0 // pred_check
    %p224 = pneg %p14
  $region19: #{dalle_encoder_forward.38} parent=0 // pred_check_branch
    %226 = sbr.rel (%p224) target = $region21
  $region20: #{dalle_encoder_forward.38} parent=0 // pred_region
    %v227 = vld [vmem:[#allocation2] sm:$0xff]
    %v228 = vld [vmem:[#allocation2 + $0x8] sm:$0xff]
    %v229 = vld [vmem:[#allocation2 + $0x10] sm:$0xff]
    %v230 = vld [vmem:[#allocation2 + $0x18] sm:$0xff]
    %v231 = vld [vmem:[%s2] sm:$0x1]
    %v233 = vperm.slane %v231, 0
    %v235 = vadd.f32 %v227, %v233
    %v236 = vadd.f32 %v228, %v233
    %v237 = vadd.f32 %v229, %v233
    %v238 = vadd.f32 %v230, %v233
    %v239 = vpack.c.bf16 %v235, %v235
    %v240 = vpack.c.bf16 %v236, %v236
    %v241 = vpack.c.bf16 %v237, %v237
    %v242 = vpack.c.bf16 %v238, %v238
    %243 = vst [vmem:[%s3] sm:$0xf] %v239
    %244 = vst [vmem:[%s3 + $0x4] sm:$0xf] %v240
    %245 = vst [vmem:[%s3 + $0x8] sm:$0xf] %v241
    %246 = vst [vmem:[%s3 + $0xc] sm:$0xf] %v242
  $region21: #{dalle_encoder_forward.38} parent=0 // pred_fallthru
    _
  // Predicated region
  $region22: #{dalle_encoder_forward.38} parent=0 // pred_check
    _
  $region23: #{dalle_encoder_forward.38} parent=0 // pred_check_branch
    %248 = sbr.rel (0) target = $region25
  $region24: #{dalle_encoder_forward.38} parent=0 // pred_region
    _
  $region25: #{dalle_encoder_forward.38} parent=0 // pred_fallthru
    _
  // Predicated region
  $region26: #{dalle_encoder_forward.38} parent=0 // pred_check
    _
  $region27: #{dalle_encoder_forward.38} parent=0 // pred_check_branch
    %250 = sbr.rel (0) target = $region29
  $region28: #{dalle_encoder_forward.38} parent=0 // pred_region
    _
  $region29: #{dalle_encoder_forward.38} parent=0 // pred_fallthru
    _

// kernel: dalle_encoder_forward.37
$region0: #{dalle_encoder_forward.37}
  #allocation0 [shape = 'u32[]', space=smem, size = 0x4, offset = 0x4, fixed_abs, tag = 'smem constant byte address 0x4 - core index']
  #allocation1 [shape = 'u32[72,128]{1,0:T(1,128)}', space=vmem, size = 0x9000, scoped, tag = 'internal scratch']
  #allocation2 [shape = 'f32[32,128]{1,0:T(8,128)}', space=vmem, size = 0x4000, scoped, tag = 'scratch operand']
  %s0 = inlined_call_operand.vmem [shape: bf16[32,384], index: 0, kind: input, shape index: {}]
  %s1 = inlined_call_operand.vmem [shape: bf16[384,128], index: 1, kind: input, shape index: {}]
  %s2 = inlined_call_operand.vmem [shape: f32[1,128], index: 2, kind: input, shape index: {}]
  %s3 = inlined_call_operand.vmem [shape: bf16[32,128], index: 3, kind: output, shape index: {}]
  %s4 = sld [smem:[#allocation0]]
  $region30: #{dalle_encoder_forward.37} parent=0
    _
  %s6 = ssub.s32 1, %s4
  %s7 = scalar_select 0, %s6, %s4
  // Predicated region
  $region2: #{dalle_encoder_forward.37} parent=0 // pred_check
    _
  $region3: #{dalle_encoder_forward.37} parent=0 // pred_check_branch
    %9 = sbr.rel (0) target = $region5
  $region4: #{dalle_encoder_forward.37} parent=0 // pred_region
    _
  $region5: #{dalle_encoder_forward.37} parent=0 // pred_fallthru
    _
  // Predicated region
  $region6: #{dalle_encoder_forward.37} parent=0 // pred_check
    _
  $region7: #{dalle_encoder_forward.37} parent=0 // pred_check_branch
    %11 = sbr.rel (0) target = $region9
  $region8: #{dalle_encoder_forward.37} parent=0 // pred_region
    _
  $region9: #{dalle_encoder_forward.37} parent=0 // pred_fallthru
    _
  // Predicated region
  $region10: #{dalle_encoder_forward.37} parent=0 // pred_check
    _
  $region11: #{dalle_encoder_forward.37} parent=0 // pred_check_branch
    %13 = sbr.rel (0) target = $region13
  $region12: #{dalle_encoder_forward.37} parent=0 // pred_region
    _
  $region13: #{dalle_encoder_forward.37} parent=0 // pred_fallthru
    _
  %p14 = scmp.eq.s32.totalorder 0, 0
  // Predicated region
  $region14: #{dalle_encoder_forward.37} parent=0 // pred_check
    %p15 = pneg %p14
  $region15: #{dalle_encoder_forward.37} parent=0 // pred_check_branch
    %17 = sbr.rel (%p15) target = $region17
  $region16: #{dalle_encoder_forward.37} parent=0 // pred_region
    %18 = vst [vmem:[#allocation2] sm:$0xff] 0.0
    %19 = vst [vmem:[#allocation2 + $0x8] sm:$0xff] 0.0
    %20 = vst [vmem:[#allocation2 + $0x10] sm:$0xff] 0.0
    %21 = vst [vmem:[#allocation2 + $0x18] sm:$0xff] 0.0
  $region17: #{dalle_encoder_forward.37} parent=0 // pred_fallthru
    _
  %v22 = vld [vmem:[%s0] sm:$0xff]
  %v23 = vld [vmem:[%s0 + $0x8] sm:$0xf]
  %v24 = vld [vmem:[%s0 + $0xc] sm:$0xff]
  %v25 = vld [vmem:[%s0 + $0x14] sm:$0xf]
  %v26 = vld [vmem:[%s0 + $0x18] sm:$0xff]
  %v27 = vld [vmem:[%s0 + $0x20] sm:$0xf]
  %v28 = vld [vmem:[%s0 + $0x24] sm:$0xff]
  %v29 = vld [vmem:[%s0 + $0x2c] sm:$0xf]
  %v30 = vunpack.c.l.bf16 %v22
  %v31 = vunpack.c.h.bf16 %v22
  %v32 = vunpack.c.l.bf16 %v23
  %v33 = vunpack.c.l.bf16 %v24
  %v34 = vunpack.c.h.bf16 %v24
  %v35 = vunpack.c.l.bf16 %v25
  %v36 = vunpack.c.l.bf16 %v26
  %v37 = vunpack.c.h.bf16 %v26
  %v38 = vunpack.c.l.bf16 %v27
  %v39 = vunpack.c.l.bf16 %v28
  %v40 = vunpack.c.h.bf16 %v28
  %v41 = vunpack.c.l.bf16 %v29
  %v42 = vmax.f32 %v30, 0.0
  %v43 = vmax.f32 %v31, 0.0
  %v44 = vmax.f32 %v32, 0.0
  %v45 = vmax.f32 %v33, 0.0
  %v46 = vmax.f32 %v34, 0.0
  %v47 = vmax.f32 %v35, 0.0
  %v48 = vmax.f32 %v36, 0.0
  %v49 = vmax.f32 %v37, 0.0
  %v50 = vmax.f32 %v38, 0.0
  %v51 = vmax.f32 %v39, 0.0
  %v52 = vmax.f32 %v40, 0.0
  %v53 = vmax.f32 %v41, 0.0
  %v54 = vpack.c.bf16 %v45, %v42
  %v55 = vpack.c.bf16 %v46, %v43
  %v56 = vpack.c.bf16 %v47, %v44
  %v57 = vpack.c.bf16 %v51, %v48
  %v58 = vpack.c.bf16 %v52, %v49
  %v59 = vpack.c.bf16 %v53, %v50
  %v60 = vld [vmem:[#allocation2] sm:$0xff]
  %v61 = vld [vmem:[#allocation2 + $0x8] sm:$0xff]
  %v62 = vld [vmem:[#allocation2 + $0x10] sm:$0xff]
  %v63 = vld [vmem:[#allocation2 + $0x18] sm:$0xff]
  %v64 = vld [vmem:[%s1] sm:$0xf]
  %v65 = vld [vmem:[%s1 + $0x4] sm:$0xf]
  %v66 = vld [vmem:[%s1 + $0x8] sm:$0xf]
  %v67 = vld [vmem:[%s1 + $0xc] sm:$0xf]
  %v68 = vld [vmem:[%s1 + $0x10] sm:$0xf]
  %v69 = vld [vmem:[%s1 + $0x14] sm:$0xf]
  %v70 = vld [vmem:[%s1 + $0x18] sm:$0xf]
  %v71 = vld [vmem:[%s1 + $0x1c] sm:$0xf]
  %v72 = vld [vmem:[%s1 + $0x20] sm:$0xf]
  %v73 = vld [vmem:[%s1 + $0x24] sm:$0xf]
  %v74 = vld [vmem:[%s1 + $0x28] sm:$0xf]
  %v75 = vld [vmem:[%s1 + $0x2c] sm:$0xf]
  %v76 = vld [vmem:[%s1 + $0x30] sm:$0xf]
  %v77 = vld [vmem:[%s1 + $0x34] sm:$0xf]
  %v78 = vld [vmem:[%s1 + $0x38] sm:$0xf]
  %v79 = vld [vmem:[%s1 + $0x3c] sm:$0xf]
  %v80 = vld [vmem:[%s1 + $0x40] sm:$0xf]
  %v81 = vld [vmem:[%s1 + $0x44] sm:$0xf]
  %v82 = vld [vmem:[%s1 + $0x48] sm:$0xf]
  %v83 = vld [vmem:[%s1 + $0x4c] sm:$0xf]
  %v84 = vld [vmem:[%s1 + $0x50] sm:$0xf]
  %v85 = vld [vmem:[%s1 + $0x54] sm:$0xf]
  %v86 = vld [vmem:[%s1 + $0x58] sm:$0xf]
  %v87 = vld [vmem:[%s1 + $0x5c] sm:$0xf]
  %v88 = vld [vmem:[%s1 + $0x60] sm:$0xf]
  %v89 = vld [vmem:[%s1 + $0x64] sm:$0xf]
  %v90 = vld [vmem:[%s1 + $0x68] sm:$0xf]
  %v91 = vld [vmem:[%s1 + $0x6c] sm:$0xf]
  %v92 = vld [vmem:[%s1 + $0x70] sm:$0xf]
  %v93 = vld [vmem:[%s1 + $0x74] sm:$0xf]
  %v94 = vld [vmem:[%s1 + $0x78] sm:$0xf]
  %v95 = vld [vmem:[%s1 + $0x7c] sm:$0xf]
  %v96 = vld [vmem:[%s1 + $0x80] sm:$0xf]
  %v97 = vld [vmem:[%s1 + $0x84] sm:$0xf]
  %v98 = vld [vmem:[%s1 + $0x88] sm:$0xf]
  %v99 = vld [vmem:[%s1 + $0x8c] sm:$0xf]
  %v100 = vld [vmem:[%s1 + $0x90] sm:$0xf]
  %v101 = vld [vmem:[%s1 + $0x94] sm:$0xf]
  %v102 = vld [vmem:[%s1 + $0x98] sm:$0xf]
  %v103 = vld [vmem:[%s1 + $0x9c] sm:$0xf]
  %v104 = vld [vmem:[%s1 + $0xa0] sm:$0xf]
  %v105 = vld [vmem:[%s1 + $0xa4] sm:$0xf]
  %v106 = vld [vmem:[%s1 + $0xa8] sm:$0xf]
  %v107 = vld [vmem:[%s1 + $0xac] sm:$0xf]
  %v108 = vld [vmem:[%s1 + $0xb0] sm:$0xf]
  %v109 = vld [vmem:[%s1 + $0xb4] sm:$0xf]
  %v110 = vld [vmem:[%s1 + $0xb8] sm:$0xf]
  %v111 = vld [vmem:[%s1 + $0xbc] sm:$0xf]
  %v160 = vunpack.c.l.b16 %v64
  %v161 = vunpack.c.l.b16 %v65
  %v162 = vunpack.c.l.b16 %v66
  %v163 = vunpack.c.l.b16 %v67
  %v164 = vunpack.c.l.b16 %v68
  %v165 = vunpack.c.l.b16 %v69
  %v166 = vunpack.c.l.b16 %v70
  %v167 = vunpack.c.l.b16 %v71
  %v168 = vunpack.c.l.b16 %v72
  %v169 = vunpack.c.l.b16 %v73
  %v170 = vunpack.c.l.b16 %v74
  %v171 = vunpack.c.l.b16 %v75
  %v172 = vunpack.c.l.b16 %v76
  %v173 = vunpack.c.l.b16 %v77
  %v174 = vunpack.c.l.b16 %v78
  %v175 = vunpack.c.l.b16 %v79
  %v176 = vunpack.c.l.b16 %v80
  %v177 = vunpack.c.l.b16 %v81
  %v178 = vunpack.c.l.b16 %v82
  %v179 = vunpack.c.l.b16 %v83
  %v180 = vunpack.c.l.b16 %v84
  %v181 = vunpack.c.l.b16 %v85
  %v182 = vunpack.c.l.b16 %v86
  %v183 = vunpack.c.l.b16 %v87
  %v184 = vunpack.c.l.b16 %v88
  %v185 = vunpack.c.l.b16 %v89
  %v186 = vunpack.c.l.b16 %v90
  %v187 = vunpack.c.l.b16 %v91
  %v188 = vunpack.c.l.b16 %v92
  %v189 = vunpack.c.l.b16 %v93
  %v190 = vunpack.c.l.b16 %v94
  %v191 = vunpack.c.l.b16 %v95
  %v192 = vunpack.c.l.b16 %v96
  %v193 = vunpack.c.l.b16 %v97
  %v194 = vunpack.c.l.b16 %v98
  %v195 = vunpack.c.l.b16 %v99
  %v196 = vunpack.c.l.b16 %v100
  %v197 = vunpack.c.l.b16 %v101
  %v198 = vunpack.c.l.b16 %v102
  %v199 = vunpack.c.l.b16 %v103
  %v200 = vunpack.c.l.b16 %v104
  %v201 = vunpack.c.l.b16 %v105
  %v202 = vunpack.c.l.b16 %v106
  %v203 = vunpack.c.l.b16 %v107
  %v204 = vunpack.c.l.b16 %v108
  %v205 = vunpack.c.l.b16 %v109
  %v206 = vunpack.c.l.b16 %v110
  %v207 = vunpack.c.l.b16 %v111
  %v208 = vpack.c.b16 %v161, %v160
  %v209 = vpack.c.b16 %v163, %v162
  %v210 = vpack.c.b16 %v165, %v164
  %v211 = vpack.c.b16 %v167, %v166
  %v212 = vpack.c.b16 %v169, %v168
  %v213 = vpack.c.b16 %v171, %v170
  %v214 = vpack.c.b16 %v173, %v172
  %v215 = vpack.c.b16 %v175, %v174
  %v216 = vpack.c.b16 %v177, %v176
  %v217 = vpack.c.b16 %v179, %v178
  %v218 = vpack.c.b16 %v181, %v180
  %v219 = vpack.c.b16 %v183, %v182
  %v220 = vpack.c.b16 %v185, %v184
  %v221 = vpack.c.b16 %v187, %v186
  %v222 = vpack.c.b16 %v189, %v188
  %v223 = vpack.c.b16 %v191, %v190
  %v224 = vpack.c.b16 %v193, %v192
  %v225 = vpack.c.b16 %v195, %v194
  %v226 = vpack.c.b16 %v197, %v196
  %v227 = vpack.c.b16 %v199, %v198
  %v228 = vpack.c.b16 %v201, %v200
  %v229 = vpack.c.b16 %v203, %v202
  %v230 = vpack.c.b16 %v205, %v204
  %v231 = vpack.c.b16 %v207, %v206
  %256 = vmatpush.bf16.msra.mxu0 %v215
  %257 = vmatpush.bf16.msra.mxu0 %v214
  %258 = vmatpush.bf16.msra.mxu0 %v213
  %259 = vmatpush.bf16.msra.mxu0 %v212
  %260 = vmatpush.bf16.msra.mxu0 %v211
  %261 = vmatpush.bf16.msra.mxu0 %v210
  %262 = vmatpush.bf16.msra.mxu0 %v209
  %263 = vmatpush.bf16.msra.mxu0 %v208
  %264 = vmatmul.bf16.gmra.mxu0 %v54
  %v265 = vpop.f32.mrf.mxu0
  %v266 = vadd.f32 0.0, %v265
  %v267 = vpop.f32.mrf.mxu0
  %v268 = vadd.f32 0.0, %v267
  %269 = vmatmul.bf16.gmra.mxu0 %v57
  %v270 = vpop.f32.mrf.mxu0
  %v271 = vadd.f32 0.0, %v270
  %v272 = vpop.f32.mrf.mxu0
  %v273 = vadd.f32 0.0, %v272
  %274 = vdwg.mxu0
  %275 = vmatpush.bf16.msra.mxu0 %v223
  %276 = vmatpush.bf16.msra.mxu0 %v222
  %277 = vmatpush.bf16.msra.mxu0 %v221
  %278 = vmatpush.bf16.msra.mxu0 %v220
  %279 = vmatpush.bf16.msra.mxu0 %v219
  %280 = vmatpush.bf16.msra.mxu0 %v218
  %281 = vmatpush.bf16.msra.mxu0 %v217
  %282 = vmatpush.bf16.msra.mxu0 %v216
  %283 = vmatmul.bf16.gmra.mxu0 %v55
  %v284 = vpop.f32.mrf.mxu0
  %v285 = vadd.f32 %v266, %v284
  %v286 = vpop.f32.mrf.mxu0
  %v287 = vadd.f32 %v268, %v286
  %288 = vmatmul.bf16.gmra.mxu0 %v58
  %v289 = vpop.f32.mrf.mxu0
  %v290 = vadd.f32 %v271, %v289
  %v291 = vpop.f32.mrf.mxu0
  %v292 = vadd.f32 %v273, %v291
  %293 = vdwg.mxu0
  %294 = vmatpush.bf16.msra.mxu0 %v231
  %295 = vmatpush.bf16.msra.mxu0 %v230
  %296 = vmatpush.bf16.msra.mxu0 %v229
  %297 = vmatpush.bf16.msra.mxu0 %v228
  %298 = vmatpush.bf16.msra.mxu0 %v227
  %299 = vmatpush.bf16.msra.mxu0 %v226
  %300 = vmatpush.bf16.msra.mxu0 %v225
  %301 = vmatpush.bf16.msra.mxu0 %v224
  %302 = vmatmul.bf16.gmra.mxu0 %v56
  %v303 = vpop.f32.mrf.mxu0
  %v304 = vadd.f32 %v285, %v303
  %v305 = vpop.f32.mrf.mxu0
  %v306 = vadd.f32 %v287, %v305
  %307 = vmatmul.bf16.gmra.mxu0 %v59
  %v308 = vpop.f32.mrf.mxu0
  %v309 = vadd.f32 %v290, %v308
  %v310 = vpop.f32.mrf.mxu0
  %v311 = vadd.f32 %v292, %v310
  %312 = vdwg.mxu0
  %v313 = vadd.f32 %v60, %v304
  %v314 = vadd.f32 %v61, %v306
  %v315 = vadd.f32 %v62, %v309
  %v316 = vadd.f32 %v63, %v311
  %317 = vst [vmem:[#allocation2] sm:$0xff] %v313
  %318 = vst [vmem:[#allocation2 + $0x8] sm:$0xff] %v314
  %319 = vst [vmem:[#allocation2 + $0x10] sm:$0xff] %v315
  %320 = vst [vmem:[#allocation2 + $0x18] sm:$0xff] %v316
  // Predicated region
  $region18: #{dalle_encoder_forward.37} parent=0 // pred_check
    %p321 = pneg %p14
  $region19: #{dalle_encoder_forward.37} parent=0 // pred_check_branch
    %323 = sbr.rel (%p321) target = $region21
  $region20: #{dalle_encoder_forward.37} parent=0 // pred_region
    %v324 = vld [vmem:[#allocation2] sm:$0xff]
    %v325 = vld [vmem:[#allocation2 + $0x8] sm:$0xff]
    %v326 = vld [vmem:[#allocation2 + $0x10] sm:$0xff]
    %v327 = vld [vmem:[#allocation2 + $0x18] sm:$0xff]
    %v328 = vld [vmem:[%s2] sm:$0x1]
    %v330 = vperm.slane %v328, 0
    %v332 = vadd.f32 %v324, %v330
    %v333 = vadd.f32 %v325, %v330
    %v334 = vadd.f32 %v326, %v330
    %v335 = vadd.f32 %v327, %v330
    %v336 = vpack.c.bf16 %v332, %v332
    %v337 = vpack.c.bf16 %v333, %v333
    %v338 = vpack.c.bf16 %v334, %v334
    %v339 = vpack.c.bf16 %v335, %v335
    %340 = vst [vmem:[%s3] sm:$0xf] %v336
    %341 = vst [vmem:[%s3 + $0x4] sm:$0xf] %v337
    %342 = vst [vmem:[%s3 + $0x8] sm:$0xf] %v338
    %343 = vst [vmem:[%s3 + $0xc] sm:$0xf] %v339
  $region21: #{dalle_encoder_forward.37} parent=0 // pred_fallthru
    _
  // Predicated region
  $region22: #{dalle_encoder_forward.37} parent=0 // pred_check
    _
  $region23: #{dalle_encoder_forward.37} parent=0 // pred_check_branch
    %345 = sbr.rel (0) target = $region25
  $region24: #{dalle_encoder_forward.37} parent=0 // pred_region
    _
  $region25: #{dalle_encoder_forward.37} parent=0 // pred_fallthru
    _
  // Predicated region
  $region26: #{dalle_encoder_forward.37} parent=0 // pred_check
    _
  $region27: #{dalle_encoder_forward.37} parent=0 // pred_check_branch
    %347 = sbr.rel (0) target = $region29
  $region28: #{dalle_encoder_forward.37} parent=0 // pred_region
    _
  $region29: #{dalle_encoder_forward.37} parent=0 // pred_fallthru
    _

// kernel: dalle_encoder_forward.36
$region0: #{dalle_encoder_forward.36}
  #allocation0 [shape = 'u32[]', space=smem, size = 0x4, offset = 0x4, fixed_abs, tag = 'smem constant byte address 0x4 - core index']
  #allocation1 [shape = 'u32[72,128]{1,0:T(1,128)}', space=vmem, size = 0x9000, scoped, tag = 'internal scratch']
  #allocation2 [shape = 'f32[32,128]{1,0:T(8,128)}', space=vmem, size = 0x4000, scoped, tag = 'scratch operand']
  %s0 = inlined_call_operand.vmem [shape: bf16[32,128], index: 0, kind: input, shape index: {}]
  %s1 = inlined_call_operand.vmem [shape: bf16[128,128], index: 1, kind: input, shape index: {}]
  %s2 = inlined_call_operand.vmem [shape: f32[1,128], index: 2, kind: input, shape index: {}]
  %s3 = inlined_call_operand.vmem [shape: bf16[32,128], index: 3, kind: output, shape index: {}]
  %s4 = sld [smem:[#allocation0]]
  $region30: #{dalle_encoder_forward.36} parent=0
    _
  %s6 = ssub.s32 1, %s4
  %s7 = scalar_select 0, %s6, %s4
  // Predicated region
  $region2: #{dalle_encoder_forward.36} parent=0 // pred_check
    _
  $region3: #{dalle_encoder_forward.36} parent=0 // pred_check_branch
    %9 = sbr.rel (0) target = $region5
  $region4: #{dalle_encoder_forward.36} parent=0 // pred_region
    _
  $region5: #{dalle_encoder_forward.36} parent=0 // pred_fallthru
    _
  // Predicated region
  $region6: #{dalle_encoder_forward.36} parent=0 // pred_check
    _
  $region7: #{dalle_encoder_forward.36} parent=0 // pred_check_branch
    %11 = sbr.rel (0) target = $region9
  $region8: #{dalle_encoder_forward.36} parent=0 // pred_region
    _
  $region9: #{dalle_encoder_forward.36} parent=0 // pred_fallthru
    _
  // Predicated region
  $region10: #{dalle_encoder_forward.36} parent=0 // pred_check
    _
  $region11: #{dalle_encoder_forward.36} parent=0 // pred_check_branch
    %13 = sbr.rel (0) target = $region13
  $region12: #{dalle_encoder_forward.36} parent=0 // pred_region
    _
  $region13: #{dalle_encoder_forward.36} parent=0 // pred_fallthru
    _
  %p14 = scmp.eq.s32.totalorder 0, 0
  // Predicated region
  $region14: #{dalle_encoder_forward.36} parent=0 // pred_check
    %p15 = pneg %p14
  $region15: #{dalle_encoder_forward.36} parent=0 // pred_check_branch
    %17 = sbr.rel (%p15) target = $region17
  $region16: #{dalle_encoder_forward.36} parent=0 // pred_region
    %18 = vst [vmem:[#allocation2] sm:$0xff] 0.0
    %19 = vst [vmem:[#allocation2 + $0x8] sm:$0xff] 0.0
    %20 = vst [vmem:[#allocation2 + $0x10] sm:$0xff] 0.0
    %21 = vst [vmem:[#allocation2 + $0x18] sm:$0xff] 0.0
  $region17: #{dalle_encoder_forward.36} parent=0 // pred_fallthru
    _
  %v22 = vld [vmem:[%s0] sm:$0xf]
  %v23 = vld [vmem:[%s0 + $0x4] sm:$0xf]
  %v24 = vld [vmem:[%s0 + $0x8] sm:$0xf]
  %v25 = vld [vmem:[%s0 + $0xc] sm:$0xf]
  %v26 = vld [vmem:[#allocation2] sm:$0xff]
  %v27 = vld [vmem:[#allocation2 + $0x8] sm:$0xff]
  %v28 = vld [vmem:[#allocation2 + $0x10] sm:$0xff]
  %v29 = vld [vmem:[#allocation2 + $0x18] sm:$0xff]
  %v30 = vld [vmem:[%s1] sm:$0xf]
  %v31 = vld [vmem:[%s1 + $0x4] sm:$0xf]
  %v32 = vld [vmem:[%s1 + $0x8] sm:$0xf]
  %v33 = vld [vmem:[%s1 + $0xc] sm:$0xf]
  %v34 = vld [vmem:[%s1 + $0x10] sm:$0xf]
  %v35 = vld [vmem:[%s1 + $0x14] sm:$0xf]
  %v36 = vld [vmem:[%s1 + $0x18] sm:$0xf]
  %v37 = vld [vmem:[%s1 + $0x1c] sm:$0xf]
  %v38 = vld [vmem:[%s1 + $0x20] sm:$0xf]
  %v39 = vld [vmem:[%s1 + $0x24] sm:$0xf]
  %v40 = vld [vmem:[%s1 + $0x28] sm:$0xf]
  %v41 = vld [vmem:[%s1 + $0x2c] sm:$0xf]
  %v42 = vld [vmem:[%s1 + $0x30] sm:$0xf]
  %v43 = vld [vmem:[%s1 + $0x34] sm:$0xf]
  %v44 = vld [vmem:[%s1 + $0x38] sm:$0xf]
  %v45 = vld [vmem:[%s1 + $0x3c] sm:$0xf]
  %v50 = vunpack.c.l.b16 %v22
  %v51 = vunpack.c.l.b16 %v23
  %v52 = vunpack.c.l.b16 %v24
  %v53 = vunpack.c.l.b16 %v25
  %v54 = vpack.c.b16 %v51, %v50
  %v55 = vpack.c.b16 %v53, %v52
  %v74 = vunpack.c.l.b16 %v30
  %v75 = vunpack.c.l.b16 %v31
  %v76 = vunpack.c.l.b16 %v32
  %v77 = vunpack.c.l.b16 %v33
  %v78 = vunpack.c.l.b16 %v34
  %v79 = vunpack.c.l.b16 %v35
  %v80 = vunpack.c.l.b16 %v36
  %v81 = vunpack.c.l.b16 %v37
  %v82 = vunpack.c.l.b16 %v38
  %v83 = vunpack.c.l.b16 %v39
  %v84 = vunpack.c.l.b16 %v40
  %v85 = vunpack.c.l.b16 %v41
  %v86 = vunpack.c.l.b16 %v42
  %v87 = vunpack.c.l.b16 %v43
  %v88 = vunpack.c.l.b16 %v44
  %v89 = vunpack.c.l.b16 %v45
  %v90 = vpack.c.b16 %v75, %v74
  %v91 = vpack.c.b16 %v77, %v76
  %v92 = vpack.c.b16 %v79, %v78
  %v93 = vpack.c.b16 %v81, %v80
  %v94 = vpack.c.b16 %v83, %v82
  %v95 = vpack.c.b16 %v85, %v84
  %v96 = vpack.c.b16 %v87, %v86
  %v97 = vpack.c.b16 %v89, %v88
  %106 = vmatpush.bf16.msra.mxu0 %v97
  %107 = vmatpush.bf16.msra.mxu0 %v96
  %108 = vmatpush.bf16.msra.mxu0 %v95
  %109 = vmatpush.bf16.msra.mxu0 %v94
  %110 = vmatpush.bf16.msra.mxu0 %v93
  %111 = vmatpush.bf16.msra.mxu0 %v92
  %112 = vmatpush.bf16.msra.mxu0 %v91
  %113 = vmatpush.bf16.msra.mxu0 %v90
  %114 = vmatmul.bf16.gmra.mxu0 %v54
  %v115 = vpop.f32.mrf.mxu0
  %v116 = vadd.f32 0.0, %v115
  %v117 = vpop.f32.mrf.mxu0
  %v118 = vadd.f32 0.0, %v117
  %119 = vmatmul.bf16.gmra.mxu0 %v55
  %v120 = vpop.f32.mrf.mxu0
  %v121 = vadd.f32 0.0, %v120
  %v122 = vpop.f32.mrf.mxu0
  %v123 = vadd.f32 0.0, %v122
  %124 = vdwg.mxu0
  %v125 = vadd.f32 %v26, %v116
  %v126 = vadd.f32 %v27, %v118
  %v127 = vadd.f32 %v28, %v121
  %v128 = vadd.f32 %v29, %v123
  %129 = vst [vmem:[#allocation2] sm:$0xff] %v125
  %130 = vst [vmem:[#allocation2 + $0x8] sm:$0xff] %v126
  %131 = vst [vmem:[#allocation2 + $0x10] sm:$0xff] %v127
  %132 = vst [vmem:[#allocation2 + $0x18] sm:$0xff] %v128
  // Predicated region
  $region18: #{dalle_encoder_forward.36} parent=0 // pred_check
    %p133 = pneg %p14
  $region19: #{dalle_encoder_forward.36} parent=0 // pred_check_branch
    %135 = sbr.rel (%p133) target = $region21
  $region20: #{dalle_encoder_forward.36} parent=0 // pred_region
    %v136 = vld [vmem:[#allocation2] sm:$0xff]
    %v137 = vld [vmem:[#allocation2 + $0x8] sm:$0xff]
    %v138 = vld [vmem:[#allocation2 + $0x10] sm:$0xff]
    %v139 = vld [vmem:[#allocation2 + $0x18] sm:$0xff]
    %v140 = vld [vmem:[%s2] sm:$0x1]
    %v142 = vperm.slane %v140, 0
    %v144 = vadd.f32 %v136, %v142
    %v145 = vadd.f32 %v137, %v142
    %v146 = vadd.f32 %v138, %v142
    %v147 = vadd.f32 %v139, %v142
    %v148 = vpack.c.bf16 %v144, %v144
    %v149 = vpack.c.bf16 %v145, %v145
    %v150 = vpack.c.bf16 %v146, %v146
    %v151 = vpack.c.bf16 %v147, %v147
    %152 = vst [vmem:[%s3] sm:$0xf] %v148
    %153 = vst [vmem:[%s3 + $0x4] sm:$0xf] %v149
    %154 = vst [vmem:[%s3 + $0x8] sm:$0xf] %v150
    %155 = vst [vmem:[%s3 + $0xc] sm:$0xf] %v151
  $region21: #{dalle_encoder_forward.36} parent=0 // pred_fallthru
    _
  // Predicated region
  $region22: #{dalle_encoder_forward.36} parent=0 // pred_check
    _
  $region23: #{dalle_encoder_forward.36} parent=0 // pred_check_branch
    %157 = sbr.rel (0) target = $region25
  $region24: #{dalle_encoder_forward.36} parent=0 // pred_region
    _
  $region25: #{dalle_encoder_forward.36} parent=0 // pred_fallthru
    _
  // Predicated region
  $region26: #{dalle_encoder_forward.36} parent=0 // pred_check
    _
  $region27: #{dalle_encoder_forward.36} parent=0 // pred_check_branch
    %159 = sbr.rel (0) target = $region29
  $region28: #{dalle_encoder_forward.36} parent=0 // pred_region
    _
  $region29: #{dalle_encoder_forward.36} parent=0 // pred_fallthru
    _

// kernel: dalle_encoder_forward.40
$region0: #{dalle_encoder_forward.40}
  #allocation0 [shape = 'u32[]', space=smem, size = 0x4, offset = 0x4, fixed_abs, tag = 'smem constant byte address 0x4 - core index']
  #allocation1 [shape = 'u32[72,128]{1,0:T(1,128)}', space=vmem, size = 0x9000, scoped, tag = 'internal scratch']
  #allocation2 [shape = 'f32[32,128]{1,0:T(8,128)}', space=vmem, size = 0x4000, scoped, tag = 'scratch operand']
  %s0 = inlined_call_operand.vmem [shape: bf16[32,128], index: 0, kind: input, shape index: {}]
  %s1 = inlined_call_operand.vmem [shape: bf16[128,128], index: 1, kind: input, shape index: {}]
  %s2 = inlined_call_operand.vmem [shape: f32[1,128], index: 2, kind: input, shape index: {}]
  %s3 = inlined_call_operand.vmem [shape: bf16[32,128], index: 3, kind: input, shape index: {}]
  %s4 = inlined_call_operand.vmem [shape: bf16[32,128], index: 4, kind: output, shape index: {}]
  %s5 = sld [smem:[#allocation0]]
  $region34: #{dalle_encoder_forward.40} parent=0
    _
  %s7 = ssub.s32 1, %s5
  %s8 = scalar_select 0, %s7, %s5
  // Predicated region
  $region2: #{dalle_encoder_forward.40} parent=0 // pred_check
    _
  $region3: #{dalle_encoder_forward.40} parent=0 // pred_check_branch
    %10 = sbr.rel (0) target = $region5
  $region4: #{dalle_encoder_forward.40} parent=0 // pred_region
    _
  $region5: #{dalle_encoder_forward.40} parent=0 // pred_fallthru
    _
  // Predicated region
  $region6: #{dalle_encoder_forward.40} parent=0 // pred_check
    _
  $region7: #{dalle_encoder_forward.40} parent=0 // pred_check_branch
    %12 = sbr.rel (0) target = $region9
  $region8: #{dalle_encoder_forward.40} parent=0 // pred_region
    _
  $region9: #{dalle_encoder_forward.40} parent=0 // pred_fallthru
    _
  // Predicated region
  $region10: #{dalle_encoder_forward.40} parent=0 // pred_check
    _
  $region11: #{dalle_encoder_forward.40} parent=0 // pred_check_branch
    %14 = sbr.rel (0) target = $region13
  $region12: #{dalle_encoder_forward.40} parent=0 // pred_region
    _
  $region13: #{dalle_encoder_forward.40} parent=0 // pred_fallthru
    _
  // Predicated region
  $region14: #{dalle_encoder_forward.40} parent=0 // pred_check
    _
  $region15: #{dalle_encoder_forward.40} parent=0 // pred_check_branch
    %16 = sbr.rel (0) target = $region17
  $region16: #{dalle_encoder_forward.40} parent=0 // pred_region
    _
  $region17: #{dalle_encoder_forward.40} parent=0 // pred_fallthru
    _
  %p17 = scmp.eq.s32.totalorder 0, 0
  // Predicated region
  $region18: #{dalle_encoder_forward.40} parent=0 // pred_check
    %p18 = pneg %p17
  $region19: #{dalle_encoder_forward.40} parent=0 // pred_check_branch
    %20 = sbr.rel (%p18) target = $region21
  $region20: #{dalle_encoder_forward.40} parent=0 // pred_region
    %21 = vst [vmem:[#allocation2] sm:$0xff] 0.0
    %22 = vst [vmem:[#allocation2 + $0x8] sm:$0xff] 0.0
    %23 = vst [vmem:[#allocation2 + $0x10] sm:$0xff] 0.0
    %24 = vst [vmem:[#allocation2 + $0x18] sm:$0xff] 0.0
  $region21: #{dalle_encoder_forward.40} parent=0 // pred_fallthru
    _
  %v25 = vld [vmem:[%s0] sm:$0xf]
  %v26 = vld [vmem:[%s0 + $0x4] sm:$0xf]
  %v27 = vld [vmem:[%s0 + $0x8] sm:$0xf]
  %v28 = vld [vmem:[%s0 + $0xc] sm:$0xf]
  %v29 = vunpack.c.l.bf16 %v25
  %v30 = vunpack.c.l.bf16 %v26
  %v31 = vunpack.c.l.bf16 %v27
  %v32 = vunpack.c.l.bf16 %v28
  %v33 = vmax.f32 %v29, 0.0
  %v34 = vmax.f32 %v30, 0.0
  %v35 = vmax.f32 %v31, 0.0
  %v36 = vmax.f32 %v32, 0.0
  %v37 = vpack.c.bf16 %v34, %v33
  %v38 = vpack.c.bf16 %v36, %v35
  %v39 = vld [vmem:[#allocation2] sm:$0xff]
  %v40 = vld [vmem:[#allocation2 + $0x8] sm:$0xff]
  %v41 = vld [vmem:[#allocation2 + $0x10] sm:$0xff]
  %v42 = vld [vmem:[#allocation2 + $0x18] sm:$0xff]
  %v43 = vld [vmem:[%s1] sm:$0xf]
  %v44 = vld [vmem:[%s1 + $0x4] sm:$0xf]
  %v45 = vld [vmem:[%s1 + $0x8] sm:$0xf]
  %v46 = vld [vmem:[%s1 + $0xc] sm:$0xf]
  %v47 = vld [vmem:[%s1 + $0x10] sm:$0xf]
  %v48 = vld [vmem:[%s1 + $0x14] sm:$0xf]
  %v49 = vld [vmem:[%s1 + $0x18] sm:$0xf]
  %v50 = vld [vmem:[%s1 + $0x1c] sm:$0xf]
  %v51 = vld [vmem:[%s1 + $0x20] sm:$0xf]
  %v52 = vld [vmem:[%s1 + $0x24] sm:$0xf]
  %v53 = vld [vmem:[%s1 + $0x28] sm:$0xf]
  %v54 = vld [vmem:[%s1 + $0x2c] sm:$0xf]
  %v55 = vld [vmem:[%s1 + $0x30] sm:$0xf]
  %v56 = vld [vmem:[%s1 + $0x34] sm:$0xf]
  %v57 = vld [vmem:[%s1 + $0x38] sm:$0xf]
  %v58 = vld [vmem:[%s1 + $0x3c] sm:$0xf]
  %v75 = vunpack.c.l.b16 %v43
  %v76 = vunpack.c.l.b16 %v44
  %v77 = vunpack.c.l.b16 %v45
  %v78 = vunpack.c.l.b16 %v46
  %v79 = vunpack.c.l.b16 %v47
  %v80 = vunpack.c.l.b16 %v48
  %v81 = vunpack.c.l.b16 %v49
  %v82 = vunpack.c.l.b16 %v50
  %v83 = vunpack.c.l.b16 %v51
  %v84 = vunpack.c.l.b16 %v52
  %v85 = vunpack.c.l.b16 %v53
  %v86 = vunpack.c.l.b16 %v54
  %v87 = vunpack.c.l.b16 %v55
  %v88 = vunpack.c.l.b16 %v56
  %v89 = vunpack.c.l.b16 %v57
  %v90 = vunpack.c.l.b16 %v58
  %v91 = vpack.c.b16 %v76, %v75
  %v92 = vpack.c.b16 %v78, %v77
  %v93 = vpack.c.b16 %v80, %v79
  %v94 = vpack.c.b16 %v82, %v81
  %v95 = vpack.c.b16 %v84, %v83
  %v96 = vpack.c.b16 %v86, %v85
  %v97 = vpack.c.b16 %v88, %v87
  %v98 = vpack.c.b16 %v90, %v89
  %107 = vmatpush.bf16.msra.mxu0 %v98
  %108 = vmatpush.bf16.msra.mxu0 %v97
  %109 = vmatpush.bf16.msra.mxu0 %v96
  %110 = vmatpush.bf16.msra.mxu0 %v95
  %111 = vmatpush.bf16.msra.mxu0 %v94
  %112 = vmatpush.bf16.msra.mxu0 %v93
  %113 = vmatpush.bf16.msra.mxu0 %v92
  %114 = vmatpush.bf16.msra.mxu0 %v91
  %115 = vmatmul.bf16.gmra.mxu0 %v37
  %v116 = vpop.f32.mrf.mxu0
  %v117 = vadd.f32 0.0, %v116
  %v118 = vpop.f32.mrf.mxu0
  %v119 = vadd.f32 0.0, %v118
  %120 = vmatmul.bf16.gmra.mxu0 %v38
  %v121 = vpop.f32.mrf.mxu0
  %v122 = vadd.f32 0.0, %v121
  %v123 = vpop.f32.mrf.mxu0
  %v124 = vadd.f32 0.0, %v123
  %125 = vdwg.mxu0
  %v126 = vadd.f32 %v39, %v117
  %v127 = vadd.f32 %v40, %v119
  %v128 = vadd.f32 %v41, %v122
  %v129 = vadd.f32 %v42, %v124
  %130 = vst [vmem:[#allocation2] sm:$0xff] %v126
  %131 = vst [vmem:[#allocation2 + $0x8] sm:$0xff] %v127
  %132 = vst [vmem:[#allocation2 + $0x10] sm:$0xff] %v128
  %133 = vst [vmem:[#allocation2 + $0x18] sm:$0xff] %v129
  // Predicated region
  $region22: #{dalle_encoder_forward.40} parent=0 // pred_check
    %p134 = pneg %p17
  $region23: #{dalle_encoder_forward.40} parent=0 // pred_check_branch
    %136 = sbr.rel (%p134) target = $region25
  $region24: #{dalle_encoder_forward.40} parent=0 // pred_region
    %v137 = vld [vmem:[#allocation2] sm:$0xff]
    %v138 = vld [vmem:[#allocation2 + $0x8] sm:$0xff]
    %v139 = vld [vmem:[#allocation2 + $0x10] sm:$0xff]
    %v140 = vld [vmem:[#allocation2 + $0x18] sm:$0xff]
    %v141 = vld [vmem:[%s2] sm:$0x1]
    %v143 = vperm.slane %v141, 0
    %v145 = vadd.f32 %v137, %v143
    %v146 = vadd.f32 %v138, %v143
    %v147 = vadd.f32 %v139, %v143
    %v148 = vadd.f32 %v140, %v143
    %v149 = vld [vmem:[%s3] sm:$0xf]
    %v150 = vld [vmem:[%s3 + $0x4] sm:$0xf]
    %v151 = vld [vmem:[%s3 + $0x8] sm:$0xf]
    %v152 = vld [vmem:[%s3 + $0xc] sm:$0xf]
    %v153 = vunpack.c.l.bf16 %v149
    %v154 = vunpack.c.l.bf16 %v150
    %v155 = vunpack.c.l.bf16 %v151
    %v156 = vunpack.c.l.bf16 %v152
    %v157 = vmul.f32 %v145, 0.0625
    %v158 = vmul.f32 %v146, 0.0625
    %v159 = vmul.f32 %v147, 0.0625
    %v160 = vmul.f32 %v148, 0.0625
    %v161 = vadd.f32 %v153, %v157
    %v162 = vadd.f32 %v154, %v158
    %v163 = vadd.f32 %v155, %v159
    %v164 = vadd.f32 %v156, %v160
    %v165 = vpack.c.bf16 %v161, %v161
    %v166 = vpack.c.bf16 %v162, %v162
    %v167 = vpack.c.bf16 %v163, %v163
    %v168 = vpack.c.bf16 %v164, %v164
    %169 = vst [vmem:[%s4] sm:$0xf] %v165
    %170 = vst [vmem:[%s4 + $0x4] sm:$0xf] %v166
    %171 = vst [vmem:[%s4 + $0x8] sm:$0xf] %v167
    %172 = vst [vmem:[%s4 + $0xc] sm:$0xf] %v168
  $region25: #{dalle_encoder_forward.40} parent=0 // pred_fallthru
    _
  // Predicated region
  $region26: #{dalle_encoder_forward.40} parent=0 // pred_check
    _
  $region27: #{dalle_encoder_forward.40} parent=0 // pred_check_branch
    %174 = sbr.rel (0) target = $region29
  $region28: #{dalle_encoder_forward.40} parent=0 // pred_region
    _
  $region29: #{dalle_encoder_forward.40} parent=0 // pred_fallthru
    _
  // Predicated region
  $region30: #{dalle_encoder_forward.40} parent=0 // pred_check
    _
  $region31: #{dalle_encoder_forward.40} parent=0 // pred_check_branch
    %176 = sbr.rel (0) target = $region33
  $region32: #{dalle_encoder_forward.40} parent=0 // pred_region
    _
  $region33: #{dalle_encoder_forward.40} parent=0 // pred_fallthru
    _

// kernel: dalle_encoder_forward.41
$region0: #{dalle_encoder_forward.41}
  #allocation0 [shape = 'u32[]', space=smem, size = 0x4, offset = 0x4, fixed_abs, tag = 'smem constant byte address 0x4 - core index']
  #allocation1 [shape = 'u32[72,128]{1,0:T(1,128)}', space=vmem, size = 0x9000, scoped, tag = 'internal scratch']
  %s0 = inlined_call_operand.vmem [shape: bf16[2,2,2,2,128], index: 0, kind: input, shape index: {}]
  %s1 = inlined_call_operand.vmem [shape: bf16[2,2,2,64], index: 1, kind: output, shape index: {}]
  %s2 = sld [smem:[#allocation0]]
  $region37: #{dalle_encoder_forward.41} parent=0
    _
  %s4 = ssub.s32 1, %s2
  %s5 = scalar_select 0, %s4, %s2
  loop: start=0, step=1, limit=4
  $region2: #{dalle_encoder_forward.41} parent=0 // loop_pre_header
    _
  $region3: #{dalle_encoder_forward.41} parent=0 // loop_header
    %s7 = sphi 0, %s11
    %p8 = scmp.ge.s32.totalorder %s7, 4
    %s14 = sphi 0, %s26
    %s15 = sphi 0, %s22
    %s16 = sphi 0, %s14
    %s17 = sphi 0, %s15
    %s18 = sphi 0, %s16
    %s19 = sphi 0, %s17
    %s31 = sphi 0, %s33
    %s34 = sphi 0, %s31
    %s35 = sphi 0, %s34
    %s51 = sphi 0, %s35
    %s59 = sphi 0, %s61
    %s62 = sphi 0, %s59
    %s63 = sphi 0, %s62
    %s79 = sphi 0, %s63
  $region4: #{dalle_encoder_forward.41} parent=0 // loop_header_branch
    %10 = sbr.rel (%p8) target = $region8
  $region5: #{dalle_encoder_forward.41} parent=0 // loop_body
    %s12 = ssub.s32 %s7, 1
    %s13 = ssub.s32 %s7, 2
    %s20 = sadd.s32 1, %s15
    %p21 = scmp.ge.s32.totalorder %s20, 1
    %s22 = scalar_select %p21, 0, %s20
    %s23 = sadd.s32 1, %s14
    %s24 = scalar_select %p21, %s23, %s14
    %p25 = scmp.ge.s32.totalorder %s24, 2
    %s26 = scalar_select %p25, 0, %s24
    %s27 = ssub.s32 %s14, %s26
    %s28 = ssub.s32 %s15, %s22
    %s29 = sor.u32 %s27, %s28
    %p30 = scmp.eq.s32.totalorder %s29, 0
    %s32 = sadd.s32 %s31, 1
    %s33 = scalar_select %p30, %s31, %s32
    %p36 = pneg %p30
    %p37 = scmp.eq.s32.totalorder %s7, 1
    %p38 = por %p36, %p37
    %p39 = scmp.ne.s32.totalorder %s31, %s34
    %p40 = scmp.eq.s32.totalorder %s7, 0
    %p41 = por %p39, %p40
    %p42 = scmp.ne.s32.totalorder %s31, %s34
    %p43 = scmp.eq.s32.totalorder %s12, 1
    %p44 = por %p42, %p43
    %p45 = scmp.ne.s32.totalorder %s34, %s35
    %p46 = scmp.eq.s32.totalorder %s12, 0
    %p47 = por %p45, %p46
    %p48 = scmp.ne.s32.totalorder %s34, %s35
    %p49 = scmp.eq.s32.totalorder %s13, 1
    %p50 = por %p48, %p49
    %p52 = scmp.ne.s32.totalorder %s35, %s51
    %p53 = scmp.eq.s32.totalorder %s13, 0
    %p54 = por %p52, %p53
    %s55 = ssub.s32 %s14, %s26
    %s56 = ssub.s32 %s15, %s22
    %s57 = sor.u32 %s55, %s56
    %p58 = scmp.eq.s32.totalorder %s57, 0
    %s60 = sadd.s32 %s59, 1
    %s61 = scalar_select %p58, %s59, %s60
    %p64 = pneg %p58
    %p65 = scmp.eq.s32.totalorder %s7, 1
    %p66 = por %p64, %p65
    %p67 = scmp.ne.s32.totalorder %s59, %s62
    %p68 = scmp.eq.s32.totalorder %s7, 0
    %p69 = por %p67, %p68
    %p70 = scmp.ne.s32.totalorder %s59, %s62
    %p71 = scmp.eq.s32.totalorder %s12, 1
    %p72 = por %p70, %p71
    %p73 = scmp.ne.s32.totalorder %s62, %s63
    %p74 = scmp.eq.s32.totalorder %s12, 0
    %p75 = por %p73, %p74
    %p76 = scmp.ne.s32.totalorder %s62, %s63
    %p77 = scmp.eq.s32.totalorder %s13, 1
    %p78 = por %p76, %p77
    %p80 = scmp.ne.s32.totalorder %s63, %s79
    %p81 = scmp.eq.s32.totalorder %s13, 0
    %p82 = por %p80, %p81
    %p83 = scmp.le.s32.totalorder 1, %s7
    %p84 = scmp.lt.s32.totalorder %s7, 3
    %p85 = pnand %p83, %p84
    %p86 = pneg %p85
    // Predicated region
    $region9: #{dalle_encoder_forward.41} parent=5 // pred_check
      _
    $region10: #{dalle_encoder_forward.41} parent=5 // pred_check_branch
      %88 = sbr.rel (%p85) target = $region12
    $region11: #{dalle_encoder_forward.41} parent=5 // pred_region
      %s89 = ssub.s32 %s7, 1
    $region12: #{dalle_encoder_forward.41} parent=5 // pred_fallthru
      _
    %p90 = scmp.lt.s32.totalorder %s7, 2
    // Predicated region
    $region13: #{dalle_encoder_forward.41} parent=5 // pred_check
      %p91 = pneg %p90
    $region14: #{dalle_encoder_forward.41} parent=5 // pred_check_branch
      %93 = sbr.rel (%p91) target = $region16
    $region15: #{dalle_encoder_forward.41} parent=5 // pred_region
      // Predicated region
      $region17: #{dalle_encoder_forward.41} parent=15 // pred_check
        %p94 = pneg %p41
      $region18: #{dalle_encoder_forward.41} parent=15 // pred_check_branch
        %96 = sbr.rel (%p94) target = $region20
      $region19: #{dalle_encoder_forward.41} parent=15 // pred_region
        %s97 = smul.u32 2, %s15
        %p98 = scmp.lt.s32.totalorder %s14, 1
        %s99 = scalar_select %p98, %s14, 1
        %p100 = scmp.lt.s32.totalorder %s97, 1
        %s101 = scalar_select %p100, %s97, 1
        %s102 = smul.addr %s101, 2
        %s103 = smul.addr %s99, 4
        %s104 = sadd.s32 %s102, %s103
        %s105 = scalar_lea.vmem %s0, %s104
        %s106 = smul.u32 2, %s15
      $region20: #{dalle_encoder_forward.41} parent=15 // pred_fallthru
        _
    $region16: #{dalle_encoder_forward.41} parent=5 // pred_fallthru
      _
    %p107 = scmp.le.s32.totalorder 1, %s7
    %p108 = scmp.lt.s32.totalorder %s7, 3
    %p109 = pnand %p107, %p108
    %p110 = pneg %p109
    // Predicated region
    $region21: #{dalle_encoder_forward.41} parent=5 // pred_check
      _
    $region22: #{dalle_encoder_forward.41} parent=5 // pred_check_branch
      %112 = sbr.rel (%p109) target = $region24
    $region23: #{dalle_encoder_forward.41} parent=5 // pred_region
      %s113 = ssub.s32 %s7, 1
      %s114 = smul.u32 2, %s17
      %p115 = scmp.lt.s32.totalorder %s16, 1
      %s116 = scalar_select %p115, %s16, 1
      %p117 = scmp.lt.s32.totalorder %s114, 1
      %s118 = scalar_select %p117, %s114, 1
      %s119 = smul.addr %s118, 2
      %s120 = smul.addr %s116, 4
      %s121 = sadd.s32 %s119, %s120
      %s122 = scalar_lea.vmem %s0, %s121
      %p123 = pneg %p47
      %p124 = pneg %p44
      %p125 = pneg %p75
      %p126 = pneg %p72
      %s127 = smul.u32 2, %s17
      %p128 = scmp.lt.s32.totalorder %s16, 1
      %s129 = scalar_select %p128, %s16, 1
      %p130 = scmp.lt.s32.totalorder %s127, 1
      %s131 = scalar_select %p130, %s127, 1
      %s132 = smul.addr %s129, 2
      %s133 = sadd.s32 %s131, %s132
      %s134 = scalar_lea.vmem %s1, %s133
      %s135 = smul.u32 2, %s17
      %p136 = scmp.lt.s32.totalorder %s16, 1
      %s137 = scalar_select %p136, %s16, 1
      %p138 = scmp.lt.s32.totalorder %s135, 1
      %s139 = scalar_select %p138, %s135, 1
      %s140 = smul.addr %s139, 2
      %s141 = smul.addr %s137, 4
      %s142 = sadd.s32 %s140, %s141
      %s143 = scalar_lea.vmem %s0, %s142
      %s144 = smul.u32 2, %s17
      %s145 = smul.u32 2, %s17
      %p146 = scmp.lt.s32.totalorder %s16, 1
      %s147 = scalar_select %p146, %s16, 1
      %p148 = scmp.lt.s32.totalorder %s145, 1
      %s149 = scalar_select %p148, %s145, 1
      %s150 = smul.addr %s147, 2
      %s151 = sadd.s32 %s149, %s150
      %s152 = scalar_lea.vmem %s1, %s151
      %s153 = smul.u32 2, %s17
      %v154 = vld [vmem:[%s143] sm:$0x1]
      %v155 = vld [vmem:[%s143 + $0x1] sm:$0x1]
      %v156 = vld [vmem:[%s143 + $0x2] sm:$0x1]
      %v157 = vld [vmem:[%s143 + $0x3] sm:$0x1]
      %v158 = vunpack.c.l.bf16 %v154
      %v159 = vunpack.c.l.bf16 %v156
      %v160 = vunpack.c.l.bf16 %v155
      %v161 = vunpack.c.l.bf16 %v157
      %v162 = vmax.f32 %v158, %v160
      %v163 = vmax.f32 %v159, %v161
      %v164 = vpack.c.bf16 %v162, %v162
      %v165 = vpack.c.bf16 %v163, %v163
      %v166 = vunpack.c.l.bf16 %v164
      %v167 = vunpack.c.l.bf16 %v165
      %170 = vrot.lane.b32.xlu0 %v166, 64
      %v171 = vpop.permute.xlu0 %170
      %172 = vrot.lane.b32.xlu0 %v167, 64
      %v173 = vpop.permute.xlu0 %172
      %v176 = vmax.f32 %v166, %v171
      %v177 = vmax.f32 %v167, %v173
      %v178 = vpack.c.bf16 %v176, %v176
      %v179 = vpack.c.bf16 %v177, %v177
      %vm180 = vcmask 516096
      %181 = vst.msk [vmem:[%s152] sm:$0x1] %vm180, %v178
      %182 = vst.msk [vmem:[%s152 + $0x1] sm:$0x1] %vm180, %v179
      %s183 = smul.u32 2, %s17
      %p184 = scmp.lt.s32.totalorder %s16, 1
      %s185 = scalar_select %p184, %s16, 1
      %p186 = scmp.lt.s32.totalorder %s183, 1
      %s187 = scalar_select %p186, %s183, 1
      %s188 = smul.addr %s185, 2
      %s189 = sadd.s32 %s187, %s188
      %s190 = scalar_lea.vmem %s1, %s189
      // Predicated region
      $region25: #{dalle_encoder_forward.41} parent=23 // pred_check
        %p191 = pneg %p72
      $region26: #{dalle_encoder_forward.41} parent=23 // pred_check_branch
        %193 = sbr.rel (%p191) target = $region28
      $region27: #{dalle_encoder_forward.41} parent=23 // pred_region
        %s194 = smul.u32 2, %s17
      $region28: #{dalle_encoder_forward.41} parent=23 // pred_fallthru
        _
    $region24: #{dalle_encoder_forward.41} parent=5 // pred_fallthru
      _
    %p195 = scmp.le.s32.totalorder 2, %s7
    // Predicated region
    $region29: #{dalle_encoder_forward.41} parent=5 // pred_check
      %p196 = pneg %p195
    $region30: #{dalle_encoder_forward.41} parent=5 // pred_check_branch
      %198 = sbr.rel (%p196) target = $region32
    $region31: #{dalle_encoder_forward.41} parent=5 // pred_region
      %s199 = ssub.s32 %s7, 2
      // Predicated region
      $region33: #{dalle_encoder_forward.41} parent=31 // pred_check
        %p200 = pneg %p78
      $region34: #{dalle_encoder_forward.41} parent=31 // pred_check_branch
        %202 = sbr.rel (%p200) target = $region36
      $region35: #{dalle_encoder_forward.41} parent=31 // pred_region
        %s203 = smul.u32 2, %s19
        %p204 = scmp.lt.s32.totalorder %s18, 1
        %s205 = scalar_select %p204, %s18, 1
        %p206 = scmp.lt.s32.totalorder %s203, 1
        %s207 = scalar_select %p206, %s203, 1
        %s208 = smul.addr %s205, 2
        %s209 = sadd.s32 %s207, %s208
        %s210 = scalar_lea.vmem %s1, %s209
      $region36: #{dalle_encoder_forward.41} parent=31 // pred_fallthru
        _
    $region32: #{dalle_encoder_forward.41} parent=5 // pred_fallthru
      _
  $region6: #{dalle_encoder_forward.41} parent=0 // loop_footer
    %s11 = sadd.s32 1, %s7
  $region7: #{dalle_encoder_forward.41} parent=0 // loop_footer_branch
    %6 = sbr.rel target = $region3
  $region8: #{dalle_encoder_forward.41} parent=0 // loop_exit
    _

// kernel: dalle_encoder_forward.43
$region0: #{dalle_encoder_forward.43}
  #allocation0 [shape = 'u32[]', space=smem, size = 0x4, offset = 0x4, fixed_abs, tag = 'smem constant byte address 0x4 - core index']
  #allocation1 [shape = 'u32[72,128]{1,0:T(1,128)}', space=vmem, size = 0x9000, scoped, tag = 'internal scratch']
  #allocation2 [shape = 'f32[16,128]{1,0:T(8,128)}', space=vmem, size = 0x2000, scoped, tag = 'scratch operand']
  %s0 = inlined_call_operand.vmem [shape: bf16[16,640], index: 0, kind: input, shape index: {}]
  %s1 = inlined_call_operand.vmem [shape: bf16[640,128], index: 1, kind: input, shape index: {}]
  %s2 = inlined_call_operand.vmem [shape: f32[1,128], index: 2, kind: input, shape index: {}]
  %s3 = inlined_call_operand.vmem [shape: bf16[16,128], index: 3, kind: output, shape index: {}]
  %s4 = sld [smem:[#allocation0]]
  $region30: #{dalle_encoder_forward.43} parent=0
    _
  %s6 = ssub.s32 1, %s4
  %s7 = scalar_select 0, %s6, %s4
  // Predicated region
  $region2: #{dalle_encoder_forward.43} parent=0 // pred_check
    _
  $region3: #{dalle_encoder_forward.43} parent=0 // pred_check_branch
    %9 = sbr.rel (0) target = $region5
  $region4: #{dalle_encoder_forward.43} parent=0 // pred_region
    _
  $region5: #{dalle_encoder_forward.43} parent=0 // pred_fallthru
    _
  // Predicated region
  $region6: #{dalle_encoder_forward.43} parent=0 // pred_check
    _
  $region7: #{dalle_encoder_forward.43} parent=0 // pred_check_branch
    %11 = sbr.rel (0) target = $region9
  $region8: #{dalle_encoder_forward.43} parent=0 // pred_region
    _
  $region9: #{dalle_encoder_forward.43} parent=0 // pred_fallthru
    _
  // Predicated region
  $region10: #{dalle_encoder_forward.43} parent=0 // pred_check
    _
  $region11: #{dalle_encoder_forward.43} parent=0 // pred_check_branch
    %13 = sbr.rel (0) target = $region13
  $region12: #{dalle_encoder_forward.43} parent=0 // pred_region
    _
  $region13: #{dalle_encoder_forward.43} parent=0 // pred_fallthru
    _
  %p14 = scmp.eq.s32.totalorder 0, 0
  // Predicated region
  $region14: #{dalle_encoder_forward.43} parent=0 // pred_check
    %p15 = pneg %p14
  $region15: #{dalle_encoder_forward.43} parent=0 // pred_check_branch
    %17 = sbr.rel (%p15) target = $region17
  $region16: #{dalle_encoder_forward.43} parent=0 // pred_region
    %18 = vst [vmem:[#allocation2] sm:$0xff] 0.0
    %19 = vst [vmem:[#allocation2 + $0x8] sm:$0xff] 0.0
  $region17: #{dalle_encoder_forward.43} parent=0 // pred_fallthru
    _
  %v20 = vld [vmem:[%s0] sm:$0xff]
  %v21 = vld [vmem:[%s0 + $0x8] sm:$0xff]
  %v22 = vld [vmem:[%s0 + $0x10] sm:$0xf]
  %v23 = vld [vmem:[%s0 + $0x14] sm:$0xff]
  %v24 = vld [vmem:[%s0 + $0x1c] sm:$0xff]
  %v25 = vld [vmem:[%s0 + $0x24] sm:$0xf]
  %v26 = vunpack.c.l.bf16 %v20
  %v27 = vunpack.c.h.bf16 %v20
  %v28 = vunpack.c.l.bf16 %v21
  %v29 = vunpack.c.h.bf16 %v21
  %v30 = vunpack.c.l.bf16 %v22
  %v31 = vunpack.c.l.bf16 %v23
  %v32 = vunpack.c.h.bf16 %v23
  %v33 = vunpack.c.l.bf16 %v24
  %v34 = vunpack.c.h.bf16 %v24
  %v35 = vunpack.c.l.bf16 %v25
  %v36 = vmax.f32 %v26, 0.0
  %v37 = vmax.f32 %v27, 0.0
  %v38 = vmax.f32 %v28, 0.0
  %v39 = vmax.f32 %v29, 0.0
  %v40 = vmax.f32 %v30, 0.0
  %v41 = vmax.f32 %v31, 0.0
  %v42 = vmax.f32 %v32, 0.0
  %v43 = vmax.f32 %v33, 0.0
  %v44 = vmax.f32 %v34, 0.0
  %v45 = vmax.f32 %v35, 0.0
  %v46 = vpack.c.bf16 %v41, %v36
  %v47 = vpack.c.bf16 %v42, %v37
  %v48 = vpack.c.bf16 %v43, %v38
  %v49 = vpack.c.bf16 %v44, %v39
  %v50 = vpack.c.bf16 %v45, %v40
  %v51 = vld [vmem:[#allocation2] sm:$0xff]
  %v52 = vld [vmem:[#allocation2 + $0x8] sm:$0xff]
  %v53 = vld [vmem:[%s1] sm:$0xf]
  %v54 = vld [vmem:[%s1 + $0x4] sm:$0xf]
  %v55 = vld [vmem:[%s1 + $0x8] sm:$0xf]
  %v56 = vld [vmem:[%s1 + $0xc] sm:$0xf]
  %v57 = vld [vmem:[%s1 + $0x10] sm:$0xf]
  %v58 = vld [vmem:[%s1 + $0x14] sm:$0xf]
  %v59 = vld [vmem:[%s1 + $0x18] sm:$0xf]
  %v60 = vld [vmem:[%s1 + $0x1c] sm:$0xf]
  %v61 = vld [vmem:[%s1 + $0x20] sm:$0xf]
  %v62 = vld [vmem:[%s1 + $0x24] sm:$0xf]
  %v63 = vld [vmem:[%s1 + $0x28] sm:$0xf]
  %v64 = vld [vmem:[%s1 + $0x2c] sm:$0xf]
  %v65 = vld [vmem:[%s1 + $0x30] sm:$0xf]
  %v66 = vld [vmem:[%s1 + $0x34] sm:$0xf]
  %v67 = vld [vmem:[%s1 + $0x38] sm:$0xf]
  %v68 = vld [vmem:[%s1 + $0x3c] sm:$0xf]
  %v69 = vld [vmem:[%s1 + $0x40] sm:$0xf]
  %v70 = vld [vmem:[%s1 + $0x44] sm:$0xf]
  %v71 = vld [vmem:[%s1 + $0x48] sm:$0xf]
  %v72 = vld [vmem:[%s1 + $0x4c] sm:$0xf]
  %v73 = vld [vmem:[%s1 + $0x50] sm:$0xf]
  %v74 = vld [vmem:[%s1 + $0x54] sm:$0xf]
  %v75 = vld [vmem:[%s1 + $0x58] sm:$0xf]
  %v76 = vld [vmem:[%s1 + $0x5c] sm:$0xf]
  %v77 = vld [vmem:[%s1 + $0x60] sm:$0xf]
  %v78 = vld [vmem:[%s1 + $0x64] sm:$0xf]
  %v79 = vld [vmem:[%s1 + $0x68] sm:$0xf]
  %v80 = vld [vmem:[%s1 + $0x6c] sm:$0xf]
  %v81 = vld [vmem:[%s1 + $0x70] sm:$0xf]
  %v82 = vld [vmem:[%s1 + $0x74] sm:$0xf]
  %v83 = vld [vmem:[%s1 + $0x78] sm:$0xf]
  %v84 = vld [vmem:[%s1 + $0x7c] sm:$0xf]
  %v85 = vld [vmem:[%s1 + $0x80] sm:$0xf]
  %v86 = vld [vmem:[%s1 + $0x84] sm:$0xf]
  %v87 = vld [vmem:[%s1 + $0x88] sm:$0xf]
  %v88 = vld [vmem:[%s1 + $0x8c] sm:$0xf]
  %v89 = vld [vmem:[%s1 + $0x90] sm:$0xf]
  %v90 = vld [vmem:[%s1 + $0x94] sm:$0xf]
  %v91 = vld [vmem:[%s1 + $0x98] sm:$0xf]
  %v92 = vld [vmem:[%s1 + $0x9c] sm:$0xf]
  %v93 = vld [vmem:[%s1 + $0xa0] sm:$0xf]
  %v94 = vld [vmem:[%s1 + $0xa4] sm:$0xf]
  %v95 = vld [vmem:[%s1 + $0xa8] sm:$0xf]
  %v96 = vld [vmem:[%s1 + $0xac] sm:$0xf]
  %v97 = vld [vmem:[%s1 + $0xb0] sm:$0xf]
  %v98 = vld [vmem:[%s1 + $0xb4] sm:$0xf]
  %v99 = vld [vmem:[%s1 + $0xb8] sm:$0xf]
  %v100 = vld [vmem:[%s1 + $0xbc] sm:$0xf]
  %v101 = vld [vmem:[%s1 + $0xc0] sm:$0xf]
  %v102 = vld [vmem:[%s1 + $0xc4] sm:$0xf]
  %v103 = vld [vmem:[%s1 + $0xc8] sm:$0xf]
  %v104 = vld [vmem:[%s1 + $0xcc] sm:$0xf]
  %v105 = vld [vmem:[%s1 + $0xd0] sm:$0xf]
  %v106 = vld [vmem:[%s1 + $0xd4] sm:$0xf]
  %v107 = vld [vmem:[%s1 + $0xd8] sm:$0xf]
  %v108 = vld [vmem:[%s1 + $0xdc] sm:$0xf]
  %v109 = vld [vmem:[%s1 + $0xe0] sm:$0xf]
  %v110 = vld [vmem:[%s1 + $0xe4] sm:$0xf]
  %v111 = vld [vmem:[%s1 + $0xe8] sm:$0xf]
  %v112 = vld [vmem:[%s1 + $0xec] sm:$0xf]
  %v113 = vld [vmem:[%s1 + $0xf0] sm:$0xf]
  %v114 = vld [vmem:[%s1 + $0xf4] sm:$0xf]
  %v115 = vld [vmem:[%s1 + $0xf8] sm:$0xf]
  %v116 = vld [vmem:[%s1 + $0xfc] sm:$0xf]
  %v117 = vld [vmem:[%s1 + $0x100] sm:$0xf]
  %v118 = vld [vmem:[%s1 + $0x104] sm:$0xf]
  %v119 = vld [vmem:[%s1 + $0x108] sm:$0xf]
  %v120 = vld [vmem:[%s1 + $0x10c] sm:$0xf]
  %v121 = vld [vmem:[%s1 + $0x110] sm:$0xf]
  %v122 = vld [vmem:[%s1 + $0x114] sm:$0xf]
  %v123 = vld [vmem:[%s1 + $0x118] sm:$0xf]
  %v124 = vld [vmem:[%s1 + $0x11c] sm:$0xf]
  %v125 = vld [vmem:[%s1 + $0x120] sm:$0xf]
  %v126 = vld [vmem:[%s1 + $0x124] sm:$0xf]
  %v127 = vld [vmem:[%s1 + $0x128] sm:$0xf]
  %v128 = vld [vmem:[%s1 + $0x12c] sm:$0xf]
  %v129 = vld [vmem:[%s1 + $0x130] sm:$0xf]
  %v130 = vld [vmem:[%s1 + $0x134] sm:$0xf]
  %v131 = vld [vmem:[%s1 + $0x138] sm:$0xf]
  %v132 = vld [vmem:[%s1 + $0x13c] sm:$0xf]
  %v213 = vunpack.c.l.b16 %v53
  %v214 = vunpack.c.l.b16 %v54
  %v215 = vunpack.c.l.b16 %v55
  %v216 = vunpack.c.l.b16 %v56
  %v217 = vunpack.c.l.b16 %v57
  %v218 = vunpack.c.l.b16 %v58
  %v219 = vunpack.c.l.b16 %v59
  %v220 = vunpack.c.l.b16 %v60
  %v221 = vunpack.c.l.b16 %v61
  %v222 = vunpack.c.l.b16 %v62
  %v223 = vunpack.c.l.b16 %v63
  %v224 = vunpack.c.l.b16 %v64
  %v225 = vunpack.c.l.b16 %v65
  %v226 = vunpack.c.l.b16 %v66
  %v227 = vunpack.c.l.b16 %v67
  %v228 = vunpack.c.l.b16 %v68
  %v229 = vunpack.c.l.b16 %v69
  %v230 = vunpack.c.l.b16 %v70
  %v231 = vunpack.c.l.b16 %v71
  %v232 = vunpack.c.l.b16 %v72
  %v233 = vunpack.c.l.b16 %v73
  %v234 = vunpack.c.l.b16 %v74
  %v235 = vunpack.c.l.b16 %v75
  %v236 = vunpack.c.l.b16 %v76
  %v237 = vunpack.c.l.b16 %v77
  %v238 = vunpack.c.l.b16 %v78
  %v239 = vunpack.c.l.b16 %v79
  %v240 = vunpack.c.l.b16 %v80
  %v241 = vunpack.c.l.b16 %v81
  %v242 = vunpack.c.l.b16 %v82
  %v243 = vunpack.c.l.b16 %v83
  %v244 = vunpack.c.l.b16 %v84
  %v245 = vunpack.c.l.b16 %v85
  %v246 = vunpack.c.l.b16 %v86
  %v247 = vunpack.c.l.b16 %v87
  %v248 = vunpack.c.l.b16 %v88
  %v249 = vunpack.c.l.b16 %v89
  %v250 = vunpack.c.l.b16 %v90
  %v251 = vunpack.c.l.b16 %v91
  %v252 = vunpack.c.l.b16 %v92
  %v253 = vunpack.c.l.b16 %v93
  %v254 = vunpack.c.l.b16 %v94
  %v255 = vunpack.c.l.b16 %v95
  %v256 = vunpack.c.l.b16 %v96
  %v257 = vunpack.c.l.b16 %v97
  %v258 = vunpack.c.l.b16 %v98
  %v259 = vunpack.c.l.b16 %v99
  %v260 = vunpack.c.l.b16 %v100
  %v261 = vunpack.c.l.b16 %v101
  %v262 = vunpack.c.l.b16 %v102
  %v263 = vunpack.c.l.b16 %v103
  %v264 = vunpack.c.l.b16 %v104
  %v265 = vunpack.c.l.b16 %v105
  %v266 = vunpack.c.l.b16 %v106
  %v267 = vunpack.c.l.b16 %v107
  %v268 = vunpack.c.l.b16 %v108
  %v269 = vunpack.c.l.b16 %v109
  %v270 = vunpack.c.l.b16 %v110
  %v271 = vunpack.c.l.b16 %v111
  %v272 = vunpack.c.l.b16 %v112
  %v273 = vunpack.c.l.b16 %v113
  %v274 = vunpack.c.l.b16 %v114
  %v275 = vunpack.c.l.b16 %v115
  %v276 = vunpack.c.l.b16 %v116
  %v277 = vunpack.c.l.b16 %v117
  %v278 = vunpack.c.l.b16 %v118
  %v279 = vunpack.c.l.b16 %v119
  %v280 = vunpack.c.l.b16 %v120
  %v281 = vunpack.c.l.b16 %v121
  %v282 = vunpack.c.l.b16 %v122
  %v283 = vunpack.c.l.b16 %v123
  %v284 = vunpack.c.l.b16 %v124
  %v285 = vunpack.c.l.b16 %v125
  %v286 = vunpack.c.l.b16 %v126
  %v287 = vunpack.c.l.b16 %v127
  %v288 = vunpack.c.l.b16 %v128
  %v289 = vunpack.c.l.b16 %v129
  %v290 = vunpack.c.l.b16 %v130
  %v291 = vunpack.c.l.b16 %v131
  %v292 = vunpack.c.l.b16 %v132
  %v293 = vpack.c.b16 %v214, %v213
  %v294 = vpack.c.b16 %v216, %v215
  %v295 = vpack.c.b16 %v218, %v217
  %v296 = vpack.c.b16 %v220, %v219
  %v297 = vpack.c.b16 %v222, %v221
  %v298 = vpack.c.b16 %v224, %v223
  %v299 = vpack.c.b16 %v226, %v225
  %v300 = vpack.c.b16 %v228, %v227
  %v301 = vpack.c.b16 %v230, %v229
  %v302 = vpack.c.b16 %v232, %v231
  %v303 = vpack.c.b16 %v234, %v233
  %v304 = vpack.c.b16 %v236, %v235
  %v305 = vpack.c.b16 %v238, %v237
  %v306 = vpack.c.b16 %v240, %v239
  %v307 = vpack.c.b16 %v242, %v241
  %v308 = vpack.c.b16 %v244, %v243
  %v309 = vpack.c.b16 %v246, %v245
  %v310 = vpack.c.b16 %v248, %v247
  %v311 = vpack.c.b16 %v250, %v249
  %v312 = vpack.c.b16 %v252, %v251
  %v313 = vpack.c.b16 %v254, %v253
  %v314 = vpack.c.b16 %v256, %v255
  %v315 = vpack.c.b16 %v258, %v257
  %v316 = vpack.c.b16 %v260, %v259
  %v317 = vpack.c.b16 %v262, %v261
  %v318 = vpack.c.b16 %v264, %v263
  %v319 = vpack.c.b16 %v266, %v265
  %v320 = vpack.c.b16 %v268, %v267
  %v321 = vpack.c.b16 %v270, %v269
  %v322 = vpack.c.b16 %v272, %v271
  %v323 = vpack.c.b16 %v274, %v273
  %v324 = vpack.c.b16 %v276, %v275
  %v325 = vpack.c.b16 %v278, %v277
  %v326 = vpack.c.b16 %v280, %v279
  %v327 = vpack.c.b16 %v282, %v281
  %v328 = vpack.c.b16 %v284, %v283
  %v329 = vpack.c.b16 %v286, %v285
  %v330 = vpack.c.b16 %v288, %v287
  %v331 = vpack.c.b16 %v290, %v289
  %v332 = vpack.c.b16 %v292, %v291
  %373 = vmatpush.bf16.msra.mxu0 %v300
  %374 = vmatpush.bf16.msra.mxu0 %v299
  %375 = vmatpush.bf16.msra.mxu0 %v298
  %376 = vmatpush.bf16.msra.mxu0 %v297
  %377 = vmatpush.bf16.msra.mxu0 %v296
  %378 = vmatpush.bf16.msra.mxu0 %v295
  %379 = vmatpush.bf16.msra.mxu0 %v294
  %380 = vmatpush.bf16.msra.mxu0 %v293
  %381 = vmatmul.bf16.gmra.mxu0 %v46
  %v382 = vpop.f32.mrf.mxu0
  %v383 = vadd.f32 0.0, %v382
  %v384 = vpop.f32.mrf.mxu0
  %v385 = vadd.f32 0.0, %v384
  %386 = vdwg.mxu0
  %387 = vmatpush.bf16.msra.mxu0 %v308
  %388 = vmatpush.bf16.msra.mxu0 %v307
  %389 = vmatpush.bf16.msra.mxu0 %v306
  %390 = vmatpush.bf16.msra.mxu0 %v305
  %391 = vmatpush.bf16.msra.mxu0 %v304
  %392 = vmatpush.bf16.msra.mxu0 %v303
  %393 = vmatpush.bf16.msra.mxu0 %v302
  %394 = vmatpush.bf16.msra.mxu0 %v301
  %395 = vmatmul.bf16.gmra.mxu0 %v47
  %v396 = vpop.f32.mrf.mxu0
  %v397 = vadd.f32 %v383, %v396
  %v398 = vpop.f32.mrf.mxu0
  %v399 = vadd.f32 %v385, %v398
  %400 = vdwg.mxu0
  %401 = vmatpush.bf16.msra.mxu0 %v316
  %402 = vmatpush.bf16.msra.mxu0 %v315
  %403 = vmatpush.bf16.msra.mxu0 %v314
  %404 = vmatpush.bf16.msra.mxu0 %v313
  %405 = vmatpush.bf16.msra.mxu0 %v312
  %406 = vmatpush.bf16.msra.mxu0 %v311
  %407 = vmatpush.bf16.msra.mxu0 %v310
  %408 = vmatpush.bf16.msra.mxu0 %v309
  %409 = vmatmul.bf16.gmra.mxu0 %v48
  %v410 = vpop.f32.mrf.mxu0
  %v411 = vadd.f32 %v397, %v410
  %v412 = vpop.f32.mrf.mxu0
  %v413 = vadd.f32 %v399, %v412
  %414 = vdwg.mxu0
  %415 = vmatpush.bf16.msra.mxu0 %v324
  %416 = vmatpush.bf16.msra.mxu0 %v323
  %417 = vmatpush.bf16.msra.mxu0 %v322
  %418 = vmatpush.bf16.msra.mxu0 %v321
  %419 = vmatpush.bf16.msra.mxu0 %v320
  %420 = vmatpush.bf16.msra.mxu0 %v319
  %421 = vmatpush.bf16.msra.mxu0 %v318
  %422 = vmatpush.bf16.msra.mxu0 %v317
  %423 = vmatmul.bf16.gmra.mxu0 %v49
  %v424 = vpop.f32.mrf.mxu0
  %v425 = vadd.f32 %v411, %v424
  %v426 = vpop.f32.mrf.mxu0
  %v427 = vadd.f32 %v413, %v426
  %428 = vdwg.mxu0
  %429 = vmatpush.bf16.msra.mxu0 %v332
  %430 = vmatpush.bf16.msra.mxu0 %v331
  %431 = vmatpush.bf16.msra.mxu0 %v330
  %432 = vmatpush.bf16.msra.mxu0 %v329
  %433 = vmatpush.bf16.msra.mxu0 %v328
  %434 = vmatpush.bf16.msra.mxu0 %v327
  %435 = vmatpush.bf16.msra.mxu0 %v326
  %436 = vmatpush.bf16.msra.mxu0 %v325
  %437 = vmatmul.bf16.gmra.mxu0 %v50
  %v438 = vpop.f32.mrf.mxu0
  %v439 = vadd.f32 %v425, %v438
  %v440 = vpop.f32.mrf.mxu0
  %v441 = vadd.f32 %v427, %v440
  %442 = vdwg.mxu0
  %v443 = vadd.f32 %v51, %v439
  %v444 = vadd.f32 %v52, %v441
  %445 = vst [vmem:[#allocation2] sm:$0xff] %v443
  %446 = vst [vmem:[#allocation2 + $0x8] sm:$0xff] %v444
  // Predicated region
  $region18: #{dalle_encoder_forward.43} parent=0 // pred_check
    %p447 = pneg %p14
  $region19: #{dalle_encoder_forward.43} parent=0 // pred_check_branch
    %449 = sbr.rel (%p447) target = $region21
  $region20: #{dalle_encoder_forward.43} parent=0 // pred_region
    %v450 = vld [vmem:[#allocation2] sm:$0xff]
    %v451 = vld [vmem:[#allocation2 + $0x8] sm:$0xff]
    %v452 = vld [vmem:[%s2] sm:$0x1]
    %v454 = vperm.slane %v452, 0
    %v456 = vadd.f32 %v450, %v454
    %v457 = vadd.f32 %v451, %v454
    %v458 = vpack.c.bf16 %v456, %v456
    %v459 = vpack.c.bf16 %v457, %v457
    %460 = vst [vmem:[%s3] sm:$0xf] %v458
    %461 = vst [vmem:[%s3 + $0x4] sm:$0xf] %v459
  $region21: #{dalle_encoder_forward.43} parent=0 // pred_fallthru
    _
  // Predicated region
  $region22: #{dalle_encoder_forward.43} parent=0 // pred_check
    _
  $region23: #{dalle_encoder_forward.43} parent=0 // pred_check_branch
    %463 = sbr.rel (0) target = $region25
  $region24: #{dalle_encoder_forward.43} parent=0 // pred_region
    _
  $region25: #{dalle_encoder_forward.43} parent=0 // pred_fallthru
    _
  // Predicated region
  $region26: #{dalle_encoder_forward.43} parent=0 // pred_check
    _
  $region27: #{dalle_encoder_forward.43} parent=0 // pred_check_branch
    %465 = sbr.rel (0) target = $region29
  $region28: #{dalle_encoder_forward.43} parent=0 // pred_region
    _
  $region29: #{dalle_encoder_forward.43} parent=0 // pred_fallthru
    _

// kernel: dalle_encoder_forward.44
$region0: #{dalle_encoder_forward.44}
  #allocation0 [shape = 'u32[]', space=smem, size = 0x4, offset = 0x4, fixed_abs, tag = 'smem constant byte address 0x4 - core index']
  #allocation1 [shape = 'u32[72,128]{1,0:T(1,128)}', space=vmem, size = 0x9000, scoped, tag = 'internal scratch']
  #allocation2 [shape = 'f32[16,128]{1,0:T(8,128)}', space=vmem, size = 0x2000, scoped, tag = 'scratch operand']
  %s0 = inlined_call_operand.vmem [shape: bf16[16,384], index: 0, kind: input, shape index: {}]
  %s1 = inlined_call_operand.vmem [shape: bf16[384,128], index: 1, kind: input, shape index: {}]
  %s2 = inlined_call_operand.vmem [shape: f32[1,128], index: 2, kind: input, shape index: {}]
  %s3 = inlined_call_operand.vmem [shape: bf16[16,128], index: 3, kind: output, shape index: {}]
  %s4 = sld [smem:[#allocation0]]
  $region30: #{dalle_encoder_forward.44} parent=0
    _
  %s6 = ssub.s32 1, %s4
  %s7 = scalar_select 0, %s6, %s4
  // Predicated region
  $region2: #{dalle_encoder_forward.44} parent=0 // pred_check
    _
  $region3: #{dalle_encoder_forward.44} parent=0 // pred_check_branch
    %9 = sbr.rel (0) target = $region5
  $region4: #{dalle_encoder_forward.44} parent=0 // pred_region
    _
  $region5: #{dalle_encoder_forward.44} parent=0 // pred_fallthru
    _
  // Predicated region
  $region6: #{dalle_encoder_forward.44} parent=0 // pred_check
    _
  $region7: #{dalle_encoder_forward.44} parent=0 // pred_check_branch
    %11 = sbr.rel (0) target = $region9
  $region8: #{dalle_encoder_forward.44} parent=0 // pred_region
    _
  $region9: #{dalle_encoder_forward.44} parent=0 // pred_fallthru
    _
  // Predicated region
  $region10: #{dalle_encoder_forward.44} parent=0 // pred_check
    _
  $region11: #{dalle_encoder_forward.44} parent=0 // pred_check_branch
    %13 = sbr.rel (0) target = $region13
  $region12: #{dalle_encoder_forward.44} parent=0 // pred_region
    _
  $region13: #{dalle_encoder_forward.44} parent=0 // pred_fallthru
    _
  %p14 = scmp.eq.s32.totalorder 0, 0
  // Predicated region
  $region14: #{dalle_encoder_forward.44} parent=0 // pred_check
    %p15 = pneg %p14
  $region15: #{dalle_encoder_forward.44} parent=0 // pred_check_branch
    %17 = sbr.rel (%p15) target = $region17
  $region16: #{dalle_encoder_forward.44} parent=0 // pred_region
    %18 = vst [vmem:[#allocation2] sm:$0xff] 0.0
    %19 = vst [vmem:[#allocation2 + $0x8] sm:$0xff] 0.0
  $region17: #{dalle_encoder_forward.44} parent=0 // pred_fallthru
    _
  %v20 = vld [vmem:[%s0] sm:$0xff]
  %v21 = vld [vmem:[%s0 + $0x8] sm:$0xf]
  %v22 = vld [vmem:[%s0 + $0xc] sm:$0xff]
  %v23 = vld [vmem:[%s0 + $0x14] sm:$0xf]
  %v24 = vunpack.c.l.bf16 %v20
  %v25 = vunpack.c.h.bf16 %v20
  %v26 = vunpack.c.l.bf16 %v21
  %v27 = vunpack.c.l.bf16 %v22
  %v28 = vunpack.c.h.bf16 %v22
  %v29 = vunpack.c.l.bf16 %v23
  %v30 = vmax.f32 %v24, 0.0
  %v31 = vmax.f32 %v25, 0.0
  %v32 = vmax.f32 %v26, 0.0
  %v33 = vmax.f32 %v27, 0.0
  %v34 = vmax.f32 %v28, 0.0
  %v35 = vmax.f32 %v29, 0.0
  %v36 = vpack.c.bf16 %v33, %v30
  %v37 = vpack.c.bf16 %v34, %v31
  %v38 = vpack.c.bf16 %v35, %v32
  %v39 = vld [vmem:[#allocation2] sm:$0xff]
  %v40 = vld [vmem:[#allocation2 + $0x8] sm:$0xff]
  %v41 = vld [vmem:[%s1] sm:$0xf]
  %v42 = vld [vmem:[%s1 + $0x4] sm:$0xf]
  %v43 = vld [vmem:[%s1 + $0x8] sm:$0xf]
  %v44 = vld [vmem:[%s1 + $0xc] sm:$0xf]
  %v45 = vld [vmem:[%s1 + $0x10] sm:$0xf]
  %v46 = vld [vmem:[%s1 + $0x14] sm:$0xf]
  %v47 = vld [vmem:[%s1 + $0x18] sm:$0xf]
  %v48 = vld [vmem:[%s1 + $0x1c] sm:$0xf]
  %v49 = vld [vmem:[%s1 + $0x20] sm:$0xf]
  %v50 = vld [vmem:[%s1 + $0x24] sm:$0xf]
  %v51 = vld [vmem:[%s1 + $0x28] sm:$0xf]
  %v52 = vld [vmem:[%s1 + $0x2c] sm:$0xf]
  %v53 = vld [vmem:[%s1 + $0x30] sm:$0xf]
  %v54 = vld [vmem:[%s1 + $0x34] sm:$0xf]
  %v55 = vld [vmem:[%s1 + $0x38] sm:$0xf]
  %v56 = vld [vmem:[%s1 + $0x3c] sm:$0xf]
  %v57 = vld [vmem:[%s1 + $0x40] sm:$0xf]
  %v58 = vld [vmem:[%s1 + $0x44] sm:$0xf]
  %v59 = vld [vmem:[%s1 + $0x48] sm:$0xf]
  %v60 = vld [vmem:[%s1 + $0x4c] sm:$0xf]
  %v61 = vld [vmem:[%s1 + $0x50] sm:$0xf]
  %v62 = vld [vmem:[%s1 + $0x54] sm:$0xf]
  %v63 = vld [vmem:[%s1 + $0x58] sm:$0xf]
  %v64 = vld [vmem:[%s1 + $0x5c] sm:$0xf]
  %v65 = vld [vmem:[%s1 + $0x60] sm:$0xf]
  %v66 = vld [vmem:[%s1 + $0x64] sm:$0xf]
  %v67 = vld [vmem:[%s1 + $0x68] sm:$0xf]
  %v68 = vld [vmem:[%s1 + $0x6c] sm:$0xf]
  %v69 = vld [vmem:[%s1 + $0x70] sm:$0xf]
  %v70 = vld [vmem:[%s1 + $0x74] sm:$0xf]
  %v71 = vld [vmem:[%s1 + $0x78] sm:$0xf]
  %v72 = vld [vmem:[%s1 + $0x7c] sm:$0xf]
  %v73 = vld [vmem:[%s1 + $0x80] sm:$0xf]
  %v74 = vld [vmem:[%s1 + $0x84] sm:$0xf]
  %v75 = vld [vmem:[%s1 + $0x88] sm:$0xf]
  %v76 = vld [vmem:[%s1 + $0x8c] sm:$0xf]
  %v77 = vld [vmem:[%s1 + $0x90] sm:$0xf]
  %v78 = vld [vmem:[%s1 + $0x94] sm:$0xf]
  %v79 = vld [vmem:[%s1 + $0x98] sm:$0xf]
  %v80 = vld [vmem:[%s1 + $0x9c] sm:$0xf]
  %v81 = vld [vmem:[%s1 + $0xa0] sm:$0xf]
  %v82 = vld [vmem:[%s1 + $0xa4] sm:$0xf]
  %v83 = vld [vmem:[%s1 + $0xa8] sm:$0xf]
  %v84 = vld [vmem:[%s1 + $0xac] sm:$0xf]
  %v85 = vld [vmem:[%s1 + $0xb0] sm:$0xf]
  %v86 = vld [vmem:[%s1 + $0xb4] sm:$0xf]
  %v87 = vld [vmem:[%s1 + $0xb8] sm:$0xf]
  %v88 = vld [vmem:[%s1 + $0xbc] sm:$0xf]
  %v137 = vunpack.c.l.b16 %v41
  %v138 = vunpack.c.l.b16 %v42
  %v139 = vunpack.c.l.b16 %v43
  %v140 = vunpack.c.l.b16 %v44
  %v141 = vunpack.c.l.b16 %v45
  %v142 = vunpack.c.l.b16 %v46
  %v143 = vunpack.c.l.b16 %v47
  %v144 = vunpack.c.l.b16 %v48
  %v145 = vunpack.c.l.b16 %v49
  %v146 = vunpack.c.l.b16 %v50
  %v147 = vunpack.c.l.b16 %v51
  %v148 = vunpack.c.l.b16 %v52
  %v149 = vunpack.c.l.b16 %v53
  %v150 = vunpack.c.l.b16 %v54
  %v151 = vunpack.c.l.b16 %v55
  %v152 = vunpack.c.l.b16 %v56
  %v153 = vunpack.c.l.b16 %v57
  %v154 = vunpack.c.l.b16 %v58
  %v155 = vunpack.c.l.b16 %v59
  %v156 = vunpack.c.l.b16 %v60
  %v157 = vunpack.c.l.b16 %v61
  %v158 = vunpack.c.l.b16 %v62
  %v159 = vunpack.c.l.b16 %v63
  %v160 = vunpack.c.l.b16 %v64
  %v161 = vunpack.c.l.b16 %v65
  %v162 = vunpack.c.l.b16 %v66
  %v163 = vunpack.c.l.b16 %v67
  %v164 = vunpack.c.l.b16 %v68
  %v165 = vunpack.c.l.b16 %v69
  %v166 = vunpack.c.l.b16 %v70
  %v167 = vunpack.c.l.b16 %v71
  %v168 = vunpack.c.l.b16 %v72
  %v169 = vunpack.c.l.b16 %v73
  %v170 = vunpack.c.l.b16 %v74
  %v171 = vunpack.c.l.b16 %v75
  %v172 = vunpack.c.l.b16 %v76
  %v173 = vunpack.c.l.b16 %v77
  %v174 = vunpack.c.l.b16 %v78
  %v175 = vunpack.c.l.b16 %v79
  %v176 = vunpack.c.l.b16 %v80
  %v177 = vunpack.c.l.b16 %v81
  %v178 = vunpack.c.l.b16 %v82
  %v179 = vunpack.c.l.b16 %v83
  %v180 = vunpack.c.l.b16 %v84
  %v181 = vunpack.c.l.b16 %v85
  %v182 = vunpack.c.l.b16 %v86
  %v183 = vunpack.c.l.b16 %v87
  %v184 = vunpack.c.l.b16 %v88
  %v185 = vpack.c.b16 %v138, %v137
  %v186 = vpack.c.b16 %v140, %v139
  %v187 = vpack.c.b16 %v142, %v141
  %v188 = vpack.c.b16 %v144, %v143
  %v189 = vpack.c.b16 %v146, %v145
  %v190 = vpack.c.b16 %v148, %v147
  %v191 = vpack.c.b16 %v150, %v149
  %v192 = vpack.c.b16 %v152, %v151
  %v193 = vpack.c.b16 %v154, %v153
  %v194 = vpack.c.b16 %v156, %v155
  %v195 = vpack.c.b16 %v158, %v157
  %v196 = vpack.c.b16 %v160, %v159
  %v197 = vpack.c.b16 %v162, %v161
  %v198 = vpack.c.b16 %v164, %v163
  %v199 = vpack.c.b16 %v166, %v165
  %v200 = vpack.c.b16 %v168, %v167
  %v201 = vpack.c.b16 %v170, %v169
  %v202 = vpack.c.b16 %v172, %v171
  %v203 = vpack.c.b16 %v174, %v173
  %v204 = vpack.c.b16 %v176, %v175
  %v205 = vpack.c.b16 %v178, %v177
  %v206 = vpack.c.b16 %v180, %v179
  %v207 = vpack.c.b16 %v182, %v181
  %v208 = vpack.c.b16 %v184, %v183
  %233 = vmatpush.bf16.msra.mxu0 %v192
  %234 = vmatpush.bf16.msra.mxu0 %v191
  %235 = vmatpush.bf16.msra.mxu0 %v190
  %236 = vmatpush.bf16.msra.mxu0 %v189
  %237 = vmatpush.bf16.msra.mxu0 %v188
  %238 = vmatpush.bf16.msra.mxu0 %v187
  %239 = vmatpush.bf16.msra.mxu0 %v186
  %240 = vmatpush.bf16.msra.mxu0 %v185
  %241 = vmatmul.bf16.gmra.mxu0 %v36
  %v242 = vpop.f32.mrf.mxu0
  %v243 = vadd.f32 0.0, %v242
  %v244 = vpop.f32.mrf.mxu0
  %v245 = vadd.f32 0.0, %v244
  %246 = vdwg.mxu0
  %247 = vmatpush.bf16.msra.mxu0 %v200
  %248 = vmatpush.bf16.msra.mxu0 %v199
  %249 = vmatpush.bf16.msra.mxu0 %v198
  %250 = vmatpush.bf16.msra.mxu0 %v197
  %251 = vmatpush.bf16.msra.mxu0 %v196
  %252 = vmatpush.bf16.msra.mxu0 %v195
  %253 = vmatpush.bf16.msra.mxu0 %v194
  %254 = vmatpush.bf16.msra.mxu0 %v193
  %255 = vmatmul.bf16.gmra.mxu0 %v37
  %v256 = vpop.f32.mrf.mxu0
  %v257 = vadd.f32 %v243, %v256
  %v258 = vpop.f32.mrf.mxu0
  %v259 = vadd.f32 %v245, %v258
  %260 = vdwg.mxu0
  %261 = vmatpush.bf16.msra.mxu0 %v208
  %262 = vmatpush.bf16.msra.mxu0 %v207
  %263 = vmatpush.bf16.msra.mxu0 %v206
  %264 = vmatpush.bf16.msra.mxu0 %v205
  %265 = vmatpush.bf16.msra.mxu0 %v204
  %266 = vmatpush.bf16.msra.mxu0 %v203
  %267 = vmatpush.bf16.msra.mxu0 %v202
  %268 = vmatpush.bf16.msra.mxu0 %v201
  %269 = vmatmul.bf16.gmra.mxu0 %v38
  %v270 = vpop.f32.mrf.mxu0
  %v271 = vadd.f32 %v257, %v270
  %v272 = vpop.f32.mrf.mxu0
  %v273 = vadd.f32 %v259, %v272
  %274 = vdwg.mxu0
  %v275 = vadd.f32 %v39, %v271
  %v276 = vadd.f32 %v40, %v273
  %277 = vst [vmem:[#allocation2] sm:$0xff] %v275
  %278 = vst [vmem:[#allocation2 + $0x8] sm:$0xff] %v276
  // Predicated region
  $region18: #{dalle_encoder_forward.44} parent=0 // pred_check
    %p279 = pneg %p14
  $region19: #{dalle_encoder_forward.44} parent=0 // pred_check_branch
    %281 = sbr.rel (%p279) target = $region21
  $region20: #{dalle_encoder_forward.44} parent=0 // pred_region
    %v282 = vld [vmem:[#allocation2] sm:$0xff]
    %v283 = vld [vmem:[#allocation2 + $0x8] sm:$0xff]
    %v284 = vld [vmem:[%s2] sm:$0x1]
    %v286 = vperm.slane %v284, 0
    %v288 = vadd.f32 %v282, %v286
    %v289 = vadd.f32 %v283, %v286
    %v290 = vpack.c.bf16 %v288, %v288
    %v291 = vpack.c.bf16 %v289, %v289
    %292 = vst [vmem:[%s3] sm:$0xf] %v290
    %293 = vst [vmem:[%s3 + $0x4] sm:$0xf] %v291
  $region21: #{dalle_encoder_forward.44} parent=0 // pred_fallthru
    _
  // Predicated region
  $region22: #{dalle_encoder_forward.44} parent=0 // pred_check
    _
  $region23: #{dalle_encoder_forward.44} parent=0 // pred_check_branch
    %295 = sbr.rel (0) target = $region25
  $region24: #{dalle_encoder_forward.44} parent=0 // pred_region
    _
  $region25: #{dalle_encoder_forward.44} parent=0 // pred_fallthru
    _
  // Predicated region
  $region26: #{dalle_encoder_forward.44} parent=0 // pred_check
    _
  $region27: #{dalle_encoder_forward.44} parent=0 // pred_check_branch
    %297 = sbr.rel (0) target = $region29
  $region28: #{dalle_encoder_forward.44} parent=0 // pred_region
    _
  $region29: #{dalle_encoder_forward.44} parent=0 // pred_fallthru
    _

// kernel: dalle_encoder_forward.42
$region0: #{dalle_encoder_forward.42}
  #allocation0 [shape = 'u32[]', space=smem, size = 0x4, offset = 0x4, fixed_abs, tag = 'smem constant byte address 0x4 - core index']
  #allocation1 [shape = 'u32[72,128]{1,0:T(1,128)}', space=vmem, size = 0x9000, scoped, tag = 'internal scratch']
  #allocation2 [shape = 'f32[16,128]{1,0:T(8,128)}', space=vmem, size = 0x2000, scoped, tag = 'scratch operand']
  %s0 = inlined_call_operand.vmem [shape: bf16[16,128], index: 0, kind: input, shape index: {}]
  %s1 = inlined_call_operand.vmem [shape: bf16[128,128], index: 1, kind: input, shape index: {}]
  %s2 = inlined_call_operand.vmem [shape: f32[1,128], index: 2, kind: input, shape index: {}]
  %s3 = inlined_call_operand.vmem [shape: bf16[16,128], index: 3, kind: output, shape index: {}]
  %s4 = sld [smem:[#allocation0]]
  $region30: #{dalle_encoder_forward.42} parent=0
    _
  %s6 = ssub.s32 1, %s4
  %s7 = scalar_select 0, %s6, %s4
  // Predicated region
  $region2: #{dalle_encoder_forward.42} parent=0 // pred_check
    _
  $region3: #{dalle_encoder_forward.42} parent=0 // pred_check_branch
    %9 = sbr.rel (0) target = $region5
  $region4: #{dalle_encoder_forward.42} parent=0 // pred_region
    _
  $region5: #{dalle_encoder_forward.42} parent=0 // pred_fallthru
    _
  // Predicated region
  $region6: #{dalle_encoder_forward.42} parent=0 // pred_check
    _
  $region7: #{dalle_encoder_forward.42} parent=0 // pred_check_branch
    %11 = sbr.rel (0) target = $region9
  $region8: #{dalle_encoder_forward.42} parent=0 // pred_region
    _
  $region9: #{dalle_encoder_forward.42} parent=0 // pred_fallthru
    _
  // Predicated region
  $region10: #{dalle_encoder_forward.42} parent=0 // pred_check
    _
  $region11: #{dalle_encoder_forward.42} parent=0 // pred_check_branch
    %13 = sbr.rel (0) target = $region13
  $region12: #{dalle_encoder_forward.42} parent=0 // pred_region
    _
  $region13: #{dalle_encoder_forward.42} parent=0 // pred_fallthru
    _
  %p14 = scmp.eq.s32.totalorder 0, 0
  // Predicated region
  $region14: #{dalle_encoder_forward.42} parent=0 // pred_check
    %p15 = pneg %p14
  $region15: #{dalle_encoder_forward.42} parent=0 // pred_check_branch
    %17 = sbr.rel (%p15) target = $region17
  $region16: #{dalle_encoder_forward.42} parent=0 // pred_region
    %18 = vst [vmem:[#allocation2] sm:$0xff] 0.0
    %19 = vst [vmem:[#allocation2 + $0x8] sm:$0xff] 0.0
  $region17: #{dalle_encoder_forward.42} parent=0 // pred_fallthru
    _
  %v20 = vld [vmem:[%s0] sm:$0xf]
  %v21 = vld [vmem:[%s0 + $0x4] sm:$0xf]
  %v22 = vld [vmem:[#allocation2] sm:$0xff]
  %v23 = vld [vmem:[#allocation2 + $0x8] sm:$0xff]
  %v24 = vld [vmem:[%s1] sm:$0xf]
  %v25 = vld [vmem:[%s1 + $0x4] sm:$0xf]
  %v26 = vld [vmem:[%s1 + $0x8] sm:$0xf]
  %v27 = vld [vmem:[%s1 + $0xc] sm:$0xf]
  %v28 = vld [vmem:[%s1 + $0x10] sm:$0xf]
  %v29 = vld [vmem:[%s1 + $0x14] sm:$0xf]
  %v30 = vld [vmem:[%s1 + $0x18] sm:$0xf]
  %v31 = vld [vmem:[%s1 + $0x1c] sm:$0xf]
  %v32 = vld [vmem:[%s1 + $0x20] sm:$0xf]
  %v33 = vld [vmem:[%s1 + $0x24] sm:$0xf]
  %v34 = vld [vmem:[%s1 + $0x28] sm:$0xf]
  %v35 = vld [vmem:[%s1 + $0x2c] sm:$0xf]
  %v36 = vld [vmem:[%s1 + $0x30] sm:$0xf]
  %v37 = vld [vmem:[%s1 + $0x34] sm:$0xf]
  %v38 = vld [vmem:[%s1 + $0x38] sm:$0xf]
  %v39 = vld [vmem:[%s1 + $0x3c] sm:$0xf]
  %v42 = vunpack.c.l.b16 %v20
  %v43 = vunpack.c.l.b16 %v21
  %v44 = vpack.c.b16 %v43, %v42
  %v62 = vunpack.c.l.b16 %v24
  %v63 = vunpack.c.l.b16 %v25
  %v64 = vunpack.c.l.b16 %v26
  %v65 = vunpack.c.l.b16 %v27
  %v66 = vunpack.c.l.b16 %v28
  %v67 = vunpack.c.l.b16 %v29
  %v68 = vunpack.c.l.b16 %v30
  %v69 = vunpack.c.l.b16 %v31
  %v70 = vunpack.c.l.b16 %v32
  %v71 = vunpack.c.l.b16 %v33
  %v72 = vunpack.c.l.b16 %v34
  %v73 = vunpack.c.l.b16 %v35
  %v74 = vunpack.c.l.b16 %v36
  %v75 = vunpack.c.l.b16 %v37
  %v76 = vunpack.c.l.b16 %v38
  %v77 = vunpack.c.l.b16 %v39
  %v78 = vpack.c.b16 %v63, %v62
  %v79 = vpack.c.b16 %v65, %v64
  %v80 = vpack.c.b16 %v67, %v66
  %v81 = vpack.c.b16 %v69, %v68
  %v82 = vpack.c.b16 %v71, %v70
  %v83 = vpack.c.b16 %v73, %v72
  %v84 = vpack.c.b16 %v75, %v74
  %v85 = vpack.c.b16 %v77, %v76
  %94 = vmatpush.bf16.msra.mxu0 %v85
  %95 = vmatpush.bf16.msra.mxu0 %v84
  %96 = vmatpush.bf16.msra.mxu0 %v83
  %97 = vmatpush.bf16.msra.mxu0 %v82
  %98 = vmatpush.bf16.msra.mxu0 %v81
  %99 = vmatpush.bf16.msra.mxu0 %v80
  %100 = vmatpush.bf16.msra.mxu0 %v79
  %101 = vmatpush.bf16.msra.mxu0 %v78
  %102 = vmatmul.bf16.gmra.mxu0 %v44
  %v103 = vpop.f32.mrf.mxu0
  %v104 = vadd.f32 0.0, %v103
  %v105 = vpop.f32.mrf.mxu0
  %v106 = vadd.f32 0.0, %v105
  %107 = vdwg.mxu0
  %v108 = vadd.f32 %v22, %v104
  %v109 = vadd.f32 %v23, %v106
  %110 = vst [vmem:[#allocation2] sm:$0xff] %v108
  %111 = vst [vmem:[#allocation2 + $0x8] sm:$0xff] %v109
  // Predicated region
  $region18: #{dalle_encoder_forward.42} parent=0 // pred_check
    %p112 = pneg %p14
  $region19: #{dalle_encoder_forward.42} parent=0 // pred_check_branch
    %114 = sbr.rel (%p112) target = $region21
  $region20: #{dalle_encoder_forward.42} parent=0 // pred_region
    %v115 = vld [vmem:[#allocation2] sm:$0xff]
    %v116 = vld [vmem:[#allocation2 + $0x8] sm:$0xff]
    %v117 = vld [vmem:[%s2] sm:$0x1]
    %v119 = vperm.slane %v117, 0
    %v121 = vadd.f32 %v115, %v119
    %v122 = vadd.f32 %v116, %v119
    %v123 = vpack.c.bf16 %v121, %v121
    %v124 = vpack.c.bf16 %v122, %v122
    %125 = vst [vmem:[%s3] sm:$0xf] %v123
    %126 = vst [vmem:[%s3 + $0x4] sm:$0xf] %v124
  $region21: #{dalle_encoder_forward.42} parent=0 // pred_fallthru
    _
  // Predicated region
  $region22: #{dalle_encoder_forward.42} parent=0 // pred_check
    _
  $region23: #{dalle_encoder_forward.42} parent=0 // pred_check_branch
    %128 = sbr.rel (0) target = $region25
  $region24: #{dalle_encoder_forward.42} parent=0 // pred_region
    _
  $region25: #{dalle_encoder_forward.42} parent=0 // pred_fallthru
    _
  // Predicated region
  $region26: #{dalle_encoder_forward.42} parent=0 // pred_check
    _
  $region27: #{dalle_encoder_forward.42} parent=0 // pred_check_branch
    %130 = sbr.rel (0) target = $region29
  $region28: #{dalle_encoder_forward.42} parent=0 // pred_region
    _
  $region29: #{dalle_encoder_forward.42} parent=0 // pred_fallthru
    _

// kernel: dalle_encoder_forward.46
$region0: #{dalle_encoder_forward.46}
  #allocation0 [shape = 'u32[]', space=smem, size = 0x4, offset = 0x4, fixed_abs, tag = 'smem constant byte address 0x4 - core index']
  #allocation1 [shape = 'u32[72,128]{1,0:T(1,128)}', space=vmem, size = 0x9000, scoped, tag = 'internal scratch']
  #allocation2 [shape = 'f32[16,128]{1,0:T(8,128)}', space=vmem, size = 0x2000, scoped, tag = 'scratch operand']
  %s0 = inlined_call_operand.vmem [shape: bf16[16,128], index: 0, kind: input, shape index: {}]
  %s1 = inlined_call_operand.vmem [shape: bf16[128,128], index: 1, kind: input, shape index: {}]
  %s2 = inlined_call_operand.vmem [shape: f32[1,128], index: 2, kind: input, shape index: {}]
  %s3 = inlined_call_operand.vmem [shape: bf16[16,128], index: 3, kind: input, shape index: {}]
  %s4 = inlined_call_operand.vmem [shape: bf16[16,128], index: 4, kind: output, shape index: {}]
  %s5 = sld [smem:[#allocation0]]
  $region34: #{dalle_encoder_forward.46} parent=0
    _
  %s7 = ssub.s32 1, %s5
  %s8 = scalar_select 0, %s7, %s5
  // Predicated region
  $region2: #{dalle_encoder_forward.46} parent=0 // pred_check
    _
  $region3: #{dalle_encoder_forward.46} parent=0 // pred_check_branch
    %10 = sbr.rel (0) target = $region5
  $region4: #{dalle_encoder_forward.46} parent=0 // pred_region
    _
  $region5: #{dalle_encoder_forward.46} parent=0 // pred_fallthru
    _
  // Predicated region
  $region6: #{dalle_encoder_forward.46} parent=0 // pred_check
    _
  $region7: #{dalle_encoder_forward.46} parent=0 // pred_check_branch
    %12 = sbr.rel (0) target = $region9
  $region8: #{dalle_encoder_forward.46} parent=0 // pred_region
    _
  $region9: #{dalle_encoder_forward.46} parent=0 // pred_fallthru
    _
  // Predicated region
  $region10: #{dalle_encoder_forward.46} parent=0 // pred_check
    _
  $region11: #{dalle_encoder_forward.46} parent=0 // pred_check_branch
    %14 = sbr.rel (0) target = $region13
  $region12: #{dalle_encoder_forward.46} parent=0 // pred_region
    _
  $region13: #{dalle_encoder_forward.46} parent=0 // pred_fallthru
    _
  // Predicated region
  $region14: #{dalle_encoder_forward.46} parent=0 // pred_check
    _
  $region15: #{dalle_encoder_forward.46} parent=0 // pred_check_branch
    %16 = sbr.rel (0) target = $region17
  $region16: #{dalle_encoder_forward.46} parent=0 // pred_region
    _
  $region17: #{dalle_encoder_forward.46} parent=0 // pred_fallthru
    _
  %p17 = scmp.eq.s32.totalorder 0, 0
  // Predicated region
  $region18: #{dalle_encoder_forward.46} parent=0 // pred_check
    %p18 = pneg %p17
  $region19: #{dalle_encoder_forward.46} parent=0 // pred_check_branch
    %20 = sbr.rel (%p18) target = $region21
  $region20: #{dalle_encoder_forward.46} parent=0 // pred_region
    %21 = vst [vmem:[#allocation2] sm:$0xff] 0.0
    %22 = vst [vmem:[#allocation2 + $0x8] sm:$0xff] 0.0
  $region21: #{dalle_encoder_forward.46} parent=0 // pred_fallthru
    _
  %v23 = vld [vmem:[%s0] sm:$0xf]
  %v24 = vld [vmem:[%s0 + $0x4] sm:$0xf]
  %v25 = vunpack.c.l.bf16 %v23
  %v26 = vunpack.c.l.bf16 %v24
  %v27 = vmax.f32 %v25, 0.0
  %v28 = vmax.f32 %v26, 0.0
  %v29 = vpack.c.bf16 %v28, %v27
  %v30 = vld [vmem:[#allocation2] sm:$0xff]
  %v31 = vld [vmem:[#allocation2 + $0x8] sm:$0xff]
  %v32 = vld [vmem:[%s1] sm:$0xf]
  %v33 = vld [vmem:[%s1 + $0x4] sm:$0xf]
  %v34 = vld [vmem:[%s1 + $0x8] sm:$0xf]
  %v35 = vld [vmem:[%s1 + $0xc] sm:$0xf]
  %v36 = vld [vmem:[%s1 + $0x10] sm:$0xf]
  %v37 = vld [vmem:[%s1 + $0x14] sm:$0xf]
  %v38 = vld [vmem:[%s1 + $0x18] sm:$0xf]
  %v39 = vld [vmem:[%s1 + $0x1c] sm:$0xf]
  %v40 = vld [vmem:[%s1 + $0x20] sm:$0xf]
  %v41 = vld [vmem:[%s1 + $0x24] sm:$0xf]
  %v42 = vld [vmem:[%s1 + $0x28] sm:$0xf]
  %v43 = vld [vmem:[%s1 + $0x2c] sm:$0xf]
  %v44 = vld [vmem:[%s1 + $0x30] sm:$0xf]
  %v45 = vld [vmem:[%s1 + $0x34] sm:$0xf]
  %v46 = vld [vmem:[%s1 + $0x38] sm:$0xf]
  %v47 = vld [vmem:[%s1 + $0x3c] sm:$0xf]
  %v64 = vunpack.c.l.b16 %v32
  %v65 = vunpack.c.l.b16 %v33
  %v66 = vunpack.c.l.b16 %v34
  %v67 = vunpack.c.l.b16 %v35
  %v68 = vunpack.c.l.b16 %v36
  %v69 = vunpack.c.l.b16 %v37
  %v70 = vunpack.c.l.b16 %v38
  %v71 = vunpack.c.l.b16 %v39
  %v72 = vunpack.c.l.b16 %v40
  %v73 = vunpack.c.l.b16 %v41
  %v74 = vunpack.c.l.b16 %v42
  %v75 = vunpack.c.l.b16 %v43
  %v76 = vunpack.c.l.b16 %v44
  %v77 = vunpack.c.l.b16 %v45
  %v78 = vunpack.c.l.b16 %v46
  %v79 = vunpack.c.l.b16 %v47
  %v80 = vpack.c.b16 %v65, %v64
  %v81 = vpack.c.b16 %v67, %v66
  %v82 = vpack.c.b16 %v69, %v68
  %v83 = vpack.c.b16 %v71, %v70
  %v84 = vpack.c.b16 %v73, %v72
  %v85 = vpack.c.b16 %v75, %v74
  %v86 = vpack.c.b16 %v77, %v76
  %v87 = vpack.c.b16 %v79, %v78
  %96 = vmatpush.bf16.msra.mxu0 %v87
  %97 = vmatpush.bf16.msra.mxu0 %v86
  %98 = vmatpush.bf16.msra.mxu0 %v85
  %99 = vmatpush.bf16.msra.mxu0 %v84
  %100 = vmatpush.bf16.msra.mxu0 %v83
  %101 = vmatpush.bf16.msra.mxu0 %v82
  %102 = vmatpush.bf16.msra.mxu0 %v81
  %103 = vmatpush.bf16.msra.mxu0 %v80
  %104 = vmatmul.bf16.gmra.mxu0 %v29
  %v105 = vpop.f32.mrf.mxu0
  %v106 = vadd.f32 0.0, %v105
  %v107 = vpop.f32.mrf.mxu0
  %v108 = vadd.f32 0.0, %v107
  %109 = vdwg.mxu0
  %v110 = vadd.f32 %v30, %v106
  %v111 = vadd.f32 %v31, %v108
  %112 = vst [vmem:[#allocation2] sm:$0xff] %v110
  %113 = vst [vmem:[#allocation2 + $0x8] sm:$0xff] %v111
  // Predicated region
  $region22: #{dalle_encoder_forward.46} parent=0 // pred_check
    %p114 = pneg %p17
  $region23: #{dalle_encoder_forward.46} parent=0 // pred_check_branch
    %116 = sbr.rel (%p114) target = $region25
  $region24: #{dalle_encoder_forward.46} parent=0 // pred_region
    %v117 = vld [vmem:[#allocation2] sm:$0xff]
    %v118 = vld [vmem:[#allocation2 + $0x8] sm:$0xff]
    %v119 = vld [vmem:[%s2] sm:$0x1]
    %v121 = vperm.slane %v119, 0
    %v123 = vadd.f32 %v117, %v121
    %v124 = vadd.f32 %v118, %v121
    %v125 = vld [vmem:[%s3] sm:$0xf]
    %v126 = vld [vmem:[%s3 + $0x4] sm:$0xf]
    %v127 = vunpack.c.l.bf16 %v125
    %v128 = vunpack.c.l.bf16 %v126
    %v129 = vmul.f32 %v123, 0.0625
    %v130 = vmul.f32 %v124, 0.0625
    %v131 = vadd.f32 %v127, %v129
    %v132 = vadd.f32 %v128, %v130
    %v133 = vpack.c.bf16 %v131, %v131
    %v134 = vpack.c.bf16 %v132, %v132
    %135 = vst [vmem:[%s4] sm:$0xf] %v133
    %136 = vst [vmem:[%s4 + $0x4] sm:$0xf] %v134
  $region25: #{dalle_encoder_forward.46} parent=0 // pred_fallthru
    _
  // Predicated region
  $region26: #{dalle_encoder_forward.46} parent=0 // pred_check
    _
  $region27: #{dalle_encoder_forward.46} parent=0 // pred_check_branch
    %138 = sbr.rel (0) target = $region29
  $region28: #{dalle_encoder_forward.46} parent=0 // pred_region
    _
  $region29: #{dalle_encoder_forward.46} parent=0 // pred_fallthru
    _
  // Predicated region
  $region30: #{dalle_encoder_forward.46} parent=0 // pred_check
    _
  $region31: #{dalle_encoder_forward.46} parent=0 // pred_check_branch
    %140 = sbr.rel (0) target = $region33
  $region32: #{dalle_encoder_forward.46} parent=0 // pred_region
    _
  $region33: #{dalle_encoder_forward.46} parent=0 // pred_fallthru
    _

// kernel: dalle_encoder_forward.47
$region0: #{dalle_encoder_forward.47}
  #allocation0 [shape = 'u32[]', space=smem, size = 0x4, offset = 0x4, fixed_abs, tag = 'smem constant byte address 0x4 - core index']
  #allocation1 [shape = 'u32[72,128]{1,0:T(1,128)}', space=vmem, size = 0x9000, scoped, tag = 'internal scratch']
  #allocation2 [shape = 'f32[16,128]{1,0:T(8,128)}', space=vmem, size = 0x2000, scoped, tag = 'scratch operand']
  %s0 = inlined_call_operand.vmem [shape: bf16[16,128], index: 0, kind: input, shape index: {}]
  %s1 = inlined_call_operand.vmem [shape: bf16[128,128], index: 1, kind: input, shape index: {}]
  %s2 = inlined_call_operand.vmem [shape: f32[1,128], index: 2, kind: input, shape index: {}]
  %s3 = inlined_call_operand.vmem [shape: f32[16,128], index: 3, kind: output, shape index: {}]
  %s4 = sld [smem:[#allocation0]]
  $region30: #{dalle_encoder_forward.47} parent=0
    _
  %s6 = ssub.s32 1, %s4
  %s7 = scalar_select 0, %s6, %s4
  // Predicated region
  $region2: #{dalle_encoder_forward.47} parent=0 // pred_check
    _
  $region3: #{dalle_encoder_forward.47} parent=0 // pred_check_branch
    %9 = sbr.rel (0) target = $region5
  $region4: #{dalle_encoder_forward.47} parent=0 // pred_region
    _
  $region5: #{dalle_encoder_forward.47} parent=0 // pred_fallthru
    _
  // Predicated region
  $region6: #{dalle_encoder_forward.47} parent=0 // pred_check
    _
  $region7: #{dalle_encoder_forward.47} parent=0 // pred_check_branch
    %11 = sbr.rel (0) target = $region9
  $region8: #{dalle_encoder_forward.47} parent=0 // pred_region
    _
  $region9: #{dalle_encoder_forward.47} parent=0 // pred_fallthru
    _
  // Predicated region
  $region10: #{dalle_encoder_forward.47} parent=0 // pred_check
    _
  $region11: #{dalle_encoder_forward.47} parent=0 // pred_check_branch
    %13 = sbr.rel (0) target = $region13
  $region12: #{dalle_encoder_forward.47} parent=0 // pred_region
    _
  $region13: #{dalle_encoder_forward.47} parent=0 // pred_fallthru
    _
  %p14 = scmp.eq.s32.totalorder 0, 0
  // Predicated region
  $region14: #{dalle_encoder_forward.47} parent=0 // pred_check
    %p15 = pneg %p14
  $region15: #{dalle_encoder_forward.47} parent=0 // pred_check_branch
    %17 = sbr.rel (%p15) target = $region17
  $region16: #{dalle_encoder_forward.47} parent=0 // pred_region
    %18 = vst [vmem:[#allocation2] sm:$0xff] 0.0
    %19 = vst [vmem:[#allocation2 + $0x8] sm:$0xff] 0.0
  $region17: #{dalle_encoder_forward.47} parent=0 // pred_fallthru
    _
  %v20 = vld [vmem:[%s0] sm:$0xf]
  %v21 = vld [vmem:[%s0 + $0x4] sm:$0xf]
  %v22 = vunpack.c.l.bf16 %v20
  %v23 = vunpack.c.l.bf16 %v21
  %v24 = vmax.f32 %v22, 0.0
  %v25 = vmax.f32 %v23, 0.0
  %v26 = vpack.c.bf16 %v25, %v24
  %v27 = vld [vmem:[#allocation2] sm:$0xff]
  %v28 = vld [vmem:[#allocation2 + $0x8] sm:$0xff]
  %v29 = vld [vmem:[%s1] sm:$0xf]
  %v30 = vld [vmem:[%s1 + $0x4] sm:$0xf]
  %v31 = vld [vmem:[%s1 + $0x8] sm:$0xf]
  %v32 = vld [vmem:[%s1 + $0xc] sm:$0xf]
  %v33 = vld [vmem:[%s1 + $0x10] sm:$0xf]
  %v34 = vld [vmem:[%s1 + $0x14] sm:$0xf]
  %v35 = vld [vmem:[%s1 + $0x18] sm:$0xf]
  %v36 = vld [vmem:[%s1 + $0x1c] sm:$0xf]
  %v37 = vld [vmem:[%s1 + $0x20] sm:$0xf]
  %v38 = vld [vmem:[%s1 + $0x24] sm:$0xf]
  %v39 = vld [vmem:[%s1 + $0x28] sm:$0xf]
  %v40 = vld [vmem:[%s1 + $0x2c] sm:$0xf]
  %v41 = vld [vmem:[%s1 + $0x30] sm:$0xf]
  %v42 = vld [vmem:[%s1 + $0x34] sm:$0xf]
  %v43 = vld [vmem:[%s1 + $0x38] sm:$0xf]
  %v44 = vld [vmem:[%s1 + $0x3c] sm:$0xf]
  %v61 = vunpack.c.l.b16 %v29
  %v62 = vunpack.c.l.b16 %v30
  %v63 = vunpack.c.l.b16 %v31
  %v64 = vunpack.c.l.b16 %v32
  %v65 = vunpack.c.l.b16 %v33
  %v66 = vunpack.c.l.b16 %v34
  %v67 = vunpack.c.l.b16 %v35
  %v68 = vunpack.c.l.b16 %v36
  %v69 = vunpack.c.l.b16 %v37
  %v70 = vunpack.c.l.b16 %v38
  %v71 = vunpack.c.l.b16 %v39
  %v72 = vunpack.c.l.b16 %v40
  %v73 = vunpack.c.l.b16 %v41
  %v74 = vunpack.c.l.b16 %v42
  %v75 = vunpack.c.l.b16 %v43
  %v76 = vunpack.c.l.b16 %v44
  %v77 = vpack.c.b16 %v62, %v61
  %v78 = vpack.c.b16 %v64, %v63
  %v79 = vpack.c.b16 %v66, %v65
  %v80 = vpack.c.b16 %v68, %v67
  %v81 = vpack.c.b16 %v70, %v69
  %v82 = vpack.c.b16 %v72, %v71
  %v83 = vpack.c.b16 %v74, %v73
  %v84 = vpack.c.b16 %v76, %v75
  %93 = vmatpush.bf16.msra.mxu0 %v84
  %94 = vmatpush.bf16.msra.mxu0 %v83
  %95 = vmatpush.bf16.msra.mxu0 %v82
  %96 = vmatpush.bf16.msra.mxu0 %v81
  %97 = vmatpush.bf16.msra.mxu0 %v80
  %98 = vmatpush.bf16.msra.mxu0 %v79
  %99 = vmatpush.bf16.msra.mxu0 %v78
  %100 = vmatpush.bf16.msra.mxu0 %v77
  %101 = vmatmul.bf16.gmra.mxu0 %v26
  %v102 = vpop.f32.mrf.mxu0
  %v103 = vadd.f32 0.0, %v102
  %v104 = vpop.f32.mrf.mxu0
  %v105 = vadd.f32 0.0, %v104
  %106 = vdwg.mxu0
  %v107 = vadd.f32 %v27, %v103
  %v108 = vadd.f32 %v28, %v105
  %109 = vst [vmem:[#allocation2] sm:$0xff] %v107
  %110 = vst [vmem:[#allocation2 + $0x8] sm:$0xff] %v108
  // Predicated region
  $region18: #{dalle_encoder_forward.47} parent=0 // pred_check
    %p111 = pneg %p14
  $region19: #{dalle_encoder_forward.47} parent=0 // pred_check_branch
    %113 = sbr.rel (%p111) target = $region21
  $region20: #{dalle_encoder_forward.47} parent=0 // pred_region
    %v114 = vld [vmem:[#allocation2] sm:$0xff]
    %v115 = vld [vmem:[#allocation2 + $0x8] sm:$0xff]
    %v116 = vld [vmem:[%s2] sm:$0x1]
    %v118 = vperm.slane %v116, 0
    %v120 = vadd.f32 %v114, %v118
    %v121 = vadd.f32 %v115, %v118
    %122 = vst [vmem:[%s3] sm:$0xff] %v120
    %123 = vst [vmem:[%s3 + $0x8] sm:$0xff] %v121
  $region21: #{dalle_encoder_forward.47} parent=0 // pred_fallthru
    _
  // Predicated region
  $region22: #{dalle_encoder_forward.47} parent=0 // pred_check
    _
  $region23: #{dalle_encoder_forward.47} parent=0 // pred_check_branch
    %125 = sbr.rel (0) target = $region25
  $region24: #{dalle_encoder_forward.47} parent=0 // pred_region
    _
  $region25: #{dalle_encoder_forward.47} parent=0 // pred_fallthru
    _
  // Predicated region
  $region26: #{dalle_encoder_forward.47} parent=0 // pred_check
    _
  $region27: #{dalle_encoder_forward.47} parent=0 // pred_check_branch
    %127 = sbr.rel (0) target = $region29
  $region28: #{dalle_encoder_forward.47} parent=0 // pred_region
    _
  $region29: #{dalle_encoder_forward.47} parent=0 // pred_fallthru
    _

</llo_original>
